<compile_context>
chip_gen: v7x
topology: tpu7x:2x2x1
jax: 0.10.0
libtpu: 0.0.40
codegen_flags: <defaults>
</compile_context>

<pallas_src>
import math

import jax
import jax.numpy as jnp
from jax.experimental import pallas as pl
from jax.experimental.pallas import tpu as pltpu

# ----------------------------- model constants -----------------------------
NUM_LAYERS = 8
HIDDEN = 256
HALF = HIDDEN // 2                     # 128
NUM_FREQ = 10                          # num_encoding_fn_input
IN_DIM = 2                             # include_input_input
DIM_UV = IN_DIM * (1 + 2 * NUM_FREQ)   # 42
SKIP = 3 + 1                           # skip_connect_every + 1
OUTPUT_CH = 1
HEAD_W = 8                             # packed head width: [depth, diff(3), spec, pad(3)]


# ----------------------------- encode_fn (plain JAX) -----------------------
def positional_encoding(x):
    """NeRF positional encoding: [x, sin(2^i x), cos(2^i x)] -> (N, DIM_UV)."""
    freqs = 2.0 ** jnp.arange(NUM_FREQ, dtype=jnp.float32)             # (F,)
    xf = x[:, None, :] * freqs[None, :, None]                          # (N, F, 2)
    enc = jnp.concatenate([jnp.sin(xf), jnp.cos(xf)], axis=-1)         # (N, F, 4)
    return jnp.concatenate([x, enc.reshape(x.shape[0], -1)], axis=-1)  # (N, 42)


# ----------------------------- Pallas kernel --------------------------------
def _spinlight_kernel(x_ref, *refs):
    """One batch tile of the full SpinLightMLP forward.

    refs = [w0, b0, ..., (skip: wx, wh, b), ..., w_feat, b_feat,
            branch0_w, branch0_b, ..., branch3_w, branch3_b,
            w_heads, b_heads, out_ref]
    Consumption order matches pack_kernel_params() exactly.
    Weights are bf16; biases f32; accumulation f32.
    """
    out_ref = refs[-1]
    it = iter(refs[:-1])

    def mm(a, w):
        # bf16 operands on the MXU, f32 accumulate.
        return jnp.dot(a.astype(jnp.bfloat16), w,
                       preferred_element_type=jnp.float32)

    def layer(h, relu=True):
        w = next(it)[...]
        b = next(it)[...]
        y = mm(h, w) + b                      # f32 accumulator + f32 bias
        return jnp.maximum(y, 0.0) if relu else y

    xyz = x_ref[...]                          # (tile, 42) bf16

    # ---- encode trunk (8 layers, concat-free skip at layer SKIP) ----
    h = layer(xyz)                            # layer 0
    for i in range(1, NUM_LAYERS):
        if i == SKIP:
            wx = next(it)[...]                # (42, 256)  bf16
            wh = next(it)[...]                # (256, 256) bf16
            b = next(it)[...]                 # (1, 256)   f32
            h = jnp.maximum(mm(xyz, wx) + mm(h, wh) + b, 0.0)
        else:
            h = layer(h)

    # ---- fused depth/coeff branches ----
    # fc_d_feat | fc_feat packed side by side -> [feat_depth | feat], no relu.
    dc = layer(h, relu=False)                 # (tile, 512)
    # 4 block-diagonal layers: depth_w[i] top-left, coeff_w[i] bottom-right.
    for _ in range(4):
        dc = layer(dc)                        # (tile, 256) after the first

    # ---- packed heads: [depth | diff(3) | spec | pad(3)] in one matmul ----
    w_heads = next(it)[...]                   # (256, 8) bf16
    b_heads = next(it)[...]                   # (1, 8)   f32
    out_ref[...] = jnp.abs(mm(dc, w_heads) + b_heads)   # single packed store


# ----------------------------- parameter handling ---------------------------
def init_params(key):
    """Logical (unpadded, f32) parameters, mirroring the PyTorch module layout."""

    def linear(k, fan_in, fan_out):
        k1, k2 = jax.random.split(k)
        bound = 1.0 / math.sqrt(fan_in)
        w = jax.random.uniform(k1, (fan_in, fan_out), jnp.float32, -bound, bound)
        b = jax.random.uniform(k2, (1, fan_out), jnp.float32, -bound, bound)
        return w, b

    keys = iter(jax.random.split(key, 64))
    p = {'enc_w': [], 'enc_b': [], 'depth_w': [], 'depth_b': [],
         'coeff_w': [], 'coeff_b': []}

    w, b = linear(next(keys), DIM_UV, HIDDEN)
    p['enc_w'].append(w); p['enc_b'].append(b)
    for i in range(1, NUM_LAYERS):
        fan_in = DIM_UV + HIDDEN if i == SKIP else HIDDEN
        w, b = linear(next(keys), fan_in, HIDDEN)
        p['enc_w'].append(w); p['enc_b'].append(b)

    p['d_feat_w'], p['d_feat_b'] = linear(next(keys), HIDDEN, HIDDEN)
    w, b = linear(next(keys), HIDDEN, HALF)
    p['depth_w'].append(w); p['depth_b'].append(b)
    for _ in range(3):
        w, b = linear(next(keys), HALF, HALF)
        p['depth_w'].append(w); p['depth_b'].append(b)
    p['z_w'], p['z_b'] = linear(next(keys), HALF, 1)

    p['feat_w'], p['feat_b'] = linear(next(keys), HIDDEN, HIDDEN)
    w, b = linear(next(keys), HIDDEN, HALF)
    p['coeff_w'].append(w); p['coeff_b'].append(b)
    for _ in range(3):
        w, b = linear(next(keys), HALF, HALF)
        p['coeff_w'].append(w); p['coeff_b'].append(b)
    p['spec_w'], p['spec_b'] = linear(next(keys), HALF, OUTPUT_CH)
    p['diff_w'], p['diff_b'] = linear(next(keys), HALF, 3)
    return p


def pack_kernel_params(p):
    """Flat parameter list (bf16 weights, f32 biases) in kernel consumption order."""
    bf = lambda w: w.astype(jnp.bfloat16)
    f32 = lambda b: b.astype(jnp.float32)
    flat = []

    # trunk
    flat += [bf(p['enc_w'][0]), f32(p['enc_b'][0])]
    for i in range(1, NUM_LAYERS):
        if i == SKIP:
            w = p['enc_w'][i]                             # (42 + 256, 256)
            flat += [bf(w[:DIM_UV]), bf(w[DIM_UV:]), f32(p['enc_b'][i])]
        else:
            flat += [bf(p['enc_w'][i]), f32(p['enc_b'][i])]

    # fused feature layer: [fc_d_feat | fc_feat]  (256, 512), no relu
    w_feat = jnp.concatenate([p['d_feat_w'], p['feat_w']], axis=1)
    b_feat = jnp.concatenate([p['d_feat_b'], p['feat_b']], axis=1)
    flat += [bf(w_feat), f32(b_feat)]

    # fused branch layer 0: (512, 256) block-diagonal
    w0 = jnp.zeros((2 * HIDDEN, 2 * HALF), jnp.float32)
    w0 = w0.at[:HIDDEN, :HALF].set(p['depth_w'][0])
    w0 = w0.at[HIDDEN:, HALF:].set(p['coeff_w'][0])
    b0 = jnp.concatenate([p['depth_b'][0], p['coeff_b'][0]], axis=1)
    flat += [bf(w0), f32(b0)]

    # fused branch layers 1..3: (256, 256) block-diagonal
    for i in range(1, 4):
        w = jnp.zeros((2 * HALF, 2 * HALF), jnp.float32)
        w = w.at[:HALF, :HALF].set(p['depth_w'][i])
        w = w.at[HALF:, HALF:].set(p['coeff_w'][i])
        b = jnp.concatenate([p['depth_b'][i], p['coeff_b'][i]], axis=1)
        flat += [bf(w), f32(b)]

    # packed heads: rows [0:HALF] act on depth features, [HALF:] on coeff feats
    w_heads = jnp.zeros((2 * HALF, HEAD_W), jnp.float32)
    w_heads = w_heads.at[:HALF, 0:1].set(p['z_w'])
    w_heads = w_heads.at[HALF:, 1:4].set(p['diff_w'])
    w_heads = w_heads.at[HALF:, 4:4 + OUTPUT_CH].set(p['spec_w'])
    b_heads = jnp.zeros((1, HEAD_W), jnp.float32)
    b_heads = b_heads.at[:, 0:1].set(p['z_b'])
    b_heads = b_heads.at[:, 1:4].set(p['diff_b'])
    b_heads = b_heads.at[:, 4:4 + OUTPUT_CH].set(p['spec_b'])
    flat += [bf(w_heads), f32(b_heads)]
    return flat


# ----------------------------- pallas wrapper --------------------------------
def _pick_tile(n):
    # Big tiles amortize per-step overhead & weight pushes, but keep >= 2 grid
    # steps whenever possible so v7x can shard the 'parallel' axis over 2 TCs.
    for t in (512, 256, 128):
        if n >= 2 * t:
            return t
    return 128


def spinlight_forward(x_uv, flat_params):
    n = x_uv.shape[0]

    # External encode_fn: tiny elementwise op -> plain jnp (XLA fuses it).
    x_enc = positional_encoding(x_uv)                     # (n, 42) f32

    tile = _pick_tile(n)
    n_pad = -(-n // tile) * tile
    if n_pad != n:
        x_enc = jnp.pad(x_enc, ((0, n_pad - n), (0, 0)))
    x_bf16 = x_enc.astype(jnp.bfloat16)                   # lane-tight bf16 input

    in_specs = [pl.BlockSpec((tile, DIM_UV), lambda i: (i, 0))]
    # Constant index_maps: weights stay VMEM-resident across grid steps.
    in_specs += [pl.BlockSpec(w.shape, lambda i: (0, 0)) for w in flat_params]
    out_spec = pl.BlockSpec((tile, HEAD_W), lambda i: (i, 0))

    out = pl.pallas_call(
        _spinlight_kernel,
        out_shape=jax.ShapeDtypeStruct((n_pad, HEAD_W), jnp.float32),
        grid_spec=pltpu.PrefetchScalarGridSpec(
            num_scalar_prefetch=0,
            grid=(n_pad // tile,),
            in_specs=in_specs,
            out_specs=out_spec,
        ),
        compiler_params=pltpu.CompilerParams(
            dimension_semantics=("parallel",),            # batch tiles independent
        ),
    )(x_bf16, *flat_params)

    out = out[:n]
    return {
        'diff': out[:, 1:4],
        'spec_coeff': out[:, 4:4 + OUTPUT_CH],
        'depth': out[:, 0:1],
    }


# ----------------------------- references (plain JAX) ------------------------
def reference_forward_f32(x_uv, p):
    mm = lambda a, b: jnp.dot(a, b, precision=jax.lax.Precision.HIGHEST)
    x = positional_encoding(x_uv)
    xyz = x[..., :DIM_UV]
    h = xyz
    for i in range(NUM_LAYERS):
        if i == SKIP:
            h = mm(jnp.concatenate([xyz, h], -1), p['enc_w'][i]) + p['enc_b'][i]
        else:
            h = mm(h, p['enc_w'][i]) + p['enc_b'][i]
        h = jax.nn.relu(h)
    d = mm(h, p['d_feat_w']) + p['d_feat_b']
    for i in range(4):
        d = jax.nn.relu(mm(d, p['depth_w'][i]) + p['depth_b'][i])
    depth = jnp.abs(mm(d, p['z_w']) + p['z_b'])
    c = mm(h, p['feat_w']) + p['feat_b']
    for i in range(4):
        c = jax.nn.relu(mm(c, p['coeff_w'][i]) + p['coeff_b'][i])
    diff = jnp.abs(mm(c, p['diff_w']) + p['diff_b'])
    spec = jnp.abs(mm(c, p['spec_w']) + p['spec_b'])
    return {'diff': diff, 'spec_coeff': spec, 'depth': depth}


def reference_forward_bf16(x_uv, p):
    """Same layer structure, emulating the kernel's bf16-in / f32-accum dots."""
    def mm(a, b):
        return jnp.dot(a.astype(jnp.bfloat16), b.astype(jnp.bfloat16),
                       preferred_element_type=jnp.float32)
    x = positional_encoding(x_uv)
    xyz = x[..., :DIM_UV]
    h = xyz
    for i in range(NUM_LAYERS):
        if i == SKIP:
            h = mm(jnp.concatenate([xyz, h], -1), p['enc_w'][i]) + p['enc_b'][i]
        else:
            h = mm(h, p['enc_w'][i]) + p['enc_b'][i]
        h = jax.nn.relu(h)
    d = mm(h, p['d_feat_w']) + p['d_feat_b']
    for i in range(4):
        d = jax.nn.relu(mm(d, p['depth_w'][i]) + p['depth_b'][i])
    depth = jnp.abs(mm(d, p['z_w']) + p['z_b'])
    c = mm(h, p['feat_w']) + p['feat_b']
    for i in range(4):
        c = jax.nn.relu(mm(c, p['coeff_w'][i]) + p['coeff_b'][i])
    diff = jnp.abs(mm(c, p['diff_w']) + p['diff_b'])
    spec = jnp.abs(mm(c, p['spec_w']) + p['spec_b'])
    return {'diff': diff, 'spec_coeff': spec, 'depth': depth}


# ----------------------------- module-style wrapper ---------------------------
class SpinLightMLP:
    def __init__(self, key):
        self.params = init_params(key)
        self.flat_params = pack_kernel_params(self.params)
        self._fwd = jax.jit(spinlight_forward)

    def forward(self, x_uv):
        return self._fwd(x_uv, self.flat_params)


# ----------------------------- main -------------------------------------------
if __name__ == "__main__":
    key = jax.random.PRNGKey(0)
    k_param, k_input = jax.random.split(key)

    model = SpinLightMLP(k_param)

    N = 512  # small batch of uv points; tile=256 -> grid=(2,) so both v7x TCs get work
    x_uv = jax.random.uniform(k_input, (N, IN_DIM), jnp.float32, -1.0, 1.0)

    out = jax.block_until_ready(model.forward(x_uv))

    ref16 = reference_forward_bf16(x_uv, model.params)   # matches kernel numerics
    ref32 = reference_forward_f32(x_uv, model.params)    # full-precision semantics

    assert out['depth'].shape == (N, 1)
    assert out['diff'].shape == (N, 3)
    assert out['spec_coeff'].shape == (N, OUTPUT_CH)

    for name in ('depth', 'diff', 'spec_coeff'):
        assert jnp.allclose(out[name], ref16[name], atol=1e-3, rtol=1e-3), (
            f"mismatch vs bf16 reference in {name}: max abs err "
            f"{float(jnp.max(jnp.abs(out[name] - ref16[name])))}")
        assert jnp.allclose(out[name], ref32[name], atol=3e-2, rtol=3e-2), (
            f"mismatch vs f32 reference in {name}: max abs err "
            f"{float(jnp.max(jnp.abs(out[name] - ref32[name])))}")

    print("KERNEL_OK")
</pallas_src>

<mosaic_0001>
module attributes {stable_mosaic.version = 11 : i64} {
  func.func @_spinlight_kernel(%arg0: i32, %arg1: memref<256x42xbf16, #tpu.memory_space<vmem>>, %arg2: memref<42x256xbf16, #tpu.memory_space<vmem>>, %arg3: memref<1x256xf32, #tpu.memory_space<vmem>>, %arg4: memref<256x256xbf16, #tpu.memory_space<vmem>>, %arg5: memref<1x256xf32, #tpu.memory_space<vmem>>, %arg6: memref<256x256xbf16, #tpu.memory_space<vmem>>, %arg7: memref<1x256xf32, #tpu.memory_space<vmem>>, %arg8: memref<256x256xbf16, #tpu.memory_space<vmem>>, %arg9: memref<1x256xf32, #tpu.memory_space<vmem>>, %arg10: memref<42x256xbf16, #tpu.memory_space<vmem>>, %arg11: memref<256x256xbf16, #tpu.memory_space<vmem>>, %arg12: memref<1x256xf32, #tpu.memory_space<vmem>>, %arg13: memref<256x256xbf16, #tpu.memory_space<vmem>>, %arg14: memref<1x256xf32, #tpu.memory_space<vmem>>, %arg15: memref<256x256xbf16, #tpu.memory_space<vmem>>, %arg16: memref<1x256xf32, #tpu.memory_space<vmem>>, %arg17: memref<256x256xbf16, #tpu.memory_space<vmem>>, %arg18: memref<1x256xf32, #tpu.memory_space<vmem>>, %arg19: memref<256x512xbf16, #tpu.memory_space<vmem>>, %arg20: memref<1x512xf32, #tpu.memory_space<vmem>>, %arg21: memref<512x256xbf16, #tpu.memory_space<vmem>>, %arg22: memref<1x256xf32, #tpu.memory_space<vmem>>, %arg23: memref<256x256xbf16, #tpu.memory_space<vmem>>, %arg24: memref<1x256xf32, #tpu.memory_space<vmem>>, %arg25: memref<256x256xbf16, #tpu.memory_space<vmem>>, %arg26: memref<1x256xf32, #tpu.memory_space<vmem>>, %arg27: memref<256x256xbf16, #tpu.memory_space<vmem>>, %arg28: memref<1x256xf32, #tpu.memory_space<vmem>>, %arg29: memref<256x8xbf16, #tpu.memory_space<vmem>>, %arg30: memref<1x8xf32, #tpu.memory_space<vmem>>, %arg31: memref<256x8xf32, #tpu.memory_space<vmem>>) attributes {dimension_semantics = [#tpu.dimension_semantics<parallel>], iteration_bounds = array<i64: 2>, scalar_prefetch = 0 : i64, scratch_operands = 0 : i64, tpu.core_type = #tpu.core_type<tc>, window_params = [{transform_indices = @transform_0, window_bounds = array<i64: 256, 42>}, {pipeline_mode = #tpu.pipeline_mode<synchronous>, transform_indices = @transform_1, window_bounds = array<i64: 42, 256>}, {pipeline_mode = #tpu.pipeline_mode<synchronous>, transform_indices = @transform_2, window_bounds = array<i64: 1, 256>}, {pipeline_mode = #tpu.pipeline_mode<synchronous>, transform_indices = @transform_3, window_bounds = array<i64: 256, 256>}, {pipeline_mode = #tpu.pipeline_mode<synchronous>, transform_indices = @transform_4, window_bounds = array<i64: 1, 256>}, {pipeline_mode = #tpu.pipeline_mode<synchronous>, transform_indices = @transform_5, window_bounds = array<i64: 256, 256>}, {pipeline_mode = #tpu.pipeline_mode<synchronous>, transform_indices = @transform_6, window_bounds = array<i64: 1, 256>}, {pipeline_mode = #tpu.pipeline_mode<synchronous>, transform_indices = @transform_7, window_bounds = array<i64: 256, 256>}, {pipeline_mode = #tpu.pipeline_mode<synchronous>, transform_indices = @transform_8, window_bounds = array<i64: 1, 256>}, {pipeline_mode = #tpu.pipeline_mode<synchronous>, transform_indices = @transform_9, window_bounds = array<i64: 42, 256>}, {pipeline_mode = #tpu.pipeline_mode<synchronous>, transform_indices = @transform_10, window_bounds = array<i64: 256, 256>}, {pipeline_mode = #tpu.pipeline_mode<synchronous>, transform_indices = @transform_11, window_bounds = array<i64: 1, 256>}, {pipeline_mode = #tpu.pipeline_mode<synchronous>, transform_indices = @transform_12, window_bounds = array<i64: 256, 256>}, {pipeline_mode = #tpu.pipeline_mode<synchronous>, transform_indices = @transform_13, window_bounds = array<i64: 1, 256>}, {pipeline_mode = #tpu.pipeline_mode<synchronous>, transform_indices = @transform_14, window_bounds = array<i64: 256, 256>}, {pipeline_mode = #tpu.pipeline_mode<synchronous>, transform_indices = @transform_15, window_bounds = array<i64: 1, 256>}, {pipeline_mode = #tpu.pipeline_mode<synchronous>, transform_indices = @transform_16, window_bounds = array<i64: 256, 256>}, {pipeline_mode = #tpu.pipeline_mode<synchronous>, transform_indices = @transform_17, window_bounds = array<i64: 1, 256>}, {pipeline_mode = #tpu.pipeline_mode<synchronous>, transform_indices = @transform_18, window_bounds = array<i64: 256, 512>}, {pipeline_mode = #tpu.pipeline_mode<synchronous>, transform_indices = @transform_19, window_bounds = array<i64: 1, 512>}, {pipeline_mode = #tpu.pipeline_mode<synchronous>, transform_indices = @transform_20, window_bounds = array<i64: 512, 256>}, {pipeline_mode = #tpu.pipeline_mode<synchronous>, transform_indices = @transform_21, window_bounds = array<i64: 1, 256>}, {pipeline_mode = #tpu.pipeline_mode<synchronous>, transform_indices = @transform_22, window_bounds = array<i64: 256, 256>}, {pipeline_mode = #tpu.pipeline_mode<synchronous>, transform_indices = @transform_23, window_bounds = array<i64: 1, 256>}, {pipeline_mode = #tpu.pipeline_mode<synchronous>, transform_indices = @transform_24, window_bounds = array<i64: 256, 256>}, {pipeline_mode = #tpu.pipeline_mode<synchronous>, transform_indices = @transform_25, window_bounds = array<i64: 1, 256>}, {pipeline_mode = #tpu.pipeline_mode<synchronous>, transform_indices = @transform_26, window_bounds = array<i64: 256, 256>}, {pipeline_mode = #tpu.pipeline_mode<synchronous>, transform_indices = @transform_27, window_bounds = array<i64: 1, 256>}, {pipeline_mode = #tpu.pipeline_mode<synchronous>, transform_indices = @transform_28, window_bounds = array<i64: 256, 8>}, {pipeline_mode = #tpu.pipeline_mode<synchronous>, transform_indices = @transform_29, window_bounds = array<i64: 1, 8>}, {transform_indices = @transform_30, window_bounds = array<i64: 256, 8>}]} {
    %c0 = arith.constant 0 : index
    %c0_0 = arith.constant 0 : index
    %0 = vector.load %arg1[%c0, %c0_0] : memref<256x42xbf16, #tpu.memory_space<vmem>>, vector<256x42xbf16>
    %c0_1 = arith.constant 0 : index
    %c0_2 = arith.constant 0 : index
    %1 = vector.load %arg2[%c0_1, %c0_2] : memref<42x256xbf16, #tpu.memory_space<vmem>>, vector<42x256xbf16>
    %c0_3 = arith.constant 0 : index
    %c0_4 = arith.constant 0 : index
    %2 = vector.load %arg3[%c0_3, %c0_4] : memref<1x256xf32, #tpu.memory_space<vmem>>, vector<1x256xf32>
    %cst = arith.constant dense<0.000000e+00> : vector<256x256xf32>
    %3 = tpu.matmul %0, %1, %cst {dimension_numbers = #tpu.dot_dimension_numbers<[1], [0], [0], [1], [0, 0, 1, 1], [], []>} : vector<256x42xbf16>, vector<42x256xbf16>, vector<256x256xf32> -> vector<256x256xf32>
    %4 = vector.broadcast %2 : vector<1x256xf32> to vector<256x256xf32>
    %5 = arith.addf %3, %4 : vector<256x256xf32>
    %cst_5 = arith.constant 0.000000e+00 : f32
    %6 = vector.broadcast %cst_5 : f32 to vector<256x256xf32>
    %7 = arith.maximumf %5, %6 : vector<256x256xf32>
    %c0_6 = arith.constant 0 : index
    %c0_7 = arith.constant 0 : index
    %8 = vector.load %arg4[%c0_6, %c0_7] : memref<256x256xbf16, #tpu.memory_space<vmem>>, vector<256x256xbf16>
    %c0_8 = arith.constant 0 : index
    %c0_9 = arith.constant 0 : index
    %9 = vector.load %arg5[%c0_8, %c0_9] : memref<1x256xf32, #tpu.memory_space<vmem>>, vector<1x256xf32>
    %10 = arith.truncf %7 : vector<256x256xf32> to vector<256x256xbf16>
    %cst_10 = arith.constant dense<0.000000e+00> : vector<256x256xf32>
    %11 = tpu.matmul %10, %8, %cst_10 {dimension_numbers = #tpu.dot_dimension_numbers<[1], [0], [0], [1], [0, 0, 1, 1], [], []>} : vector<256x256xbf16>, vector<256x256xbf16>, vector<256x256xf32> -> vector<256x256xf32>
    %12 = vector.broadcast %9 : vector<1x256xf32> to vector<256x256xf32>
    %13 = arith.addf %11, %12 : vector<256x256xf32>
    %cst_11 = arith.constant 0.000000e+00 : f32
    %14 = vector.broadcast %cst_11 : f32 to vector<256x256xf32>
    %15 = arith.maximumf %13, %14 : vector<256x256xf32>
    %c0_12 = arith.constant 0 : index
    %c0_13 = arith.constant 0 : index
    %16 = vector.load %arg6[%c0_12, %c0_13] : memref<256x256xbf16, #tpu.memory_space<vmem>>, vector<256x256xbf16>
    %c0_14 = arith.constant 0 : index
    %c0_15 = arith.constant 0 : index
    %17 = vector.load %arg7[%c0_14, %c0_15] : memref<1x256xf32, #tpu.memory_space<vmem>>, vector<1x256xf32>
    %18 = arith.truncf %15 : vector<256x256xf32> to vector<256x256xbf16>
    %cst_16 = arith.constant dense<0.000000e+00> : vector<256x256xf32>
    %19 = tpu.matmul %18, %16, %cst_16 {dimension_numbers = #tpu.dot_dimension_numbers<[1], [0], [0], [1], [0, 0, 1, 1], [], []>} : vector<256x256xbf16>, vector<256x256xbf16>, vector<256x256xf32> -> vector<256x256xf32>
    %20 = vector.broadcast %17 : vector<1x256xf32> to vector<256x256xf32>
    %21 = arith.addf %19, %20 : vector<256x256xf32>
    %cst_17 = arith.constant 0.000000e+00 : f32
    %22 = vector.broadcast %cst_17 : f32 to vector<256x256xf32>
    %23 = arith.maximumf %21, %22 : vector<256x256xf32>
    %c0_18 = arith.constant 0 : index
    %c0_19 = arith.constant 0 : index
    %24 = vector.load %arg8[%c0_18, %c0_19] : memref<256x256xbf16, #tpu.memory_space<vmem>>, vector<256x256xbf16>
    %c0_20 = arith.constant 0 : index
    %c0_21 = arith.constant 0 : index
    %25 = vector.load %arg9[%c0_20, %c0_21] : memref<1x256xf32, #tpu.memory_space<vmem>>, vector<1x256xf32>
    %26 = arith.truncf %23 : vector<256x256xf32> to vector<256x256xbf16>
    %cst_22 = arith.constant dense<0.000000e+00> : vector<256x256xf32>
    %27 = tpu.matmul %26, %24, %cst_22 {dimension_numbers = #tpu.dot_dimension_numbers<[1], [0], [0], [1], [0, 0, 1, 1], [], []>} : vector<256x256xbf16>, vector<256x256xbf16>, vector<256x256xf32> -> vector<256x256xf32>
    %28 = vector.broadcast %25 : vector<1x256xf32> to vector<256x256xf32>
    %29 = arith.addf %27, %28 : vector<256x256xf32>
    %cst_23 = arith.constant 0.000000e+00 : f32
    %30 = vector.broadcast %cst_23 : f32 to vector<256x256xf32>
    %31 = arith.maximumf %29, %30 : vector<256x256xf32>
    %c0_24 = arith.constant 0 : index
    %c0_25 = arith.constant 0 : index
    %32 = vector.load %arg10[%c0_24, %c0_25] : memref<42x256xbf16, #tpu.memory_space<vmem>>, vector<42x256xbf16>
    %c0_26 = arith.constant 0 : index
    %c0_27 = arith.constant 0 : index
    %33 = vector.load %arg11[%c0_26, %c0_27] : memref<256x256xbf16, #tpu.memory_space<vmem>>, vector<256x256xbf16>
    %c0_28 = arith.constant 0 : index
    %c0_29 = arith.constant 0 : index
    %34 = vector.load %arg12[%c0_28, %c0_29] : memref<1x256xf32, #tpu.memory_space<vmem>>, vector<1x256xf32>
    %cst_30 = arith.constant dense<0.000000e+00> : vector<256x256xf32>
    %35 = tpu.matmul %0, %32, %cst_30 {dimension_numbers = #tpu.dot_dimension_numbers<[1], [0], [0], [1], [0, 0, 1, 1], [], []>} : vector<256x42xbf16>, vector<42x256xbf16>, vector<256x256xf32> -> vector<256x256xf32>
    %36 = arith.truncf %31 : vector<256x256xf32> to vector<256x256xbf16>
    %cst_31 = arith.constant dense<0.000000e+00> : vector<256x256xf32>
    %37 = tpu.matmul %36, %33, %cst_31 {dimension_numbers = #tpu.dot_dimension_numbers<[1], [0], [0], [1], [0, 0, 1, 1], [], []>} : vector<256x256xbf16>, vector<256x256xbf16>, vector<256x256xf32> -> vector<256x256xf32>
    %38 = arith.addf %35, %37 : vector<256x256xf32>
    %39 = vector.broadcast %34 : vector<1x256xf32> to vector<256x256xf32>
    %40 = arith.addf %38, %39 : vector<256x256xf32>
    %cst_32 = arith.constant 0.000000e+00 : f32
    %41 = vector.broadcast %cst_32 : f32 to vector<256x256xf32>
    %42 = arith.maximumf %40, %41 : vector<256x256xf32>
    %c0_33 = arith.constant 0 : index
    %c0_34 = arith.constant 0 : index
    %43 = vector.load %arg13[%c0_33, %c0_34] : memref<256x256xbf16, #tpu.memory_space<vmem>>, vector<256x256xbf16>
    %c0_35 = arith.constant 0 : index
    %c0_36 = arith.constant 0 : index
    %44 = vector.load %arg14[%c0_35, %c0_36] : memref<1x256xf32, #tpu.memory_space<vmem>>, vector<1x256xf32>
    %45 = arith.truncf %42 : vector<256x256xf32> to vector<256x256xbf16>
    %cst_37 = arith.constant dense<0.000000e+00> : vector<256x256xf32>
    %46 = tpu.matmul %45, %43, %cst_37 {dimension_numbers = #tpu.dot_dimension_numbers<[1], [0], [0], [1], [0, 0, 1, 1], [], []>} : vector<256x256xbf16>, vector<256x256xbf16>, vector<256x256xf32> -> vector<256x256xf32>
    %47 = vector.broadcast %44 : vector<1x256xf32> to vector<256x256xf32>
    %48 = arith.addf %46, %47 : vector<256x256xf32>
    %cst_38 = arith.constant 0.000000e+00 : f32
    %49 = vector.broadcast %cst_38 : f32 to vector<256x256xf32>
    %50 = arith.maximumf %48, %49 : vector<256x256xf32>
    %c0_39 = arith.constant 0 : index
    %c0_40 = arith.constant 0 : index
    %51 = vector.load %arg15[%c0_39, %c0_40] : memref<256x256xbf16, #tpu.memory_space<vmem>>, vector<256x256xbf16>
    %c0_41 = arith.constant 0 : index
    %c0_42 = arith.constant 0 : index
    %52 = vector.load %arg16[%c0_41, %c0_42] : memref<1x256xf32, #tpu.memory_space<vmem>>, vector<1x256xf32>
    %53 = arith.truncf %50 : vector<256x256xf32> to vector<256x256xbf16>
    %cst_43 = arith.constant dense<0.000000e+00> : vector<256x256xf32>
    %54 = tpu.matmul %53, %51, %cst_43 {dimension_numbers = #tpu.dot_dimension_numbers<[1], [0], [0], [1], [0, 0, 1, 1], [], []>} : vector<256x256xbf16>, vector<256x256xbf16>, vector<256x256xf32> -> vector<256x256xf32>
    %55 = vector.broadcast %52 : vector<1x256xf32> to vector<256x256xf32>
    %56 = arith.addf %54, %55 : vector<256x256xf32>
    %cst_44 = arith.constant 0.000000e+00 : f32
    %57 = vector.broadcast %cst_44 : f32 to vector<256x256xf32>
    %58 = arith.maximumf %56, %57 : vector<256x256xf32>
    %c0_45 = arith.constant 0 : index
    %c0_46 = arith.constant 0 : index
    %59 = vector.load %arg17[%c0_45, %c0_46] : memref<256x256xbf16, #tpu.memory_space<vmem>>, vector<256x256xbf16>
    %c0_47 = arith.constant 0 : index
    %c0_48 = arith.constant 0 : index
    %60 = vector.load %arg18[%c0_47, %c0_48] : memref<1x256xf32, #tpu.memory_space<vmem>>, vector<1x256xf32>
    %61 = arith.truncf %58 : vector<256x256xf32> to vector<256x256xbf16>
    %cst_49 = arith.constant dense<0.000000e+00> : vector<256x256xf32>
    %62 = tpu.matmul %61, %59, %cst_49 {dimension_numbers = #tpu.dot_dimension_numbers<[1], [0], [0], [1], [0, 0, 1, 1], [], []>} : vector<256x256xbf16>, vector<256x256xbf16>, vector<256x256xf32> -> vector<256x256xf32>
    %63 = vector.broadcast %60 : vector<1x256xf32> to vector<256x256xf32>
    %64 = arith.addf %62, %63 : vector<256x256xf32>
    %cst_50 = arith.constant 0.000000e+00 : f32
    %65 = vector.broadcast %cst_50 : f32 to vector<256x256xf32>
    %66 = arith.maximumf %64, %65 : vector<256x256xf32>
    %c0_51 = arith.constant 0 : index
    %c0_52 = arith.constant 0 : index
    %67 = vector.load %arg19[%c0_51, %c0_52] : memref<256x512xbf16, #tpu.memory_space<vmem>>, vector<256x512xbf16>
    %c0_53 = arith.constant 0 : index
    %c0_54 = arith.constant 0 : index
    %68 = vector.load %arg20[%c0_53, %c0_54] : memref<1x512xf32, #tpu.memory_space<vmem>>, vector<1x512xf32>
    %69 = arith.truncf %66 : vector<256x256xf32> to vector<256x256xbf16>
    %cst_55 = arith.constant dense<0.000000e+00> : vector<256x512xf32>
    %70 = tpu.matmul %69, %67, %cst_55 {dimension_numbers = #tpu.dot_dimension_numbers<[1], [0], [0], [1], [0, 0, 1, 1], [], []>} : vector<256x256xbf16>, vector<256x512xbf16>, vector<256x512xf32> -> vector<256x512xf32>
    %71 = vector.broadcast %68 : vector<1x512xf32> to vector<256x512xf32>
    %72 = arith.addf %70, %71 : vector<256x512xf32>
    %c0_56 = arith.constant 0 : index
    %c0_57 = arith.constant 0 : index
    %73 = vector.load %arg21[%c0_56, %c0_57] : memref<512x256xbf16, #tpu.memory_space<vmem>>, vector<512x256xbf16>
    %c0_58 = arith.constant 0 : index
    %c0_59 = arith.constant 0 : index
    %74 = vector.load %arg22[%c0_58, %c0_59] : memref<1x256xf32, #tpu.memory_space<vmem>>, vector<1x256xf32>
    %75 = arith.truncf %72 : vector<256x512xf32> to vector<256x512xbf16>
    %cst_60 = arith.constant dense<0.000000e+00> : vector<256x256xf32>
    %76 = tpu.matmul %75, %73, %cst_60 {dimension_numbers = #tpu.dot_dimension_numbers<[1], [0], [0], [1], [0, 0, 1, 1], [], []>} : vector<256x512xbf16>, vector<512x256xbf16>, vector<256x256xf32> -> vector<256x256xf32>
    %77 = vector.broadcast %74 : vector<1x256xf32> to vector<256x256xf32>
    %78 = arith.addf %76, %77 : vector<256x256xf32>
    %cst_61 = arith.constant 0.000000e+00 : f32
    %79 = vector.broadcast %cst_61 : f32 to vector<256x256xf32>
    %80 = arith.maximumf %78, %79 : vector<256x256xf32>
    %c0_62 = arith.constant 0 : index
    %c0_63 = arith.constant 0 : index
    %81 = vector.load %arg23[%c0_62, %c0_63] : memref<256x256xbf16, #tpu.memory_space<vmem>>, vector<256x256xbf16>
    %c0_64 = arith.constant 0 : index
    %c0_65 = arith.constant 0 : index
    %82 = vector.load %arg24[%c0_64, %c0_65] : memref<1x256xf32, #tpu.memory_space<vmem>>, vector<1x256xf32>
    %83 = arith.truncf %80 : vector<256x256xf32> to vector<256x256xbf16>
    %cst_66 = arith.constant dense<0.000000e+00> : vector<256x256xf32>
    %84 = tpu.matmul %83, %81, %cst_66 {dimension_numbers = #tpu.dot_dimension_numbers<[1], [0], [0], [1], [0, 0, 1, 1], [], []>} : vector<256x256xbf16>, vector<256x256xbf16>, vector<256x256xf32> -> vector<256x256xf32>
    %85 = vector.broadcast %82 : vector<1x256xf32> to vector<256x256xf32>
    %86 = arith.addf %84, %85 : vector<256x256xf32>
    %cst_67 = arith.constant 0.000000e+00 : f32
    %87 = vector.broadcast %cst_67 : f32 to vector<256x256xf32>
    %88 = arith.maximumf %86, %87 : vector<256x256xf32>
    %c0_68 = arith.constant 0 : index
    %c0_69 = arith.constant 0 : index
    %89 = vector.load %arg25[%c0_68, %c0_69] : memref<256x256xbf16, #tpu.memory_space<vmem>>, vector<256x256xbf16>
    %c0_70 = arith.constant 0 : index
    %c0_71 = arith.constant 0 : index
    %90 = vector.load %arg26[%c0_70, %c0_71] : memref<1x256xf32, #tpu.memory_space<vmem>>, vector<1x256xf32>
    %91 = arith.truncf %88 : vector<256x256xf32> to vector<256x256xbf16>
    %cst_72 = arith.constant dense<0.000000e+00> : vector<256x256xf32>
    %92 = tpu.matmul %91, %89, %cst_72 {dimension_numbers = #tpu.dot_dimension_numbers<[1], [0], [0], [1], [0, 0, 1, 1], [], []>} : vector<256x256xbf16>, vector<256x256xbf16>, vector<256x256xf32> -> vector<256x256xf32>
    %93 = vector.broadcast %90 : vector<1x256xf32> to vector<256x256xf32>
    %94 = arith.addf %92, %93 : vector<256x256xf32>
    %cst_73 = arith.constant 0.000000e+00 : f32
    %95 = vector.broadcast %cst_73 : f32 to vector<256x256xf32>
    %96 = arith.maximumf %94, %95 : vector<256x256xf32>
    %c0_74 = arith.constant 0 : index
    %c0_75 = arith.constant 0 : index
    %97 = vector.load %arg27[%c0_74, %c0_75] : memref<256x256xbf16, #tpu.memory_space<vmem>>, vector<256x256xbf16>
    %c0_76 = arith.constant 0 : index
    %c0_77 = arith.constant 0 : index
    %98 = vector.load %arg28[%c0_76, %c0_77] : memref<1x256xf32, #tpu.memory_space<vmem>>, vector<1x256xf32>
    %99 = arith.truncf %96 : vector<256x256xf32> to vector<256x256xbf16>
    %cst_78 = arith.constant dense<0.000000e+00> : vector<256x256xf32>
    %100 = tpu.matmul %99, %97, %cst_78 {dimension_numbers = #tpu.dot_dimension_numbers<[1], [0], [0], [1], [0, 0, 1, 1], [], []>} : vector<256x256xbf16>, vector<256x256xbf16>, vector<256x256xf32> -> vector<256x256xf32>
    %101 = vector.broadcast %98 : vector<1x256xf32> to vector<256x256xf32>
    %102 = arith.addf %100, %101 : vector<256x256xf32>
    %cst_79 = arith.constant 0.000000e+00 : f32
    %103 = vector.broadcast %cst_79 : f32 to vector<256x256xf32>
    %104 = arith.maximumf %102, %103 : vector<256x256xf32>
    %c0_80 = arith.constant 0 : index
    %c0_81 = arith.constant 0 : index
    %105 = vector.load %arg29[%c0_80, %c0_81] : memref<256x8xbf16, #tpu.memory_space<vmem>>, vector<256x8xbf16>
    %c0_82 = arith.constant 0 : index
    %c0_83 = arith.constant 0 : index
    %106 = vector.load %arg30[%c0_82, %c0_83] : memref<1x8xf32, #tpu.memory_space<vmem>>, vector<1x8xf32>
    %107 = arith.truncf %104 : vector<256x256xf32> to vector<256x256xbf16>
    %cst_84 = arith.constant dense<0.000000e+00> : vector<256x8xf32>
    %108 = tpu.matmul %107, %105, %cst_84 {dimension_numbers = #tpu.dot_dimension_numbers<[1], [0], [0], [1], [0, 0, 1, 1], [], []>} : vector<256x256xbf16>, vector<256x8xbf16>, vector<256x8xf32> -> vector<256x8xf32>
    %109 = vector.broadcast %106 : vector<1x8xf32> to vector<256x8xf32>
    %110 = arith.addf %108, %109 : vector<256x8xf32>
    %111 = math.absf %110 : vector<256x8xf32>
    %c0_85 = arith.constant 0 : index
    %c0_86 = arith.constant 0 : index
    %112 = vector.load %arg31[%c0_85, %c0_86] : memref<256x8xf32, #tpu.memory_space<vmem>>, vector<256x8xf32>
    tpu.vector_store %arg31[%c0_85, %c0_86], %111 {strides = array<i32>} : memref<256x8xf32, #tpu.memory_space<vmem>>, vector<256x8xf32>,
    return
  }
  func.func @transform_0(%arg0: i32) -> (i32, i32) {
    %c0_i32 = arith.constant 0 : i32
    %c0_i32_0 = arith.constant 0 : i32
    return %arg0, %c0_i32 : i32, i32
  }
  func.func @transform_1(%arg0: i32) -> (i32, i32) {
    %c0_i32 = arith.constant 0 : i32
    %c0_i32_0 = arith.constant 0 : i32
    %c0_i32_1 = arith.constant 0 : i32
    return %c0_i32, %c0_i32_0 : i32, i32
  }
  func.func @transform_2(%arg0: i32) -> (i32, i32) {
    %c0_i32 = arith.constant 0 : i32
    %c0_i32_0 = arith.constant 0 : i32
    %c0_i32_1 = arith.constant 0 : i32
    return %c0_i32, %c0_i32_0 : i32, i32
  }
  func.func @transform_3(%arg0: i32) -> (i32, i32) {
    %c0_i32 = arith.constant 0 : i32
    %c0_i32_0 = arith.constant 0 : i32
    %c0_i32_1 = arith.constant 0 : i32
    return %c0_i32, %c0_i32_0 : i32, i32
  }
  func.func @transform_4(%arg0: i32) -> (i32, i32) {
    %c0_i32 = arith.constant 0 : i32
    %c0_i32_0 = arith.constant 0 : i32
    %c0_i32_1 = arith.constant 0 : i32
    return %c0_i32, %c0_i32_0 : i32, i32
  }
  func.func @transform_5(%arg0: i32) -> (i32, i32) {
    %c0_i32 = arith.constant 0 : i32
    %c0_i32_0 = arith.constant 0 : i32
    %c0_i32_1 = arith.constant 0 : i32
    return %c0_i32, %c0_i32_0 : i32, i32
  }
  func.func @transform_6(%arg0: i32) -> (i32, i32) {
    %c0_i32 = arith.constant 0 : i32
    %c0_i32_0 = arith.constant 0 : i32
    %c0_i32_1 = arith.constant 0 : i32
    return %c0_i32, %c0_i32_0 : i32, i32
  }
  func.func @transform_7(%arg0: i32) -> (i32, i32) {
    %c0_i32 = arith.constant 0 : i32
    %c0_i32_0 = arith.constant 0 : i32
    %c0_i32_1 = arith.constant 0 : i32
    return %c0_i32, %c0_i32_0 : i32, i32
  }
  func.func @transform_8(%arg0: i32) -> (i32, i32) {
    %c0_i32 = arith.constant 0 : i32
    %c0_i32_0 = arith.constant 0 : i32
    %c0_i32_1 = arith.constant 0 : i32
    return %c0_i32, %c0_i32_0 : i32, i32
  }
  func.func @transform_9(%arg0: i32) -> (i32, i32) {
    %c0_i32 = arith.constant 0 : i32
    %c0_i32_0 = arith.constant 0 : i32
    %c0_i32_1 = arith.constant 0 : i32
    return %c0_i32, %c0_i32_0 : i32, i32
  }
  func.func @transform_10(%arg0: i32) -> (i32, i32) {
    %c0_i32 = arith.constant 0 : i32
    %c0_i32_0 = arith.constant 0 : i32
    %c0_i32_1 = arith.constant 0 : i32
    return %c0_i32, %c0_i32_0 : i32, i32
  }
  func.func @transform_11(%arg0: i32) -> (i32, i32) {
    %c0_i32 = arith.constant 0 : i32
    %c0_i32_0 = arith.constant 0 : i32
    %c0_i32_1 = arith.constant 0 : i32
    return %c0_i32, %c0_i32_0 : i32, i32
  }
  func.func @transform_12(%arg0: i32) -> (i32, i32) {
    %c0_i32 = arith.constant 0 : i32
    %c0_i32_0 = arith.constant 0 : i32
    %c0_i32_1 = arith.constant 0 : i32
    return %c0_i32, %c0_i32_0 : i32, i32
  }
  func.func @transform_13(%arg0: i32) -> (i32, i32) {
    %c0_i32 = arith.constant 0 : i32
    %c0_i32_0 = arith.constant 0 : i32
    %c0_i32_1 = arith.constant 0 : i32
    return %c0_i32, %c0_i32_0 : i32, i32
  }
  func.func @transform_14(%arg0: i32) -> (i32, i32) {
    %c0_i32 = arith.constant 0 : i32
    %c0_i32_0 = arith.constant 0 : i32
    %c0_i32_1 = arith.constant 0 : i32
    return %c0_i32, %c0_i32_0 : i32, i32
  }
  func.func @transform_15(%arg0: i32) -> (i32, i32) {
    %c0_i32 = arith.constant 0 : i32
    %c0_i32_0 = arith.constant 0 : i32
    %c0_i32_1 = arith.constant 0 : i32
    return %c0_i32, %c0_i32_0 : i32, i32
  }
  func.func @transform_16(%arg0: i32) -> (i32, i32) {
    %c0_i32 = arith.constant 0 : i32
    %c0_i32_0 = arith.constant 0 : i32
    %c0_i32_1 = arith.constant 0 : i32
    return %c0_i32, %c0_i32_0 : i32, i32
  }
  func.func @transform_17(%arg0: i32) -> (i32, i32) {
    %c0_i32 = arith.constant 0 : i32
    %c0_i32_0 = arith.constant 0 : i32
    %c0_i32_1 = arith.constant 0 : i32
    return %c0_i32, %c0_i32_0 : i32, i32
  }
  func.func @transform_18(%arg0: i32) -> (i32, i32) {
    %c0_i32 = arith.constant 0 : i32
    %c0_i32_0 = arith.constant 0 : i32
    %c0_i32_1 = arith.constant 0 : i32
    return %c0_i32, %c0_i32_0 : i32, i32
  }
  func.func @transform_19(%arg0: i32) -> (i32, i32) {
    %c0_i32 = arith.constant 0 : i32
    %c0_i32_0 = arith.constant 0 : i32
    %c0_i32_1 = arith.constant 0 : i32
    return %c0_i32, %c0_i32_0 : i32, i32
  }
  func.func @transform_20(%arg0: i32) -> (i32, i32) {
    %c0_i32 = arith.constant 0 : i32
    %c0_i32_0 = arith.constant 0 : i32
    %c0_i32_1 = arith.constant 0 : i32
    return %c0_i32, %c0_i32_0 : i32, i32
  }
  func.func @transform_21(%arg0: i32) -> (i32, i32) {
    %c0_i32 = arith.constant 0 : i32
    %c0_i32_0 = arith.constant 0 : i32
    %c0_i32_1 = arith.constant 0 : i32
    return %c0_i32, %c0_i32_0 : i32, i32
  }
  func.func @transform_22(%arg0: i32) -> (i32, i32) {
    %c0_i32 = arith.constant 0 : i32
    %c0_i32_0 = arith.constant 0 : i32
    %c0_i32_1 = arith.constant 0 : i32
    return %c0_i32, %c0_i32_0 : i32, i32
  }
  func.func @transform_23(%arg0: i32) -> (i32, i32) {
    %c0_i32 = arith.constant 0 : i32
    %c0_i32_0 = arith.constant 0 : i32
    %c0_i32_1 = arith.constant 0 : i32
    return %c0_i32, %c0_i32_0 : i32, i32
  }
  func.func @transform_24(%arg0: i32) -> (i32, i32) {
    %c0_i32 = arith.constant 0 : i32
    %c0_i32_0 = arith.constant 0 : i32
    %c0_i32_1 = arith.constant 0 : i32
    return %c0_i32, %c0_i32_0 : i32, i32
  }
  func.func @transform_25(%arg0: i32) -> (i32, i32) {
    %c0_i32 = arith.constant 0 : i32
    %c0_i32_0 = arith.constant 0 : i32
    %c0_i32_1 = arith.constant 0 : i32
    return %c0_i32, %c0_i32_0 : i32, i32
  }
  func.func @transform_26(%arg0: i32) -> (i32, i32) {
    %c0_i32 = arith.constant 0 : i32
    %c0_i32_0 = arith.constant 0 : i32
    %c0_i32_1 = arith.constant 0 : i32
    return %c0_i32, %c0_i32_0 : i32, i32
  }
  func.func @transform_27(%arg0: i32) -> (i32, i32) {
    %c0_i32 = arith.constant 0 : i32
    %c0_i32_0 = arith.constant 0 : i32
    %c0_i32_1 = arith.constant 0 : i32
    return %c0_i32, %c0_i32_0 : i32, i32
  }
  func.func @transform_28(%arg0: i32) -> (i32, i32) {
    %c0_i32 = arith.constant 0 : i32
    %c0_i32_0 = arith.constant 0 : i32
    %c0_i32_1 = arith.constant 0 : i32
    return %c0_i32, %c0_i32_0 : i32, i32
  }
  func.func @transform_29(%arg0: i32) -> (i32, i32) {
    %c0_i32 = arith.constant 0 : i32
    %c0_i32_0 = arith.constant 0 : i32
    %c0_i32_1 = arith.constant 0 : i32
    return %c0_i32, %c0_i32_0 : i32, i32
  }
  func.func @transform_30(%arg0: i32) -> (i32, i32) {
    %c0_i32 = arith.constant 0 : i32
    %c0_i32_0 = arith.constant 0 : i32
    return %arg0, %c0_i32 : i32, i32
  }
}

</mosaic_0001>

<llo_original>
// kernel: spinlight_forward.1
$region0: #{spinlight_forward.1}
  #allocation0 [shape = 'u32[]', space=smem, size = 0x4, offset = 0x4, fixed_abs, tag = 'smem constant byte address 0x4 - core index']
  #allocation1 [shape = 'u32[144,128]{1,0:T(1,128)}', space=vmem, size = 0x12000, scoped, tag = 'internal scratch']
  %s0 = inlined_call_operand.smem [shape: u32[31], index: -1, kind: input, shape index: {}]
  %s1 = sld [smem:[%s0]]
  %s2 = scalar_lea.smem %s0, 1
  %s3 = sld [smem:[%s2]]
  %s4 = scalar_lea.smem %s0, 2
  %s5 = sld [smem:[%s4]]
  %s6 = scalar_lea.smem %s0, 3
  %s7 = sld [smem:[%s6]]
  %s8 = scalar_lea.smem %s0, 4
  %s9 = sld [smem:[%s8]]
  %s10 = scalar_lea.smem %s0, 5
  %s11 = sld [smem:[%s10]]
  %s12 = scalar_lea.smem %s0, 6
  %s13 = sld [smem:[%s12]]
  %s14 = scalar_lea.smem %s0, 7
  %s15 = sld [smem:[%s14]]
  %s16 = scalar_lea.smem %s0, 8
  %s17 = sld [smem:[%s16]]
  %s18 = scalar_lea.smem %s0, 9
  %s19 = sld [smem:[%s18]]
  %s20 = scalar_lea.smem %s0, 10
  %s21 = sld [smem:[%s20]]
  %s22 = scalar_lea.smem %s0, 11
  %s23 = sld [smem:[%s22]]
  %s24 = scalar_lea.smem %s0, 12
  %s25 = sld [smem:[%s24]]
  %s26 = scalar_lea.smem %s0, 13
  %s27 = sld [smem:[%s26]]
  %s28 = scalar_lea.smem %s0, 14
  %s29 = sld [smem:[%s28]]
  %s30 = scalar_lea.smem %s0, 15
  %s31 = sld [smem:[%s30]]
  %s32 = scalar_lea.smem %s0, 16
  %s33 = sld [smem:[%s32]]
  %s34 = scalar_lea.smem %s0, 17
  %s35 = sld [smem:[%s34]]
  %s36 = scalar_lea.smem %s0, 18
  %s37 = sld [smem:[%s36]]
  %s38 = scalar_lea.smem %s0, 19
  %s39 = sld [smem:[%s38]]
  %s40 = scalar_lea.smem %s0, 20
  %s41 = sld [smem:[%s40]]
  %s42 = scalar_lea.smem %s0, 21
  %s43 = sld [smem:[%s42]]
  %s44 = scalar_lea.smem %s0, 22
  %s45 = sld [smem:[%s44]]
  %s46 = scalar_lea.smem %s0, 23
  %s47 = sld [smem:[%s46]]
  %s48 = scalar_lea.smem %s0, 24
  %s49 = sld [smem:[%s48]]
  %s50 = scalar_lea.smem %s0, 25
  %s51 = sld [smem:[%s50]]
  %s52 = scalar_lea.smem %s0, 26
  %s53 = sld [smem:[%s52]]
  %s54 = scalar_lea.smem %s0, 27
  %s55 = sld [smem:[%s54]]
  %s56 = scalar_lea.smem %s0, 28
  %s57 = sld [smem:[%s56]]
  %s58 = scalar_lea.smem %s0, 29
  %s59 = sld [smem:[%s58]]
  %s60 = scalar_lea.smem %s0, 30
  %s61 = sld [smem:[%s60]]
  %s62 = sld [smem:[#allocation0]]
  $region197: #{spinlight_forward.1} parent=0
    _
  %s64 = ssub.s32 1, %s62
  %s65 = scalar_select 0, %s64, %s62
  $region1: #{spinlight_forward.1} parent=0
    #allocation2 [shape = 'u8[131072]{0}', space=vmem, size = 0x20000, scoped, tag = 'input window, operand 3, single buffered']
    #allocation3 [shape = 's32[2]{0}', space=sflag, size = 0x8, scoped, tag = 'scoped memory for spinlight_forward.1']
    #allocation4 [shape = 'u8[131072]{0}', space=vmem, size = 0x20000, scoped, tag = 'input window, operand 5, single buffered']
    #allocation5 [shape = 's32[1]{0}', space=sflag, size = 0x4, scoped, tag = 'scoped memory for spinlight_forward.1']
    #allocation6 [shape = 'u8[131072]{0}', space=vmem, size = 0x20000, scoped, tag = 'input window, operand 7, single buffered']
    #allocation7 [shape = 'u8[24576]{0}', space=vmem, size = 0x6000, scoped, tag = 'input window, operand 9, single buffered']
    #allocation8 [shape = 's32[1]{0}', space=sflag, size = 0x4, scoped, tag = 'scoped memory for spinlight_forward.1']
    #allocation9 [shape = 'u8[131072]{0}', space=vmem, size = 0x20000, scoped, tag = 'input window, operand 10, single buffered']
    #allocation10 [shape = 'u8[131072]{0}', space=vmem, size = 0x20000, scoped, tag = 'input window, operand 12, single buffered']
    #allocation11 [shape = 's32[1]{0}', space=sflag, size = 0x4, scoped, tag = 'scoped memory for spinlight_forward.1']
    #allocation12 [shape = 'u8[131072]{0}', space=vmem, size = 0x20000, scoped, tag = 'input window, operand 14, single buffered']
    #allocation13 [shape = 'u8[131072]{0}', space=vmem, size = 0x20000, scoped, tag = 'input window, operand 16, single buffered']
    #allocation14 [shape = 's32[1]{0}', space=sflag, size = 0x4, scoped, tag = 'scoped memory for spinlight_forward.1']
    #allocation15 [shape = 'u8[131072]{0}', space=vmem, size = 0x20000, scoped, tag = 'input window, operand 22, single buffered']
    #allocation16 [shape = 'u8[131072]{0}', space=vmem, size = 0x20000, scoped, tag = 'input window, operand 24, single buffered']
    #allocation17 [shape = 's32[1]{0}', space=sflag, size = 0x4, scoped, tag = 'scoped memory for spinlight_forward.1']
    #allocation18 [shape = 'u8[131072]{0}', space=vmem, size = 0x20000, scoped, tag = 'input window, operand 26, single buffered']
    %66 = vsyncpa [#allocation3], 0
    %67 = vsyncpa [#allocation5], 0
    %68 = vsyncpa [#allocation8], 0
    %69 = vsyncpa [#allocation11], 0
    %70 = vsyncpa [#allocation14], 0
    %71 = vsyncpa [#allocation17], 0
    loop: start=0, step=1, limit=4
    $region2: #{spinlight_forward.1} parent=1 // loop_pre_header
      _
    $region3: #{spinlight_forward.1} parent=1 // loop_header
      %s73 = sphi 0, %s77
      %p74 = scmp.ge.s32.totalorder %s73, 4
      %s83 = sphi 0, %s85
      %s86 = sphi 0, %s83
      %s87 = sphi 0, %s86
      %s103 = sphi 0, %s87
      %s107 = sphi 0, %s107
      %s109 = sphi 0, %s107
      %s110 = sphi 0, %s109
      %s124 = sphi 0, %s110
      %s128 = sphi 0, %s128
      %s130 = sphi 0, %s128
      %s131 = sphi 0, %s130
      %s145 = sphi 0, %s131
      %s149 = sphi 0, %s149
      %s151 = sphi 0, %s149
      %s152 = sphi 0, %s151
      %s166 = sphi 0, %s152
      %s170 = sphi 0, %s170
      %s172 = sphi 0, %s170
      %s173 = sphi 0, %s172
      %s187 = sphi 0, %s173
      %s191 = sphi 0, %s191
      %s193 = sphi 0, %s191
      %s194 = sphi 0, %s193
      %s208 = sphi 0, %s194
      %s212 = sphi 0, %s212
      %s214 = sphi 0, %s212
      %s215 = sphi 0, %s214
      %s229 = sphi 0, %s215
      %s233 = sphi 0, %s233
      %s235 = sphi 0, %s233
      %s236 = sphi 0, %s235
      %s250 = sphi 0, %s236
      %s254 = sphi 0, %s254
      %s256 = sphi 0, %s254
      %s257 = sphi 0, %s256
      %s271 = sphi 0, %s257
      %s275 = sphi 0, %s275
      %s277 = sphi 0, %s275
      %s278 = sphi 0, %s277
      %s292 = sphi 0, %s278
      %s296 = sphi 0, %s296
      %s298 = sphi 0, %s296
      %s299 = sphi 0, %s298
      %s313 = sphi 0, %s299
      %s317 = sphi 0, %s317
      %s319 = sphi 0, %s317
      %s320 = sphi 0, %s319
      %s334 = sphi 0, %s320
      %s338 = sphi 0, %s338
      %s340 = sphi 0, %s338
      %s341 = sphi 0, %s340
      %s355 = sphi 0, %s341
      %s359 = sphi 0, %s359
      %s361 = sphi 0, %s359
      %s362 = sphi 0, %s361
      %s376 = sphi 0, %s362
      %s380 = sphi 0, %s380
      %s382 = sphi 0, %s380
      %s383 = sphi 0, %s382
      %s397 = sphi 0, %s383
      %s401 = sphi 0, %s401
      %s403 = sphi 0, %s401
      %s404 = sphi 0, %s403
      %s418 = sphi 0, %s404
      %s422 = sphi 0, %s422
      %s424 = sphi 0, %s422
      %s425 = sphi 0, %s424
      %s439 = sphi 0, %s425
      %s443 = sphi 0, %s443
      %s445 = sphi 0, %s443
      %s446 = sphi 0, %s445
      %s460 = sphi 0, %s446
      %s464 = sphi 0, %s464
      %s466 = sphi 0, %s464
      %s467 = sphi 0, %s466
      %s481 = sphi 0, %s467
      %s485 = sphi 0, %s485
      %s487 = sphi 0, %s485
      %s488 = sphi 0, %s487
      %s502 = sphi 0, %s488
      %s506 = sphi 0, %s506
      %s508 = sphi 0, %s506
      %s509 = sphi 0, %s508
      %s523 = sphi 0, %s509
      %s527 = sphi 0, %s527
      %s529 = sphi 0, %s527
      %s530 = sphi 0, %s529
      %s544 = sphi 0, %s530
      %s548 = sphi 0, %s548
      %s550 = sphi 0, %s548
      %s551 = sphi 0, %s550
      %s565 = sphi 0, %s551
      %s569 = sphi 0, %s569
      %s571 = sphi 0, %s569
      %s572 = sphi 0, %s571
      %s586 = sphi 0, %s572
      %s590 = sphi 0, %s590
      %s592 = sphi 0, %s590
      %s593 = sphi 0, %s592
      %s607 = sphi 0, %s593
      %s611 = sphi 0, %s611
      %s613 = sphi 0, %s611
      %s614 = sphi 0, %s613
      %s628 = sphi 0, %s614
      %s632 = sphi 0, %s632
      %s634 = sphi 0, %s632
      %s635 = sphi 0, %s634
      %s649 = sphi 0, %s635
      %s653 = sphi 0, %s653
      %s655 = sphi 0, %s653
      %s656 = sphi 0, %s655
      %s670 = sphi 0, %s656
      %s674 = sphi 0, %s674
      %s676 = sphi 0, %s674
      %s677 = sphi 0, %s676
      %s691 = sphi 0, %s677
      %s695 = sphi 0, %s695
      %s697 = sphi 0, %s695
      %s698 = sphi 0, %s697
      %s712 = sphi 0, %s698
      %s718 = sphi 0, %s720
      %s721 = sphi 0, %s718
      %s722 = sphi 0, %s721
      %s738 = sphi 0, %s722
    $region4: #{spinlight_forward.1} parent=1 // loop_header_branch
      %76 = sbr.rel (%p74) target = $region8
    $region5: #{spinlight_forward.1} parent=1 // loop_body
      %s78 = ssub.s32 %s73, 1
      %s79 = ssub.s32 %s73, 2
      %s80 = sadd.s32 %s73, 1
      %s81 = ssub.s32 %s73, %s80
      %p82 = scmp.eq.s32.totalorder %s81, 0
      %s84 = sadd.s32 %s83, 1
      %s85 = scalar_select %p82, %s83, %s84
      %p88 = pneg %p82
      %p89 = scmp.eq.s32.totalorder %s73, 1
      %p90 = por %p88, %p89
      %p91 = scmp.ne.s32.totalorder %s83, %s86
      %p92 = scmp.eq.s32.totalorder %s73, 0
      %p93 = por %p91, %p92
      %p94 = scmp.ne.s32.totalorder %s83, %s86
      %p95 = scmp.eq.s32.totalorder %s78, 1
      %p96 = por %p94, %p95
      %p97 = scmp.ne.s32.totalorder %s86, %s87
      %p98 = scmp.eq.s32.totalorder %s78, 0
      %p99 = por %p97, %p98
      %p100 = scmp.ne.s32.totalorder %s86, %s87
      %p101 = scmp.eq.s32.totalorder %s79, 1
      %p102 = por %p100, %p101
      %p104 = scmp.ne.s32.totalorder %s87, %s103
      %p105 = scmp.eq.s32.totalorder %s79, 0
      %p106 = por %p104, %p105
      %s108 = sadd.s32 %s107, 1
      %p111 = scmp.eq.s32.totalorder %s73, 1
      %p112 = scmp.ne.s32.totalorder %s107, %s109
      %p113 = scmp.eq.s32.totalorder %s73, 0
      %p114 = por %p112, %p113
      %p115 = scmp.ne.s32.totalorder %s107, %s109
      %p116 = scmp.eq.s32.totalorder %s78, 1
      %p117 = por %p115, %p116
      %p118 = scmp.ne.s32.totalorder %s109, %s110
      %p119 = scmp.eq.s32.totalorder %s78, 0
      %p120 = por %p118, %p119
      %p121 = scmp.ne.s32.totalorder %s109, %s110
      %p122 = scmp.eq.s32.totalorder %s79, 1
      %p123 = por %p121, %p122
      %p125 = scmp.ne.s32.totalorder %s110, %s124
      %p126 = scmp.eq.s32.totalorder %s79, 0
      %p127 = por %p125, %p126
      %s129 = sadd.s32 %s128, 1
      %p132 = scmp.eq.s32.totalorder %s73, 1
      %p133 = scmp.ne.s32.totalorder %s128, %s130
      %p134 = scmp.eq.s32.totalorder %s73, 0
      %p135 = por %p133, %p134
      %p136 = scmp.ne.s32.totalorder %s128, %s130
      %p137 = scmp.eq.s32.totalorder %s78, 1
      %p138 = por %p136, %p137
      %p139 = scmp.ne.s32.totalorder %s130, %s131
      %p140 = scmp.eq.s32.totalorder %s78, 0
      %p141 = por %p139, %p140
      %p142 = scmp.ne.s32.totalorder %s130, %s131
      %p143 = scmp.eq.s32.totalorder %s79, 1
      %p144 = por %p142, %p143
      %p146 = scmp.ne.s32.totalorder %s131, %s145
      %p147 = scmp.eq.s32.totalorder %s79, 0
      %p148 = por %p146, %p147
      %s150 = sadd.s32 %s149, 1
      %p153 = scmp.eq.s32.totalorder %s73, 1
      %p154 = scmp.ne.s32.totalorder %s149, %s151
      %p155 = scmp.eq.s32.totalorder %s73, 0
      %p156 = por %p154, %p155
      %p157 = scmp.ne.s32.totalorder %s149, %s151
      %p158 = scmp.eq.s32.totalorder %s78, 1
      %p159 = por %p157, %p158
      %p160 = scmp.ne.s32.totalorder %s151, %s152
      %p161 = scmp.eq.s32.totalorder %s78, 0
      %p162 = por %p160, %p161
      %p163 = scmp.ne.s32.totalorder %s151, %s152
      %p164 = scmp.eq.s32.totalorder %s79, 1
      %p165 = por %p163, %p164
      %p167 = scmp.ne.s32.totalorder %s152, %s166
      %p168 = scmp.eq.s32.totalorder %s79, 0
      %p169 = por %p167, %p168
      %s171 = sadd.s32 %s170, 1
      %p174 = scmp.eq.s32.totalorder %s73, 1
      %p175 = scmp.ne.s32.totalorder %s170, %s172
      %p176 = scmp.eq.s32.totalorder %s73, 0
      %p177 = por %p175, %p176
      %p178 = scmp.ne.s32.totalorder %s170, %s172
      %p179 = scmp.eq.s32.totalorder %s78, 1
      %p180 = por %p178, %p179
      %p181 = scmp.ne.s32.totalorder %s172, %s173
      %p182 = scmp.eq.s32.totalorder %s78, 0
      %p183 = por %p181, %p182
      %p184 = scmp.ne.s32.totalorder %s172, %s173
      %p185 = scmp.eq.s32.totalorder %s79, 1
      %p186 = por %p184, %p185
      %p188 = scmp.ne.s32.totalorder %s173, %s187
      %p189 = scmp.eq.s32.totalorder %s79, 0
      %p190 = por %p188, %p189
      %s192 = sadd.s32 %s191, 1
      %p195 = scmp.eq.s32.totalorder %s73, 1
      %p196 = scmp.ne.s32.totalorder %s191, %s193
      %p197 = scmp.eq.s32.totalorder %s73, 0
      %p198 = por %p196, %p197
      %p199 = scmp.ne.s32.totalorder %s191, %s193
      %p200 = scmp.eq.s32.totalorder %s78, 1
      %p201 = por %p199, %p200
      %p202 = scmp.ne.s32.totalorder %s193, %s194
      %p203 = scmp.eq.s32.totalorder %s78, 0
      %p204 = por %p202, %p203
      %p205 = scmp.ne.s32.totalorder %s193, %s194
      %p206 = scmp.eq.s32.totalorder %s79, 1
      %p207 = por %p205, %p206
      %p209 = scmp.ne.s32.totalorder %s194, %s208
      %p210 = scmp.eq.s32.totalorder %s79, 0
      %p211 = por %p209, %p210
      %s213 = sadd.s32 %s212, 1
      %p216 = scmp.eq.s32.totalorder %s73, 1
      %p217 = scmp.ne.s32.totalorder %s212, %s214
      %p218 = scmp.eq.s32.totalorder %s73, 0
      %p219 = por %p217, %p218
      %p220 = scmp.ne.s32.totalorder %s212, %s214
      %p221 = scmp.eq.s32.totalorder %s78, 1
      %p222 = por %p220, %p221
      %p223 = scmp.ne.s32.totalorder %s214, %s215
      %p224 = scmp.eq.s32.totalorder %s78, 0
      %p225 = por %p223, %p224
      %p226 = scmp.ne.s32.totalorder %s214, %s215
      %p227 = scmp.eq.s32.totalorder %s79, 1
      %p228 = por %p226, %p227
      %p230 = scmp.ne.s32.totalorder %s215, %s229
      %p231 = scmp.eq.s32.totalorder %s79, 0
      %p232 = por %p230, %p231
      %s234 = sadd.s32 %s233, 1
      %p237 = scmp.eq.s32.totalorder %s73, 1
      %p238 = scmp.ne.s32.totalorder %s233, %s235
      %p239 = scmp.eq.s32.totalorder %s73, 0
      %p240 = por %p238, %p239
      %p241 = scmp.ne.s32.totalorder %s233, %s235
      %p242 = scmp.eq.s32.totalorder %s78, 1
      %p243 = por %p241, %p242
      %p244 = scmp.ne.s32.totalorder %s235, %s236
      %p245 = scmp.eq.s32.totalorder %s78, 0
      %p246 = por %p244, %p245
      %p247 = scmp.ne.s32.totalorder %s235, %s236
      %p248 = scmp.eq.s32.totalorder %s79, 1
      %p249 = por %p247, %p248
      %p251 = scmp.ne.s32.totalorder %s236, %s250
      %p252 = scmp.eq.s32.totalorder %s79, 0
      %p253 = por %p251, %p252
      %s255 = sadd.s32 %s254, 1
      %p258 = scmp.eq.s32.totalorder %s73, 1
      %p259 = scmp.ne.s32.totalorder %s254, %s256
      %p260 = scmp.eq.s32.totalorder %s73, 0
      %p261 = por %p259, %p260
      %p262 = scmp.ne.s32.totalorder %s254, %s256
      %p263 = scmp.eq.s32.totalorder %s78, 1
      %p264 = por %p262, %p263
      %p265 = scmp.ne.s32.totalorder %s256, %s257
      %p266 = scmp.eq.s32.totalorder %s78, 0
      %p267 = por %p265, %p266
      %p268 = scmp.ne.s32.totalorder %s256, %s257
      %p269 = scmp.eq.s32.totalorder %s79, 1
      %p270 = por %p268, %p269
      %p272 = scmp.ne.s32.totalorder %s257, %s271
      %p273 = scmp.eq.s32.totalorder %s79, 0
      %p274 = por %p272, %p273
      %s276 = sadd.s32 %s275, 1
      %p279 = scmp.eq.s32.totalorder %s73, 1
      %p280 = scmp.ne.s32.totalorder %s275, %s277
      %p281 = scmp.eq.s32.totalorder %s73, 0
      %p282 = por %p280, %p281
      %p283 = scmp.ne.s32.totalorder %s275, %s277
      %p284 = scmp.eq.s32.totalorder %s78, 1
      %p285 = por %p283, %p284
      %p286 = scmp.ne.s32.totalorder %s277, %s278
      %p287 = scmp.eq.s32.totalorder %s78, 0
      %p288 = por %p286, %p287
      %p289 = scmp.ne.s32.totalorder %s277, %s278
      %p290 = scmp.eq.s32.totalorder %s79, 1
      %p291 = por %p289, %p290
      %p293 = scmp.ne.s32.totalorder %s278, %s292
      %p294 = scmp.eq.s32.totalorder %s79, 0
      %p295 = por %p293, %p294
      %s297 = sadd.s32 %s296, 1
      %p300 = scmp.eq.s32.totalorder %s73, 1
      %p301 = scmp.ne.s32.totalorder %s296, %s298
      %p302 = scmp.eq.s32.totalorder %s73, 0
      %p303 = por %p301, %p302
      %p304 = scmp.ne.s32.totalorder %s296, %s298
      %p305 = scmp.eq.s32.totalorder %s78, 1
      %p306 = por %p304, %p305
      %p307 = scmp.ne.s32.totalorder %s298, %s299
      %p308 = scmp.eq.s32.totalorder %s78, 0
      %p309 = por %p307, %p308
      %p310 = scmp.ne.s32.totalorder %s298, %s299
      %p311 = scmp.eq.s32.totalorder %s79, 1
      %p312 = por %p310, %p311
      %p314 = scmp.ne.s32.totalorder %s299, %s313
      %p315 = scmp.eq.s32.totalorder %s79, 0
      %p316 = por %p314, %p315
      %s318 = sadd.s32 %s317, 1
      %p321 = scmp.eq.s32.totalorder %s73, 1
      %p322 = scmp.ne.s32.totalorder %s317, %s319
      %p323 = scmp.eq.s32.totalorder %s73, 0
      %p324 = por %p322, %p323
      %p325 = scmp.ne.s32.totalorder %s317, %s319
      %p326 = scmp.eq.s32.totalorder %s78, 1
      %p327 = por %p325, %p326
      %p328 = scmp.ne.s32.totalorder %s319, %s320
      %p329 = scmp.eq.s32.totalorder %s78, 0
      %p330 = por %p328, %p329
      %p331 = scmp.ne.s32.totalorder %s319, %s320
      %p332 = scmp.eq.s32.totalorder %s79, 1
      %p333 = por %p331, %p332
      %p335 = scmp.ne.s32.totalorder %s320, %s334
      %p336 = scmp.eq.s32.totalorder %s79, 0
      %p337 = por %p335, %p336
      %s339 = sadd.s32 %s338, 1
      %p342 = scmp.eq.s32.totalorder %s73, 1
      %p343 = scmp.ne.s32.totalorder %s338, %s340
      %p344 = scmp.eq.s32.totalorder %s73, 0
      %p345 = por %p343, %p344
      %p346 = scmp.ne.s32.totalorder %s338, %s340
      %p347 = scmp.eq.s32.totalorder %s78, 1
      %p348 = por %p346, %p347
      %p349 = scmp.ne.s32.totalorder %s340, %s341
      %p350 = scmp.eq.s32.totalorder %s78, 0
      %p351 = por %p349, %p350
      %p352 = scmp.ne.s32.totalorder %s340, %s341
      %p353 = scmp.eq.s32.totalorder %s79, 1
      %p354 = por %p352, %p353
      %p356 = scmp.ne.s32.totalorder %s341, %s355
      %p357 = scmp.eq.s32.totalorder %s79, 0
      %p358 = por %p356, %p357
      %s360 = sadd.s32 %s359, 1
      %p363 = scmp.eq.s32.totalorder %s73, 1
      %p364 = scmp.ne.s32.totalorder %s359, %s361
      %p365 = scmp.eq.s32.totalorder %s73, 0
      %p366 = por %p364, %p365
      %p367 = scmp.ne.s32.totalorder %s359, %s361
      %p368 = scmp.eq.s32.totalorder %s78, 1
      %p369 = por %p367, %p368
      %p370 = scmp.ne.s32.totalorder %s361, %s362
      %p371 = scmp.eq.s32.totalorder %s78, 0
      %p372 = por %p370, %p371
      %p373 = scmp.ne.s32.totalorder %s361, %s362
      %p374 = scmp.eq.s32.totalorder %s79, 1
      %p375 = por %p373, %p374
      %p377 = scmp.ne.s32.totalorder %s362, %s376
      %p378 = scmp.eq.s32.totalorder %s79, 0
      %p379 = por %p377, %p378
      %s381 = sadd.s32 %s380, 1
      %p384 = scmp.eq.s32.totalorder %s73, 1
      %p385 = scmp.ne.s32.totalorder %s380, %s382
      %p386 = scmp.eq.s32.totalorder %s73, 0
      %p387 = por %p385, %p386
      %p388 = scmp.ne.s32.totalorder %s380, %s382
      %p389 = scmp.eq.s32.totalorder %s78, 1
      %p390 = por %p388, %p389
      %p391 = scmp.ne.s32.totalorder %s382, %s383
      %p392 = scmp.eq.s32.totalorder %s78, 0
      %p393 = por %p391, %p392
      %p394 = scmp.ne.s32.totalorder %s382, %s383
      %p395 = scmp.eq.s32.totalorder %s79, 1
      %p396 = por %p394, %p395
      %p398 = scmp.ne.s32.totalorder %s383, %s397
      %p399 = scmp.eq.s32.totalorder %s79, 0
      %p400 = por %p398, %p399
      %s402 = sadd.s32 %s401, 1
      %p405 = scmp.eq.s32.totalorder %s73, 1
      %p406 = scmp.ne.s32.totalorder %s401, %s403
      %p407 = scmp.eq.s32.totalorder %s73, 0
      %p408 = por %p406, %p407
      %p409 = scmp.ne.s32.totalorder %s401, %s403
      %p410 = scmp.eq.s32.totalorder %s78, 1
      %p411 = por %p409, %p410
      %p412 = scmp.ne.s32.totalorder %s403, %s404
      %p413 = scmp.eq.s32.totalorder %s78, 0
      %p414 = por %p412, %p413
      %p415 = scmp.ne.s32.totalorder %s403, %s404
      %p416 = scmp.eq.s32.totalorder %s79, 1
      %p417 = por %p415, %p416
      %p419 = scmp.ne.s32.totalorder %s404, %s418
      %p420 = scmp.eq.s32.totalorder %s79, 0
      %p421 = por %p419, %p420
      %s423 = sadd.s32 %s422, 1
      %p426 = scmp.eq.s32.totalorder %s73, 1
      %p427 = scmp.ne.s32.totalorder %s422, %s424
      %p428 = scmp.eq.s32.totalorder %s73, 0
      %p429 = por %p427, %p428
      %p430 = scmp.ne.s32.totalorder %s422, %s424
      %p431 = scmp.eq.s32.totalorder %s78, 1
      %p432 = por %p430, %p431
      %p433 = scmp.ne.s32.totalorder %s424, %s425
      %p434 = scmp.eq.s32.totalorder %s78, 0
      %p435 = por %p433, %p434
      %p436 = scmp.ne.s32.totalorder %s424, %s425
      %p437 = scmp.eq.s32.totalorder %s79, 1
      %p438 = por %p436, %p437
      %p440 = scmp.ne.s32.totalorder %s425, %s439
      %p441 = scmp.eq.s32.totalorder %s79, 0
      %p442 = por %p440, %p441
      %s444 = sadd.s32 %s443, 1
      %p447 = scmp.eq.s32.totalorder %s73, 1
      %p448 = scmp.ne.s32.totalorder %s443, %s445
      %p449 = scmp.eq.s32.totalorder %s73, 0
      %p450 = por %p448, %p449
      %p451 = scmp.ne.s32.totalorder %s443, %s445
      %p452 = scmp.eq.s32.totalorder %s78, 1
      %p453 = por %p451, %p452
      %p454 = scmp.ne.s32.totalorder %s445, %s446
      %p455 = scmp.eq.s32.totalorder %s78, 0
      %p456 = por %p454, %p455
      %p457 = scmp.ne.s32.totalorder %s445, %s446
      %p458 = scmp.eq.s32.totalorder %s79, 1
      %p459 = por %p457, %p458
      %p461 = scmp.ne.s32.totalorder %s446, %s460
      %p462 = scmp.eq.s32.totalorder %s79, 0
      %p463 = por %p461, %p462
      %s465 = sadd.s32 %s464, 1
      %p468 = scmp.eq.s32.totalorder %s73, 1
      %p469 = scmp.ne.s32.totalorder %s464, %s466
      %p470 = scmp.eq.s32.totalorder %s73, 0
      %p471 = por %p469, %p470
      %p472 = scmp.ne.s32.totalorder %s464, %s466
      %p473 = scmp.eq.s32.totalorder %s78, 1
      %p474 = por %p472, %p473
      %p475 = scmp.ne.s32.totalorder %s466, %s467
      %p476 = scmp.eq.s32.totalorder %s78, 0
      %p477 = por %p475, %p476
      %p478 = scmp.ne.s32.totalorder %s466, %s467
      %p479 = scmp.eq.s32.totalorder %s79, 1
      %p480 = por %p478, %p479
      %p482 = scmp.ne.s32.totalorder %s467, %s481
      %p483 = scmp.eq.s32.totalorder %s79, 0
      %p484 = por %p482, %p483
      %s486 = sadd.s32 %s485, 1
      %p489 = scmp.eq.s32.totalorder %s73, 1
      %p490 = scmp.ne.s32.totalorder %s485, %s487
      %p491 = scmp.eq.s32.totalorder %s73, 0
      %p492 = por %p490, %p491
      %p493 = scmp.ne.s32.totalorder %s485, %s487
      %p494 = scmp.eq.s32.totalorder %s78, 1
      %p495 = por %p493, %p494
      %p496 = scmp.ne.s32.totalorder %s487, %s488
      %p497 = scmp.eq.s32.totalorder %s78, 0
      %p498 = por %p496, %p497
      %p499 = scmp.ne.s32.totalorder %s487, %s488
      %p500 = scmp.eq.s32.totalorder %s79, 1
      %p501 = por %p499, %p500
      %p503 = scmp.ne.s32.totalorder %s488, %s502
      %p504 = scmp.eq.s32.totalorder %s79, 0
      %p505 = por %p503, %p504
      %s507 = sadd.s32 %s506, 1
      %p510 = scmp.eq.s32.totalorder %s73, 1
      %p511 = scmp.ne.s32.totalorder %s506, %s508
      %p512 = scmp.eq.s32.totalorder %s73, 0
      %p513 = por %p511, %p512
      %p514 = scmp.ne.s32.totalorder %s506, %s508
      %p515 = scmp.eq.s32.totalorder %s78, 1
      %p516 = por %p514, %p515
      %p517 = scmp.ne.s32.totalorder %s508, %s509
      %p518 = scmp.eq.s32.totalorder %s78, 0
      %p519 = por %p517, %p518
      %p520 = scmp.ne.s32.totalorder %s508, %s509
      %p521 = scmp.eq.s32.totalorder %s79, 1
      %p522 = por %p520, %p521
      %p524 = scmp.ne.s32.totalorder %s509, %s523
      %p525 = scmp.eq.s32.totalorder %s79, 0
      %p526 = por %p524, %p525
      %s528 = sadd.s32 %s527, 1
      %p531 = scmp.eq.s32.totalorder %s73, 1
      %p532 = scmp.ne.s32.totalorder %s527, %s529
      %p533 = scmp.eq.s32.totalorder %s73, 0
      %p534 = por %p532, %p533
      %p535 = scmp.ne.s32.totalorder %s527, %s529
      %p536 = scmp.eq.s32.totalorder %s78, 1
      %p537 = por %p535, %p536
      %p538 = scmp.ne.s32.totalorder %s529, %s530
      %p539 = scmp.eq.s32.totalorder %s78, 0
      %p540 = por %p538, %p539
      %p541 = scmp.ne.s32.totalorder %s529, %s530
      %p542 = scmp.eq.s32.totalorder %s79, 1
      %p543 = por %p541, %p542
      %p545 = scmp.ne.s32.totalorder %s530, %s544
      %p546 = scmp.eq.s32.totalorder %s79, 0
      %p547 = por %p545, %p546
      %s549 = sadd.s32 %s548, 1
      %p552 = scmp.eq.s32.totalorder %s73, 1
      %p553 = scmp.ne.s32.totalorder %s548, %s550
      %p554 = scmp.eq.s32.totalorder %s73, 0
      %p555 = por %p553, %p554
      %p556 = scmp.ne.s32.totalorder %s548, %s550
      %p557 = scmp.eq.s32.totalorder %s78, 1
      %p558 = por %p556, %p557
      %p559 = scmp.ne.s32.totalorder %s550, %s551
      %p560 = scmp.eq.s32.totalorder %s78, 0
      %p561 = por %p559, %p560
      %p562 = scmp.ne.s32.totalorder %s550, %s551
      %p563 = scmp.eq.s32.totalorder %s79, 1
      %p564 = por %p562, %p563
      %p566 = scmp.ne.s32.totalorder %s551, %s565
      %p567 = scmp.eq.s32.totalorder %s79, 0
      %p568 = por %p566, %p567
      %s570 = sadd.s32 %s569, 1
      %p573 = scmp.eq.s32.totalorder %s73, 1
      %p574 = scmp.ne.s32.totalorder %s569, %s571
      %p575 = scmp.eq.s32.totalorder %s73, 0
      %p576 = por %p574, %p575
      %p577 = scmp.ne.s32.totalorder %s569, %s571
      %p578 = scmp.eq.s32.totalorder %s78, 1
      %p579 = por %p577, %p578
      %p580 = scmp.ne.s32.totalorder %s571, %s572
      %p581 = scmp.eq.s32.totalorder %s78, 0
      %p582 = por %p580, %p581
      %p583 = scmp.ne.s32.totalorder %s571, %s572
      %p584 = scmp.eq.s32.totalorder %s79, 1
      %p585 = por %p583, %p584
      %p587 = scmp.ne.s32.totalorder %s572, %s586
      %p588 = scmp.eq.s32.totalorder %s79, 0
      %p589 = por %p587, %p588
      %s591 = sadd.s32 %s590, 1
      %p594 = scmp.eq.s32.totalorder %s73, 1
      %p595 = scmp.ne.s32.totalorder %s590, %s592
      %p596 = scmp.eq.s32.totalorder %s73, 0
      %p597 = por %p595, %p596
      %p598 = scmp.ne.s32.totalorder %s590, %s592
      %p599 = scmp.eq.s32.totalorder %s78, 1
      %p600 = por %p598, %p599
      %p601 = scmp.ne.s32.totalorder %s592, %s593
      %p602 = scmp.eq.s32.totalorder %s78, 0
      %p603 = por %p601, %p602
      %p604 = scmp.ne.s32.totalorder %s592, %s593
      %p605 = scmp.eq.s32.totalorder %s79, 1
      %p606 = por %p604, %p605
      %p608 = scmp.ne.s32.totalorder %s593, %s607
      %p609 = scmp.eq.s32.totalorder %s79, 0
      %p610 = por %p608, %p609
      %s612 = sadd.s32 %s611, 1
      %p615 = scmp.eq.s32.totalorder %s73, 1
      %p616 = scmp.ne.s32.totalorder %s611, %s613
      %p617 = scmp.eq.s32.totalorder %s73, 0
      %p618 = por %p616, %p617
      %p619 = scmp.ne.s32.totalorder %s611, %s613
      %p620 = scmp.eq.s32.totalorder %s78, 1
      %p621 = por %p619, %p620
      %p622 = scmp.ne.s32.totalorder %s613, %s614
      %p623 = scmp.eq.s32.totalorder %s78, 0
      %p624 = por %p622, %p623
      %p625 = scmp.ne.s32.totalorder %s613, %s614
      %p626 = scmp.eq.s32.totalorder %s79, 1
      %p627 = por %p625, %p626
      %p629 = scmp.ne.s32.totalorder %s614, %s628
      %p630 = scmp.eq.s32.totalorder %s79, 0
      %p631 = por %p629, %p630
      %s633 = sadd.s32 %s632, 1
      %p636 = scmp.eq.s32.totalorder %s73, 1
      %p637 = scmp.ne.s32.totalorder %s632, %s634
      %p638 = scmp.eq.s32.totalorder %s73, 0
      %p639 = por %p637, %p638
      %p640 = scmp.ne.s32.totalorder %s632, %s634
      %p641 = scmp.eq.s32.totalorder %s78, 1
      %p642 = por %p640, %p641
      %p643 = scmp.ne.s32.totalorder %s634, %s635
      %p644 = scmp.eq.s32.totalorder %s78, 0
      %p645 = por %p643, %p644
      %p646 = scmp.ne.s32.totalorder %s634, %s635
      %p647 = scmp.eq.s32.totalorder %s79, 1
      %p648 = por %p646, %p647
      %p650 = scmp.ne.s32.totalorder %s635, %s649
      %p651 = scmp.eq.s32.totalorder %s79, 0
      %p652 = por %p650, %p651
      %s654 = sadd.s32 %s653, 1
      %p657 = scmp.eq.s32.totalorder %s73, 1
      %p658 = scmp.ne.s32.totalorder %s653, %s655
      %p659 = scmp.eq.s32.totalorder %s73, 0
      %p660 = por %p658, %p659
      %p661 = scmp.ne.s32.totalorder %s653, %s655
      %p662 = scmp.eq.s32.totalorder %s78, 1
      %p663 = por %p661, %p662
      %p664 = scmp.ne.s32.totalorder %s655, %s656
      %p665 = scmp.eq.s32.totalorder %s78, 0
      %p666 = por %p664, %p665
      %p667 = scmp.ne.s32.totalorder %s655, %s656
      %p668 = scmp.eq.s32.totalorder %s79, 1
      %p669 = por %p667, %p668
      %p671 = scmp.ne.s32.totalorder %s656, %s670
      %p672 = scmp.eq.s32.totalorder %s79, 0
      %p673 = por %p671, %p672
      %s675 = sadd.s32 %s674, 1
      %p678 = scmp.eq.s32.totalorder %s73, 1
      %p679 = scmp.ne.s32.totalorder %s674, %s676
      %p680 = scmp.eq.s32.totalorder %s73, 0
      %p681 = por %p679, %p680
      %p682 = scmp.ne.s32.totalorder %s674, %s676
      %p683 = scmp.eq.s32.totalorder %s78, 1
      %p684 = por %p682, %p683
      %p685 = scmp.ne.s32.totalorder %s676, %s677
      %p686 = scmp.eq.s32.totalorder %s78, 0
      %p687 = por %p685, %p686
      %p688 = scmp.ne.s32.totalorder %s676, %s677
      %p689 = scmp.eq.s32.totalorder %s79, 1
      %p690 = por %p688, %p689
      %p692 = scmp.ne.s32.totalorder %s677, %s691
      %p693 = scmp.eq.s32.totalorder %s79, 0
      %p694 = por %p692, %p693
      %s696 = sadd.s32 %s695, 1
      %p699 = scmp.eq.s32.totalorder %s73, 1
      %p700 = scmp.ne.s32.totalorder %s695, %s697
      %p701 = scmp.eq.s32.totalorder %s73, 0
      %p702 = por %p700, %p701
      %p703 = scmp.ne.s32.totalorder %s695, %s697
      %p704 = scmp.eq.s32.totalorder %s78, 1
      %p705 = por %p703, %p704
      %p706 = scmp.ne.s32.totalorder %s697, %s698
      %p707 = scmp.eq.s32.totalorder %s78, 0
      %p708 = por %p706, %p707
      %p709 = scmp.ne.s32.totalorder %s697, %s698
      %p710 = scmp.eq.s32.totalorder %s79, 1
      %p711 = por %p709, %p710
      %p713 = scmp.ne.s32.totalorder %s698, %s712
      %p714 = scmp.eq.s32.totalorder %s79, 0
      %p715 = por %p713, %p714
      %s716 = ssub.s32 %s73, %s80
      %p717 = scmp.eq.s32.totalorder %s716, 0
      %s719 = sadd.s32 %s718, 1
      %s720 = scalar_select %p717, %s718, %s719
      %p723 = pneg %p717
      %p724 = scmp.eq.s32.totalorder %s73, 1
      %p725 = por %p723, %p724
      %p726 = scmp.ne.s32.totalorder %s718, %s721
      %p727 = scmp.eq.s32.totalorder %s73, 0
      %p728 = por %p726, %p727
      %p729 = scmp.ne.s32.totalorder %s718, %s721
      %p730 = scmp.eq.s32.totalorder %s78, 1
      %p731 = por %p729, %p730
      %p732 = scmp.ne.s32.totalorder %s721, %s722
      %p733 = scmp.eq.s32.totalorder %s78, 0
      %p734 = por %p732, %p733
      %p735 = scmp.ne.s32.totalorder %s721, %s722
      %p736 = scmp.eq.s32.totalorder %s79, 1
      %p737 = por %p735, %p736
      %p739 = scmp.ne.s32.totalorder %s722, %s738
      %p740 = scmp.eq.s32.totalorder %s79, 0
      %p741 = por %p739, %p740
      %p742 = scmp.le.s32.totalorder 1, %s73
      %p743 = scmp.lt.s32.totalorder %s73, 3
      %p744 = pnand %p742, %p743
      %p745 = pneg %p744
      // Predicated region
      $region9: #{spinlight_forward.1} parent=5 // pred_check
        _
      $region10: #{spinlight_forward.1} parent=5 // pred_check_branch
        %747 = sbr.rel (%p744) target = $region12
      $region11: #{spinlight_forward.1} parent=5 // pred_region
        %s748 = ssub.s32 %s73, 1
        // Predicated region
        $region13: #{spinlight_forward.1} parent=11 // pred_check
          %p749 = pneg %p120
        $region14: #{spinlight_forward.1} parent=11 // pred_check_branch
          %751 = sbr.rel (%p749) target = $region16
        $region15: #{spinlight_forward.1} parent=11 // pred_region
          _
        $region16: #{spinlight_forward.1} parent=11 // pred_fallthru
          _
        // Predicated region
        $region17: #{spinlight_forward.1} parent=11 // pred_check
          %p752 = pneg %p141
        $region18: #{spinlight_forward.1} parent=11 // pred_check_branch
          %754 = sbr.rel (%p752) target = $region20
        $region19: #{spinlight_forward.1} parent=11 // pred_region
          _
        $region20: #{spinlight_forward.1} parent=11 // pred_fallthru
          _
        // Predicated region
        $region21: #{spinlight_forward.1} parent=11 // pred_check
          %p755 = pneg %p162
        $region22: #{spinlight_forward.1} parent=11 // pred_check_branch
          %757 = sbr.rel (%p755) target = $region24
        $region23: #{spinlight_forward.1} parent=11 // pred_region
          %s759 = ssub.s32 4096, 4096
          %760 = vsyncadd [#allocation3], %s759
          %s761 = sshll.u32 [#allocation2], 4
          %s762 = int_to_ptr.vmem [resolvable:$true] %s761
          %767 = dma.hbm_to_vmem [thread:$0]  %s7, 4096, %s762, [#allocation3], 128, 128, 8
        $region24: #{spinlight_forward.1} parent=11 // pred_fallthru
          _
        // Predicated region
        $region25: #{spinlight_forward.1} parent=11 // pred_check
          %p768 = pneg %p183
        $region26: #{spinlight_forward.1} parent=11 // pred_check_branch
          %770 = sbr.rel (%p768) target = $region28
        $region27: #{spinlight_forward.1} parent=11 // pred_region
          _
        $region28: #{spinlight_forward.1} parent=11 // pred_fallthru
          _
        // Predicated region
        $region29: #{spinlight_forward.1} parent=11 // pred_check
          %p771 = pneg %p204
        $region30: #{spinlight_forward.1} parent=11 // pred_check_branch
          %773 = sbr.rel (%p771) target = $region32
        $region31: #{spinlight_forward.1} parent=11 // pred_region
          %s775 = ssub.s32 4096, 4096
          %776 = vsyncadd [#allocation5], %s775
          %s777 = sshll.u32 [#allocation4], 4
          %s778 = int_to_ptr.vmem [resolvable:$true] %s777
          %783 = dma.hbm_to_vmem [thread:$0]  %s11, 4096, %s778, [#allocation5], 128, 128, 8
        $region32: #{spinlight_forward.1} parent=11 // pred_fallthru
          _
        // Predicated region
        $region33: #{spinlight_forward.1} parent=11 // pred_check
          %p784 = pneg %p225
        $region34: #{spinlight_forward.1} parent=11 // pred_check_branch
          %786 = sbr.rel (%p784) target = $region36
        $region35: #{spinlight_forward.1} parent=11 // pred_region
          _
        $region36: #{spinlight_forward.1} parent=11 // pred_fallthru
          _
        // Predicated region
        $region37: #{spinlight_forward.1} parent=11 // pred_check
          %p787 = pneg %p246
        $region38: #{spinlight_forward.1} parent=11 // pred_check_branch
          %789 = sbr.rel (%p787) target = $region40
        $region39: #{spinlight_forward.1} parent=11 // pred_region
          %s791 = ssub.s32 4096, 4096
          %792 = vsyncadd [#allocation5], %s791
          %s793 = sshll.u32 [#allocation6], 4
          %s794 = int_to_ptr.vmem [resolvable:$true] %s793
          %799 = dma.hbm_to_vmem [thread:$0]  %s15, 4096, %s794, [#allocation5], 128, 128, 8
        $region40: #{spinlight_forward.1} parent=11 // pred_fallthru
          _
        // Predicated region
        $region41: #{spinlight_forward.1} parent=11 // pred_check
          %p800 = pneg %p267
        $region42: #{spinlight_forward.1} parent=11 // pred_check_branch
          %802 = sbr.rel (%p800) target = $region44
        $region43: #{spinlight_forward.1} parent=11 // pred_region
          _
        $region44: #{spinlight_forward.1} parent=11 // pred_fallthru
          _
        // Predicated region
        $region45: #{spinlight_forward.1} parent=11 // pred_check
          %p803 = pneg %p288
        $region46: #{spinlight_forward.1} parent=11 // pred_check_branch
          %805 = sbr.rel (%p803) target = $region48
        $region47: #{spinlight_forward.1} parent=11 // pred_region
          %s807 = ssub.s32 768, 768
          %808 = vsyncadd [#allocation8], %s807
          %s809 = sshll.u32 [#allocation7], 4
          %s810 = int_to_ptr.vmem [resolvable:$true] %s809
          %815 = dma.hbm_to_vmem [thread:$0]  %s19, 768, %s810, [#allocation8], 128, 128, 8
        $region48: #{spinlight_forward.1} parent=11 // pred_fallthru
          _
        // Predicated region
        $region49: #{spinlight_forward.1} parent=11 // pred_check
          %p816 = pneg %p309
        $region50: #{spinlight_forward.1} parent=11 // pred_check_branch
          %818 = sbr.rel (%p816) target = $region52
        $region51: #{spinlight_forward.1} parent=11 // pred_region
          %s820 = ssub.s32 4096, 4096
          %821 = vsyncadd [#allocation8], %s820
          %s822 = sshll.u32 [#allocation9], 4
          %s823 = int_to_ptr.vmem [resolvable:$true] %s822
          %828 = dma.hbm_to_vmem [thread:$0]  %s21, 4096, %s823, [#allocation8], 128, 128, 8
        $region52: #{spinlight_forward.1} parent=11 // pred_fallthru
          _
        // Predicated region
        $region53: #{spinlight_forward.1} parent=11 // pred_check
          %p829 = pneg %p330
        $region54: #{spinlight_forward.1} parent=11 // pred_check_branch
          %831 = sbr.rel (%p829) target = $region56
        $region55: #{spinlight_forward.1} parent=11 // pred_region
          _
        $region56: #{spinlight_forward.1} parent=11 // pred_fallthru
          _
        // Predicated region
        $region57: #{spinlight_forward.1} parent=11 // pred_check
          %p832 = pneg %p351
        $region58: #{spinlight_forward.1} parent=11 // pred_check_branch
          %834 = sbr.rel (%p832) target = $region60
        $region59: #{spinlight_forward.1} parent=11 // pred_region
          %s836 = ssub.s32 4096, 4096
          %837 = vsyncadd [#allocation11], %s836
          %s838 = sshll.u32 [#allocation10], 4
          %s839 = int_to_ptr.vmem [resolvable:$true] %s838
          %844 = dma.hbm_to_vmem [thread:$0]  %s25, 4096, %s839, [#allocation11], 128, 128, 8
        $region60: #{spinlight_forward.1} parent=11 // pred_fallthru
          _
        // Predicated region
        $region61: #{spinlight_forward.1} parent=11 // pred_check
          %p845 = pneg %p372
        $region62: #{spinlight_forward.1} parent=11 // pred_check_branch
          %847 = sbr.rel (%p845) target = $region64
        $region63: #{spinlight_forward.1} parent=11 // pred_region
          _
        $region64: #{spinlight_forward.1} parent=11 // pred_fallthru
          _
        // Predicated region
        $region65: #{spinlight_forward.1} parent=11 // pred_check
          %p848 = pneg %p393
        $region66: #{spinlight_forward.1} parent=11 // pred_check_branch
          %850 = sbr.rel (%p848) target = $region68
        $region67: #{spinlight_forward.1} parent=11 // pred_region
          %s852 = ssub.s32 4096, 4096
          %853 = vsyncadd [#allocation11], %s852
          %s854 = sshll.u32 [#allocation12], 4
          %s855 = int_to_ptr.vmem [resolvable:$true] %s854
          %860 = dma.hbm_to_vmem [thread:$0]  %s29, 4096, %s855, [#allocation11], 128, 128, 8
        $region68: #{spinlight_forward.1} parent=11 // pred_fallthru
          _
        // Predicated region
        $region69: #{spinlight_forward.1} parent=11 // pred_check
          %p861 = pneg %p414
        $region70: #{spinlight_forward.1} parent=11 // pred_check_branch
          %863 = sbr.rel (%p861) target = $region72
        $region71: #{spinlight_forward.1} parent=11 // pred_region
          _
        $region72: #{spinlight_forward.1} parent=11 // pred_fallthru
          _
        // Predicated region
        $region73: #{spinlight_forward.1} parent=11 // pred_check
          %p864 = pneg %p435
        $region74: #{spinlight_forward.1} parent=11 // pred_check_branch
          %866 = sbr.rel (%p864) target = $region76
        $region75: #{spinlight_forward.1} parent=11 // pred_region
          %s868 = ssub.s32 4096, 4096
          %869 = vsyncadd [#allocation14], %s868
          %s870 = sshll.u32 [#allocation13], 4
          %s871 = int_to_ptr.vmem [resolvable:$true] %s870
          %876 = dma.hbm_to_vmem [thread:$0]  %s33, 4096, %s871, [#allocation14], 128, 128, 8
        $region76: #{spinlight_forward.1} parent=11 // pred_fallthru
          _
        // Predicated region
        $region77: #{spinlight_forward.1} parent=11 // pred_check
          %p877 = pneg %p456
        $region78: #{spinlight_forward.1} parent=11 // pred_check_branch
          %879 = sbr.rel (%p877) target = $region80
        $region79: #{spinlight_forward.1} parent=11 // pred_region
          _
        $region80: #{spinlight_forward.1} parent=11 // pred_fallthru
          _
        // Predicated region
        $region81: #{spinlight_forward.1} parent=11 // pred_check
          %p880 = pneg %p477
        $region82: #{spinlight_forward.1} parent=11 // pred_check_branch
          %882 = sbr.rel (%p880) target = $region84
        $region83: #{spinlight_forward.1} parent=11 // pred_region
          _
        $region84: #{spinlight_forward.1} parent=11 // pred_fallthru
          _
        // Predicated region
        $region85: #{spinlight_forward.1} parent=11 // pred_check
          %p883 = pneg %p498
        $region86: #{spinlight_forward.1} parent=11 // pred_check_branch
          %885 = sbr.rel (%p883) target = $region88
        $region87: #{spinlight_forward.1} parent=11 // pred_region
          _
        $region88: #{spinlight_forward.1} parent=11 // pred_fallthru
          _
        // Predicated region
        $region89: #{spinlight_forward.1} parent=11 // pred_check
          %p886 = pneg %p519
        $region90: #{spinlight_forward.1} parent=11 // pred_check_branch
          %888 = sbr.rel (%p886) target = $region92
        $region91: #{spinlight_forward.1} parent=11 // pred_region
          _
        $region92: #{spinlight_forward.1} parent=11 // pred_fallthru
          _
        // Predicated region
        $region93: #{spinlight_forward.1} parent=11 // pred_check
          %p889 = pneg %p540
        $region94: #{spinlight_forward.1} parent=11 // pred_check_branch
          %891 = sbr.rel (%p889) target = $region96
        $region95: #{spinlight_forward.1} parent=11 // pred_region
          _
        $region96: #{spinlight_forward.1} parent=11 // pred_fallthru
          _
        // Predicated region
        $region97: #{spinlight_forward.1} parent=11 // pred_check
          %p892 = pneg %p561
        $region98: #{spinlight_forward.1} parent=11 // pred_check_branch
          %894 = sbr.rel (%p892) target = $region100
        $region99: #{spinlight_forward.1} parent=11 // pred_region
          %s896 = ssub.s32 4096, 4096
          %897 = vsyncadd [#allocation14], %s896
          %s898 = sshll.u32 [#allocation15], 4
          %s899 = int_to_ptr.vmem [resolvable:$true] %s898
          %904 = dma.hbm_to_vmem [thread:$0]  %s45, 4096, %s899, [#allocation14], 128, 128, 8
        $region100: #{spinlight_forward.1} parent=11 // pred_fallthru
          _
        // Predicated region
        $region101: #{spinlight_forward.1} parent=11 // pred_check
          %p905 = pneg %p582
        $region102: #{spinlight_forward.1} parent=11 // pred_check_branch
          %907 = sbr.rel (%p905) target = $region104
        $region103: #{spinlight_forward.1} parent=11 // pred_region
          _
        $region104: #{spinlight_forward.1} parent=11 // pred_fallthru
          _
        // Predicated region
        $region105: #{spinlight_forward.1} parent=11 // pred_check
          %p908 = pneg %p603
        $region106: #{spinlight_forward.1} parent=11 // pred_check_branch
          %910 = sbr.rel (%p908) target = $region108
        $region107: #{spinlight_forward.1} parent=11 // pred_region
          %s912 = ssub.s32 4096, 4096
          %913 = vsyncadd [#allocation17], %s912
          %s914 = sshll.u32 [#allocation16], 4
          %s915 = int_to_ptr.vmem [resolvable:$true] %s914
          %920 = dma.hbm_to_vmem [thread:$0]  %s49, 4096, %s915, [#allocation17], 128, 128, 8
        $region108: #{spinlight_forward.1} parent=11 // pred_fallthru
          _
        // Predicated region
        $region109: #{spinlight_forward.1} parent=11 // pred_check
          %p921 = pneg %p624
        $region110: #{spinlight_forward.1} parent=11 // pred_check_branch
          %923 = sbr.rel (%p921) target = $region112
        $region111: #{spinlight_forward.1} parent=11 // pred_region
          _
        $region112: #{spinlight_forward.1} parent=11 // pred_fallthru
          _
        // Predicated region
        $region113: #{spinlight_forward.1} parent=11 // pred_check
          %p924 = pneg %p645
        $region114: #{spinlight_forward.1} parent=11 // pred_check_branch
          %926 = sbr.rel (%p924) target = $region116
        $region115: #{spinlight_forward.1} parent=11 // pred_region
          %s928 = ssub.s32 4096, 4096
          %929 = vsyncadd [#allocation17], %s928
          %s930 = sshll.u32 [#allocation18], 4
          %s931 = int_to_ptr.vmem [resolvable:$true] %s930
          %936 = dma.hbm_to_vmem [thread:$0]  %s53, 4096, %s931, [#allocation17], 128, 128, 8
        $region116: #{spinlight_forward.1} parent=11 // pred_fallthru
          _
        // Predicated region
        $region117: #{spinlight_forward.1} parent=11 // pred_check
          %p937 = pneg %p666
        $region118: #{spinlight_forward.1} parent=11 // pred_check_branch
          %939 = sbr.rel (%p937) target = $region120
        $region119: #{spinlight_forward.1} parent=11 // pred_region
          _
        $region120: #{spinlight_forward.1} parent=11 // pred_fallthru
          _
        // Predicated region
        $region121: #{spinlight_forward.1} parent=11 // pred_check
          %p940 = pneg %p687
        $region122: #{spinlight_forward.1} parent=11 // pred_check_branch
          %942 = sbr.rel (%p940) target = $region124
        $region123: #{spinlight_forward.1} parent=11 // pred_region
          _
        $region124: #{spinlight_forward.1} parent=11 // pred_fallthru
          _
        // Predicated region
        $region125: #{spinlight_forward.1} parent=11 // pred_check
          %p943 = pneg %p708
        $region126: #{spinlight_forward.1} parent=11 // pred_check_branch
          %945 = sbr.rel (%p943) target = $region128
        $region127: #{spinlight_forward.1} parent=11 // pred_region
          _
        $region128: #{spinlight_forward.1} parent=11 // pred_fallthru
          _
      $region12: #{spinlight_forward.1} parent=5 // pred_fallthru
        _
      %p946 = scmp.lt.s32.totalorder %s73, 2
      // Predicated region
      $region129: #{spinlight_forward.1} parent=5 // pred_check
        %p947 = pneg %p946
      $region130: #{spinlight_forward.1} parent=5 // pred_check_branch
        %949 = sbr.rel (%p947) target = $region132
      $region131: #{spinlight_forward.1} parent=5 // pred_region
        // Predicated region
        $region133: #{spinlight_forward.1} parent=131 // pred_check
          %p950 = pneg %p93
        $region134: #{spinlight_forward.1} parent=131 // pred_check_branch
          %952 = sbr.rel (%p950) target = $region136
        $region135: #{spinlight_forward.1} parent=131 // pred_region
          %s953 = smul.u32 32, %s73
          %p954 = scmp.lt.s32.totalorder %s953, 63
          %s955 = scalar_select %p954, %s953, 63
          %s956 = smul.addr %s955, 4
          %s957 = scalar_lea.vmem %s1, %s956
          %s958 = smul.u32 32, %s73
        $region136: #{spinlight_forward.1} parent=131 // pred_fallthru
          _
      $region132: #{spinlight_forward.1} parent=5 // pred_fallthru
        _
      %p959 = scmp.le.s32.totalorder 1, %s73
      %p960 = scmp.lt.s32.totalorder %s73, 3
      %p961 = pnand %p959, %p960
      %p962 = pneg %p961
      // Predicated region
      $region137: #{spinlight_forward.1} parent=5 // pred_check
        _
      $region138: #{spinlight_forward.1} parent=5 // pred_check_branch
        %964 = sbr.rel (%p961) target = $region140
      $region139: #{spinlight_forward.1} parent=5 // pred_region
        %s965 = ssub.s32 %s73, 1
        // Predicated region
        $region141: #{spinlight_forward.1} parent=139 // pred_check
          %p966 = pneg %p162
        $region142: #{spinlight_forward.1} parent=139 // pred_check_branch
          %968 = sbr.rel (%p966) target = $region144
        $region143: #{spinlight_forward.1} parent=139 // pred_region
          %969 = dma.done [#allocation3], 4096
        $region144: #{spinlight_forward.1} parent=139 // pred_fallthru
          _
        // Predicated region
        $region145: #{spinlight_forward.1} parent=139 // pred_check
          %p970 = pneg %p204
        $region146: #{spinlight_forward.1} parent=139 // pred_check_branch
          %972 = sbr.rel (%p970) target = $region148
        $region147: #{spinlight_forward.1} parent=139 // pred_region
          %973 = dma.done [#allocation5], 4096
        $region148: #{spinlight_forward.1} parent=139 // pred_fallthru
          _
        // Predicated region
        $region149: #{spinlight_forward.1} parent=139 // pred_check
          %p974 = pneg %p246
        $region150: #{spinlight_forward.1} parent=139 // pred_check_branch
          %976 = sbr.rel (%p974) target = $region152
        $region151: #{spinlight_forward.1} parent=139 // pred_region
          %977 = dma.done [#allocation5], 4096
        $region152: #{spinlight_forward.1} parent=139 // pred_fallthru
          _
        // Predicated region
        $region153: #{spinlight_forward.1} parent=139 // pred_check
          %p978 = pneg %p288
        $region154: #{spinlight_forward.1} parent=139 // pred_check_branch
          %980 = sbr.rel (%p978) target = $region156
        $region155: #{spinlight_forward.1} parent=139 // pred_region
          %981 = dma.done [#allocation8], 768
        $region156: #{spinlight_forward.1} parent=139 // pred_fallthru
          _
        // Predicated region
        $region157: #{spinlight_forward.1} parent=139 // pred_check
          %p982 = pneg %p309
        $region158: #{spinlight_forward.1} parent=139 // pred_check_branch
          %984 = sbr.rel (%p982) target = $region160
        $region159: #{spinlight_forward.1} parent=139 // pred_region
          %985 = dma.done [#allocation8], 4096
        $region160: #{spinlight_forward.1} parent=139 // pred_fallthru
          _
        // Predicated region
        $region161: #{spinlight_forward.1} parent=139 // pred_check
          %p986 = pneg %p351
        $region162: #{spinlight_forward.1} parent=139 // pred_check_branch
          %988 = sbr.rel (%p986) target = $region164
        $region163: #{spinlight_forward.1} parent=139 // pred_region
          %989 = dma.done [#allocation11], 4096
        $region164: #{spinlight_forward.1} parent=139 // pred_fallthru
          _
        // Predicated region
        $region165: #{spinlight_forward.1} parent=139 // pred_check
          %p990 = pneg %p393
        $region166: #{spinlight_forward.1} parent=139 // pred_check_branch
          %992 = sbr.rel (%p990) target = $region168
        $region167: #{spinlight_forward.1} parent=139 // pred_region
          %993 = dma.done [#allocation11], 4096
        $region168: #{spinlight_forward.1} parent=139 // pred_fallthru
          _
        // Predicated region
        $region169: #{spinlight_forward.1} parent=139 // pred_check
          %p994 = pneg %p435
        $region170: #{spinlight_forward.1} parent=139 // pred_check_branch
          %996 = sbr.rel (%p994) target = $region172
        $region171: #{spinlight_forward.1} parent=139 // pred_region
          %997 = dma.done [#allocation14], 4096
        $region172: #{spinlight_forward.1} parent=139 // pred_fallthru
          _
        // Predicated region
        $region173: #{spinlight_forward.1} parent=139 // pred_check
          %p998 = pneg %p561
        $region174: #{spinlight_forward.1} parent=139 // pred_check_branch
          %1000 = sbr.rel (%p998) target = $region176
        $region175: #{spinlight_forward.1} parent=139 // pred_region
          %1001 = dma.done [#allocation14], 4096
        $region176: #{spinlight_forward.1} parent=139 // pred_fallthru
          _
        // Predicated region
        $region177: #{spinlight_forward.1} parent=139 // pred_check
          %p1002 = pneg %p603
        $region178: #{spinlight_forward.1} parent=139 // pred_check_branch
          %1004 = sbr.rel (%p1002) target = $region180
        $region179: #{spinlight_forward.1} parent=139 // pred_region
          %1005 = dma.done [#allocation17], 4096
        $region180: #{spinlight_forward.1} parent=139 // pred_fallthru
          _
        // Predicated region
        $region181: #{spinlight_forward.1} parent=139 // pred_check
          %p1006 = pneg %p645
        $region182: #{spinlight_forward.1} parent=139 // pred_check_branch
          %1008 = sbr.rel (%p1006) target = $region184
        $region183: #{spinlight_forward.1} parent=139 // pred_region
          %1009 = dma.done [#allocation17], 4096
        $region184: #{spinlight_forward.1} parent=139 // pred_fallthru
          _
        %s1010 = smul.u32 32, %s78
        %p1011 = scmp.lt.s32.totalorder %s1010, 63
        %s1012 = scalar_select %p1011, %s1010, 63
        %s1013 = smul.addr %s1012, 4
        %s1014 = scalar_lea.vmem %s1, %s1013
        %p1015 = pneg %p99
        %p1016 = pneg %p96
        %p1017 = pneg %p120
        %p1018 = pneg %p117
        %p1019 = pneg %p141
        %p1020 = pneg %p138
        %p1021 = pneg %p162
        %p1022 = pneg %p159
        %p1023 = pneg %p183
        %p1024 = pneg %p180
        %p1025 = pneg %p204
        %p1026 = pneg %p201
        %p1027 = pneg %p225
        %p1028 = pneg %p222
        %p1029 = pneg %p246
        %p1030 = pneg %p243
        %p1031 = pneg %p267
        %p1032 = pneg %p264
        %p1033 = pneg %p288
        %p1034 = pneg %p285
        %p1035 = pneg %p309
        %p1036 = pneg %p306
        %p1037 = pneg %p330
        %p1038 = pneg %p327
        %p1039 = pneg %p351
        %p1040 = pneg %p348
        %p1041 = pneg %p372
        %p1042 = pneg %p369
        %p1043 = pneg %p393
        %p1044 = pneg %p390
        %p1045 = pneg %p414
        %p1046 = pneg %p411
        %p1047 = pneg %p435
        %p1048 = pneg %p432
        %p1049 = pneg %p456
        %p1050 = pneg %p453
        %p1051 = pneg %p477
        %p1052 = pneg %p474
        %p1053 = pneg %p498
        %p1054 = pneg %p495
        %p1055 = pneg %p519
        %p1056 = pneg %p516
        %p1057 = pneg %p540
        %p1058 = pneg %p537
        %p1059 = pneg %p561
        %p1060 = pneg %p558
        %p1061 = pneg %p582
        %p1062 = pneg %p579
        %p1063 = pneg %p603
        %p1064 = pneg %p600
        %p1065 = pneg %p624
        %p1066 = pneg %p621
        %p1067 = pneg %p645
        %p1068 = pneg %p642
        %p1069 = pneg %p666
        %p1070 = pneg %p663
        %p1071 = pneg %p687
        %p1072 = pneg %p684
        %p1073 = pneg %p708
        %p1074 = pneg %p705
        %p1075 = pneg %p734
        %p1076 = pneg %p731
        %s1077 = smul.u32 32, %s78
        %p1078 = scmp.lt.s32.totalorder %s1077, 63
        %s1079 = scalar_select %p1078, %s1077, 63
        %s1080 = smul.addr %s1079, 8
        %s1081 = scalar_lea.vmem %s61, %s1080
        %s1082 = smul.u32 32, %s78
        %p1083 = scmp.lt.s32.totalorder %s1082, 63
        %s1084 = scalar_select %p1083, %s1082, 63
        %s1085 = smul.addr %s1084, 4
        %s1086 = scalar_lea.vmem %s1, %s1085
        %s1087 = smul.u32 32, %s78
        %s1088 = smul.u32 32, %s78
        %p1089 = scmp.lt.s32.totalorder %s1088, 63
        %s1090 = scalar_select %p1089, %s1088, 63
        %s1091 = smul.addr %s1090, 8
        %s1092 = scalar_lea.vmem %s61, %s1091
        %s1093 = smul.u32 32, %s78
        %v1095 = vld [vmem:[%s1086] sm:$0xf]
        %v1096 = vld [vmem:[%s1086 + $0x4] sm:$0xf]
        %v1097 = vld [vmem:[%s1086 + $0x8] sm:$0xf]
        %v1098 = vld [vmem:[%s1086 + $0xc] sm:$0xf]
        %v1099 = vld [vmem:[%s1086 + $0x10] sm:$0xf]
        %v1100 = vld [vmem:[%s1086 + $0x14] sm:$0xf]
        %v1101 = vld [vmem:[%s1086 + $0x18] sm:$0xf]
        %v1102 = vld [vmem:[%s1086 + $0x1c] sm:$0xf]
        %v1103 = vld [vmem:[%s1086 + $0x20] sm:$0xf]
        %v1104 = vld [vmem:[%s1086 + $0x24] sm:$0xf]
        %v1105 = vld [vmem:[%s1086 + $0x28] sm:$0xf]
        %v1106 = vld [vmem:[%s1086 + $0x2c] sm:$0xf]
        %v1107 = vld [vmem:[%s1086 + $0x30] sm:$0xf]
        %v1108 = vld [vmem:[%s1086 + $0x34] sm:$0xf]
        %v1109 = vld [vmem:[%s1086 + $0x38] sm:$0xf]
        %v1110 = vld [vmem:[%s1086 + $0x3c] sm:$0xf]
        %v1111 = vld [vmem:[%s1086 + $0x40] sm:$0xf]
        %v1112 = vld [vmem:[%s1086 + $0x44] sm:$0xf]
        %v1113 = vld [vmem:[%s1086 + $0x48] sm:$0xf]
        %v1114 = vld [vmem:[%s1086 + $0x4c] sm:$0xf]
        %v1115 = vld [vmem:[%s1086 + $0x50] sm:$0xf]
        %v1116 = vld [vmem:[%s1086 + $0x54] sm:$0xf]
        %v1117 = vld [vmem:[%s1086 + $0x58] sm:$0xf]
        %v1118 = vld [vmem:[%s1086 + $0x5c] sm:$0xf]
        %v1119 = vld [vmem:[%s1086 + $0x60] sm:$0xf]
        %v1120 = vld [vmem:[%s1086 + $0x64] sm:$0xf]
        %v1121 = vld [vmem:[%s1086 + $0x68] sm:$0xf]
        %v1122 = vld [vmem:[%s1086 + $0x6c] sm:$0xf]
        %v1123 = vld [vmem:[%s1086 + $0x70] sm:$0xf]
        %v1124 = vld [vmem:[%s1086 + $0x74] sm:$0xf]
        %v1125 = vld [vmem:[%s1086 + $0x78] sm:$0xf]
        %v1126 = vld [vmem:[%s1086 + $0x7c] sm:$0xf]
        %v1127 = vld [vmem:[%s3] sm:$0xff]
        %v1128 = vld [vmem:[%s3 + $0x8] sm:$0xff]
        %v1129 = vld [vmem:[%s3 + $0x10] sm:$0xff]
        %v1130 = vld [vmem:[%s3 + $0x18] sm:$0xff]
        %v1131 = vld [vmem:[%s3 + $0x20] sm:$0xff]
        %v1132 = vld [vmem:[%s3 + $0x28] sm:$0x11]
        %v1133 = vld [vmem:[%s5] sm:$0x3]
        %v1135 = vlaneseq
        %v1136 = vshrl.u32 %v1135, 7
        %v1137 = vsub.s32 0, %v1136
        %v1138 = vrot.slane %v1133, %v1137
        %v1139 = vlaneseq
        %v1140 = vshrl.u32 %v1139, 7
        %v1141 = vsub.s32 1, %v1140
        %v1142 = vrot.slane %v1133, %v1141
        %v1177 = vunpack.c.l.b16 %v1095
        %v1178 = vunpack.c.l.b16 %v1096
        %v1179 = vunpack.c.l.b16 %v1097
        %v1180 = vunpack.c.l.b16 %v1098
        %v1181 = vunpack.c.l.b16 %v1099
        %v1182 = vunpack.c.l.b16 %v1100
        %v1183 = vunpack.c.l.b16 %v1101
        %v1184 = vunpack.c.l.b16 %v1102
        %v1185 = vunpack.c.l.b16 %v1103
        %v1186 = vunpack.c.l.b16 %v1104
        %v1187 = vunpack.c.l.b16 %v1105
        %v1188 = vunpack.c.l.b16 %v1106
        %v1189 = vunpack.c.l.b16 %v1107
        %v1190 = vunpack.c.l.b16 %v1108
        %v1191 = vunpack.c.l.b16 %v1109
        %v1192 = vunpack.c.l.b16 %v1110
        %v1193 = vunpack.c.l.b16 %v1111
        %v1194 = vunpack.c.l.b16 %v1112
        %v1195 = vunpack.c.l.b16 %v1113
        %v1196 = vunpack.c.l.b16 %v1114
        %v1197 = vunpack.c.l.b16 %v1115
        %v1198 = vunpack.c.l.b16 %v1116
        %v1199 = vunpack.c.l.b16 %v1117
        %v1200 = vunpack.c.l.b16 %v1118
        %v1201 = vunpack.c.l.b16 %v1119
        %v1202 = vunpack.c.l.b16 %v1120
        %v1203 = vunpack.c.l.b16 %v1121
        %v1204 = vunpack.c.l.b16 %v1122
        %v1205 = vunpack.c.l.b16 %v1123
        %v1206 = vunpack.c.l.b16 %v1124
        %v1207 = vunpack.c.l.b16 %v1125
        %v1208 = vunpack.c.l.b16 %v1126
        %v1209 = vpack.c.b16 %v1178, %v1177
        %v1210 = vpack.c.b16 %v1180, %v1179
        %v1211 = vpack.c.b16 %v1182, %v1181
        %v1212 = vpack.c.b16 %v1184, %v1183
        %v1213 = vpack.c.b16 %v1186, %v1185
        %v1214 = vpack.c.b16 %v1188, %v1187
        %v1215 = vpack.c.b16 %v1190, %v1189
        %v1216 = vpack.c.b16 %v1192, %v1191
        %v1217 = vpack.c.b16 %v1194, %v1193
        %v1218 = vpack.c.b16 %v1196, %v1195
        %v1219 = vpack.c.b16 %v1198, %v1197
        %v1220 = vpack.c.b16 %v1200, %v1199
        %v1221 = vpack.c.b16 %v1202, %v1201
        %v1222 = vpack.c.b16 %v1204, %v1203
        %v1223 = vpack.c.b16 %v1206, %v1205
        %v1224 = vpack.c.b16 %v1208, %v1207
        %v1231 = vunpack.c.l.b16 %v1127
        %v1232 = vunpack.c.h.b16 %v1127
        %v1233 = vunpack.c.l.b16 %v1128
        %v1234 = vunpack.c.h.b16 %v1128
        %v1235 = vunpack.c.l.b16 %v1129
        %v1236 = vunpack.c.h.b16 %v1129
        %v1237 = vunpack.c.l.b16 %v1130
        %v1238 = vunpack.c.h.b16 %v1130
        %v1239 = vunpack.c.l.b16 %v1131
        %v1240 = vunpack.c.h.b16 %v1131
        %v1241 = vunpack.c.l.b16 %v1132
        %v1242 = vunpack.c.h.b16 %v1132
        %v1243 = vpack.c.b16 %v1233, %v1231
        %v1244 = vpack.c.b16 %v1234, %v1232
        %v1245 = vpack.c.b16 %v1237, %v1235
        %v1246 = vpack.c.b16 %v1238, %v1236
        %v1247 = vpack.c.b16 %v1241, %v1239
        %v1248 = vpack.c.b16 %v1242, %v1240
        %vm1253 = vcmask 343040
        %v1255 = vsel %vm1253, %v1209, 0
        %v1258 = vsel %vm1253, %v1210, 0
        %v1261 = vsel %vm1253, %v1211, 0
        %v1264 = vsel %vm1253, %v1212, 0
        %v1267 = vsel %vm1253, %v1213, 0
        %v1270 = vsel %vm1253, %v1214, 0
        %v1273 = vsel %vm1253, %v1215, 0
        %v1276 = vsel %vm1253, %v1216, 0
        %v1279 = vsel %vm1253, %v1217, 0
        %v1282 = vsel %vm1253, %v1218, 0
        %v1285 = vsel %vm1253, %v1219, 0
        %v1288 = vsel %vm1253, %v1220, 0
        %v1291 = vsel %vm1253, %v1221, 0
        %v1294 = vsel %vm1253, %v1222, 0
        %v1297 = vsel %vm1253, %v1223, 0
        %v1300 = vsel %vm1253, %v1224, 0
        %vm1302 = vcmask 1044480
        %v1304 = vsel %vm1302, %v1247, 0
        %v1307 = vsel %vm1302, %v1248, 0
        %1309 = vmatprep.subr.bf16.mxu0 %v1244
        %1310 = vmatpush1.bf16.msra.mxu0 %v1243
        %1311 = vmatprep.subr.bf16.mxu0 %v1246
        %1312 = vmatpush1.bf16.msra.mxu0 %v1245
        %1313 = vmatprep.subr.bf16.mxu0 %v1307
        %1314 = vmatpush1.bf16.msra.mxu0 %v1304
        %1315 = vmatprep.subr.bf16.mxu0 0
        %1316 = vmatpush1.bf16.msra.mxu0 0
        %1317 = vmatprep.subr.bf16.mxu0 0
        %1318 = vmatpush1.bf16.msra.mxu0 0
        %1319 = vmatprep.subr.bf16.mxu0 0
        %1320 = vmatpush1.bf16.msra.mxu0 0
        %1321 = vmatprep.subr.bf16.mxu0 0
        %1322 = vmatpush1.bf16.msra.mxu0 0
        %1323 = vmatprep.subr.bf16.mxu0 0
        %1324 = vmatpush1.bf16.msra.mxu0 0
        %1325 = vmatprep.subr.bf16.mxu0 0
        %1326 = vmatpush1.bf16.msra.mxu0 0
        %1327 = vmatprep.subr.bf16.mxu0 0
        %1328 = vmatpush1.bf16.msra.mxu0 0
        %1329 = vmatprep.subr.bf16.mxu0 0
        %1330 = vmatpush1.bf16.msra.mxu0 0
        %1331 = vmatprep.subr.bf16.mxu0 0
        %1332 = vmatpush1.bf16.msra.mxu0 0
        %1333 = vmatprep.subr.bf16.mxu0 0
        %1334 = vmatpush1.bf16.msra.mxu0 0
        %1335 = vmatprep.subr.bf16.mxu0 0
        %1336 = vmatpush1.bf16.msra.mxu0 0
        %1337 = vmatprep.subr.bf16.mxu0 0
        %1338 = vmatpush1.bf16.msra.mxu0 0
        %1339 = vmatprep.subr.bf16.mxu0 0
        %1340 = vmatpush1.bf16.msra.mxu0 0
        %1341 = vmatprep.mubr.bf16.mxu0 0
        %1342 = vmatmul.mubr.bf16.gmra.mrb[0].mxu0 %v1255
        %v1343 = vpop.f32.mrb[0].mxu0
        %v1344 = vadd.f32 %v1138, %v1343
        %v1345 = vpop.f32.mrb[0].mxu0
        %v1346 = vadd.f32 %v1142, %v1345
        %v1347 = vpop.f32.mrb[0].mxu0
        %v1348 = vadd.f32 %v1138, %v1347
        %v1349 = vpop.f32.mrb[0].mxu0
        %v1350 = vadd.f32 %v1142, %v1349
        %1351 = vmatprep.mubr.bf16.mxu0 0
        %1352 = vmatmul.mubr.bf16.gmra.mrb[0].mxu0 %v1258
        %v1353 = vpop.f32.mrb[0].mxu0
        %v1354 = vadd.f32 %v1138, %v1353
        %v1355 = vpop.f32.mrb[0].mxu0
        %v1356 = vadd.f32 %v1142, %v1355
        %v1357 = vpop.f32.mrb[0].mxu0
        %v1358 = vadd.f32 %v1138, %v1357
        %v1359 = vpop.f32.mrb[0].mxu0
        %v1360 = vadd.f32 %v1142, %v1359
        %1361 = vmatprep.mubr.bf16.mxu0 0
        %1362 = vmatmul.mubr.bf16.gmra.mrb[0].mxu0 %v1261
        %v1363 = vpop.f32.mrb[0].mxu0
        %v1364 = vadd.f32 %v1138, %v1363
        %v1365 = vpop.f32.mrb[0].mxu0
        %v1366 = vadd.f32 %v1142, %v1365
        %v1367 = vpop.f32.mrb[0].mxu0
        %v1368 = vadd.f32 %v1138, %v1367
        %v1369 = vpop.f32.mrb[0].mxu0
        %v1370 = vadd.f32 %v1142, %v1369
        %1371 = vmatprep.mubr.bf16.mxu0 0
        %1372 = vmatmul.mubr.bf16.gmra.mrb[0].mxu0 %v1264
        %v1373 = vpop.f32.mrb[0].mxu0
        %v1374 = vadd.f32 %v1138, %v1373
        %v1375 = vpop.f32.mrb[0].mxu0
        %v1376 = vadd.f32 %v1142, %v1375
        %v1377 = vpop.f32.mrb[0].mxu0
        %v1378 = vadd.f32 %v1138, %v1377
        %v1379 = vpop.f32.mrb[0].mxu0
        %v1380 = vadd.f32 %v1142, %v1379
        %1381 = vmatprep.mubr.bf16.mxu0 0
        %1382 = vmatmul.mubr.bf16.gmra.mrb[0].mxu0 %v1267
        %v1383 = vpop.f32.mrb[0].mxu0
        %v1384 = vadd.f32 %v1138, %v1383
        %v1385 = vpop.f32.mrb[0].mxu0
        %v1386 = vadd.f32 %v1142, %v1385
        %v1387 = vpop.f32.mrb[0].mxu0
        %v1388 = vadd.f32 %v1138, %v1387
        %v1389 = vpop.f32.mrb[0].mxu0
        %v1390 = vadd.f32 %v1142, %v1389
        %1391 = vmatprep.mubr.bf16.mxu0 0
        %1392 = vmatmul.mubr.bf16.gmra.mrb[0].mxu0 %v1270
        %v1393 = vpop.f32.mrb[0].mxu0
        %v1394 = vadd.f32 %v1138, %v1393
        %v1395 = vpop.f32.mrb[0].mxu0
        %v1396 = vadd.f32 %v1142, %v1395
        %v1397 = vpop.f32.mrb[0].mxu0
        %v1398 = vadd.f32 %v1138, %v1397
        %v1399 = vpop.f32.mrb[0].mxu0
        %v1400 = vadd.f32 %v1142, %v1399
        %1401 = vmatprep.mubr.bf16.mxu0 0
        %1402 = vmatmul.mubr.bf16.gmra.mrb[0].mxu0 %v1273
        %v1403 = vpop.f32.mrb[0].mxu0
        %v1404 = vadd.f32 %v1138, %v1403
        %v1405 = vpop.f32.mrb[0].mxu0
        %v1406 = vadd.f32 %v1142, %v1405
        %v1407 = vpop.f32.mrb[0].mxu0
        %v1408 = vadd.f32 %v1138, %v1407
        %v1409 = vpop.f32.mrb[0].mxu0
        %v1410 = vadd.f32 %v1142, %v1409
        %1411 = vmatprep.mubr.bf16.mxu0 0
        %1412 = vmatmul.mubr.bf16.gmra.mrb[0].mxu0 %v1276
        %v1413 = vpop.f32.mrb[0].mxu0
        %v1414 = vadd.f32 %v1138, %v1413
        %v1415 = vpop.f32.mrb[0].mxu0
        %v1416 = vadd.f32 %v1142, %v1415
        %v1417 = vpop.f32.mrb[0].mxu0
        %v1418 = vadd.f32 %v1138, %v1417
        %v1419 = vpop.f32.mrb[0].mxu0
        %v1420 = vadd.f32 %v1142, %v1419
        %1421 = vmatprep.mubr.bf16.mxu0 0
        %1422 = vmatmul.mubr.bf16.gmra.mrb[0].mxu0 %v1279
        %v1423 = vpop.f32.mrb[0].mxu0
        %v1424 = vadd.f32 %v1138, %v1423
        %v1425 = vpop.f32.mrb[0].mxu0
        %v1426 = vadd.f32 %v1142, %v1425
        %v1427 = vpop.f32.mrb[0].mxu0
        %v1428 = vadd.f32 %v1138, %v1427
        %v1429 = vpop.f32.mrb[0].mxu0
        %v1430 = vadd.f32 %v1142, %v1429
        %1431 = vmatprep.mubr.bf16.mxu0 0
        %1432 = vmatmul.mubr.bf16.gmra.mrb[0].mxu0 %v1282
        %v1433 = vpop.f32.mrb[0].mxu0
        %v1434 = vadd.f32 %v1138, %v1433
        %v1435 = vpop.f32.mrb[0].mxu0
        %v1436 = vadd.f32 %v1142, %v1435
        %v1437 = vpop.f32.mrb[0].mxu0
        %v1438 = vadd.f32 %v1138, %v1437
        %v1439 = vpop.f32.mrb[0].mxu0
        %v1440 = vadd.f32 %v1142, %v1439
        %1441 = vmatprep.mubr.bf16.mxu0 0
        %1442 = vmatmul.mubr.bf16.gmra.mrb[0].mxu0 %v1285
        %v1443 = vpop.f32.mrb[0].mxu0
        %v1444 = vadd.f32 %v1138, %v1443
        %v1445 = vpop.f32.mrb[0].mxu0
        %v1446 = vadd.f32 %v1142, %v1445
        %v1447 = vpop.f32.mrb[0].mxu0
        %v1448 = vadd.f32 %v1138, %v1447
        %v1449 = vpop.f32.mrb[0].mxu0
        %v1450 = vadd.f32 %v1142, %v1449
        %1451 = vmatprep.mubr.bf16.mxu0 0
        %1452 = vmatmul.mubr.bf16.gmra.mrb[0].mxu0 %v1288
        %v1453 = vpop.f32.mrb[0].mxu0
        %v1454 = vadd.f32 %v1138, %v1453
        %v1455 = vpop.f32.mrb[0].mxu0
        %v1456 = vadd.f32 %v1142, %v1455
        %v1457 = vpop.f32.mrb[0].mxu0
        %v1458 = vadd.f32 %v1138, %v1457
        %v1459 = vpop.f32.mrb[0].mxu0
        %v1460 = vadd.f32 %v1142, %v1459
        %1461 = vmatprep.mubr.bf16.mxu0 0
        %1462 = vmatmul.mubr.bf16.gmra.mrb[0].mxu0 %v1291
        %v1463 = vpop.f32.mrb[0].mxu0
        %v1464 = vadd.f32 %v1138, %v1463
        %v1465 = vpop.f32.mrb[0].mxu0
        %v1466 = vadd.f32 %v1142, %v1465
        %v1467 = vpop.f32.mrb[0].mxu0
        %v1468 = vadd.f32 %v1138, %v1467
        %v1469 = vpop.f32.mrb[0].mxu0
        %v1470 = vadd.f32 %v1142, %v1469
        %1471 = vmatprep.mubr.bf16.mxu0 0
        %1472 = vmatmul.mubr.bf16.gmra.mrb[0].mxu0 %v1294
        %v1473 = vpop.f32.mrb[0].mxu0
        %v1474 = vadd.f32 %v1138, %v1473
        %v1475 = vpop.f32.mrb[0].mxu0
        %v1476 = vadd.f32 %v1142, %v1475
        %v1477 = vpop.f32.mrb[0].mxu0
        %v1478 = vadd.f32 %v1138, %v1477
        %v1479 = vpop.f32.mrb[0].mxu0
        %v1480 = vadd.f32 %v1142, %v1479
        %1481 = vmatprep.mubr.bf16.mxu0 0
        %1482 = vmatmul.mubr.bf16.gmra.mrb[0].mxu0 %v1297
        %v1483 = vpop.f32.mrb[0].mxu0
        %v1484 = vadd.f32 %v1138, %v1483
        %v1485 = vpop.f32.mrb[0].mxu0
        %v1486 = vadd.f32 %v1142, %v1485
        %v1487 = vpop.f32.mrb[0].mxu0
        %v1488 = vadd.f32 %v1138, %v1487
        %v1489 = vpop.f32.mrb[0].mxu0
        %v1490 = vadd.f32 %v1142, %v1489
        %1491 = vmatprep.mubr.bf16.mxu0 0
        %1492 = vmatmul.mubr.bf16.gmra.mrb[0].mxu0 %v1300
        %v1493 = vpop.f32.mrb[0].mxu0
        %v1494 = vadd.f32 %v1138, %v1493
        %v1495 = vpop.f32.mrb[0].mxu0
        %v1496 = vadd.f32 %v1142, %v1495
        %v1497 = vpop.f32.mrb[0].mxu0
        %v1498 = vadd.f32 %v1138, %v1497
        %v1499 = vpop.f32.mrb[0].mxu0
        %v1500 = vadd.f32 %v1142, %v1499
        %1501 = vdwg.mxu0
        %v1502 = vmax.f32 %v1344, 0.0
        %v1503 = vmax.f32 %v1346, 0.0
        %v1504 = vmax.f32 %v1348, 0.0
        %v1505 = vmax.f32 %v1350, 0.0
        %v1506 = vmax.f32 %v1354, 0.0
        %v1507 = vmax.f32 %v1356, 0.0
        %v1508 = vmax.f32 %v1358, 0.0
        %v1509 = vmax.f32 %v1360, 0.0
        %v1510 = vmax.f32 %v1364, 0.0
        %v1511 = vmax.f32 %v1366, 0.0
        %v1512 = vmax.f32 %v1368, 0.0
        %v1513 = vmax.f32 %v1370, 0.0
        %v1514 = vmax.f32 %v1374, 0.0
        %v1515 = vmax.f32 %v1376, 0.0
        %v1516 = vmax.f32 %v1378, 0.0
        %v1517 = vmax.f32 %v1380, 0.0
        %v1518 = vmax.f32 %v1384, 0.0
        %v1519 = vmax.f32 %v1386, 0.0
        %v1520 = vmax.f32 %v1388, 0.0
        %v1521 = vmax.f32 %v1390, 0.0
        %v1522 = vmax.f32 %v1394, 0.0
        %v1523 = vmax.f32 %v1396, 0.0
        %v1524 = vmax.f32 %v1398, 0.0
        %v1525 = vmax.f32 %v1400, 0.0
        %v1526 = vmax.f32 %v1404, 0.0
        %v1527 = vmax.f32 %v1406, 0.0
        %v1528 = vmax.f32 %v1408, 0.0
        %v1529 = vmax.f32 %v1410, 0.0
        %v1530 = vmax.f32 %v1414, 0.0
        %v1531 = vmax.f32 %v1416, 0.0
        %v1532 = vmax.f32 %v1418, 0.0
        %v1533 = vmax.f32 %v1420, 0.0
        %v1534 = vmax.f32 %v1424, 0.0
        %v1535 = vmax.f32 %v1426, 0.0
        %v1536 = vmax.f32 %v1428, 0.0
        %v1537 = vmax.f32 %v1430, 0.0
        %v1538 = vmax.f32 %v1434, 0.0
        %v1539 = vmax.f32 %v1436, 0.0
        %v1540 = vmax.f32 %v1438, 0.0
        %v1541 = vmax.f32 %v1440, 0.0
        %v1542 = vmax.f32 %v1444, 0.0
        %v1543 = vmax.f32 %v1446, 0.0
        %v1544 = vmax.f32 %v1448, 0.0
        %v1545 = vmax.f32 %v1450, 0.0
        %v1546 = vmax.f32 %v1454, 0.0
        %v1547 = vmax.f32 %v1456, 0.0
        %v1548 = vmax.f32 %v1458, 0.0
        %v1549 = vmax.f32 %v1460, 0.0
        %v1550 = vmax.f32 %v1464, 0.0
        %v1551 = vmax.f32 %v1466, 0.0
        %v1552 = vmax.f32 %v1468, 0.0
        %v1553 = vmax.f32 %v1470, 0.0
        %v1554 = vmax.f32 %v1474, 0.0
        %v1555 = vmax.f32 %v1476, 0.0
        %v1556 = vmax.f32 %v1478, 0.0
        %v1557 = vmax.f32 %v1480, 0.0
        %v1558 = vmax.f32 %v1484, 0.0
        %v1559 = vmax.f32 %v1486, 0.0
        %v1560 = vmax.f32 %v1488, 0.0
        %v1561 = vmax.f32 %v1490, 0.0
        %v1562 = vmax.f32 %v1494, 0.0
        %v1563 = vmax.f32 %v1496, 0.0
        %v1564 = vmax.f32 %v1498, 0.0
        %v1565 = vmax.f32 %v1500, 0.0
        %v1566 = vld [vmem:[#allocation2] sm:$0xff]
        %v1567 = vld [vmem:[#allocation2 + $0x8] sm:$0xff]
        %v1568 = vld [vmem:[#allocation2 + $0x10] sm:$0xff]
        %v1569 = vld [vmem:[#allocation2 + $0x18] sm:$0xff]
        %v1570 = vld [vmem:[#allocation2 + $0x20] sm:$0xff]
        %v1571 = vld [vmem:[#allocation2 + $0x28] sm:$0xff]
        %v1572 = vld [vmem:[#allocation2 + $0x30] sm:$0xff]
        %v1573 = vld [vmem:[#allocation2 + $0x38] sm:$0xff]
        %v1574 = vld [vmem:[#allocation2 + $0x40] sm:$0xff]
        %v1575 = vld [vmem:[#allocation2 + $0x48] sm:$0xff]
        %v1576 = vld [vmem:[#allocation2 + $0x50] sm:$0xff]
        %v1577 = vld [vmem:[#allocation2 + $0x58] sm:$0xff]
        %v1578 = vld [vmem:[#allocation2 + $0x60] sm:$0xff]
        %v1579 = vld [vmem:[#allocation2 + $0x68] sm:$0xff]
        %v1580 = vld [vmem:[#allocation2 + $0x70] sm:$0xff]
        %v1581 = vld [vmem:[#allocation2 + $0x78] sm:$0xff]
        %v1582 = vld [vmem:[#allocation2 + $0x80] sm:$0xff]
        %v1583 = vld [vmem:[#allocation2 + $0x88] sm:$0xff]
        %v1584 = vld [vmem:[#allocation2 + $0x90] sm:$0xff]
        %v1585 = vld [vmem:[#allocation2 + $0x98] sm:$0xff]
        %v1586 = vld [vmem:[#allocation2 + $0xa0] sm:$0xff]
        %v1587 = vld [vmem:[#allocation2 + $0xa8] sm:$0xff]
        %v1588 = vld [vmem:[#allocation2 + $0xb0] sm:$0xff]
        %v1589 = vld [vmem:[#allocation2 + $0xb8] sm:$0xff]
        %v1590 = vld [vmem:[#allocation2 + $0xc0] sm:$0xff]
        %v1591 = vld [vmem:[#allocation2 + $0xc8] sm:$0xff]
        %v1592 = vld [vmem:[#allocation2 + $0xd0] sm:$0xff]
        %v1593 = vld [vmem:[#allocation2 + $0xd8] sm:$0xff]
        %v1594 = vld [vmem:[#allocation2 + $0xe0] sm:$0xff]
        %v1595 = vld [vmem:[#allocation2 + $0xe8] sm:$0xff]
        %v1596 = vld [vmem:[#allocation2 + $0xf0] sm:$0xff]
        %v1597 = vld [vmem:[#allocation2 + $0xf8] sm:$0xff]
        %v1598 = vld [vmem:[%s9] sm:$0x3]
        %v1599 = vpack.c.bf16 %v1504, %v1502
        %v1600 = vpack.c.bf16 %v1505, %v1503
        %v1601 = vpack.c.bf16 %v1508, %v1506
        %v1602 = vpack.c.bf16 %v1509, %v1507
        %v1603 = vpack.c.bf16 %v1512, %v1510
        %v1604 = vpack.c.bf16 %v1513, %v1511
        %v1605 = vpack.c.bf16 %v1516, %v1514
        %v1606 = vpack.c.bf16 %v1517, %v1515
        %v1607 = vpack.c.bf16 %v1520, %v1518
        %v1608 = vpack.c.bf16 %v1521, %v1519
        %v1609 = vpack.c.bf16 %v1524, %v1522
        %v1610 = vpack.c.bf16 %v1525, %v1523
        %v1611 = vpack.c.bf16 %v1528, %v1526
        %v1612 = vpack.c.bf16 %v1529, %v1527
        %v1613 = vpack.c.bf16 %v1532, %v1530
        %v1614 = vpack.c.bf16 %v1533, %v1531
        %v1615 = vpack.c.bf16 %v1536, %v1534
        %v1616 = vpack.c.bf16 %v1537, %v1535
        %v1617 = vpack.c.bf16 %v1540, %v1538
        %v1618 = vpack.c.bf16 %v1541, %v1539
        %v1619 = vpack.c.bf16 %v1544, %v1542
        %v1620 = vpack.c.bf16 %v1545, %v1543
        %v1621 = vpack.c.bf16 %v1548, %v1546
        %v1622 = vpack.c.bf16 %v1549, %v1547
        %v1623 = vpack.c.bf16 %v1552, %v1550
        %v1624 = vpack.c.bf16 %v1553, %v1551
        %v1625 = vpack.c.bf16 %v1556, %v1554
        %v1626 = vpack.c.bf16 %v1557, %v1555
        %v1627 = vpack.c.bf16 %v1560, %v1558
        %v1628 = vpack.c.bf16 %v1561, %v1559
        %v1629 = vpack.c.bf16 %v1564, %v1562
        %v1630 = vpack.c.bf16 %v1565, %v1563
        %v1632 = vlaneseq
        %v1633 = vshrl.u32 %v1632, 7
        %v1634 = vsub.s32 0, %v1633
        %v1635 = vrot.slane %v1598, %v1634
        %v1636 = vlaneseq
        %v1637 = vshrl.u32 %v1636, 7
        %v1638 = vsub.s32 1, %v1637
        %v1639 = vrot.slane %v1598, %v1638
        %v1674 = vunpack.c.l.b16 %v1566
        %v1675 = vunpack.c.h.b16 %v1566
        %v1676 = vunpack.c.l.b16 %v1567
        %v1677 = vunpack.c.h.b16 %v1567
        %v1678 = vunpack.c.l.b16 %v1568
        %v1679 = vunpack.c.h.b16 %v1568
        %v1680 = vunpack.c.l.b16 %v1569
        %v1681 = vunpack.c.h.b16 %v1569
        %v1682 = vunpack.c.l.b16 %v1570
        %v1683 = vunpack.c.h.b16 %v1570
        %v1684 = vunpack.c.l.b16 %v1571
        %v1685 = vunpack.c.h.b16 %v1571
        %v1686 = vunpack.c.l.b16 %v1572
        %v1687 = vunpack.c.h.b16 %v1572
        %v1688 = vunpack.c.l.b16 %v1573
        %v1689 = vunpack.c.h.b16 %v1573
        %v1690 = vunpack.c.l.b16 %v1574
        %v1691 = vunpack.c.h.b16 %v1574
        %v1692 = vunpack.c.l.b16 %v1575
        %v1693 = vunpack.c.h.b16 %v1575
        %v1694 = vunpack.c.l.b16 %v1576
        %v1695 = vunpack.c.h.b16 %v1576
        %v1696 = vunpack.c.l.b16 %v1577
        %v1697 = vunpack.c.h.b16 %v1577
        %v1698 = vunpack.c.l.b16 %v1578
        %v1699 = vunpack.c.h.b16 %v1578
        %v1700 = vunpack.c.l.b16 %v1579
        %v1701 = vunpack.c.h.b16 %v1579
        %v1702 = vunpack.c.l.b16 %v1580
        %v1703 = vunpack.c.h.b16 %v1580
        %v1704 = vunpack.c.l.b16 %v1581
        %v1705 = vunpack.c.h.b16 %v1581
        %v1706 = vunpack.c.l.b16 %v1582
        %v1707 = vunpack.c.h.b16 %v1582
        %v1708 = vunpack.c.l.b16 %v1583
        %v1709 = vunpack.c.h.b16 %v1583
        %v1710 = vunpack.c.l.b16 %v1584
        %v1711 = vunpack.c.h.b16 %v1584
        %v1712 = vunpack.c.l.b16 %v1585
        %v1713 = vunpack.c.h.b16 %v1585
        %v1714 = vunpack.c.l.b16 %v1586
        %v1715 = vunpack.c.h.b16 %v1586
        %v1716 = vunpack.c.l.b16 %v1587
        %v1717 = vunpack.c.h.b16 %v1587
        %v1718 = vunpack.c.l.b16 %v1588
        %v1719 = vunpack.c.h.b16 %v1588
        %v1720 = vunpack.c.l.b16 %v1589
        %v1721 = vunpack.c.h.b16 %v1589
        %v1722 = vunpack.c.l.b16 %v1590
        %v1723 = vunpack.c.h.b16 %v1590
        %v1724 = vunpack.c.l.b16 %v1591
        %v1725 = vunpack.c.h.b16 %v1591
        %v1726 = vunpack.c.l.b16 %v1592
        %v1727 = vunpack.c.h.b16 %v1592
        %v1728 = vunpack.c.l.b16 %v1593
        %v1729 = vunpack.c.h.b16 %v1593
        %v1730 = vunpack.c.l.b16 %v1594
        %v1731 = vunpack.c.h.b16 %v1594
        %v1732 = vunpack.c.l.b16 %v1595
        %v1733 = vunpack.c.h.b16 %v1595
        %v1734 = vunpack.c.l.b16 %v1596
        %v1735 = vunpack.c.h.b16 %v1596
        %v1736 = vunpack.c.l.b16 %v1597
        %v1737 = vunpack.c.h.b16 %v1597
        %v1738 = vpack.c.b16 %v1676, %v1674
        %v1739 = vpack.c.b16 %v1677, %v1675
        %v1740 = vpack.c.b16 %v1680, %v1678
        %v1741 = vpack.c.b16 %v1681, %v1679
        %v1742 = vpack.c.b16 %v1684, %v1682
        %v1743 = vpack.c.b16 %v1685, %v1683
        %v1744 = vpack.c.b16 %v1688, %v1686
        %v1745 = vpack.c.b16 %v1689, %v1687
        %v1746 = vpack.c.b16 %v1692, %v1690
        %v1747 = vpack.c.b16 %v1693, %v1691
        %v1748 = vpack.c.b16 %v1696, %v1694
        %v1749 = vpack.c.b16 %v1697, %v1695
        %v1750 = vpack.c.b16 %v1700, %v1698
        %v1751 = vpack.c.b16 %v1701, %v1699
        %v1752 = vpack.c.b16 %v1704, %v1702
        %v1753 = vpack.c.b16 %v1705, %v1703
        %v1754 = vpack.c.b16 %v1708, %v1706
        %v1755 = vpack.c.b16 %v1709, %v1707
        %v1756 = vpack.c.b16 %v1712, %v1710
        %v1757 = vpack.c.b16 %v1713, %v1711
        %v1758 = vpack.c.b16 %v1716, %v1714
        %v1759 = vpack.c.b16 %v1717, %v1715
        %v1760 = vpack.c.b16 %v1720, %v1718
        %v1761 = vpack.c.b16 %v1721, %v1719
        %v1762 = vpack.c.b16 %v1724, %v1722
        %v1763 = vpack.c.b16 %v1725, %v1723
        %v1764 = vpack.c.b16 %v1728, %v1726
        %v1765 = vpack.c.b16 %v1729, %v1727
        %v1766 = vpack.c.b16 %v1732, %v1730
        %v1767 = vpack.c.b16 %v1733, %v1731
        %v1768 = vpack.c.b16 %v1736, %v1734
        %v1769 = vpack.c.b16 %v1737, %v1735
        %1802 = vmatprep.subr.bf16.mxu0 %v1739
        %1803 = vmatpush1.bf16.msra.mxu0 %v1738
        %1804 = vmatprep.subr.bf16.mxu0 %v1741
        %1805 = vmatpush1.bf16.msra.mxu0 %v1740
        %1806 = vmatprep.subr.bf16.mxu0 %v1743
        %1807 = vmatpush1.bf16.msra.mxu0 %v1742
        %1808 = vmatprep.subr.bf16.mxu0 %v1745
        %1809 = vmatpush1.bf16.msra.mxu0 %v1744
        %1810 = vmatprep.subr.bf16.mxu0 %v1747
        %1811 = vmatpush1.bf16.msra.mxu0 %v1746
        %1812 = vmatprep.subr.bf16.mxu0 %v1749
        %1813 = vmatpush1.bf16.msra.mxu0 %v1748
        %1814 = vmatprep.subr.bf16.mxu0 %v1751
        %1815 = vmatpush1.bf16.msra.mxu0 %v1750
        %1816 = vmatprep.subr.bf16.mxu0 %v1753
        %1817 = vmatpush1.bf16.msra.mxu0 %v1752
        %1818 = vmatprep.subr.bf16.mxu0 %v1755
        %1819 = vmatpush1.bf16.msra.mxu0 %v1754
        %1820 = vmatprep.subr.bf16.mxu0 %v1757
        %1821 = vmatpush1.bf16.msra.mxu0 %v1756
        %1822 = vmatprep.subr.bf16.mxu0 %v1759
        %1823 = vmatpush1.bf16.msra.mxu0 %v1758
        %1824 = vmatprep.subr.bf16.mxu0 %v1761
        %1825 = vmatpush1.bf16.msra.mxu0 %v1760
        %1826 = vmatprep.subr.bf16.mxu0 %v1763
        %1827 = vmatpush1.bf16.msra.mxu0 %v1762
        %1828 = vmatprep.subr.bf16.mxu0 %v1765
        %1829 = vmatpush1.bf16.msra.mxu0 %v1764
        %1830 = vmatprep.subr.bf16.mxu0 %v1767
        %1831 = vmatpush1.bf16.msra.mxu0 %v1766
        %1832 = vmatprep.subr.bf16.mxu0 %v1769
        %1833 = vmatpush1.bf16.msra.mxu0 %v1768
        %1834 = vmatprep.mubr.bf16.mxu0 %v1600
        %1835 = vmatmul.mubr.bf16.gmra.mrb[0].mxu0 %v1599
        %v1836 = vpop.f32.mrb[0].mxu0
        %v1837 = vadd.f32 %v1635, %v1836
        %v1838 = vpop.f32.mrb[0].mxu0
        %v1839 = vadd.f32 %v1639, %v1838
        %v1840 = vpop.f32.mrb[0].mxu0
        %v1841 = vadd.f32 %v1635, %v1840
        %v1842 = vpop.f32.mrb[0].mxu0
        %v1843 = vadd.f32 %v1639, %v1842
        %1844 = vmatprep.mubr.bf16.mxu0 %v1602
        %1845 = vmatmul.mubr.bf16.gmra.mrb[0].mxu0 %v1601
        %v1846 = vpop.f32.mrb[0].mxu0
        %v1847 = vadd.f32 %v1635, %v1846
        %v1848 = vpop.f32.mrb[0].mxu0
        %v1849 = vadd.f32 %v1639, %v1848
        %v1850 = vpop.f32.mrb[0].mxu0
        %v1851 = vadd.f32 %v1635, %v1850
        %v1852 = vpop.f32.mrb[0].mxu0
        %v1853 = vadd.f32 %v1639, %v1852
        %1854 = vmatprep.mubr.bf16.mxu0 %v1604
        %1855 = vmatmul.mubr.bf16.gmra.mrb[0].mxu0 %v1603
        %v1856 = vpop.f32.mrb[0].mxu0
        %v1857 = vadd.f32 %v1635, %v1856
        %v1858 = vpop.f32.mrb[0].mxu0
        %v1859 = vadd.f32 %v1639, %v1858
        %v1860 = vpop.f32.mrb[0].mxu0
        %v1861 = vadd.f32 %v1635, %v1860
        %v1862 = vpop.f32.mrb[0].mxu0
        %v1863 = vadd.f32 %v1639, %v1862
        %1864 = vmatprep.mubr.bf16.mxu0 %v1606
        %1865 = vmatmul.mubr.bf16.gmra.mrb[0].mxu0 %v1605
        %v1866 = vpop.f32.mrb[0].mxu0
        %v1867 = vadd.f32 %v1635, %v1866
        %v1868 = vpop.f32.mrb[0].mxu0
        %v1869 = vadd.f32 %v1639, %v1868
        %v1870 = vpop.f32.mrb[0].mxu0
        %v1871 = vadd.f32 %v1635, %v1870
        %v1872 = vpop.f32.mrb[0].mxu0
        %v1873 = vadd.f32 %v1639, %v1872
        %1874 = vmatprep.mubr.bf16.mxu0 %v1608
        %1875 = vmatmul.mubr.bf16.gmra.mrb[0].mxu0 %v1607
        %v1876 = vpop.f32.mrb[0].mxu0
        %v1877 = vadd.f32 %v1635, %v1876
        %v1878 = vpop.f32.mrb[0].mxu0
        %v1879 = vadd.f32 %v1639, %v1878
        %v1880 = vpop.f32.mrb[0].mxu0
        %v1881 = vadd.f32 %v1635, %v1880
        %v1882 = vpop.f32.mrb[0].mxu0
        %v1883 = vadd.f32 %v1639, %v1882
        %1884 = vmatprep.mubr.bf16.mxu0 %v1610
        %1885 = vmatmul.mubr.bf16.gmra.mrb[0].mxu0 %v1609
        %v1886 = vpop.f32.mrb[0].mxu0
        %v1887 = vadd.f32 %v1635, %v1886
        %v1888 = vpop.f32.mrb[0].mxu0
        %v1889 = vadd.f32 %v1639, %v1888
        %v1890 = vpop.f32.mrb[0].mxu0
        %v1891 = vadd.f32 %v1635, %v1890
        %v1892 = vpop.f32.mrb[0].mxu0
        %v1893 = vadd.f32 %v1639, %v1892
        %1894 = vmatprep.mubr.bf16.mxu0 %v1612
        %1895 = vmatmul.mubr.bf16.gmra.mrb[0].mxu0 %v1611
        %v1896 = vpop.f32.mrb[0].mxu0
        %v1897 = vadd.f32 %v1635, %v1896
        %v1898 = vpop.f32.mrb[0].mxu0
        %v1899 = vadd.f32 %v1639, %v1898
        %v1900 = vpop.f32.mrb[0].mxu0
        %v1901 = vadd.f32 %v1635, %v1900
        %v1902 = vpop.f32.mrb[0].mxu0
        %v1903 = vadd.f32 %v1639, %v1902
        %1904 = vmatprep.mubr.bf16.mxu0 %v1614
        %1905 = vmatmul.mubr.bf16.gmra.mrb[0].mxu0 %v1613
        %v1906 = vpop.f32.mrb[0].mxu0
        %v1907 = vadd.f32 %v1635, %v1906
        %v1908 = vpop.f32.mrb[0].mxu0
        %v1909 = vadd.f32 %v1639, %v1908
        %v1910 = vpop.f32.mrb[0].mxu0
        %v1911 = vadd.f32 %v1635, %v1910
        %v1912 = vpop.f32.mrb[0].mxu0
        %v1913 = vadd.f32 %v1639, %v1912
        %1914 = vmatprep.mubr.bf16.mxu0 %v1616
        %1915 = vmatmul.mubr.bf16.gmra.mrb[0].mxu0 %v1615
        %v1916 = vpop.f32.mrb[0].mxu0
        %v1917 = vadd.f32 %v1635, %v1916
        %v1918 = vpop.f32.mrb[0].mxu0
        %v1919 = vadd.f32 %v1639, %v1918
        %v1920 = vpop.f32.mrb[0].mxu0
        %v1921 = vadd.f32 %v1635, %v1920
        %v1922 = vpop.f32.mrb[0].mxu0
        %v1923 = vadd.f32 %v1639, %v1922
        %1924 = vmatprep.mubr.bf16.mxu0 %v1618
        %1925 = vmatmul.mubr.bf16.gmra.mrb[0].mxu0 %v1617
        %v1926 = vpop.f32.mrb[0].mxu0
        %v1927 = vadd.f32 %v1635, %v1926
        %v1928 = vpop.f32.mrb[0].mxu0
        %v1929 = vadd.f32 %v1639, %v1928
        %v1930 = vpop.f32.mrb[0].mxu0
        %v1931 = vadd.f32 %v1635, %v1930
        %v1932 = vpop.f32.mrb[0].mxu0
        %v1933 = vadd.f32 %v1639, %v1932
        %1934 = vmatprep.mubr.bf16.mxu0 %v1620
        %1935 = vmatmul.mubr.bf16.gmra.mrb[0].mxu0 %v1619
        %v1936 = vpop.f32.mrb[0].mxu0
        %v1937 = vadd.f32 %v1635, %v1936
        %v1938 = vpop.f32.mrb[0].mxu0
        %v1939 = vadd.f32 %v1639, %v1938
        %v1940 = vpop.f32.mrb[0].mxu0
        %v1941 = vadd.f32 %v1635, %v1940
        %v1942 = vpop.f32.mrb[0].mxu0
        %v1943 = vadd.f32 %v1639, %v1942
        %1944 = vmatprep.mubr.bf16.mxu0 %v1622
        %1945 = vmatmul.mubr.bf16.gmra.mrb[0].mxu0 %v1621
        %v1946 = vpop.f32.mrb[0].mxu0
        %v1947 = vadd.f32 %v1635, %v1946
        %v1948 = vpop.f32.mrb[0].mxu0
        %v1949 = vadd.f32 %v1639, %v1948
        %v1950 = vpop.f32.mrb[0].mxu0
        %v1951 = vadd.f32 %v1635, %v1950
        %v1952 = vpop.f32.mrb[0].mxu0
        %v1953 = vadd.f32 %v1639, %v1952
        %1954 = vmatprep.mubr.bf16.mxu0 %v1624
        %1955 = vmatmul.mubr.bf16.gmra.mrb[0].mxu0 %v1623
        %v1956 = vpop.f32.mrb[0].mxu0
        %v1957 = vadd.f32 %v1635, %v1956
        %v1958 = vpop.f32.mrb[0].mxu0
        %v1959 = vadd.f32 %v1639, %v1958
        %v1960 = vpop.f32.mrb[0].mxu0
        %v1961 = vadd.f32 %v1635, %v1960
        %v1962 = vpop.f32.mrb[0].mxu0
        %v1963 = vadd.f32 %v1639, %v1962
        %1964 = vmatprep.mubr.bf16.mxu0 %v1626
        %1965 = vmatmul.mubr.bf16.gmra.mrb[0].mxu0 %v1625
        %v1966 = vpop.f32.mrb[0].mxu0
        %v1967 = vadd.f32 %v1635, %v1966
        %v1968 = vpop.f32.mrb[0].mxu0
        %v1969 = vadd.f32 %v1639, %v1968
        %v1970 = vpop.f32.mrb[0].mxu0
        %v1971 = vadd.f32 %v1635, %v1970
        %v1972 = vpop.f32.mrb[0].mxu0
        %v1973 = vadd.f32 %v1639, %v1972
        %1974 = vmatprep.mubr.bf16.mxu0 %v1628
        %1975 = vmatmul.mubr.bf16.gmra.mrb[0].mxu0 %v1627
        %v1976 = vpop.f32.mrb[0].mxu0
        %v1977 = vadd.f32 %v1635, %v1976
        %v1978 = vpop.f32.mrb[0].mxu0
        %v1979 = vadd.f32 %v1639, %v1978
        %v1980 = vpop.f32.mrb[0].mxu0
        %v1981 = vadd.f32 %v1635, %v1980
        %v1982 = vpop.f32.mrb[0].mxu0
        %v1983 = vadd.f32 %v1639, %v1982
        %1984 = vmatprep.mubr.bf16.mxu0 %v1630
        %1985 = vmatmul.mubr.bf16.gmra.mrb[0].mxu0 %v1629
        %v1986 = vpop.f32.mrb[0].mxu0
        %v1987 = vadd.f32 %v1635, %v1986
        %v1988 = vpop.f32.mrb[0].mxu0
        %v1989 = vadd.f32 %v1639, %v1988
        %v1990 = vpop.f32.mrb[0].mxu0
        %v1991 = vadd.f32 %v1635, %v1990
        %v1992 = vpop.f32.mrb[0].mxu0
        %v1993 = vadd.f32 %v1639, %v1992
        %1994 = vdwg.mxu0
        %v1995 = vmax.f32 %v1837, 0.0
        %v1996 = vmax.f32 %v1839, 0.0
        %v1997 = vmax.f32 %v1841, 0.0
        %v1998 = vmax.f32 %v1843, 0.0
        %v1999 = vmax.f32 %v1847, 0.0
        %v2000 = vmax.f32 %v1849, 0.0
        %v2001 = vmax.f32 %v1851, 0.0
        %v2002 = vmax.f32 %v1853, 0.0
        %v2003 = vmax.f32 %v1857, 0.0
        %v2004 = vmax.f32 %v1859, 0.0
        %v2005 = vmax.f32 %v1861, 0.0
        %v2006 = vmax.f32 %v1863, 0.0
        %v2007 = vmax.f32 %v1867, 0.0
        %v2008 = vmax.f32 %v1869, 0.0
        %v2009 = vmax.f32 %v1871, 0.0
        %v2010 = vmax.f32 %v1873, 0.0
        %v2011 = vmax.f32 %v1877, 0.0
        %v2012 = vmax.f32 %v1879, 0.0
        %v2013 = vmax.f32 %v1881, 0.0
        %v2014 = vmax.f32 %v1883, 0.0
        %v2015 = vmax.f32 %v1887, 0.0
        %v2016 = vmax.f32 %v1889, 0.0
        %v2017 = vmax.f32 %v1891, 0.0
        %v2018 = vmax.f32 %v1893, 0.0
        %v2019 = vmax.f32 %v1897, 0.0
        %v2020 = vmax.f32 %v1899, 0.0
        %v2021 = vmax.f32 %v1901, 0.0
        %v2022 = vmax.f32 %v1903, 0.0
        %v2023 = vmax.f32 %v1907, 0.0
        %v2024 = vmax.f32 %v1909, 0.0
        %v2025 = vmax.f32 %v1911, 0.0
        %v2026 = vmax.f32 %v1913, 0.0
        %v2027 = vmax.f32 %v1917, 0.0
        %v2028 = vmax.f32 %v1919, 0.0
        %v2029 = vmax.f32 %v1921, 0.0
        %v2030 = vmax.f32 %v1923, 0.0
        %v2031 = vmax.f32 %v1927, 0.0
        %v2032 = vmax.f32 %v1929, 0.0
        %v2033 = vmax.f32 %v1931, 0.0
        %v2034 = vmax.f32 %v1933, 0.0
        %v2035 = vmax.f32 %v1937, 0.0
        %v2036 = vmax.f32 %v1939, 0.0
        %v2037 = vmax.f32 %v1941, 0.0
        %v2038 = vmax.f32 %v1943, 0.0
        %v2039 = vmax.f32 %v1947, 0.0
        %v2040 = vmax.f32 %v1949, 0.0
        %v2041 = vmax.f32 %v1951, 0.0
        %v2042 = vmax.f32 %v1953, 0.0
        %v2043 = vmax.f32 %v1957, 0.0
        %v2044 = vmax.f32 %v1959, 0.0
        %v2045 = vmax.f32 %v1961, 0.0
        %v2046 = vmax.f32 %v1963, 0.0
        %v2047 = vmax.f32 %v1967, 0.0
        %v2048 = vmax.f32 %v1969, 0.0
        %v2049 = vmax.f32 %v1971, 0.0
        %v2050 = vmax.f32 %v1973, 0.0
        %v2051 = vmax.f32 %v1977, 0.0
        %v2052 = vmax.f32 %v1979, 0.0
        %v2053 = vmax.f32 %v1981, 0.0
        %v2054 = vmax.f32 %v1983, 0.0
        %v2055 = vmax.f32 %v1987, 0.0
        %v2056 = vmax.f32 %v1989, 0.0
        %v2057 = vmax.f32 %v1991, 0.0
        %v2058 = vmax.f32 %v1993, 0.0
        %v2059 = vld [vmem:[#allocation4] sm:$0xff]
        %v2060 = vld [vmem:[#allocation4 + $0x8] sm:$0xff]
        %v2061 = vld [vmem:[#allocation4 + $0x10] sm:$0xff]
        %v2062 = vld [vmem:[#allocation4 + $0x18] sm:$0xff]
        %v2063 = vld [vmem:[#allocation4 + $0x20] sm:$0xff]
        %v2064 = vld [vmem:[#allocation4 + $0x28] sm:$0xff]
        %v2065 = vld [vmem:[#allocation4 + $0x30] sm:$0xff]
        %v2066 = vld [vmem:[#allocation4 + $0x38] sm:$0xff]
        %v2067 = vld [vmem:[#allocation4 + $0x40] sm:$0xff]
        %v2068 = vld [vmem:[#allocation4 + $0x48] sm:$0xff]
        %v2069 = vld [vmem:[#allocation4 + $0x50] sm:$0xff]
        %v2070 = vld [vmem:[#allocation4 + $0x58] sm:$0xff]
        %v2071 = vld [vmem:[#allocation4 + $0x60] sm:$0xff]
        %v2072 = vld [vmem:[#allocation4 + $0x68] sm:$0xff]
        %v2073 = vld [vmem:[#allocation4 + $0x70] sm:$0xff]
        %v2074 = vld [vmem:[#allocation4 + $0x78] sm:$0xff]
        %v2075 = vld [vmem:[#allocation4 + $0x80] sm:$0xff]
        %v2076 = vld [vmem:[#allocation4 + $0x88] sm:$0xff]
        %v2077 = vld [vmem:[#allocation4 + $0x90] sm:$0xff]
        %v2078 = vld [vmem:[#allocation4 + $0x98] sm:$0xff]
        %v2079 = vld [vmem:[#allocation4 + $0xa0] sm:$0xff]
        %v2080 = vld [vmem:[#allocation4 + $0xa8] sm:$0xff]
        %v2081 = vld [vmem:[#allocation4 + $0xb0] sm:$0xff]
        %v2082 = vld [vmem:[#allocation4 + $0xb8] sm:$0xff]
        %v2083 = vld [vmem:[#allocation4 + $0xc0] sm:$0xff]
        %v2084 = vld [vmem:[#allocation4 + $0xc8] sm:$0xff]
        %v2085 = vld [vmem:[#allocation4 + $0xd0] sm:$0xff]
        %v2086 = vld [vmem:[#allocation4 + $0xd8] sm:$0xff]
        %v2087 = vld [vmem:[#allocation4 + $0xe0] sm:$0xff]
        %v2088 = vld [vmem:[#allocation4 + $0xe8] sm:$0xff]
        %v2089 = vld [vmem:[#allocation4 + $0xf0] sm:$0xff]
        %v2090 = vld [vmem:[#allocation4 + $0xf8] sm:$0xff]
        %v2091 = vld [vmem:[%s13] sm:$0x3]
        %v2092 = vpack.c.bf16 %v1997, %v1995
        %v2093 = vpack.c.bf16 %v1998, %v1996
        %v2094 = vpack.c.bf16 %v2001, %v1999
        %v2095 = vpack.c.bf16 %v2002, %v2000
        %v2096 = vpack.c.bf16 %v2005, %v2003
        %v2097 = vpack.c.bf16 %v2006, %v2004
        %v2098 = vpack.c.bf16 %v2009, %v2007
        %v2099 = vpack.c.bf16 %v2010, %v2008
        %v2100 = vpack.c.bf16 %v2013, %v2011
        %v2101 = vpack.c.bf16 %v2014, %v2012
        %v2102 = vpack.c.bf16 %v2017, %v2015
        %v2103 = vpack.c.bf16 %v2018, %v2016
        %v2104 = vpack.c.bf16 %v2021, %v2019
        %v2105 = vpack.c.bf16 %v2022, %v2020
        %v2106 = vpack.c.bf16 %v2025, %v2023
        %v2107 = vpack.c.bf16 %v2026, %v2024
        %v2108 = vpack.c.bf16 %v2029, %v2027
        %v2109 = vpack.c.bf16 %v2030, %v2028
        %v2110 = vpack.c.bf16 %v2033, %v2031
        %v2111 = vpack.c.bf16 %v2034, %v2032
        %v2112 = vpack.c.bf16 %v2037, %v2035
        %v2113 = vpack.c.bf16 %v2038, %v2036
        %v2114 = vpack.c.bf16 %v2041, %v2039
        %v2115 = vpack.c.bf16 %v2042, %v2040
        %v2116 = vpack.c.bf16 %v2045, %v2043
        %v2117 = vpack.c.bf16 %v2046, %v2044
        %v2118 = vpack.c.bf16 %v2049, %v2047
        %v2119 = vpack.c.bf16 %v2050, %v2048
        %v2120 = vpack.c.bf16 %v2053, %v2051
        %v2121 = vpack.c.bf16 %v2054, %v2052
        %v2122 = vpack.c.bf16 %v2057, %v2055
        %v2123 = vpack.c.bf16 %v2058, %v2056
        %v2125 = vlaneseq
        %v2126 = vshrl.u32 %v2125, 7
        %v2127 = vsub.s32 0, %v2126
        %v2128 = vrot.slane %v2091, %v2127
        %v2129 = vlaneseq
        %v2130 = vshrl.u32 %v2129, 7
        %v2131 = vsub.s32 1, %v2130
        %v2132 = vrot.slane %v2091, %v2131
        %v2167 = vunpack.c.l.b16 %v2059
        %v2168 = vunpack.c.h.b16 %v2059
        %v2169 = vunpack.c.l.b16 %v2060
        %v2170 = vunpack.c.h.b16 %v2060
        %v2171 = vunpack.c.l.b16 %v2061
        %v2172 = vunpack.c.h.b16 %v2061
        %v2173 = vunpack.c.l.b16 %v2062
        %v2174 = vunpack.c.h.b16 %v2062
        %v2175 = vunpack.c.l.b16 %v2063
        %v2176 = vunpack.c.h.b16 %v2063
        %v2177 = vunpack.c.l.b16 %v2064
        %v2178 = vunpack.c.h.b16 %v2064
        %v2179 = vunpack.c.l.b16 %v2065
        %v2180 = vunpack.c.h.b16 %v2065
        %v2181 = vunpack.c.l.b16 %v2066
        %v2182 = vunpack.c.h.b16 %v2066
        %v2183 = vunpack.c.l.b16 %v2067
        %v2184 = vunpack.c.h.b16 %v2067
        %v2185 = vunpack.c.l.b16 %v2068
        %v2186 = vunpack.c.h.b16 %v2068
        %v2187 = vunpack.c.l.b16 %v2069
        %v2188 = vunpack.c.h.b16 %v2069
        %v2189 = vunpack.c.l.b16 %v2070
        %v2190 = vunpack.c.h.b16 %v2070
        %v2191 = vunpack.c.l.b16 %v2071
        %v2192 = vunpack.c.h.b16 %v2071
        %v2193 = vunpack.c.l.b16 %v2072
        %v2194 = vunpack.c.h.b16 %v2072
        %v2195 = vunpack.c.l.b16 %v2073
        %v2196 = vunpack.c.h.b16 %v2073
        %v2197 = vunpack.c.l.b16 %v2074
        %v2198 = vunpack.c.h.b16 %v2074
        %v2199 = vunpack.c.l.b16 %v2075
        %v2200 = vunpack.c.h.b16 %v2075
        %v2201 = vunpack.c.l.b16 %v2076
        %v2202 = vunpack.c.h.b16 %v2076
        %v2203 = vunpack.c.l.b16 %v2077
        %v2204 = vunpack.c.h.b16 %v2077
        %v2205 = vunpack.c.l.b16 %v2078
        %v2206 = vunpack.c.h.b16 %v2078
        %v2207 = vunpack.c.l.b16 %v2079
        %v2208 = vunpack.c.h.b16 %v2079
        %v2209 = vunpack.c.l.b16 %v2080
        %v2210 = vunpack.c.h.b16 %v2080
        %v2211 = vunpack.c.l.b16 %v2081
        %v2212 = vunpack.c.h.b16 %v2081
        %v2213 = vunpack.c.l.b16 %v2082
        %v2214 = vunpack.c.h.b16 %v2082
        %v2215 = vunpack.c.l.b16 %v2083
        %v2216 = vunpack.c.h.b16 %v2083
        %v2217 = vunpack.c.l.b16 %v2084
        %v2218 = vunpack.c.h.b16 %v2084
        %v2219 = vunpack.c.l.b16 %v2085
        %v2220 = vunpack.c.h.b16 %v2085
        %v2221 = vunpack.c.l.b16 %v2086
        %v2222 = vunpack.c.h.b16 %v2086
        %v2223 = vunpack.c.l.b16 %v2087
        %v2224 = vunpack.c.h.b16 %v2087
        %v2225 = vunpack.c.l.b16 %v2088
        %v2226 = vunpack.c.h.b16 %v2088
        %v2227 = vunpack.c.l.b16 %v2089
        %v2228 = vunpack.c.h.b16 %v2089
        %v2229 = vunpack.c.l.b16 %v2090
        %v2230 = vunpack.c.h.b16 %v2090
        %v2231 = vpack.c.b16 %v2169, %v2167
        %v2232 = vpack.c.b16 %v2170, %v2168
        %v2233 = vpack.c.b16 %v2173, %v2171
        %v2234 = vpack.c.b16 %v2174, %v2172
        %v2235 = vpack.c.b16 %v2177, %v2175
        %v2236 = vpack.c.b16 %v2178, %v2176
        %v2237 = vpack.c.b16 %v2181, %v2179
        %v2238 = vpack.c.b16 %v2182, %v2180
        %v2239 = vpack.c.b16 %v2185, %v2183
        %v2240 = vpack.c.b16 %v2186, %v2184
        %v2241 = vpack.c.b16 %v2189, %v2187
        %v2242 = vpack.c.b16 %v2190, %v2188
        %v2243 = vpack.c.b16 %v2193, %v2191
        %v2244 = vpack.c.b16 %v2194, %v2192
        %v2245 = vpack.c.b16 %v2197, %v2195
        %v2246 = vpack.c.b16 %v2198, %v2196
        %v2247 = vpack.c.b16 %v2201, %v2199
        %v2248 = vpack.c.b16 %v2202, %v2200
        %v2249 = vpack.c.b16 %v2205, %v2203
        %v2250 = vpack.c.b16 %v2206, %v2204
        %v2251 = vpack.c.b16 %v2209, %v2207
        %v2252 = vpack.c.b16 %v2210, %v2208
        %v2253 = vpack.c.b16 %v2213, %v2211
        %v2254 = vpack.c.b16 %v2214, %v2212
        %v2255 = vpack.c.b16 %v2217, %v2215
        %v2256 = vpack.c.b16 %v2218, %v2216
        %v2257 = vpack.c.b16 %v2221, %v2219
        %v2258 = vpack.c.b16 %v2222, %v2220
        %v2259 = vpack.c.b16 %v2225, %v2223
        %v2260 = vpack.c.b16 %v2226, %v2224
        %v2261 = vpack.c.b16 %v2229, %v2227
        %v2262 = vpack.c.b16 %v2230, %v2228
        %2295 = vmatprep.subr.bf16.mxu0 %v2232
        %2296 = vmatpush1.bf16.msra.mxu0 %v2231
        %2297 = vmatprep.subr.bf16.mxu0 %v2234
        %2298 = vmatpush1.bf16.msra.mxu0 %v2233
        %2299 = vmatprep.subr.bf16.mxu0 %v2236
        %2300 = vmatpush1.bf16.msra.mxu0 %v2235
        %2301 = vmatprep.subr.bf16.mxu0 %v2238
        %2302 = vmatpush1.bf16.msra.mxu0 %v2237
        %2303 = vmatprep.subr.bf16.mxu0 %v2240
        %2304 = vmatpush1.bf16.msra.mxu0 %v2239
        %2305 = vmatprep.subr.bf16.mxu0 %v2242
        %2306 = vmatpush1.bf16.msra.mxu0 %v2241
        %2307 = vmatprep.subr.bf16.mxu0 %v2244
        %2308 = vmatpush1.bf16.msra.mxu0 %v2243
        %2309 = vmatprep.subr.bf16.mxu0 %v2246
        %2310 = vmatpush1.bf16.msra.mxu0 %v2245
        %2311 = vmatprep.subr.bf16.mxu0 %v2248
        %2312 = vmatpush1.bf16.msra.mxu0 %v2247
        %2313 = vmatprep.subr.bf16.mxu0 %v2250
        %2314 = vmatpush1.bf16.msra.mxu0 %v2249
        %2315 = vmatprep.subr.bf16.mxu0 %v2252
        %2316 = vmatpush1.bf16.msra.mxu0 %v2251
        %2317 = vmatprep.subr.bf16.mxu0 %v2254
        %2318 = vmatpush1.bf16.msra.mxu0 %v2253
        %2319 = vmatprep.subr.bf16.mxu0 %v2256
        %2320 = vmatpush1.bf16.msra.mxu0 %v2255
        %2321 = vmatprep.subr.bf16.mxu0 %v2258
        %2322 = vmatpush1.bf16.msra.mxu0 %v2257
        %2323 = vmatprep.subr.bf16.mxu0 %v2260
        %2324 = vmatpush1.bf16.msra.mxu0 %v2259
        %2325 = vmatprep.subr.bf16.mxu0 %v2262
        %2326 = vmatpush1.bf16.msra.mxu0 %v2261
        %2327 = vmatprep.mubr.bf16.mxu0 %v2093
        %2328 = vmatmul.mubr.bf16.gmra.mrb[0].mxu0 %v2092
        %v2329 = vpop.f32.mrb[0].mxu0
        %v2330 = vadd.f32 %v2128, %v2329
        %v2331 = vpop.f32.mrb[0].mxu0
        %v2332 = vadd.f32 %v2132, %v2331
        %v2333 = vpop.f32.mrb[0].mxu0
        %v2334 = vadd.f32 %v2128, %v2333
        %v2335 = vpop.f32.mrb[0].mxu0
        %v2336 = vadd.f32 %v2132, %v2335
        %2337 = vmatprep.mubr.bf16.mxu0 %v2095
        %2338 = vmatmul.mubr.bf16.gmra.mrb[0].mxu0 %v2094
        %v2339 = vpop.f32.mrb[0].mxu0
        %v2340 = vadd.f32 %v2128, %v2339
        %v2341 = vpop.f32.mrb[0].mxu0
        %v2342 = vadd.f32 %v2132, %v2341
        %v2343 = vpop.f32.mrb[0].mxu0
        %v2344 = vadd.f32 %v2128, %v2343
        %v2345 = vpop.f32.mrb[0].mxu0
        %v2346 = vadd.f32 %v2132, %v2345
        %2347 = vmatprep.mubr.bf16.mxu0 %v2097
        %2348 = vmatmul.mubr.bf16.gmra.mrb[0].mxu0 %v2096
        %v2349 = vpop.f32.mrb[0].mxu0
        %v2350 = vadd.f32 %v2128, %v2349
        %v2351 = vpop.f32.mrb[0].mxu0
        %v2352 = vadd.f32 %v2132, %v2351
        %v2353 = vpop.f32.mrb[0].mxu0
        %v2354 = vadd.f32 %v2128, %v2353
        %v2355 = vpop.f32.mrb[0].mxu0
        %v2356 = vadd.f32 %v2132, %v2355
        %2357 = vmatprep.mubr.bf16.mxu0 %v2099
        %2358 = vmatmul.mubr.bf16.gmra.mrb[0].mxu0 %v2098
        %v2359 = vpop.f32.mrb[0].mxu0
        %v2360 = vadd.f32 %v2128, %v2359
        %v2361 = vpop.f32.mrb[0].mxu0
        %v2362 = vadd.f32 %v2132, %v2361
        %v2363 = vpop.f32.mrb[0].mxu0
        %v2364 = vadd.f32 %v2128, %v2363
        %v2365 = vpop.f32.mrb[0].mxu0
        %v2366 = vadd.f32 %v2132, %v2365
        %2367 = vmatprep.mubr.bf16.mxu0 %v2101
        %2368 = vmatmul.mubr.bf16.gmra.mrb[0].mxu0 %v2100
        %v2369 = vpop.f32.mrb[0].mxu0
        %v2370 = vadd.f32 %v2128, %v2369
        %v2371 = vpop.f32.mrb[0].mxu0
        %v2372 = vadd.f32 %v2132, %v2371
        %v2373 = vpop.f32.mrb[0].mxu0
        %v2374 = vadd.f32 %v2128, %v2373
        %v2375 = vpop.f32.mrb[0].mxu0
        %v2376 = vadd.f32 %v2132, %v2375
        %2377 = vmatprep.mubr.bf16.mxu0 %v2103
        %2378 = vmatmul.mubr.bf16.gmra.mrb[0].mxu0 %v2102
        %v2379 = vpop.f32.mrb[0].mxu0
        %v2380 = vadd.f32 %v2128, %v2379
        %v2381 = vpop.f32.mrb[0].mxu0
        %v2382 = vadd.f32 %v2132, %v2381
        %v2383 = vpop.f32.mrb[0].mxu0
        %v2384 = vadd.f32 %v2128, %v2383
        %v2385 = vpop.f32.mrb[0].mxu0
        %v2386 = vadd.f32 %v2132, %v2385
        %2387 = vmatprep.mubr.bf16.mxu0 %v2105
        %2388 = vmatmul.mubr.bf16.gmra.mrb[0].mxu0 %v2104
        %v2389 = vpop.f32.mrb[0].mxu0
        %v2390 = vadd.f32 %v2128, %v2389
        %v2391 = vpop.f32.mrb[0].mxu0
        %v2392 = vadd.f32 %v2132, %v2391
        %v2393 = vpop.f32.mrb[0].mxu0
        %v2394 = vadd.f32 %v2128, %v2393
        %v2395 = vpop.f32.mrb[0].mxu0
        %v2396 = vadd.f32 %v2132, %v2395
        %2397 = vmatprep.mubr.bf16.mxu0 %v2107
        %2398 = vmatmul.mubr.bf16.gmra.mrb[0].mxu0 %v2106
        %v2399 = vpop.f32.mrb[0].mxu0
        %v2400 = vadd.f32 %v2128, %v2399
        %v2401 = vpop.f32.mrb[0].mxu0
        %v2402 = vadd.f32 %v2132, %v2401
        %v2403 = vpop.f32.mrb[0].mxu0
        %v2404 = vadd.f32 %v2128, %v2403
        %v2405 = vpop.f32.mrb[0].mxu0
        %v2406 = vadd.f32 %v2132, %v2405
        %2407 = vmatprep.mubr.bf16.mxu0 %v2109
        %2408 = vmatmul.mubr.bf16.gmra.mrb[0].mxu0 %v2108
        %v2409 = vpop.f32.mrb[0].mxu0
        %v2410 = vadd.f32 %v2128, %v2409
        %v2411 = vpop.f32.mrb[0].mxu0
        %v2412 = vadd.f32 %v2132, %v2411
        %v2413 = vpop.f32.mrb[0].mxu0
        %v2414 = vadd.f32 %v2128, %v2413
        %v2415 = vpop.f32.mrb[0].mxu0
        %v2416 = vadd.f32 %v2132, %v2415
        %2417 = vmatprep.mubr.bf16.mxu0 %v2111
        %2418 = vmatmul.mubr.bf16.gmra.mrb[0].mxu0 %v2110
        %v2419 = vpop.f32.mrb[0].mxu0
        %v2420 = vadd.f32 %v2128, %v2419
        %v2421 = vpop.f32.mrb[0].mxu0
        %v2422 = vadd.f32 %v2132, %v2421
        %v2423 = vpop.f32.mrb[0].mxu0
        %v2424 = vadd.f32 %v2128, %v2423
        %v2425 = vpop.f32.mrb[0].mxu0
        %v2426 = vadd.f32 %v2132, %v2425
        %2427 = vmatprep.mubr.bf16.mxu0 %v2113
        %2428 = vmatmul.mubr.bf16.gmra.mrb[0].mxu0 %v2112
        %v2429 = vpop.f32.mrb[0].mxu0
        %v2430 = vadd.f32 %v2128, %v2429
        %v2431 = vpop.f32.mrb[0].mxu0
        %v2432 = vadd.f32 %v2132, %v2431
        %v2433 = vpop.f32.mrb[0].mxu0
        %v2434 = vadd.f32 %v2128, %v2433
        %v2435 = vpop.f32.mrb[0].mxu0
        %v2436 = vadd.f32 %v2132, %v2435
        %2437 = vmatprep.mubr.bf16.mxu0 %v2115
        %2438 = vmatmul.mubr.bf16.gmra.mrb[0].mxu0 %v2114
        %v2439 = vpop.f32.mrb[0].mxu0
        %v2440 = vadd.f32 %v2128, %v2439
        %v2441 = vpop.f32.mrb[0].mxu0
        %v2442 = vadd.f32 %v2132, %v2441
        %v2443 = vpop.f32.mrb[0].mxu0
        %v2444 = vadd.f32 %v2128, %v2443
        %v2445 = vpop.f32.mrb[0].mxu0
        %v2446 = vadd.f32 %v2132, %v2445
        %2447 = vmatprep.mubr.bf16.mxu0 %v2117
        %2448 = vmatmul.mubr.bf16.gmra.mrb[0].mxu0 %v2116
        %v2449 = vpop.f32.mrb[0].mxu0
        %v2450 = vadd.f32 %v2128, %v2449
        %v2451 = vpop.f32.mrb[0].mxu0
        %v2452 = vadd.f32 %v2132, %v2451
        %v2453 = vpop.f32.mrb[0].mxu0
        %v2454 = vadd.f32 %v2128, %v2453
        %v2455 = vpop.f32.mrb[0].mxu0
        %v2456 = vadd.f32 %v2132, %v2455
        %2457 = vmatprep.mubr.bf16.mxu0 %v2119
        %2458 = vmatmul.mubr.bf16.gmra.mrb[0].mxu0 %v2118
        %v2459 = vpop.f32.mrb[0].mxu0
        %v2460 = vadd.f32 %v2128, %v2459
        %v2461 = vpop.f32.mrb[0].mxu0
        %v2462 = vadd.f32 %v2132, %v2461
        %v2463 = vpop.f32.mrb[0].mxu0
        %v2464 = vadd.f32 %v2128, %v2463
        %v2465 = vpop.f32.mrb[0].mxu0
        %v2466 = vadd.f32 %v2132, %v2465
        %2467 = vmatprep.mubr.bf16.mxu0 %v2121
        %2468 = vmatmul.mubr.bf16.gmra.mrb[0].mxu0 %v2120
        %v2469 = vpop.f32.mrb[0].mxu0
        %v2470 = vadd.f32 %v2128, %v2469
        %v2471 = vpop.f32.mrb[0].mxu0
        %v2472 = vadd.f32 %v2132, %v2471
        %v2473 = vpop.f32.mrb[0].mxu0
        %v2474 = vadd.f32 %v2128, %v2473
        %v2475 = vpop.f32.mrb[0].mxu0
        %v2476 = vadd.f32 %v2132, %v2475
        %2477 = vmatprep.mubr.bf16.mxu0 %v2123
        %2478 = vmatmul.mubr.bf16.gmra.mrb[0].mxu0 %v2122
        %v2479 = vpop.f32.mrb[0].mxu0
        %v2480 = vadd.f32 %v2128, %v2479
        %v2481 = vpop.f32.mrb[0].mxu0
        %v2482 = vadd.f32 %v2132, %v2481
        %v2483 = vpop.f32.mrb[0].mxu0
        %v2484 = vadd.f32 %v2128, %v2483
        %v2485 = vpop.f32.mrb[0].mxu0
        %v2486 = vadd.f32 %v2132, %v2485
        %2487 = vdwg.mxu0
        %v2488 = vmax.f32 %v2330, 0.0
        %v2489 = vmax.f32 %v2332, 0.0
        %v2490 = vmax.f32 %v2334, 0.0
        %v2491 = vmax.f32 %v2336, 0.0
        %v2492 = vmax.f32 %v2340, 0.0
        %v2493 = vmax.f32 %v2342, 0.0
        %v2494 = vmax.f32 %v2344, 0.0
        %v2495 = vmax.f32 %v2346, 0.0
        %v2496 = vmax.f32 %v2350, 0.0
        %v2497 = vmax.f32 %v2352, 0.0
        %v2498 = vmax.f32 %v2354, 0.0
        %v2499 = vmax.f32 %v2356, 0.0
        %v2500 = vmax.f32 %v2360, 0.0
        %v2501 = vmax.f32 %v2362, 0.0
        %v2502 = vmax.f32 %v2364, 0.0
        %v2503 = vmax.f32 %v2366, 0.0
        %v2504 = vmax.f32 %v2370, 0.0
        %v2505 = vmax.f32 %v2372, 0.0
        %v2506 = vmax.f32 %v2374, 0.0
        %v2507 = vmax.f32 %v2376, 0.0
        %v2508 = vmax.f32 %v2380, 0.0
        %v2509 = vmax.f32 %v2382, 0.0
        %v2510 = vmax.f32 %v2384, 0.0
        %v2511 = vmax.f32 %v2386, 0.0
        %v2512 = vmax.f32 %v2390, 0.0
        %v2513 = vmax.f32 %v2392, 0.0
        %v2514 = vmax.f32 %v2394, 0.0
        %v2515 = vmax.f32 %v2396, 0.0
        %v2516 = vmax.f32 %v2400, 0.0
        %v2517 = vmax.f32 %v2402, 0.0
        %v2518 = vmax.f32 %v2404, 0.0
        %v2519 = vmax.f32 %v2406, 0.0
        %v2520 = vmax.f32 %v2410, 0.0
        %v2521 = vmax.f32 %v2412, 0.0
        %v2522 = vmax.f32 %v2414, 0.0
        %v2523 = vmax.f32 %v2416, 0.0
        %v2524 = vmax.f32 %v2420, 0.0
        %v2525 = vmax.f32 %v2422, 0.0
        %v2526 = vmax.f32 %v2424, 0.0
        %v2527 = vmax.f32 %v2426, 0.0
        %v2528 = vmax.f32 %v2430, 0.0
        %v2529 = vmax.f32 %v2432, 0.0
        %v2530 = vmax.f32 %v2434, 0.0
        %v2531 = vmax.f32 %v2436, 0.0
        %v2532 = vmax.f32 %v2440, 0.0
        %v2533 = vmax.f32 %v2442, 0.0
        %v2534 = vmax.f32 %v2444, 0.0
        %v2535 = vmax.f32 %v2446, 0.0
        %v2536 = vmax.f32 %v2450, 0.0
        %v2537 = vmax.f32 %v2452, 0.0
        %v2538 = vmax.f32 %v2454, 0.0
        %v2539 = vmax.f32 %v2456, 0.0
        %v2540 = vmax.f32 %v2460, 0.0
        %v2541 = vmax.f32 %v2462, 0.0
        %v2542 = vmax.f32 %v2464, 0.0
        %v2543 = vmax.f32 %v2466, 0.0
        %v2544 = vmax.f32 %v2470, 0.0
        %v2545 = vmax.f32 %v2472, 0.0
        %v2546 = vmax.f32 %v2474, 0.0
        %v2547 = vmax.f32 %v2476, 0.0
        %v2548 = vmax.f32 %v2480, 0.0
        %v2549 = vmax.f32 %v2482, 0.0
        %v2550 = vmax.f32 %v2484, 0.0
        %v2551 = vmax.f32 %v2486, 0.0
        %v2552 = vld [vmem:[#allocation6] sm:$0xff]
        %v2553 = vld [vmem:[#allocation6 + $0x8] sm:$0xff]
        %v2554 = vld [vmem:[#allocation6 + $0x10] sm:$0xff]
        %v2555 = vld [vmem:[#allocation6 + $0x18] sm:$0xff]
        %v2556 = vld [vmem:[#allocation6 + $0x20] sm:$0xff]
        %v2557 = vld [vmem:[#allocation6 + $0x28] sm:$0xff]
        %v2558 = vld [vmem:[#allocation6 + $0x30] sm:$0xff]
        %v2559 = vld [vmem:[#allocation6 + $0x38] sm:$0xff]
        %v2560 = vld [vmem:[#allocation6 + $0x40] sm:$0xff]
        %v2561 = vld [vmem:[#allocation6 + $0x48] sm:$0xff]
        %v2562 = vld [vmem:[#allocation6 + $0x50] sm:$0xff]
        %v2563 = vld [vmem:[#allocation6 + $0x58] sm:$0xff]
        %v2564 = vld [vmem:[#allocation6 + $0x60] sm:$0xff]
        %v2565 = vld [vmem:[#allocation6 + $0x68] sm:$0xff]
        %v2566 = vld [vmem:[#allocation6 + $0x70] sm:$0xff]
        %v2567 = vld [vmem:[#allocation6 + $0x78] sm:$0xff]
        %v2568 = vld [vmem:[#allocation6 + $0x80] sm:$0xff]
        %v2569 = vld [vmem:[#allocation6 + $0x88] sm:$0xff]
        %v2570 = vld [vmem:[#allocation6 + $0x90] sm:$0xff]
        %v2571 = vld [vmem:[#allocation6 + $0x98] sm:$0xff]
        %v2572 = vld [vmem:[#allocation6 + $0xa0] sm:$0xff]
        %v2573 = vld [vmem:[#allocation6 + $0xa8] sm:$0xff]
        %v2574 = vld [vmem:[#allocation6 + $0xb0] sm:$0xff]
        %v2575 = vld [vmem:[#allocation6 + $0xb8] sm:$0xff]
        %v2576 = vld [vmem:[#allocation6 + $0xc0] sm:$0xff]
        %v2577 = vld [vmem:[#allocation6 + $0xc8] sm:$0xff]
        %v2578 = vld [vmem:[#allocation6 + $0xd0] sm:$0xff]
        %v2579 = vld [vmem:[#allocation6 + $0xd8] sm:$0xff]
        %v2580 = vld [vmem:[#allocation6 + $0xe0] sm:$0xff]
        %v2581 = vld [vmem:[#allocation6 + $0xe8] sm:$0xff]
        %v2582 = vld [vmem:[#allocation6 + $0xf0] sm:$0xff]
        %v2583 = vld [vmem:[#allocation6 + $0xf8] sm:$0xff]
        %v2584 = vld [vmem:[%s17] sm:$0x3]
        %v2585 = vpack.c.bf16 %v2490, %v2488
        %v2586 = vpack.c.bf16 %v2491, %v2489
        %v2587 = vpack.c.bf16 %v2494, %v2492
        %v2588 = vpack.c.bf16 %v2495, %v2493
        %v2589 = vpack.c.bf16 %v2498, %v2496
        %v2590 = vpack.c.bf16 %v2499, %v2497
        %v2591 = vpack.c.bf16 %v2502, %v2500
        %v2592 = vpack.c.bf16 %v2503, %v2501
        %v2593 = vpack.c.bf16 %v2506, %v2504
        %v2594 = vpack.c.bf16 %v2507, %v2505
        %v2595 = vpack.c.bf16 %v2510, %v2508
        %v2596 = vpack.c.bf16 %v2511, %v2509
        %v2597 = vpack.c.bf16 %v2514, %v2512
        %v2598 = vpack.c.bf16 %v2515, %v2513
        %v2599 = vpack.c.bf16 %v2518, %v2516
        %v2600 = vpack.c.bf16 %v2519, %v2517
        %v2601 = vpack.c.bf16 %v2522, %v2520
        %v2602 = vpack.c.bf16 %v2523, %v2521
        %v2603 = vpack.c.bf16 %v2526, %v2524
        %v2604 = vpack.c.bf16 %v2527, %v2525
        %v2605 = vpack.c.bf16 %v2530, %v2528
        %v2606 = vpack.c.bf16 %v2531, %v2529
        %v2607 = vpack.c.bf16 %v2534, %v2532
        %v2608 = vpack.c.bf16 %v2535, %v2533
        %v2609 = vpack.c.bf16 %v2538, %v2536
        %v2610 = vpack.c.bf16 %v2539, %v2537
        %v2611 = vpack.c.bf16 %v2542, %v2540
        %v2612 = vpack.c.bf16 %v2543, %v2541
        %v2613 = vpack.c.bf16 %v2546, %v2544
        %v2614 = vpack.c.bf16 %v2547, %v2545
        %v2615 = vpack.c.bf16 %v2550, %v2548
        %v2616 = vpack.c.bf16 %v2551, %v2549
        %v2618 = vlaneseq
        %v2619 = vshrl.u32 %v2618, 7
        %v2620 = vsub.s32 0, %v2619
        %v2621 = vrot.slane %v2584, %v2620
        %v2622 = vlaneseq
        %v2623 = vshrl.u32 %v2622, 7
        %v2624 = vsub.s32 1, %v2623
        %v2625 = vrot.slane %v2584, %v2624
        %v2660 = vunpack.c.l.b16 %v2552
        %v2661 = vunpack.c.h.b16 %v2552
        %v2662 = vunpack.c.l.b16 %v2553
        %v2663 = vunpack.c.h.b16 %v2553
        %v2664 = vunpack.c.l.b16 %v2554
        %v2665 = vunpack.c.h.b16 %v2554
        %v2666 = vunpack.c.l.b16 %v2555
        %v2667 = vunpack.c.h.b16 %v2555
        %v2668 = vunpack.c.l.b16 %v2556
        %v2669 = vunpack.c.h.b16 %v2556
        %v2670 = vunpack.c.l.b16 %v2557
        %v2671 = vunpack.c.h.b16 %v2557
        %v2672 = vunpack.c.l.b16 %v2558
        %v2673 = vunpack.c.h.b16 %v2558
        %v2674 = vunpack.c.l.b16 %v2559
        %v2675 = vunpack.c.h.b16 %v2559
        %v2676 = vunpack.c.l.b16 %v2560
        %v2677 = vunpack.c.h.b16 %v2560
        %v2678 = vunpack.c.l.b16 %v2561
        %v2679 = vunpack.c.h.b16 %v2561
        %v2680 = vunpack.c.l.b16 %v2562
        %v2681 = vunpack.c.h.b16 %v2562
        %v2682 = vunpack.c.l.b16 %v2563
        %v2683 = vunpack.c.h.b16 %v2563
        %v2684 = vunpack.c.l.b16 %v2564
        %v2685 = vunpack.c.h.b16 %v2564
        %v2686 = vunpack.c.l.b16 %v2565
        %v2687 = vunpack.c.h.b16 %v2565
        %v2688 = vunpack.c.l.b16 %v2566
        %v2689 = vunpack.c.h.b16 %v2566
        %v2690 = vunpack.c.l.b16 %v2567
        %v2691 = vunpack.c.h.b16 %v2567
        %v2692 = vunpack.c.l.b16 %v2568
        %v2693 = vunpack.c.h.b16 %v2568
        %v2694 = vunpack.c.l.b16 %v2569
        %v2695 = vunpack.c.h.b16 %v2569
        %v2696 = vunpack.c.l.b16 %v2570
        %v2697 = vunpack.c.h.b16 %v2570
        %v2698 = vunpack.c.l.b16 %v2571
        %v2699 = vunpack.c.h.b16 %v2571
        %v2700 = vunpack.c.l.b16 %v2572
        %v2701 = vunpack.c.h.b16 %v2572
        %v2702 = vunpack.c.l.b16 %v2573
        %v2703 = vunpack.c.h.b16 %v2573
        %v2704 = vunpack.c.l.b16 %v2574
        %v2705 = vunpack.c.h.b16 %v2574
        %v2706 = vunpack.c.l.b16 %v2575
        %v2707 = vunpack.c.h.b16 %v2575
        %v2708 = vunpack.c.l.b16 %v2576
        %v2709 = vunpack.c.h.b16 %v2576
        %v2710 = vunpack.c.l.b16 %v2577
        %v2711 = vunpack.c.h.b16 %v2577
        %v2712 = vunpack.c.l.b16 %v2578
        %v2713 = vunpack.c.h.b16 %v2578
        %v2714 = vunpack.c.l.b16 %v2579
        %v2715 = vunpack.c.h.b16 %v2579
        %v2716 = vunpack.c.l.b16 %v2580
        %v2717 = vunpack.c.h.b16 %v2580
        %v2718 = vunpack.c.l.b16 %v2581
        %v2719 = vunpack.c.h.b16 %v2581
        %v2720 = vunpack.c.l.b16 %v2582
        %v2721 = vunpack.c.h.b16 %v2582
        %v2722 = vunpack.c.l.b16 %v2583
        %v2723 = vunpack.c.h.b16 %v2583
        %v2724 = vpack.c.b16 %v2662, %v2660
        %v2725 = vpack.c.b16 %v2663, %v2661
        %v2726 = vpack.c.b16 %v2666, %v2664
        %v2727 = vpack.c.b16 %v2667, %v2665
        %v2728 = vpack.c.b16 %v2670, %v2668
        %v2729 = vpack.c.b16 %v2671, %v2669
        %v2730 = vpack.c.b16 %v2674, %v2672
        %v2731 = vpack.c.b16 %v2675, %v2673
        %v2732 = vpack.c.b16 %v2678, %v2676
        %v2733 = vpack.c.b16 %v2679, %v2677
        %v2734 = vpack.c.b16 %v2682, %v2680
        %v2735 = vpack.c.b16 %v2683, %v2681
        %v2736 = vpack.c.b16 %v2686, %v2684
        %v2737 = vpack.c.b16 %v2687, %v2685
        %v2738 = vpack.c.b16 %v2690, %v2688
        %v2739 = vpack.c.b16 %v2691, %v2689
        %v2740 = vpack.c.b16 %v2694, %v2692
        %v2741 = vpack.c.b16 %v2695, %v2693
        %v2742 = vpack.c.b16 %v2698, %v2696
        %v2743 = vpack.c.b16 %v2699, %v2697
        %v2744 = vpack.c.b16 %v2702, %v2700
        %v2745 = vpack.c.b16 %v2703, %v2701
        %v2746 = vpack.c.b16 %v2706, %v2704
        %v2747 = vpack.c.b16 %v2707, %v2705
        %v2748 = vpack.c.b16 %v2710, %v2708
        %v2749 = vpack.c.b16 %v2711, %v2709
        %v2750 = vpack.c.b16 %v2714, %v2712
        %v2751 = vpack.c.b16 %v2715, %v2713
        %v2752 = vpack.c.b16 %v2718, %v2716
        %v2753 = vpack.c.b16 %v2719, %v2717
        %v2754 = vpack.c.b16 %v2722, %v2720
        %v2755 = vpack.c.b16 %v2723, %v2721
        %2788 = vmatprep.subr.bf16.mxu0 %v2725
        %2789 = vmatpush1.bf16.msra.mxu0 %v2724
        %2790 = vmatprep.subr.bf16.mxu0 %v2727
        %2791 = vmatpush1.bf16.msra.mxu0 %v2726
        %2792 = vmatprep.subr.bf16.mxu0 %v2729
        %2793 = vmatpush1.bf16.msra.mxu0 %v2728
        %2794 = vmatprep.subr.bf16.mxu0 %v2731
        %2795 = vmatpush1.bf16.msra.mxu0 %v2730
        %2796 = vmatprep.subr.bf16.mxu0 %v2733
        %2797 = vmatpush1.bf16.msra.mxu0 %v2732
        %2798 = vmatprep.subr.bf16.mxu0 %v2735
        %2799 = vmatpush1.bf16.msra.mxu0 %v2734
        %2800 = vmatprep.subr.bf16.mxu0 %v2737
        %2801 = vmatpush1.bf16.msra.mxu0 %v2736
        %2802 = vmatprep.subr.bf16.mxu0 %v2739
        %2803 = vmatpush1.bf16.msra.mxu0 %v2738
        %2804 = vmatprep.subr.bf16.mxu0 %v2741
        %2805 = vmatpush1.bf16.msra.mxu0 %v2740
        %2806 = vmatprep.subr.bf16.mxu0 %v2743
        %2807 = vmatpush1.bf16.msra.mxu0 %v2742
        %2808 = vmatprep.subr.bf16.mxu0 %v2745
        %2809 = vmatpush1.bf16.msra.mxu0 %v2744
        %2810 = vmatprep.subr.bf16.mxu0 %v2747
        %2811 = vmatpush1.bf16.msra.mxu0 %v2746
        %2812 = vmatprep.subr.bf16.mxu0 %v2749
        %2813 = vmatpush1.bf16.msra.mxu0 %v2748
        %2814 = vmatprep.subr.bf16.mxu0 %v2751
        %2815 = vmatpush1.bf16.msra.mxu0 %v2750
        %2816 = vmatprep.subr.bf16.mxu0 %v2753
        %2817 = vmatpush1.bf16.msra.mxu0 %v2752
        %2818 = vmatprep.subr.bf16.mxu0 %v2755
        %2819 = vmatpush1.bf16.msra.mxu0 %v2754
        %2820 = vmatprep.mubr.bf16.mxu0 %v2586
        %2821 = vmatmul.mubr.bf16.gmra.mrb[0].mxu0 %v2585
        %v2822 = vpop.f32.mrb[0].mxu0
        %v2823 = vadd.f32 %v2621, %v2822
        %v2824 = vpop.f32.mrb[0].mxu0
        %v2825 = vadd.f32 %v2625, %v2824
        %v2826 = vpop.f32.mrb[0].mxu0
        %v2827 = vadd.f32 %v2621, %v2826
        %v2828 = vpop.f32.mrb[0].mxu0
        %v2829 = vadd.f32 %v2625, %v2828
        %2830 = vmatprep.mubr.bf16.mxu0 %v2588
        %2831 = vmatmul.mubr.bf16.gmra.mrb[0].mxu0 %v2587
        %v2832 = vpop.f32.mrb[0].mxu0
        %v2833 = vadd.f32 %v2621, %v2832
        %v2834 = vpop.f32.mrb[0].mxu0
        %v2835 = vadd.f32 %v2625, %v2834
        %v2836 = vpop.f32.mrb[0].mxu0
        %v2837 = vadd.f32 %v2621, %v2836
        %v2838 = vpop.f32.mrb[0].mxu0
        %v2839 = vadd.f32 %v2625, %v2838
        %2840 = vmatprep.mubr.bf16.mxu0 %v2590
        %2841 = vmatmul.mubr.bf16.gmra.mrb[0].mxu0 %v2589
        %v2842 = vpop.f32.mrb[0].mxu0
        %v2843 = vadd.f32 %v2621, %v2842
        %v2844 = vpop.f32.mrb[0].mxu0
        %v2845 = vadd.f32 %v2625, %v2844
        %v2846 = vpop.f32.mrb[0].mxu0
        %v2847 = vadd.f32 %v2621, %v2846
        %v2848 = vpop.f32.mrb[0].mxu0
        %v2849 = vadd.f32 %v2625, %v2848
        %2850 = vmatprep.mubr.bf16.mxu0 %v2592
        %2851 = vmatmul.mubr.bf16.gmra.mrb[0].mxu0 %v2591
        %v2852 = vpop.f32.mrb[0].mxu0
        %v2853 = vadd.f32 %v2621, %v2852
        %v2854 = vpop.f32.mrb[0].mxu0
        %v2855 = vadd.f32 %v2625, %v2854
        %v2856 = vpop.f32.mrb[0].mxu0
        %v2857 = vadd.f32 %v2621, %v2856
        %v2858 = vpop.f32.mrb[0].mxu0
        %v2859 = vadd.f32 %v2625, %v2858
        %2860 = vmatprep.mubr.bf16.mxu0 %v2594
        %2861 = vmatmul.mubr.bf16.gmra.mrb[0].mxu0 %v2593
        %v2862 = vpop.f32.mrb[0].mxu0
        %v2863 = vadd.f32 %v2621, %v2862
        %v2864 = vpop.f32.mrb[0].mxu0
        %v2865 = vadd.f32 %v2625, %v2864
        %v2866 = vpop.f32.mrb[0].mxu0
        %v2867 = vadd.f32 %v2621, %v2866
        %v2868 = vpop.f32.mrb[0].mxu0
        %v2869 = vadd.f32 %v2625, %v2868
        %2870 = vmatprep.mubr.bf16.mxu0 %v2596
        %2871 = vmatmul.mubr.bf16.gmra.mrb[0].mxu0 %v2595
        %v2872 = vpop.f32.mrb[0].mxu0
        %v2873 = vadd.f32 %v2621, %v2872
        %v2874 = vpop.f32.mrb[0].mxu0
        %v2875 = vadd.f32 %v2625, %v2874
        %v2876 = vpop.f32.mrb[0].mxu0
        %v2877 = vadd.f32 %v2621, %v2876
        %v2878 = vpop.f32.mrb[0].mxu0
        %v2879 = vadd.f32 %v2625, %v2878
        %2880 = vmatprep.mubr.bf16.mxu0 %v2598
        %2881 = vmatmul.mubr.bf16.gmra.mrb[0].mxu0 %v2597
        %v2882 = vpop.f32.mrb[0].mxu0
        %v2883 = vadd.f32 %v2621, %v2882
        %v2884 = vpop.f32.mrb[0].mxu0
        %v2885 = vadd.f32 %v2625, %v2884
        %v2886 = vpop.f32.mrb[0].mxu0
        %v2887 = vadd.f32 %v2621, %v2886
        %v2888 = vpop.f32.mrb[0].mxu0
        %v2889 = vadd.f32 %v2625, %v2888
        %2890 = vmatprep.mubr.bf16.mxu0 %v2600
        %2891 = vmatmul.mubr.bf16.gmra.mrb[0].mxu0 %v2599
        %v2892 = vpop.f32.mrb[0].mxu0
        %v2893 = vadd.f32 %v2621, %v2892
        %v2894 = vpop.f32.mrb[0].mxu0
        %v2895 = vadd.f32 %v2625, %v2894
        %v2896 = vpop.f32.mrb[0].mxu0
        %v2897 = vadd.f32 %v2621, %v2896
        %v2898 = vpop.f32.mrb[0].mxu0
        %v2899 = vadd.f32 %v2625, %v2898
        %2900 = vmatprep.mubr.bf16.mxu0 %v2602
        %2901 = vmatmul.mubr.bf16.gmra.mrb[0].mxu0 %v2601
        %v2902 = vpop.f32.mrb[0].mxu0
        %v2903 = vadd.f32 %v2621, %v2902
        %v2904 = vpop.f32.mrb[0].mxu0
        %v2905 = vadd.f32 %v2625, %v2904
        %v2906 = vpop.f32.mrb[0].mxu0
        %v2907 = vadd.f32 %v2621, %v2906
        %v2908 = vpop.f32.mrb[0].mxu0
        %v2909 = vadd.f32 %v2625, %v2908
        %2910 = vmatprep.mubr.bf16.mxu0 %v2604
        %2911 = vmatmul.mubr.bf16.gmra.mrb[0].mxu0 %v2603
        %v2912 = vpop.f32.mrb[0].mxu0
        %v2913 = vadd.f32 %v2621, %v2912
        %v2914 = vpop.f32.mrb[0].mxu0
        %v2915 = vadd.f32 %v2625, %v2914
        %v2916 = vpop.f32.mrb[0].mxu0
        %v2917 = vadd.f32 %v2621, %v2916
        %v2918 = vpop.f32.mrb[0].mxu0
        %v2919 = vadd.f32 %v2625, %v2918
        %2920 = vmatprep.mubr.bf16.mxu0 %v2606
        %2921 = vmatmul.mubr.bf16.gmra.mrb[0].mxu0 %v2605
        %v2922 = vpop.f32.mrb[0].mxu0
        %v2923 = vadd.f32 %v2621, %v2922
        %v2924 = vpop.f32.mrb[0].mxu0
        %v2925 = vadd.f32 %v2625, %v2924
        %v2926 = vpop.f32.mrb[0].mxu0
        %v2927 = vadd.f32 %v2621, %v2926
        %v2928 = vpop.f32.mrb[0].mxu0
        %v2929 = vadd.f32 %v2625, %v2928
        %2930 = vmatprep.mubr.bf16.mxu0 %v2608
        %2931 = vmatmul.mubr.bf16.gmra.mrb[0].mxu0 %v2607
        %v2932 = vpop.f32.mrb[0].mxu0
        %v2933 = vadd.f32 %v2621, %v2932
        %v2934 = vpop.f32.mrb[0].mxu0
        %v2935 = vadd.f32 %v2625, %v2934
        %v2936 = vpop.f32.mrb[0].mxu0
        %v2937 = vadd.f32 %v2621, %v2936
        %v2938 = vpop.f32.mrb[0].mxu0
        %v2939 = vadd.f32 %v2625, %v2938
        %2940 = vmatprep.mubr.bf16.mxu0 %v2610
        %2941 = vmatmul.mubr.bf16.gmra.mrb[0].mxu0 %v2609
        %v2942 = vpop.f32.mrb[0].mxu0
        %v2943 = vadd.f32 %v2621, %v2942
        %v2944 = vpop.f32.mrb[0].mxu0
        %v2945 = vadd.f32 %v2625, %v2944
        %v2946 = vpop.f32.mrb[0].mxu0
        %v2947 = vadd.f32 %v2621, %v2946
        %v2948 = vpop.f32.mrb[0].mxu0
        %v2949 = vadd.f32 %v2625, %v2948
        %2950 = vmatprep.mubr.bf16.mxu0 %v2612
        %2951 = vmatmul.mubr.bf16.gmra.mrb[0].mxu0 %v2611
        %v2952 = vpop.f32.mrb[0].mxu0
        %v2953 = vadd.f32 %v2621, %v2952
        %v2954 = vpop.f32.mrb[0].mxu0
        %v2955 = vadd.f32 %v2625, %v2954
        %v2956 = vpop.f32.mrb[0].mxu0
        %v2957 = vadd.f32 %v2621, %v2956
        %v2958 = vpop.f32.mrb[0].mxu0
        %v2959 = vadd.f32 %v2625, %v2958
        %2960 = vmatprep.mubr.bf16.mxu0 %v2614
        %2961 = vmatmul.mubr.bf16.gmra.mrb[0].mxu0 %v2613
        %v2962 = vpop.f32.mrb[0].mxu0
        %v2963 = vadd.f32 %v2621, %v2962
        %v2964 = vpop.f32.mrb[0].mxu0
        %v2965 = vadd.f32 %v2625, %v2964
        %v2966 = vpop.f32.mrb[0].mxu0
        %v2967 = vadd.f32 %v2621, %v2966
        %v2968 = vpop.f32.mrb[0].mxu0
        %v2969 = vadd.f32 %v2625, %v2968
        %2970 = vmatprep.mubr.bf16.mxu0 %v2616
        %2971 = vmatmul.mubr.bf16.gmra.mrb[0].mxu0 %v2615
        %v2972 = vpop.f32.mrb[0].mxu0
        %v2973 = vadd.f32 %v2621, %v2972
        %v2974 = vpop.f32.mrb[0].mxu0
        %v2975 = vadd.f32 %v2625, %v2974
        %v2976 = vpop.f32.mrb[0].mxu0
        %v2977 = vadd.f32 %v2621, %v2976
        %v2978 = vpop.f32.mrb[0].mxu0
        %v2979 = vadd.f32 %v2625, %v2978
        %2980 = vdwg.mxu0
        %v2981 = vmax.f32 %v2823, 0.0
        %v2982 = vmax.f32 %v2825, 0.0
        %v2983 = vmax.f32 %v2827, 0.0
        %v2984 = vmax.f32 %v2829, 0.0
        %v2985 = vmax.f32 %v2833, 0.0
        %v2986 = vmax.f32 %v2835, 0.0
        %v2987 = vmax.f32 %v2837, 0.0
        %v2988 = vmax.f32 %v2839, 0.0
        %v2989 = vmax.f32 %v2843, 0.0
        %v2990 = vmax.f32 %v2845, 0.0
        %v2991 = vmax.f32 %v2847, 0.0
        %v2992 = vmax.f32 %v2849, 0.0
        %v2993 = vmax.f32 %v2853, 0.0
        %v2994 = vmax.f32 %v2855, 0.0
        %v2995 = vmax.f32 %v2857, 0.0
        %v2996 = vmax.f32 %v2859, 0.0
        %v2997 = vmax.f32 %v2863, 0.0
        %v2998 = vmax.f32 %v2865, 0.0
        %v2999 = vmax.f32 %v2867, 0.0
        %v3000 = vmax.f32 %v2869, 0.0
        %v3001 = vmax.f32 %v2873, 0.0
        %v3002 = vmax.f32 %v2875, 0.0
        %v3003 = vmax.f32 %v2877, 0.0
        %v3004 = vmax.f32 %v2879, 0.0
        %v3005 = vmax.f32 %v2883, 0.0
        %v3006 = vmax.f32 %v2885, 0.0
        %v3007 = vmax.f32 %v2887, 0.0
        %v3008 = vmax.f32 %v2889, 0.0
        %v3009 = vmax.f32 %v2893, 0.0
        %v3010 = vmax.f32 %v2895, 0.0
        %v3011 = vmax.f32 %v2897, 0.0
        %v3012 = vmax.f32 %v2899, 0.0
        %v3013 = vmax.f32 %v2903, 0.0
        %v3014 = vmax.f32 %v2905, 0.0
        %v3015 = vmax.f32 %v2907, 0.0
        %v3016 = vmax.f32 %v2909, 0.0
        %v3017 = vmax.f32 %v2913, 0.0
        %v3018 = vmax.f32 %v2915, 0.0
        %v3019 = vmax.f32 %v2917, 0.0
        %v3020 = vmax.f32 %v2919, 0.0
        %v3021 = vmax.f32 %v2923, 0.0
        %v3022 = vmax.f32 %v2925, 0.0
        %v3023 = vmax.f32 %v2927, 0.0
        %v3024 = vmax.f32 %v2929, 0.0
        %v3025 = vmax.f32 %v2933, 0.0
        %v3026 = vmax.f32 %v2935, 0.0
        %v3027 = vmax.f32 %v2937, 0.0
        %v3028 = vmax.f32 %v2939, 0.0
        %v3029 = vmax.f32 %v2943, 0.0
        %v3030 = vmax.f32 %v2945, 0.0
        %v3031 = vmax.f32 %v2947, 0.0
        %v3032 = vmax.f32 %v2949, 0.0
        %v3033 = vmax.f32 %v2953, 0.0
        %v3034 = vmax.f32 %v2955, 0.0
        %v3035 = vmax.f32 %v2957, 0.0
        %v3036 = vmax.f32 %v2959, 0.0
        %v3037 = vmax.f32 %v2963, 0.0
        %v3038 = vmax.f32 %v2965, 0.0
        %v3039 = vmax.f32 %v2967, 0.0
        %v3040 = vmax.f32 %v2969, 0.0
        %v3041 = vmax.f32 %v2973, 0.0
        %v3042 = vmax.f32 %v2975, 0.0
        %v3043 = vmax.f32 %v2977, 0.0
        %v3044 = vmax.f32 %v2979, 0.0
        %v3045 = vld [vmem:[#allocation7] sm:$0xff]
        %v3046 = vld [vmem:[#allocation7 + $0x8] sm:$0xff]
        %v3047 = vld [vmem:[#allocation7 + $0x10] sm:$0xff]
        %v3048 = vld [vmem:[#allocation7 + $0x18] sm:$0xff]
        %v3049 = vld [vmem:[#allocation7 + $0x20] sm:$0xff]
        %v3050 = vld [vmem:[#allocation7 + $0x28] sm:$0x11]
        %v3051 = vld [vmem:[#allocation9] sm:$0xff]
        %v3052 = vld [vmem:[#allocation9 + $0x8] sm:$0xff]
        %v3053 = vld [vmem:[#allocation9 + $0x10] sm:$0xff]
        %v3054 = vld [vmem:[#allocation9 + $0x18] sm:$0xff]
        %v3055 = vld [vmem:[#allocation9 + $0x20] sm:$0xff]
        %v3056 = vld [vmem:[#allocation9 + $0x28] sm:$0xff]
        %v3057 = vld [vmem:[#allocation9 + $0x30] sm:$0xff]
        %v3058 = vld [vmem:[#allocation9 + $0x38] sm:$0xff]
        %v3059 = vld [vmem:[#allocation9 + $0x40] sm:$0xff]
        %v3060 = vld [vmem:[#allocation9 + $0x48] sm:$0xff]
        %v3061 = vld [vmem:[#allocation9 + $0x50] sm:$0xff]
        %v3062 = vld [vmem:[#allocation9 + $0x58] sm:$0xff]
        %v3063 = vld [vmem:[#allocation9 + $0x60] sm:$0xff]
        %v3064 = vld [vmem:[#allocation9 + $0x68] sm:$0xff]
        %v3065 = vld [vmem:[#allocation9 + $0x70] sm:$0xff]
        %v3066 = vld [vmem:[#allocation9 + $0x78] sm:$0xff]
        %v3067 = vld [vmem:[#allocation9 + $0x80] sm:$0xff]
        %v3068 = vld [vmem:[#allocation9 + $0x88] sm:$0xff]
        %v3069 = vld [vmem:[#allocation9 + $0x90] sm:$0xff]
        %v3070 = vld [vmem:[#allocation9 + $0x98] sm:$0xff]
        %v3071 = vld [vmem:[#allocation9 + $0xa0] sm:$0xff]
        %v3072 = vld [vmem:[#allocation9 + $0xa8] sm:$0xff]
        %v3073 = vld [vmem:[#allocation9 + $0xb0] sm:$0xff]
        %v3074 = vld [vmem:[#allocation9 + $0xb8] sm:$0xff]
        %v3075 = vld [vmem:[#allocation9 + $0xc0] sm:$0xff]
        %v3076 = vld [vmem:[#allocation9 + $0xc8] sm:$0xff]
        %v3077 = vld [vmem:[#allocation9 + $0xd0] sm:$0xff]
        %v3078 = vld [vmem:[#allocation9 + $0xd8] sm:$0xff]
        %v3079 = vld [vmem:[#allocation9 + $0xe0] sm:$0xff]
        %v3080 = vld [vmem:[#allocation9 + $0xe8] sm:$0xff]
        %v3081 = vld [vmem:[#allocation9 + $0xf0] sm:$0xff]
        %v3082 = vld [vmem:[#allocation9 + $0xf8] sm:$0xff]
        %v3083 = vld [vmem:[%s23] sm:$0x3]
        %v3084 = vpack.c.bf16 %v2983, %v2981
        %v3085 = vpack.c.bf16 %v2984, %v2982
        %v3086 = vpack.c.bf16 %v2987, %v2985
        %v3087 = vpack.c.bf16 %v2988, %v2986
        %v3088 = vpack.c.bf16 %v2991, %v2989
        %v3089 = vpack.c.bf16 %v2992, %v2990
        %v3090 = vpack.c.bf16 %v2995, %v2993
        %v3091 = vpack.c.bf16 %v2996, %v2994
        %v3092 = vpack.c.bf16 %v2999, %v2997
        %v3093 = vpack.c.bf16 %v3000, %v2998
        %v3094 = vpack.c.bf16 %v3003, %v3001
        %v3095 = vpack.c.bf16 %v3004, %v3002
        %v3096 = vpack.c.bf16 %v3007, %v3005
        %v3097 = vpack.c.bf16 %v3008, %v3006
        %v3098 = vpack.c.bf16 %v3011, %v3009
        %v3099 = vpack.c.bf16 %v3012, %v3010
        %v3100 = vpack.c.bf16 %v3015, %v3013
        %v3101 = vpack.c.bf16 %v3016, %v3014
        %v3102 = vpack.c.bf16 %v3019, %v3017
        %v3103 = vpack.c.bf16 %v3020, %v3018
        %v3104 = vpack.c.bf16 %v3023, %v3021
        %v3105 = vpack.c.bf16 %v3024, %v3022
        %v3106 = vpack.c.bf16 %v3027, %v3025
        %v3107 = vpack.c.bf16 %v3028, %v3026
        %v3108 = vpack.c.bf16 %v3031, %v3029
        %v3109 = vpack.c.bf16 %v3032, %v3030
        %v3110 = vpack.c.bf16 %v3035, %v3033
        %v3111 = vpack.c.bf16 %v3036, %v3034
        %v3112 = vpack.c.bf16 %v3039, %v3037
        %v3113 = vpack.c.bf16 %v3040, %v3038
        %v3114 = vpack.c.bf16 %v3043, %v3041
        %v3115 = vpack.c.bf16 %v3044, %v3042
        %v3148 = vunpack.c.l.b16 %v3051
        %v3149 = vunpack.c.h.b16 %v3051
        %v3150 = vunpack.c.l.b16 %v3052
        %v3151 = vunpack.c.h.b16 %v3052
        %v3152 = vunpack.c.l.b16 %v3053
        %v3153 = vunpack.c.h.b16 %v3053
        %v3154 = vunpack.c.l.b16 %v3054
        %v3155 = vunpack.c.h.b16 %v3054
        %v3156 = vunpack.c.l.b16 %v3055
        %v3157 = vunpack.c.h.b16 %v3055
        %v3158 = vunpack.c.l.b16 %v3056
        %v3159 = vunpack.c.h.b16 %v3056
        %v3160 = vunpack.c.l.b16 %v3057
        %v3161 = vunpack.c.h.b16 %v3057
        %v3162 = vunpack.c.l.b16 %v3058
        %v3163 = vunpack.c.h.b16 %v3058
        %v3164 = vunpack.c.l.b16 %v3059
        %v3165 = vunpack.c.h.b16 %v3059
        %v3166 = vunpack.c.l.b16 %v3060
        %v3167 = vunpack.c.h.b16 %v3060
        %v3168 = vunpack.c.l.b16 %v3061
        %v3169 = vunpack.c.h.b16 %v3061
        %v3170 = vunpack.c.l.b16 %v3062
        %v3171 = vunpack.c.h.b16 %v3062
        %v3172 = vunpack.c.l.b16 %v3063
        %v3173 = vunpack.c.h.b16 %v3063
        %v3174 = vunpack.c.l.b16 %v3064
        %v3175 = vunpack.c.h.b16 %v3064
        %v3176 = vunpack.c.l.b16 %v3065
        %v3177 = vunpack.c.h.b16 %v3065
        %v3178 = vunpack.c.l.b16 %v3066
        %v3179 = vunpack.c.h.b16 %v3066
        %v3180 = vunpack.c.l.b16 %v3067
        %v3181 = vunpack.c.h.b16 %v3067
        %v3182 = vunpack.c.l.b16 %v3068
        %v3183 = vunpack.c.h.b16 %v3068
        %v3184 = vunpack.c.l.b16 %v3069
        %v3185 = vunpack.c.h.b16 %v3069
        %v3186 = vunpack.c.l.b16 %v3070
        %v3187 = vunpack.c.h.b16 %v3070
        %v3188 = vunpack.c.l.b16 %v3071
        %v3189 = vunpack.c.h.b16 %v3071
        %v3190 = vunpack.c.l.b16 %v3072
        %v3191 = vunpack.c.h.b16 %v3072
        %v3192 = vunpack.c.l.b16 %v3073
        %v3193 = vunpack.c.h.b16 %v3073
        %v3194 = vunpack.c.l.b16 %v3074
        %v3195 = vunpack.c.h.b16 %v3074
        %v3196 = vunpack.c.l.b16 %v3075
        %v3197 = vunpack.c.h.b16 %v3075
        %v3198 = vunpack.c.l.b16 %v3076
        %v3199 = vunpack.c.h.b16 %v3076
        %v3200 = vunpack.c.l.b16 %v3077
        %v3201 = vunpack.c.h.b16 %v3077
        %v3202 = vunpack.c.l.b16 %v3078
        %v3203 = vunpack.c.h.b16 %v3078
        %v3204 = vunpack.c.l.b16 %v3079
        %v3205 = vunpack.c.h.b16 %v3079
        %v3206 = vunpack.c.l.b16 %v3080
        %v3207 = vunpack.c.h.b16 %v3080
        %v3208 = vunpack.c.l.b16 %v3081
        %v3209 = vunpack.c.h.b16 %v3081
        %v3210 = vunpack.c.l.b16 %v3082
        %v3211 = vunpack.c.h.b16 %v3082
        %v3212 = vpack.c.b16 %v3150, %v3148
        %v3213 = vpack.c.b16 %v3151, %v3149
        %v3214 = vpack.c.b16 %v3154, %v3152
        %v3215 = vpack.c.b16 %v3155, %v3153
        %v3216 = vpack.c.b16 %v3158, %v3156
        %v3217 = vpack.c.b16 %v3159, %v3157
        %v3218 = vpack.c.b16 %v3162, %v3160
        %v3219 = vpack.c.b16 %v3163, %v3161
        %v3220 = vpack.c.b16 %v3166, %v3164
        %v3221 = vpack.c.b16 %v3167, %v3165
        %v3222 = vpack.c.b16 %v3170, %v3168
        %v3223 = vpack.c.b16 %v3171, %v3169
        %v3224 = vpack.c.b16 %v3174, %v3172
        %v3225 = vpack.c.b16 %v3175, %v3173
        %v3226 = vpack.c.b16 %v3178, %v3176
        %v3227 = vpack.c.b16 %v3179, %v3177
        %v3228 = vpack.c.b16 %v3182, %v3180
        %v3229 = vpack.c.b16 %v3183, %v3181
        %v3230 = vpack.c.b16 %v3186, %v3184
        %v3231 = vpack.c.b16 %v3187, %v3185
        %v3232 = vpack.c.b16 %v3190, %v3188
        %v3233 = vpack.c.b16 %v3191, %v3189
        %v3234 = vpack.c.b16 %v3194, %v3192
        %v3235 = vpack.c.b16 %v3195, %v3193
        %v3236 = vpack.c.b16 %v3198, %v3196
        %v3237 = vpack.c.b16 %v3199, %v3197
        %v3238 = vpack.c.b16 %v3202, %v3200
        %v3239 = vpack.c.b16 %v3203, %v3201
        %v3240 = vpack.c.b16 %v3206, %v3204
        %v3241 = vpack.c.b16 %v3207, %v3205
        %v3242 = vpack.c.b16 %v3210, %v3208
        %v3243 = vpack.c.b16 %v3211, %v3209
        %3276 = vmatprep.subr.bf16.mxu0 %v3213
        %3277 = vmatpush1.bf16.msra.mxu0 %v3212
        %3278 = vmatprep.subr.bf16.mxu0 %v3215
        %3279 = vmatpush1.bf16.msra.mxu0 %v3214
        %3280 = vmatprep.subr.bf16.mxu0 %v3217
        %3281 = vmatpush1.bf16.msra.mxu0 %v3216
        %3282 = vmatprep.subr.bf16.mxu0 %v3219
        %3283 = vmatpush1.bf16.msra.mxu0 %v3218
        %3284 = vmatprep.subr.bf16.mxu0 %v3221
        %3285 = vmatpush1.bf16.msra.mxu0 %v3220
        %3286 = vmatprep.subr.bf16.mxu0 %v3223
        %3287 = vmatpush1.bf16.msra.mxu0 %v3222
        %3288 = vmatprep.subr.bf16.mxu0 %v3225
        %3289 = vmatpush1.bf16.msra.mxu0 %v3224
        %3290 = vmatprep.subr.bf16.mxu0 %v3227
        %3291 = vmatpush1.bf16.msra.mxu0 %v3226
        %3292 = vmatprep.subr.bf16.mxu0 %v3229
        %3293 = vmatpush1.bf16.msra.mxu0 %v3228
        %3294 = vmatprep.subr.bf16.mxu0 %v3231
        %3295 = vmatpush1.bf16.msra.mxu0 %v3230
        %3296 = vmatprep.subr.bf16.mxu0 %v3233
        %3297 = vmatpush1.bf16.msra.mxu0 %v3232
        %3298 = vmatprep.subr.bf16.mxu0 %v3235
        %3299 = vmatpush1.bf16.msra.mxu0 %v3234
        %3300 = vmatprep.subr.bf16.mxu0 %v3237
        %3301 = vmatpush1.bf16.msra.mxu0 %v3236
        %3302 = vmatprep.subr.bf16.mxu0 %v3239
        %3303 = vmatpush1.bf16.msra.mxu0 %v3238
        %3304 = vmatprep.subr.bf16.mxu0 %v3241
        %3305 = vmatpush1.bf16.msra.mxu0 %v3240
        %3306 = vmatprep.subr.bf16.mxu0 %v3243
        %3307 = vmatpush1.bf16.msra.mxu0 %v3242
        %3308 = vmatprep.mubr.bf16.mxu0 %v3085
        %3309 = vmatmul.mubr.bf16.gmra.mrb[0].mxu0 %v3084
        %v3310 = vpop.f32.mrb[0].mxu0
        %v3311 = vadd.f32 0.0, %v3310
        %v3312 = vpop.f32.mrb[0].mxu0
        %v3313 = vadd.f32 0.0, %v3312
        %v3314 = vpop.f32.mrb[0].mxu0
        %v3315 = vadd.f32 0.0, %v3314
        %v3316 = vpop.f32.mrb[0].mxu0
        %v3317 = vadd.f32 0.0, %v3316
        %3318 = vmatprep.mubr.bf16.mxu0 %v3087
        %3319 = vmatmul.mubr.bf16.gmra.mrb[0].mxu0 %v3086
        %v3320 = vpop.f32.mrb[0].mxu0
        %v3321 = vadd.f32 0.0, %v3320
        %v3322 = vpop.f32.mrb[0].mxu0
        %v3323 = vadd.f32 0.0, %v3322
        %v3324 = vpop.f32.mrb[0].mxu0
        %v3325 = vadd.f32 0.0, %v3324
        %v3326 = vpop.f32.mrb[0].mxu0
        %v3327 = vadd.f32 0.0, %v3326
        %3328 = vmatprep.mubr.bf16.mxu0 %v3089
        %3329 = vmatmul.mubr.bf16.gmra.mrb[0].mxu0 %v3088
        %v3330 = vpop.f32.mrb[0].mxu0
        %v3331 = vadd.f32 0.0, %v3330
        %v3332 = vpop.f32.mrb[0].mxu0
        %v3333 = vadd.f32 0.0, %v3332
        %v3334 = vpop.f32.mrb[0].mxu0
        %v3335 = vadd.f32 0.0, %v3334
        %v3336 = vpop.f32.mrb[0].mxu0
        %v3337 = vadd.f32 0.0, %v3336
        %3338 = vmatprep.mubr.bf16.mxu0 %v3091
        %3339 = vmatmul.mubr.bf16.gmra.mrb[0].mxu0 %v3090
        %v3340 = vpop.f32.mrb[0].mxu0
        %v3341 = vadd.f32 0.0, %v3340
        %v3342 = vpop.f32.mrb[0].mxu0
        %v3343 = vadd.f32 0.0, %v3342
        %v3344 = vpop.f32.mrb[0].mxu0
        %v3345 = vadd.f32 0.0, %v3344
        %v3346 = vpop.f32.mrb[0].mxu0
        %v3347 = vadd.f32 0.0, %v3346
        %3348 = vmatprep.mubr.bf16.mxu0 %v3093
        %3349 = vmatmul.mubr.bf16.gmra.mrb[0].mxu0 %v3092
        %v3350 = vpop.f32.mrb[0].mxu0
        %v3351 = vadd.f32 0.0, %v3350
        %v3352 = vpop.f32.mrb[0].mxu0
        %v3353 = vadd.f32 0.0, %v3352
        %v3354 = vpop.f32.mrb[0].mxu0
        %v3355 = vadd.f32 0.0, %v3354
        %v3356 = vpop.f32.mrb[0].mxu0
        %v3357 = vadd.f32 0.0, %v3356
        %3358 = vmatprep.mubr.bf16.mxu0 %v3095
        %3359 = vmatmul.mubr.bf16.gmra.mrb[0].mxu0 %v3094
        %v3360 = vpop.f32.mrb[0].mxu0
        %v3361 = vadd.f32 0.0, %v3360
        %v3362 = vpop.f32.mrb[0].mxu0
        %v3363 = vadd.f32 0.0, %v3362
        %v3364 = vpop.f32.mrb[0].mxu0
        %v3365 = vadd.f32 0.0, %v3364
        %v3366 = vpop.f32.mrb[0].mxu0
        %v3367 = vadd.f32 0.0, %v3366
        %3368 = vmatprep.mubr.bf16.mxu0 %v3097
        %3369 = vmatmul.mubr.bf16.gmra.mrb[0].mxu0 %v3096
        %v3370 = vpop.f32.mrb[0].mxu0
        %v3371 = vadd.f32 0.0, %v3370
        %v3372 = vpop.f32.mrb[0].mxu0
        %v3373 = vadd.f32 0.0, %v3372
        %v3374 = vpop.f32.mrb[0].mxu0
        %v3375 = vadd.f32 0.0, %v3374
        %v3376 = vpop.f32.mrb[0].mxu0
        %v3377 = vadd.f32 0.0, %v3376
        %3378 = vmatprep.mubr.bf16.mxu0 %v3099
        %3379 = vmatmul.mubr.bf16.gmra.mrb[0].mxu0 %v3098
        %v3380 = vpop.f32.mrb[0].mxu0
        %v3381 = vadd.f32 0.0, %v3380
        %v3382 = vpop.f32.mrb[0].mxu0
        %v3383 = vadd.f32 0.0, %v3382
        %v3384 = vpop.f32.mrb[0].mxu0
        %v3385 = vadd.f32 0.0, %v3384
        %v3386 = vpop.f32.mrb[0].mxu0
        %v3387 = vadd.f32 0.0, %v3386
        %3388 = vmatprep.mubr.bf16.mxu0 %v3101
        %3389 = vmatmul.mubr.bf16.gmra.mrb[0].mxu0 %v3100
        %v3390 = vpop.f32.mrb[0].mxu0
        %v3391 = vadd.f32 0.0, %v3390
        %v3392 = vpop.f32.mrb[0].mxu0
        %v3393 = vadd.f32 0.0, %v3392
        %v3394 = vpop.f32.mrb[0].mxu0
        %v3395 = vadd.f32 0.0, %v3394
        %v3396 = vpop.f32.mrb[0].mxu0
        %v3397 = vadd.f32 0.0, %v3396
        %3398 = vmatprep.mubr.bf16.mxu0 %v3103
        %3399 = vmatmul.mubr.bf16.gmra.mrb[0].mxu0 %v3102
        %v3400 = vpop.f32.mrb[0].mxu0
        %v3401 = vadd.f32 0.0, %v3400
        %v3402 = vpop.f32.mrb[0].mxu0
        %v3403 = vadd.f32 0.0, %v3402
        %v3404 = vpop.f32.mrb[0].mxu0
        %v3405 = vadd.f32 0.0, %v3404
        %v3406 = vpop.f32.mrb[0].mxu0
        %v3407 = vadd.f32 0.0, %v3406
        %3408 = vmatprep.mubr.bf16.mxu0 %v3105
        %3409 = vmatmul.mubr.bf16.gmra.mrb[0].mxu0 %v3104
        %v3410 = vpop.f32.mrb[0].mxu0
        %v3411 = vadd.f32 0.0, %v3410
        %v3412 = vpop.f32.mrb[0].mxu0
        %v3413 = vadd.f32 0.0, %v3412
        %v3414 = vpop.f32.mrb[0].mxu0
        %v3415 = vadd.f32 0.0, %v3414
        %v3416 = vpop.f32.mrb[0].mxu0
        %v3417 = vadd.f32 0.0, %v3416
        %3418 = vmatprep.mubr.bf16.mxu0 %v3107
        %3419 = vmatmul.mubr.bf16.gmra.mrb[0].mxu0 %v3106
        %v3420 = vpop.f32.mrb[0].mxu0
        %v3421 = vadd.f32 0.0, %v3420
        %v3422 = vpop.f32.mrb[0].mxu0
        %v3423 = vadd.f32 0.0, %v3422
        %v3424 = vpop.f32.mrb[0].mxu0
        %v3425 = vadd.f32 0.0, %v3424
        %v3426 = vpop.f32.mrb[0].mxu0
        %v3427 = vadd.f32 0.0, %v3426
        %3428 = vmatprep.mubr.bf16.mxu0 %v3109
        %3429 = vmatmul.mubr.bf16.gmra.mrb[0].mxu0 %v3108
        %v3430 = vpop.f32.mrb[0].mxu0
        %v3431 = vadd.f32 0.0, %v3430
        %v3432 = vpop.f32.mrb[0].mxu0
        %v3433 = vadd.f32 0.0, %v3432
        %v3434 = vpop.f32.mrb[0].mxu0
        %v3435 = vadd.f32 0.0, %v3434
        %v3436 = vpop.f32.mrb[0].mxu0
        %v3437 = vadd.f32 0.0, %v3436
        %3438 = vmatprep.mubr.bf16.mxu0 %v3111
        %3439 = vmatmul.mubr.bf16.gmra.mrb[0].mxu0 %v3110
        %v3440 = vpop.f32.mrb[0].mxu0
        %v3441 = vadd.f32 0.0, %v3440
        %v3442 = vpop.f32.mrb[0].mxu0
        %v3443 = vadd.f32 0.0, %v3442
        %v3444 = vpop.f32.mrb[0].mxu0
        %v3445 = vadd.f32 0.0, %v3444
        %v3446 = vpop.f32.mrb[0].mxu0
        %v3447 = vadd.f32 0.0, %v3446
        %3448 = vmatprep.mubr.bf16.mxu0 %v3113
        %3449 = vmatmul.mubr.bf16.gmra.mrb[0].mxu0 %v3112
        %v3450 = vpop.f32.mrb[0].mxu0
        %v3451 = vadd.f32 0.0, %v3450
        %v3452 = vpop.f32.mrb[0].mxu0
        %v3453 = vadd.f32 0.0, %v3452
        %v3454 = vpop.f32.mrb[0].mxu0
        %v3455 = vadd.f32 0.0, %v3454
        %v3456 = vpop.f32.mrb[0].mxu0
        %v3457 = vadd.f32 0.0, %v3456
        %3458 = vmatprep.mubr.bf16.mxu0 %v3115
        %3459 = vmatmul.mubr.bf16.gmra.mrb[0].mxu0 %v3114
        %v3460 = vpop.f32.mrb[0].mxu0
        %v3461 = vadd.f32 0.0, %v3460
        %v3462 = vpop.f32.mrb[0].mxu0
        %v3463 = vadd.f32 0.0, %v3462
        %v3464 = vpop.f32.mrb[0].mxu0
        %v3465 = vadd.f32 0.0, %v3464
        %v3466 = vpop.f32.mrb[0].mxu0
        %v3467 = vadd.f32 0.0, %v3466
        %3468 = vdwg.mxu0
        %v3475 = vunpack.c.l.b16 %v3045
        %v3476 = vunpack.c.h.b16 %v3045
        %v3477 = vunpack.c.l.b16 %v3046
        %v3478 = vunpack.c.h.b16 %v3046
        %v3479 = vunpack.c.l.b16 %v3047
        %v3480 = vunpack.c.h.b16 %v3047
        %v3481 = vunpack.c.l.b16 %v3048
        %v3482 = vunpack.c.h.b16 %v3048
        %v3483 = vunpack.c.l.b16 %v3049
        %v3484 = vunpack.c.h.b16 %v3049
        %v3485 = vunpack.c.l.b16 %v3050
        %v3486 = vunpack.c.h.b16 %v3050
        %v3487 = vpack.c.b16 %v3477, %v3475
        %v3488 = vpack.c.b16 %v3478, %v3476
        %v3489 = vpack.c.b16 %v3481, %v3479
        %v3490 = vpack.c.b16 %v3482, %v3480
        %v3491 = vpack.c.b16 %v3485, %v3483
        %v3492 = vpack.c.b16 %v3486, %v3484
        %v3498 = vsel %vm1302, %v3491, 0
        %v3501 = vsel %vm1302, %v3492, 0
        %3503 = vmatprep.subr.bf16.mxu0 %v3488
        %3504 = vmatpush1.bf16.msra.mxu0 %v3487
        %3505 = vmatprep.subr.bf16.mxu0 %v3490
        %3506 = vmatpush1.bf16.msra.mxu0 %v3489
        %3507 = vmatprep.subr.bf16.mxu0 %v3501
        %3508 = vmatpush1.bf16.msra.mxu0 %v3498
        %3509 = vmatprep.subr.bf16.mxu0 0
        %3510 = vmatpush1.bf16.msra.mxu0 0
        %3511 = vmatprep.subr.bf16.mxu0 0
        %3512 = vmatpush1.bf16.msra.mxu0 0
        %3513 = vmatprep.subr.bf16.mxu0 0
        %3514 = vmatpush1.bf16.msra.mxu0 0
        %3515 = vmatprep.subr.bf16.mxu0 0
        %3516 = vmatpush1.bf16.msra.mxu0 0
        %3517 = vmatprep.subr.bf16.mxu0 0
        %3518 = vmatpush1.bf16.msra.mxu0 0
        %3519 = vmatprep.subr.bf16.mxu0 0
        %3520 = vmatpush1.bf16.msra.mxu0 0
        %3521 = vmatprep.subr.bf16.mxu0 0
        %3522 = vmatpush1.bf16.msra.mxu0 0
        %3523 = vmatprep.subr.bf16.mxu0 0
        %3524 = vmatpush1.bf16.msra.mxu0 0
        %3525 = vmatprep.subr.bf16.mxu0 0
        %3526 = vmatpush1.bf16.msra.mxu0 0
        %3527 = vmatprep.subr.bf16.mxu0 0
        %3528 = vmatpush1.bf16.msra.mxu0 0
        %3529 = vmatprep.subr.bf16.mxu0 0
        %3530 = vmatpush1.bf16.msra.mxu0 0
        %3531 = vmatprep.subr.bf16.mxu0 0
        %3532 = vmatpush1.bf16.msra.mxu0 0
        %3533 = vmatprep.subr.bf16.mxu0 0
        %3534 = vmatpush1.bf16.msra.mxu0 0
        %3535 = vmatprep.mubr.bf16.mxu0 0
        %3536 = vmatmul.mubr.bf16.gmra.mrb[0].mxu0 %v1255
        %v3537 = vpop.f32.mrb[0].mxu0
        %v3538 = vadd.f32 %v3311, %v3537
        %v3539 = vpop.f32.mrb[0].mxu0
        %v3540 = vadd.f32 %v3313, %v3539
        %v3541 = vpop.f32.mrb[0].mxu0
        %v3542 = vadd.f32 %v3315, %v3541
        %v3543 = vpop.f32.mrb[0].mxu0
        %v3544 = vadd.f32 %v3317, %v3543
        %3545 = vmatprep.mubr.bf16.mxu0 0
        %3546 = vmatmul.mubr.bf16.gmra.mrb[0].mxu0 %v1258
        %v3547 = vpop.f32.mrb[0].mxu0
        %v3548 = vadd.f32 %v3321, %v3547
        %v3549 = vpop.f32.mrb[0].mxu0
        %v3550 = vadd.f32 %v3323, %v3549
        %v3551 = vpop.f32.mrb[0].mxu0
        %v3552 = vadd.f32 %v3325, %v3551
        %v3553 = vpop.f32.mrb[0].mxu0
        %v3554 = vadd.f32 %v3327, %v3553
        %3555 = vmatprep.mubr.bf16.mxu0 0
        %3556 = vmatmul.mubr.bf16.gmra.mrb[0].mxu0 %v1261
        %v3557 = vpop.f32.mrb[0].mxu0
        %v3558 = vadd.f32 %v3331, %v3557
        %v3559 = vpop.f32.mrb[0].mxu0
        %v3560 = vadd.f32 %v3333, %v3559
        %v3561 = vpop.f32.mrb[0].mxu0
        %v3562 = vadd.f32 %v3335, %v3561
        %v3563 = vpop.f32.mrb[0].mxu0
        %v3564 = vadd.f32 %v3337, %v3563
        %3565 = vmatprep.mubr.bf16.mxu0 0
        %3566 = vmatmul.mubr.bf16.gmra.mrb[0].mxu0 %v1264
        %v3567 = vpop.f32.mrb[0].mxu0
        %v3568 = vadd.f32 %v3341, %v3567
        %v3569 = vpop.f32.mrb[0].mxu0
        %v3570 = vadd.f32 %v3343, %v3569
        %v3571 = vpop.f32.mrb[0].mxu0
        %v3572 = vadd.f32 %v3345, %v3571
        %v3573 = vpop.f32.mrb[0].mxu0
        %v3574 = vadd.f32 %v3347, %v3573
        %3575 = vmatprep.mubr.bf16.mxu0 0
        %3576 = vmatmul.mubr.bf16.gmra.mrb[0].mxu0 %v1267
        %v3577 = vpop.f32.mrb[0].mxu0
        %v3578 = vadd.f32 %v3351, %v3577
        %v3579 = vpop.f32.mrb[0].mxu0
        %v3580 = vadd.f32 %v3353, %v3579
        %v3581 = vpop.f32.mrb[0].mxu0
        %v3582 = vadd.f32 %v3355, %v3581
        %v3583 = vpop.f32.mrb[0].mxu0
        %v3584 = vadd.f32 %v3357, %v3583
        %3585 = vmatprep.mubr.bf16.mxu0 0
        %3586 = vmatmul.mubr.bf16.gmra.mrb[0].mxu0 %v1270
        %v3587 = vpop.f32.mrb[0].mxu0
        %v3588 = vadd.f32 %v3361, %v3587
        %v3589 = vpop.f32.mrb[0].mxu0
        %v3590 = vadd.f32 %v3363, %v3589
        %v3591 = vpop.f32.mrb[0].mxu0
        %v3592 = vadd.f32 %v3365, %v3591
        %v3593 = vpop.f32.mrb[0].mxu0
        %v3594 = vadd.f32 %v3367, %v3593
        %3595 = vmatprep.mubr.bf16.mxu0 0
        %3596 = vmatmul.mubr.bf16.gmra.mrb[0].mxu0 %v1273
        %v3597 = vpop.f32.mrb[0].mxu0
        %v3598 = vadd.f32 %v3371, %v3597
        %v3599 = vpop.f32.mrb[0].mxu0
        %v3600 = vadd.f32 %v3373, %v3599
        %v3601 = vpop.f32.mrb[0].mxu0
        %v3602 = vadd.f32 %v3375, %v3601
        %v3603 = vpop.f32.mrb[0].mxu0
        %v3604 = vadd.f32 %v3377, %v3603
        %3605 = vmatprep.mubr.bf16.mxu0 0
        %3606 = vmatmul.mubr.bf16.gmra.mrb[0].mxu0 %v1276
        %v3607 = vpop.f32.mrb[0].mxu0
        %v3608 = vadd.f32 %v3381, %v3607
        %v3609 = vpop.f32.mrb[0].mxu0
        %v3610 = vadd.f32 %v3383, %v3609
        %v3611 = vpop.f32.mrb[0].mxu0
        %v3612 = vadd.f32 %v3385, %v3611
        %v3613 = vpop.f32.mrb[0].mxu0
        %v3614 = vadd.f32 %v3387, %v3613
        %3615 = vmatprep.mubr.bf16.mxu0 0
        %3616 = vmatmul.mubr.bf16.gmra.mrb[0].mxu0 %v1279
        %v3617 = vpop.f32.mrb[0].mxu0
        %v3618 = vadd.f32 %v3391, %v3617
        %v3619 = vpop.f32.mrb[0].mxu0
        %v3620 = vadd.f32 %v3393, %v3619
        %v3621 = vpop.f32.mrb[0].mxu0
        %v3622 = vadd.f32 %v3395, %v3621
        %v3623 = vpop.f32.mrb[0].mxu0
        %v3624 = vadd.f32 %v3397, %v3623
        %3625 = vmatprep.mubr.bf16.mxu0 0
        %3626 = vmatmul.mubr.bf16.gmra.mrb[0].mxu0 %v1282
        %v3627 = vpop.f32.mrb[0].mxu0
        %v3628 = vadd.f32 %v3401, %v3627
        %v3629 = vpop.f32.mrb[0].mxu0
        %v3630 = vadd.f32 %v3403, %v3629
        %v3631 = vpop.f32.mrb[0].mxu0
        %v3632 = vadd.f32 %v3405, %v3631
        %v3633 = vpop.f32.mrb[0].mxu0
        %v3634 = vadd.f32 %v3407, %v3633
        %3635 = vmatprep.mubr.bf16.mxu0 0
        %3636 = vmatmul.mubr.bf16.gmra.mrb[0].mxu0 %v1285
        %v3637 = vpop.f32.mrb[0].mxu0
        %v3638 = vadd.f32 %v3411, %v3637
        %v3639 = vpop.f32.mrb[0].mxu0
        %v3640 = vadd.f32 %v3413, %v3639
        %v3641 = vpop.f32.mrb[0].mxu0
        %v3642 = vadd.f32 %v3415, %v3641
        %v3643 = vpop.f32.mrb[0].mxu0
        %v3644 = vadd.f32 %v3417, %v3643
        %3645 = vmatprep.mubr.bf16.mxu0 0
        %3646 = vmatmul.mubr.bf16.gmra.mrb[0].mxu0 %v1288
        %v3647 = vpop.f32.mrb[0].mxu0
        %v3648 = vadd.f32 %v3421, %v3647
        %v3649 = vpop.f32.mrb[0].mxu0
        %v3650 = vadd.f32 %v3423, %v3649
        %v3651 = vpop.f32.mrb[0].mxu0
        %v3652 = vadd.f32 %v3425, %v3651
        %v3653 = vpop.f32.mrb[0].mxu0
        %v3654 = vadd.f32 %v3427, %v3653
        %3655 = vmatprep.mubr.bf16.mxu0 0
        %3656 = vmatmul.mubr.bf16.gmra.mrb[0].mxu0 %v1291
        %v3657 = vpop.f32.mrb[0].mxu0
        %v3658 = vadd.f32 %v3431, %v3657
        %v3659 = vpop.f32.mrb[0].mxu0
        %v3660 = vadd.f32 %v3433, %v3659
        %v3661 = vpop.f32.mrb[0].mxu0
        %v3662 = vadd.f32 %v3435, %v3661
        %v3663 = vpop.f32.mrb[0].mxu0
        %v3664 = vadd.f32 %v3437, %v3663
        %3665 = vmatprep.mubr.bf16.mxu0 0
        %3666 = vmatmul.mubr.bf16.gmra.mrb[0].mxu0 %v1294
        %v3667 = vpop.f32.mrb[0].mxu0
        %v3668 = vadd.f32 %v3441, %v3667
        %v3669 = vpop.f32.mrb[0].mxu0
        %v3670 = vadd.f32 %v3443, %v3669
        %v3671 = vpop.f32.mrb[0].mxu0
        %v3672 = vadd.f32 %v3445, %v3671
        %v3673 = vpop.f32.mrb[0].mxu0
        %v3674 = vadd.f32 %v3447, %v3673
        %3675 = vmatprep.mubr.bf16.mxu0 0
        %3676 = vmatmul.mubr.bf16.gmra.mrb[0].mxu0 %v1297
        %v3677 = vpop.f32.mrb[0].mxu0
        %v3678 = vadd.f32 %v3451, %v3677
        %v3679 = vpop.f32.mrb[0].mxu0
        %v3680 = vadd.f32 %v3453, %v3679
        %v3681 = vpop.f32.mrb[0].mxu0
        %v3682 = vadd.f32 %v3455, %v3681
        %v3683 = vpop.f32.mrb[0].mxu0
        %v3684 = vadd.f32 %v3457, %v3683
        %3685 = vmatprep.mubr.bf16.mxu0 0
        %3686 = vmatmul.mubr.bf16.gmra.mrb[0].mxu0 %v1300
        %v3687 = vpop.f32.mrb[0].mxu0
        %v3688 = vadd.f32 %v3461, %v3687
        %v3689 = vpop.f32.mrb[0].mxu0
        %v3690 = vadd.f32 %v3463, %v3689
        %v3691 = vpop.f32.mrb[0].mxu0
        %v3692 = vadd.f32 %v3465, %v3691
        %v3693 = vpop.f32.mrb[0].mxu0
        %v3694 = vadd.f32 %v3467, %v3693
        %3695 = vdwg.mxu0
        %v3697 = vlaneseq
        %v3698 = vshrl.u32 %v3697, 7
        %v3699 = vsub.s32 0, %v3698
        %v3700 = vrot.slane %v3083, %v3699
        %v3701 = vlaneseq
        %v3702 = vshrl.u32 %v3701, 7
        %v3703 = vsub.s32 1, %v3702
        %v3704 = vrot.slane %v3083, %v3703
        %v3707 = vadd.f32 %v3538, %v3700
        %v3708 = vadd.f32 %v3540, %v3704
        %v3709 = vadd.f32 %v3542, %v3700
        %v3710 = vadd.f32 %v3544, %v3704
        %v3711 = vadd.f32 %v3548, %v3700
        %v3712 = vadd.f32 %v3550, %v3704
        %v3713 = vadd.f32 %v3552, %v3700
        %v3714 = vadd.f32 %v3554, %v3704
        %v3715 = vadd.f32 %v3558, %v3700
        %v3716 = vadd.f32 %v3560, %v3704
        %v3717 = vadd.f32 %v3562, %v3700
        %v3718 = vadd.f32 %v3564, %v3704
        %v3719 = vadd.f32 %v3568, %v3700
        %v3720 = vadd.f32 %v3570, %v3704
        %v3721 = vadd.f32 %v3572, %v3700
        %v3722 = vadd.f32 %v3574, %v3704
        %v3723 = vadd.f32 %v3578, %v3700
        %v3724 = vadd.f32 %v3580, %v3704
        %v3725 = vadd.f32 %v3582, %v3700
        %v3726 = vadd.f32 %v3584, %v3704
        %v3727 = vadd.f32 %v3588, %v3700
        %v3728 = vadd.f32 %v3590, %v3704
        %v3729 = vadd.f32 %v3592, %v3700
        %v3730 = vadd.f32 %v3594, %v3704
        %v3731 = vadd.f32 %v3598, %v3700
        %v3732 = vadd.f32 %v3600, %v3704
        %v3733 = vadd.f32 %v3602, %v3700
        %v3734 = vadd.f32 %v3604, %v3704
        %v3735 = vadd.f32 %v3608, %v3700
        %v3736 = vadd.f32 %v3610, %v3704
        %v3737 = vadd.f32 %v3612, %v3700
        %v3738 = vadd.f32 %v3614, %v3704
        %v3739 = vadd.f32 %v3618, %v3700
        %v3740 = vadd.f32 %v3620, %v3704
        %v3741 = vadd.f32 %v3622, %v3700
        %v3742 = vadd.f32 %v3624, %v3704
        %v3743 = vadd.f32 %v3628, %v3700
        %v3744 = vadd.f32 %v3630, %v3704
        %v3745 = vadd.f32 %v3632, %v3700
        %v3746 = vadd.f32 %v3634, %v3704
        %v3747 = vadd.f32 %v3638, %v3700
        %v3748 = vadd.f32 %v3640, %v3704
        %v3749 = vadd.f32 %v3642, %v3700
        %v3750 = vadd.f32 %v3644, %v3704
        %v3751 = vadd.f32 %v3648, %v3700
        %v3752 = vadd.f32 %v3650, %v3704
        %v3753 = vadd.f32 %v3652, %v3700
        %v3754 = vadd.f32 %v3654, %v3704
        %v3755 = vadd.f32 %v3658, %v3700
        %v3756 = vadd.f32 %v3660, %v3704
        %v3757 = vadd.f32 %v3662, %v3700
        %v3758 = vadd.f32 %v3664, %v3704
        %v3759 = vadd.f32 %v3668, %v3700
        %v3760 = vadd.f32 %v3670, %v3704
        %v3761 = vadd.f32 %v3672, %v3700
        %v3762 = vadd.f32 %v3674, %v3704
        %v3763 = vadd.f32 %v3678, %v3700
        %v3764 = vadd.f32 %v3680, %v3704
        %v3765 = vadd.f32 %v3682, %v3700
        %v3766 = vadd.f32 %v3684, %v3704
        %v3767 = vadd.f32 %v3688, %v3700
        %v3768 = vadd.f32 %v3690, %v3704
        %v3769 = vadd.f32 %v3692, %v3700
        %v3770 = vadd.f32 %v3694, %v3704
        %v3771 = vmax.f32 %v3707, 0.0
        %v3772 = vmax.f32 %v3708, 0.0
        %v3773 = vmax.f32 %v3709, 0.0
        %v3774 = vmax.f32 %v3710, 0.0
        %v3775 = vmax.f32 %v3711, 0.0
        %v3776 = vmax.f32 %v3712, 0.0
        %v3777 = vmax.f32 %v3713, 0.0
        %v3778 = vmax.f32 %v3714, 0.0
        %v3779 = vmax.f32 %v3715, 0.0
        %v3780 = vmax.f32 %v3716, 0.0
        %v3781 = vmax.f32 %v3717, 0.0
        %v3782 = vmax.f32 %v3718, 0.0
        %v3783 = vmax.f32 %v3719, 0.0
        %v3784 = vmax.f32 %v3720, 0.0
        %v3785 = vmax.f32 %v3721, 0.0
        %v3786 = vmax.f32 %v3722, 0.0
        %v3787 = vmax.f32 %v3723, 0.0
        %v3788 = vmax.f32 %v3724, 0.0
        %v3789 = vmax.f32 %v3725, 0.0
        %v3790 = vmax.f32 %v3726, 0.0
        %v3791 = vmax.f32 %v3727, 0.0
        %v3792 = vmax.f32 %v3728, 0.0
        %v3793 = vmax.f32 %v3729, 0.0
        %v3794 = vmax.f32 %v3730, 0.0
        %v3795 = vmax.f32 %v3731, 0.0
        %v3796 = vmax.f32 %v3732, 0.0
        %v3797 = vmax.f32 %v3733, 0.0
        %v3798 = vmax.f32 %v3734, 0.0
        %v3799 = vmax.f32 %v3735, 0.0
        %v3800 = vmax.f32 %v3736, 0.0
        %v3801 = vmax.f32 %v3737, 0.0
        %v3802 = vmax.f32 %v3738, 0.0
        %v3803 = vmax.f32 %v3739, 0.0
        %v3804 = vmax.f32 %v3740, 0.0
        %v3805 = vmax.f32 %v3741, 0.0
        %v3806 = vmax.f32 %v3742, 0.0
        %v3807 = vmax.f32 %v3743, 0.0
        %v3808 = vmax.f32 %v3744, 0.0
        %v3809 = vmax.f32 %v3745, 0.0
        %v3810 = vmax.f32 %v3746, 0.0
        %v3811 = vmax.f32 %v3747, 0.0
        %v3812 = vmax.f32 %v3748, 0.0
        %v3813 = vmax.f32 %v3749, 0.0
        %v3814 = vmax.f32 %v3750, 0.0
        %v3815 = vmax.f32 %v3751, 0.0
        %v3816 = vmax.f32 %v3752, 0.0
        %v3817 = vmax.f32 %v3753, 0.0
        %v3818 = vmax.f32 %v3754, 0.0
        %v3819 = vmax.f32 %v3755, 0.0
        %v3820 = vmax.f32 %v3756, 0.0
        %v3821 = vmax.f32 %v3757, 0.0
        %v3822 = vmax.f32 %v3758, 0.0
        %v3823 = vmax.f32 %v3759, 0.0
        %v3824 = vmax.f32 %v3760, 0.0
        %v3825 = vmax.f32 %v3761, 0.0
        %v3826 = vmax.f32 %v3762, 0.0
        %v3827 = vmax.f32 %v3763, 0.0
        %v3828 = vmax.f32 %v3764, 0.0
        %v3829 = vmax.f32 %v3765, 0.0
        %v3830 = vmax.f32 %v3766, 0.0
        %v3831 = vmax.f32 %v3767, 0.0
        %v3832 = vmax.f32 %v3768, 0.0
        %v3833 = vmax.f32 %v3769, 0.0
        %v3834 = vmax.f32 %v3770, 0.0
        %v3835 = vld [vmem:[#allocation10] sm:$0xff]
        %v3836 = vld [vmem:[#allocation10 + $0x8] sm:$0xff]
        %v3837 = vld [vmem:[#allocation10 + $0x10] sm:$0xff]
        %v3838 = vld [vmem:[#allocation10 + $0x18] sm:$0xff]
        %v3839 = vld [vmem:[#allocation10 + $0x20] sm:$0xff]
        %v3840 = vld [vmem:[#allocation10 + $0x28] sm:$0xff]
        %v3841 = vld [vmem:[#allocation10 + $0x30] sm:$0xff]
        %v3842 = vld [vmem:[#allocation10 + $0x38] sm:$0xff]
        %v3843 = vld [vmem:[#allocation10 + $0x40] sm:$0xff]
        %v3844 = vld [vmem:[#allocation10 + $0x48] sm:$0xff]
        %v3845 = vld [vmem:[#allocation10 + $0x50] sm:$0xff]
        %v3846 = vld [vmem:[#allocation10 + $0x58] sm:$0xff]
        %v3847 = vld [vmem:[#allocation10 + $0x60] sm:$0xff]
        %v3848 = vld [vmem:[#allocation10 + $0x68] sm:$0xff]
        %v3849 = vld [vmem:[#allocation10 + $0x70] sm:$0xff]
        %v3850 = vld [vmem:[#allocation10 + $0x78] sm:$0xff]
        %v3851 = vld [vmem:[#allocation10 + $0x80] sm:$0xff]
        %v3852 = vld [vmem:[#allocation10 + $0x88] sm:$0xff]
        %v3853 = vld [vmem:[#allocation10 + $0x90] sm:$0xff]
        %v3854 = vld [vmem:[#allocation10 + $0x98] sm:$0xff]
        %v3855 = vld [vmem:[#allocation10 + $0xa0] sm:$0xff]
        %v3856 = vld [vmem:[#allocation10 + $0xa8] sm:$0xff]
        %v3857 = vld [vmem:[#allocation10 + $0xb0] sm:$0xff]
        %v3858 = vld [vmem:[#allocation10 + $0xb8] sm:$0xff]
        %v3859 = vld [vmem:[#allocation10 + $0xc0] sm:$0xff]
        %v3860 = vld [vmem:[#allocation10 + $0xc8] sm:$0xff]
        %v3861 = vld [vmem:[#allocation10 + $0xd0] sm:$0xff]
        %v3862 = vld [vmem:[#allocation10 + $0xd8] sm:$0xff]
        %v3863 = vld [vmem:[#allocation10 + $0xe0] sm:$0xff]
        %v3864 = vld [vmem:[#allocation10 + $0xe8] sm:$0xff]
        %v3865 = vld [vmem:[#allocation10 + $0xf0] sm:$0xff]
        %v3866 = vld [vmem:[#allocation10 + $0xf8] sm:$0xff]
        %v3867 = vld [vmem:[%s27] sm:$0x3]
        %v3868 = vpack.c.bf16 %v3773, %v3771
        %v3869 = vpack.c.bf16 %v3774, %v3772
        %v3870 = vpack.c.bf16 %v3777, %v3775
        %v3871 = vpack.c.bf16 %v3778, %v3776
        %v3872 = vpack.c.bf16 %v3781, %v3779
        %v3873 = vpack.c.bf16 %v3782, %v3780
        %v3874 = vpack.c.bf16 %v3785, %v3783
        %v3875 = vpack.c.bf16 %v3786, %v3784
        %v3876 = vpack.c.bf16 %v3789, %v3787
        %v3877 = vpack.c.bf16 %v3790, %v3788
        %v3878 = vpack.c.bf16 %v3793, %v3791
        %v3879 = vpack.c.bf16 %v3794, %v3792
        %v3880 = vpack.c.bf16 %v3797, %v3795
        %v3881 = vpack.c.bf16 %v3798, %v3796
        %v3882 = vpack.c.bf16 %v3801, %v3799
        %v3883 = vpack.c.bf16 %v3802, %v3800
        %v3884 = vpack.c.bf16 %v3805, %v3803
        %v3885 = vpack.c.bf16 %v3806, %v3804
        %v3886 = vpack.c.bf16 %v3809, %v3807
        %v3887 = vpack.c.bf16 %v3810, %v3808
        %v3888 = vpack.c.bf16 %v3813, %v3811
        %v3889 = vpack.c.bf16 %v3814, %v3812
        %v3890 = vpack.c.bf16 %v3817, %v3815
        %v3891 = vpack.c.bf16 %v3818, %v3816
        %v3892 = vpack.c.bf16 %v3821, %v3819
        %v3893 = vpack.c.bf16 %v3822, %v3820
        %v3894 = vpack.c.bf16 %v3825, %v3823
        %v3895 = vpack.c.bf16 %v3826, %v3824
        %v3896 = vpack.c.bf16 %v3829, %v3827
        %v3897 = vpack.c.bf16 %v3830, %v3828
        %v3898 = vpack.c.bf16 %v3833, %v3831
        %v3899 = vpack.c.bf16 %v3834, %v3832
        %v3901 = vlaneseq
        %v3902 = vshrl.u32 %v3901, 7
        %v3903 = vsub.s32 0, %v3902
        %v3904 = vrot.slane %v3867, %v3903
        %v3905 = vlaneseq
        %v3906 = vshrl.u32 %v3905, 7
        %v3907 = vsub.s32 1, %v3906
        %v3908 = vrot.slane %v3867, %v3907
        %v3943 = vunpack.c.l.b16 %v3835
        %v3944 = vunpack.c.h.b16 %v3835
        %v3945 = vunpack.c.l.b16 %v3836
        %v3946 = vunpack.c.h.b16 %v3836
        %v3947 = vunpack.c.l.b16 %v3837
        %v3948 = vunpack.c.h.b16 %v3837
        %v3949 = vunpack.c.l.b16 %v3838
        %v3950 = vunpack.c.h.b16 %v3838
        %v3951 = vunpack.c.l.b16 %v3839
        %v3952 = vunpack.c.h.b16 %v3839
        %v3953 = vunpack.c.l.b16 %v3840
        %v3954 = vunpack.c.h.b16 %v3840
        %v3955 = vunpack.c.l.b16 %v3841
        %v3956 = vunpack.c.h.b16 %v3841
        %v3957 = vunpack.c.l.b16 %v3842
        %v3958 = vunpack.c.h.b16 %v3842
        %v3959 = vunpack.c.l.b16 %v3843
        %v3960 = vunpack.c.h.b16 %v3843
        %v3961 = vunpack.c.l.b16 %v3844
        %v3962 = vunpack.c.h.b16 %v3844
        %v3963 = vunpack.c.l.b16 %v3845
        %v3964 = vunpack.c.h.b16 %v3845
        %v3965 = vunpack.c.l.b16 %v3846
        %v3966 = vunpack.c.h.b16 %v3846
        %v3967 = vunpack.c.l.b16 %v3847
        %v3968 = vunpack.c.h.b16 %v3847
        %v3969 = vunpack.c.l.b16 %v3848
        %v3970 = vunpack.c.h.b16 %v3848
        %v3971 = vunpack.c.l.b16 %v3849
        %v3972 = vunpack.c.h.b16 %v3849
        %v3973 = vunpack.c.l.b16 %v3850
        %v3974 = vunpack.c.h.b16 %v3850
        %v3975 = vunpack.c.l.b16 %v3851
        %v3976 = vunpack.c.h.b16 %v3851
        %v3977 = vunpack.c.l.b16 %v3852
        %v3978 = vunpack.c.h.b16 %v3852
        %v3979 = vunpack.c.l.b16 %v3853
        %v3980 = vunpack.c.h.b16 %v3853
        %v3981 = vunpack.c.l.b16 %v3854
        %v3982 = vunpack.c.h.b16 %v3854
        %v3983 = vunpack.c.l.b16 %v3855
        %v3984 = vunpack.c.h.b16 %v3855
        %v3985 = vunpack.c.l.b16 %v3856
        %v3986 = vunpack.c.h.b16 %v3856
        %v3987 = vunpack.c.l.b16 %v3857
        %v3988 = vunpack.c.h.b16 %v3857
        %v3989 = vunpack.c.l.b16 %v3858
        %v3990 = vunpack.c.h.b16 %v3858
        %v3991 = vunpack.c.l.b16 %v3859
        %v3992 = vunpack.c.h.b16 %v3859
        %v3993 = vunpack.c.l.b16 %v3860
        %v3994 = vunpack.c.h.b16 %v3860
        %v3995 = vunpack.c.l.b16 %v3861
        %v3996 = vunpack.c.h.b16 %v3861
        %v3997 = vunpack.c.l.b16 %v3862
        %v3998 = vunpack.c.h.b16 %v3862
        %v3999 = vunpack.c.l.b16 %v3863
        %v4000 = vunpack.c.h.b16 %v3863
        %v4001 = vunpack.c.l.b16 %v3864
        %v4002 = vunpack.c.h.b16 %v3864
        %v4003 = vunpack.c.l.b16 %v3865
        %v4004 = vunpack.c.h.b16 %v3865
        %v4005 = vunpack.c.l.b16 %v3866
        %v4006 = vunpack.c.h.b16 %v3866
        %v4007 = vpack.c.b16 %v3945, %v3943
        %v4008 = vpack.c.b16 %v3946, %v3944
        %v4009 = vpack.c.b16 %v3949, %v3947
        %v4010 = vpack.c.b16 %v3950, %v3948
        %v4011 = vpack.c.b16 %v3953, %v3951
        %v4012 = vpack.c.b16 %v3954, %v3952
        %v4013 = vpack.c.b16 %v3957, %v3955
        %v4014 = vpack.c.b16 %v3958, %v3956
        %v4015 = vpack.c.b16 %v3961, %v3959
        %v4016 = vpack.c.b16 %v3962, %v3960
        %v4017 = vpack.c.b16 %v3965, %v3963
        %v4018 = vpack.c.b16 %v3966, %v3964
        %v4019 = vpack.c.b16 %v3969, %v3967
        %v4020 = vpack.c.b16 %v3970, %v3968
        %v4021 = vpack.c.b16 %v3973, %v3971
        %v4022 = vpack.c.b16 %v3974, %v3972
        %v4023 = vpack.c.b16 %v3977, %v3975
        %v4024 = vpack.c.b16 %v3978, %v3976
        %v4025 = vpack.c.b16 %v3981, %v3979
        %v4026 = vpack.c.b16 %v3982, %v3980
        %v4027 = vpack.c.b16 %v3985, %v3983
        %v4028 = vpack.c.b16 %v3986, %v3984
        %v4029 = vpack.c.b16 %v3989, %v3987
        %v4030 = vpack.c.b16 %v3990, %v3988
        %v4031 = vpack.c.b16 %v3993, %v3991
        %v4032 = vpack.c.b16 %v3994, %v3992
        %v4033 = vpack.c.b16 %v3997, %v3995
        %v4034 = vpack.c.b16 %v3998, %v3996
        %v4035 = vpack.c.b16 %v4001, %v3999
        %v4036 = vpack.c.b16 %v4002, %v4000
        %v4037 = vpack.c.b16 %v4005, %v4003
        %v4038 = vpack.c.b16 %v4006, %v4004
        %4071 = vmatprep.subr.bf16.mxu0 %v4008
        %4072 = vmatpush1.bf16.msra.mxu0 %v4007
        %4073 = vmatprep.subr.bf16.mxu0 %v4010
        %4074 = vmatpush1.bf16.msra.mxu0 %v4009
        %4075 = vmatprep.subr.bf16.mxu0 %v4012
        %4076 = vmatpush1.bf16.msra.mxu0 %v4011
        %4077 = vmatprep.subr.bf16.mxu0 %v4014
        %4078 = vmatpush1.bf16.msra.mxu0 %v4013
        %4079 = vmatprep.subr.bf16.mxu0 %v4016
        %4080 = vmatpush1.bf16.msra.mxu0 %v4015
        %4081 = vmatprep.subr.bf16.mxu0 %v4018
        %4082 = vmatpush1.bf16.msra.mxu0 %v4017
        %4083 = vmatprep.subr.bf16.mxu0 %v4020
        %4084 = vmatpush1.bf16.msra.mxu0 %v4019
        %4085 = vmatprep.subr.bf16.mxu0 %v4022
        %4086 = vmatpush1.bf16.msra.mxu0 %v4021
        %4087 = vmatprep.subr.bf16.mxu0 %v4024
        %4088 = vmatpush1.bf16.msra.mxu0 %v4023
        %4089 = vmatprep.subr.bf16.mxu0 %v4026
        %4090 = vmatpush1.bf16.msra.mxu0 %v4025
        %4091 = vmatprep.subr.bf16.mxu0 %v4028
        %4092 = vmatpush1.bf16.msra.mxu0 %v4027
        %4093 = vmatprep.subr.bf16.mxu0 %v4030
        %4094 = vmatpush1.bf16.msra.mxu0 %v4029
        %4095 = vmatprep.subr.bf16.mxu0 %v4032
        %4096 = vmatpush1.bf16.msra.mxu0 %v4031
        %4097 = vmatprep.subr.bf16.mxu0 %v4034
        %4098 = vmatpush1.bf16.msra.mxu0 %v4033
        %4099 = vmatprep.subr.bf16.mxu0 %v4036
        %4100 = vmatpush1.bf16.msra.mxu0 %v4035
        %4101 = vmatprep.subr.bf16.mxu0 %v4038
        %4102 = vmatpush1.bf16.msra.mxu0 %v4037
        %4103 = vmatprep.mubr.bf16.mxu0 %v3869
        %4104 = vmatmul.mubr.bf16.gmra.mrb[0].mxu0 %v3868
        %v4105 = vpop.f32.mrb[0].mxu0
        %v4106 = vadd.f32 %v3904, %v4105
        %v4107 = vpop.f32.mrb[0].mxu0
        %v4108 = vadd.f32 %v3908, %v4107
        %v4109 = vpop.f32.mrb[0].mxu0
        %v4110 = vadd.f32 %v3904, %v4109
        %v4111 = vpop.f32.mrb[0].mxu0
        %v4112 = vadd.f32 %v3908, %v4111
        %4113 = vmatprep.mubr.bf16.mxu0 %v3871
        %4114 = vmatmul.mubr.bf16.gmra.mrb[0].mxu0 %v3870
        %v4115 = vpop.f32.mrb[0].mxu0
        %v4116 = vadd.f32 %v3904, %v4115
        %v4117 = vpop.f32.mrb[0].mxu0
        %v4118 = vadd.f32 %v3908, %v4117
        %v4119 = vpop.f32.mrb[0].mxu0
        %v4120 = vadd.f32 %v3904, %v4119
        %v4121 = vpop.f32.mrb[0].mxu0
        %v4122 = vadd.f32 %v3908, %v4121
        %4123 = vmatprep.mubr.bf16.mxu0 %v3873
        %4124 = vmatmul.mubr.bf16.gmra.mrb[0].mxu0 %v3872
        %v4125 = vpop.f32.mrb[0].mxu0
        %v4126 = vadd.f32 %v3904, %v4125
        %v4127 = vpop.f32.mrb[0].mxu0
        %v4128 = vadd.f32 %v3908, %v4127
        %v4129 = vpop.f32.mrb[0].mxu0
        %v4130 = vadd.f32 %v3904, %v4129
        %v4131 = vpop.f32.mrb[0].mxu0
        %v4132 = vadd.f32 %v3908, %v4131
        %4133 = vmatprep.mubr.bf16.mxu0 %v3875
        %4134 = vmatmul.mubr.bf16.gmra.mrb[0].mxu0 %v3874
        %v4135 = vpop.f32.mrb[0].mxu0
        %v4136 = vadd.f32 %v3904, %v4135
        %v4137 = vpop.f32.mrb[0].mxu0
        %v4138 = vadd.f32 %v3908, %v4137
        %v4139 = vpop.f32.mrb[0].mxu0
        %v4140 = vadd.f32 %v3904, %v4139
        %v4141 = vpop.f32.mrb[0].mxu0
        %v4142 = vadd.f32 %v3908, %v4141
        %4143 = vmatprep.mubr.bf16.mxu0 %v3877
        %4144 = vmatmul.mubr.bf16.gmra.mrb[0].mxu0 %v3876
        %v4145 = vpop.f32.mrb[0].mxu0
        %v4146 = vadd.f32 %v3904, %v4145
        %v4147 = vpop.f32.mrb[0].mxu0
        %v4148 = vadd.f32 %v3908, %v4147
        %v4149 = vpop.f32.mrb[0].mxu0
        %v4150 = vadd.f32 %v3904, %v4149
        %v4151 = vpop.f32.mrb[0].mxu0
        %v4152 = vadd.f32 %v3908, %v4151
        %4153 = vmatprep.mubr.bf16.mxu0 %v3879
        %4154 = vmatmul.mubr.bf16.gmra.mrb[0].mxu0 %v3878
        %v4155 = vpop.f32.mrb[0].mxu0
        %v4156 = vadd.f32 %v3904, %v4155
        %v4157 = vpop.f32.mrb[0].mxu0
        %v4158 = vadd.f32 %v3908, %v4157
        %v4159 = vpop.f32.mrb[0].mxu0
        %v4160 = vadd.f32 %v3904, %v4159
        %v4161 = vpop.f32.mrb[0].mxu0
        %v4162 = vadd.f32 %v3908, %v4161
        %4163 = vmatprep.mubr.bf16.mxu0 %v3881
        %4164 = vmatmul.mubr.bf16.gmra.mrb[0].mxu0 %v3880
        %v4165 = vpop.f32.mrb[0].mxu0
        %v4166 = vadd.f32 %v3904, %v4165
        %v4167 = vpop.f32.mrb[0].mxu0
        %v4168 = vadd.f32 %v3908, %v4167
        %v4169 = vpop.f32.mrb[0].mxu0
        %v4170 = vadd.f32 %v3904, %v4169
        %v4171 = vpop.f32.mrb[0].mxu0
        %v4172 = vadd.f32 %v3908, %v4171
        %4173 = vmatprep.mubr.bf16.mxu0 %v3883
        %4174 = vmatmul.mubr.bf16.gmra.mrb[0].mxu0 %v3882
        %v4175 = vpop.f32.mrb[0].mxu0
        %v4176 = vadd.f32 %v3904, %v4175
        %v4177 = vpop.f32.mrb[0].mxu0
        %v4178 = vadd.f32 %v3908, %v4177
        %v4179 = vpop.f32.mrb[0].mxu0
        %v4180 = vadd.f32 %v3904, %v4179
        %v4181 = vpop.f32.mrb[0].mxu0
        %v4182 = vadd.f32 %v3908, %v4181
        %4183 = vmatprep.mubr.bf16.mxu0 %v3885
        %4184 = vmatmul.mubr.bf16.gmra.mrb[0].mxu0 %v3884
        %v4185 = vpop.f32.mrb[0].mxu0
        %v4186 = vadd.f32 %v3904, %v4185
        %v4187 = vpop.f32.mrb[0].mxu0
        %v4188 = vadd.f32 %v3908, %v4187
        %v4189 = vpop.f32.mrb[0].mxu0
        %v4190 = vadd.f32 %v3904, %v4189
        %v4191 = vpop.f32.mrb[0].mxu0
        %v4192 = vadd.f32 %v3908, %v4191
        %4193 = vmatprep.mubr.bf16.mxu0 %v3887
        %4194 = vmatmul.mubr.bf16.gmra.mrb[0].mxu0 %v3886
        %v4195 = vpop.f32.mrb[0].mxu0
        %v4196 = vadd.f32 %v3904, %v4195
        %v4197 = vpop.f32.mrb[0].mxu0
        %v4198 = vadd.f32 %v3908, %v4197
        %v4199 = vpop.f32.mrb[0].mxu0
        %v4200 = vadd.f32 %v3904, %v4199
        %v4201 = vpop.f32.mrb[0].mxu0
        %v4202 = vadd.f32 %v3908, %v4201
        %4203 = vmatprep.mubr.bf16.mxu0 %v3889
        %4204 = vmatmul.mubr.bf16.gmra.mrb[0].mxu0 %v3888
        %v4205 = vpop.f32.mrb[0].mxu0
        %v4206 = vadd.f32 %v3904, %v4205
        %v4207 = vpop.f32.mrb[0].mxu0
        %v4208 = vadd.f32 %v3908, %v4207
        %v4209 = vpop.f32.mrb[0].mxu0
        %v4210 = vadd.f32 %v3904, %v4209
        %v4211 = vpop.f32.mrb[0].mxu0
        %v4212 = vadd.f32 %v3908, %v4211
        %4213 = vmatprep.mubr.bf16.mxu0 %v3891
        %4214 = vmatmul.mubr.bf16.gmra.mrb[0].mxu0 %v3890
        %v4215 = vpop.f32.mrb[0].mxu0
        %v4216 = vadd.f32 %v3904, %v4215
        %v4217 = vpop.f32.mrb[0].mxu0
        %v4218 = vadd.f32 %v3908, %v4217
        %v4219 = vpop.f32.mrb[0].mxu0
        %v4220 = vadd.f32 %v3904, %v4219
        %v4221 = vpop.f32.mrb[0].mxu0
        %v4222 = vadd.f32 %v3908, %v4221
        %4223 = vmatprep.mubr.bf16.mxu0 %v3893
        %4224 = vmatmul.mubr.bf16.gmra.mrb[0].mxu0 %v3892
        %v4225 = vpop.f32.mrb[0].mxu0
        %v4226 = vadd.f32 %v3904, %v4225
        %v4227 = vpop.f32.mrb[0].mxu0
        %v4228 = vadd.f32 %v3908, %v4227
        %v4229 = vpop.f32.mrb[0].mxu0
        %v4230 = vadd.f32 %v3904, %v4229
        %v4231 = vpop.f32.mrb[0].mxu0
        %v4232 = vadd.f32 %v3908, %v4231
        %4233 = vmatprep.mubr.bf16.mxu0 %v3895
        %4234 = vmatmul.mubr.bf16.gmra.mrb[0].mxu0 %v3894
        %v4235 = vpop.f32.mrb[0].mxu0
        %v4236 = vadd.f32 %v3904, %v4235
        %v4237 = vpop.f32.mrb[0].mxu0
        %v4238 = vadd.f32 %v3908, %v4237
        %v4239 = vpop.f32.mrb[0].mxu0
        %v4240 = vadd.f32 %v3904, %v4239
        %v4241 = vpop.f32.mrb[0].mxu0
        %v4242 = vadd.f32 %v3908, %v4241
        %4243 = vmatprep.mubr.bf16.mxu0 %v3897
        %4244 = vmatmul.mubr.bf16.gmra.mrb[0].mxu0 %v3896
        %v4245 = vpop.f32.mrb[0].mxu0
        %v4246 = vadd.f32 %v3904, %v4245
        %v4247 = vpop.f32.mrb[0].mxu0
        %v4248 = vadd.f32 %v3908, %v4247
        %v4249 = vpop.f32.mrb[0].mxu0
        %v4250 = vadd.f32 %v3904, %v4249
        %v4251 = vpop.f32.mrb[0].mxu0
        %v4252 = vadd.f32 %v3908, %v4251
        %4253 = vmatprep.mubr.bf16.mxu0 %v3899
        %4254 = vmatmul.mubr.bf16.gmra.mrb[0].mxu0 %v3898
        %v4255 = vpop.f32.mrb[0].mxu0
        %v4256 = vadd.f32 %v3904, %v4255
        %v4257 = vpop.f32.mrb[0].mxu0
        %v4258 = vadd.f32 %v3908, %v4257
        %v4259 = vpop.f32.mrb[0].mxu0
        %v4260 = vadd.f32 %v3904, %v4259
        %v4261 = vpop.f32.mrb[0].mxu0
        %v4262 = vadd.f32 %v3908, %v4261
        %4263 = vdwg.mxu0
        %v4264 = vmax.f32 %v4106, 0.0
        %v4265 = vmax.f32 %v4108, 0.0
        %v4266 = vmax.f32 %v4110, 0.0
        %v4267 = vmax.f32 %v4112, 0.0
        %v4268 = vmax.f32 %v4116, 0.0
        %v4269 = vmax.f32 %v4118, 0.0
        %v4270 = vmax.f32 %v4120, 0.0
        %v4271 = vmax.f32 %v4122, 0.0
        %v4272 = vmax.f32 %v4126, 0.0
        %v4273 = vmax.f32 %v4128, 0.0
        %v4274 = vmax.f32 %v4130, 0.0
        %v4275 = vmax.f32 %v4132, 0.0
        %v4276 = vmax.f32 %v4136, 0.0
        %v4277 = vmax.f32 %v4138, 0.0
        %v4278 = vmax.f32 %v4140, 0.0
        %v4279 = vmax.f32 %v4142, 0.0
        %v4280 = vmax.f32 %v4146, 0.0
        %v4281 = vmax.f32 %v4148, 0.0
        %v4282 = vmax.f32 %v4150, 0.0
        %v4283 = vmax.f32 %v4152, 0.0
        %v4284 = vmax.f32 %v4156, 0.0
        %v4285 = vmax.f32 %v4158, 0.0
        %v4286 = vmax.f32 %v4160, 0.0
        %v4287 = vmax.f32 %v4162, 0.0
        %v4288 = vmax.f32 %v4166, 0.0
        %v4289 = vmax.f32 %v4168, 0.0
        %v4290 = vmax.f32 %v4170, 0.0
        %v4291 = vmax.f32 %v4172, 0.0
        %v4292 = vmax.f32 %v4176, 0.0
        %v4293 = vmax.f32 %v4178, 0.0
        %v4294 = vmax.f32 %v4180, 0.0
        %v4295 = vmax.f32 %v4182, 0.0
        %v4296 = vmax.f32 %v4186, 0.0
        %v4297 = vmax.f32 %v4188, 0.0
        %v4298 = vmax.f32 %v4190, 0.0
        %v4299 = vmax.f32 %v4192, 0.0
        %v4300 = vmax.f32 %v4196, 0.0
        %v4301 = vmax.f32 %v4198, 0.0
        %v4302 = vmax.f32 %v4200, 0.0
        %v4303 = vmax.f32 %v4202, 0.0
        %v4304 = vmax.f32 %v4206, 0.0
        %v4305 = vmax.f32 %v4208, 0.0
        %v4306 = vmax.f32 %v4210, 0.0
        %v4307 = vmax.f32 %v4212, 0.0
        %v4308 = vmax.f32 %v4216, 0.0
        %v4309 = vmax.f32 %v4218, 0.0
        %v4310 = vmax.f32 %v4220, 0.0
        %v4311 = vmax.f32 %v4222, 0.0
        %v4312 = vmax.f32 %v4226, 0.0
        %v4313 = vmax.f32 %v4228, 0.0
        %v4314 = vmax.f32 %v4230, 0.0
        %v4315 = vmax.f32 %v4232, 0.0
        %v4316 = vmax.f32 %v4236, 0.0
        %v4317 = vmax.f32 %v4238, 0.0
        %v4318 = vmax.f32 %v4240, 0.0
        %v4319 = vmax.f32 %v4242, 0.0
        %v4320 = vmax.f32 %v4246, 0.0
        %v4321 = vmax.f32 %v4248, 0.0
        %v4322 = vmax.f32 %v4250, 0.0
        %v4323 = vmax.f32 %v4252, 0.0
        %v4324 = vmax.f32 %v4256, 0.0
        %v4325 = vmax.f32 %v4258, 0.0
        %v4326 = vmax.f32 %v4260, 0.0
        %v4327 = vmax.f32 %v4262, 0.0
        %v4328 = vld [vmem:[#allocation12] sm:$0xff]
        %v4329 = vld [vmem:[#allocation12 + $0x8] sm:$0xff]
        %v4330 = vld [vmem:[#allocation12 + $0x10] sm:$0xff]
        %v4331 = vld [vmem:[#allocation12 + $0x18] sm:$0xff]
        %v4332 = vld [vmem:[#allocation12 + $0x20] sm:$0xff]
        %v4333 = vld [vmem:[#allocation12 + $0x28] sm:$0xff]
        %v4334 = vld [vmem:[#allocation12 + $0x30] sm:$0xff]
        %v4335 = vld [vmem:[#allocation12 + $0x38] sm:$0xff]
        %v4336 = vld [vmem:[#allocation12 + $0x40] sm:$0xff]
        %v4337 = vld [vmem:[#allocation12 + $0x48] sm:$0xff]
        %v4338 = vld [vmem:[#allocation12 + $0x50] sm:$0xff]
        %v4339 = vld [vmem:[#allocation12 + $0x58] sm:$0xff]
        %v4340 = vld [vmem:[#allocation12 + $0x60] sm:$0xff]
        %v4341 = vld [vmem:[#allocation12 + $0x68] sm:$0xff]
        %v4342 = vld [vmem:[#allocation12 + $0x70] sm:$0xff]
        %v4343 = vld [vmem:[#allocation12 + $0x78] sm:$0xff]
        %v4344 = vld [vmem:[#allocation12 + $0x80] sm:$0xff]
        %v4345 = vld [vmem:[#allocation12 + $0x88] sm:$0xff]
        %v4346 = vld [vmem:[#allocation12 + $0x90] sm:$0xff]
        %v4347 = vld [vmem:[#allocation12 + $0x98] sm:$0xff]
        %v4348 = vld [vmem:[#allocation12 + $0xa0] sm:$0xff]
        %v4349 = vld [vmem:[#allocation12 + $0xa8] sm:$0xff]
        %v4350 = vld [vmem:[#allocation12 + $0xb0] sm:$0xff]
        %v4351 = vld [vmem:[#allocation12 + $0xb8] sm:$0xff]
        %v4352 = vld [vmem:[#allocation12 + $0xc0] sm:$0xff]
        %v4353 = vld [vmem:[#allocation12 + $0xc8] sm:$0xff]
        %v4354 = vld [vmem:[#allocation12 + $0xd0] sm:$0xff]
        %v4355 = vld [vmem:[#allocation12 + $0xd8] sm:$0xff]
        %v4356 = vld [vmem:[#allocation12 + $0xe0] sm:$0xff]
        %v4357 = vld [vmem:[#allocation12 + $0xe8] sm:$0xff]
        %v4358 = vld [vmem:[#allocation12 + $0xf0] sm:$0xff]
        %v4359 = vld [vmem:[#allocation12 + $0xf8] sm:$0xff]
        %v4360 = vld [vmem:[%s31] sm:$0x3]
        %v4361 = vpack.c.bf16 %v4266, %v4264
        %v4362 = vpack.c.bf16 %v4267, %v4265
        %v4363 = vpack.c.bf16 %v4270, %v4268
        %v4364 = vpack.c.bf16 %v4271, %v4269
        %v4365 = vpack.c.bf16 %v4274, %v4272
        %v4366 = vpack.c.bf16 %v4275, %v4273
        %v4367 = vpack.c.bf16 %v4278, %v4276
        %v4368 = vpack.c.bf16 %v4279, %v4277
        %v4369 = vpack.c.bf16 %v4282, %v4280
        %v4370 = vpack.c.bf16 %v4283, %v4281
        %v4371 = vpack.c.bf16 %v4286, %v4284
        %v4372 = vpack.c.bf16 %v4287, %v4285
        %v4373 = vpack.c.bf16 %v4290, %v4288
        %v4374 = vpack.c.bf16 %v4291, %v4289
        %v4375 = vpack.c.bf16 %v4294, %v4292
        %v4376 = vpack.c.bf16 %v4295, %v4293
        %v4377 = vpack.c.bf16 %v4298, %v4296
        %v4378 = vpack.c.bf16 %v4299, %v4297
        %v4379 = vpack.c.bf16 %v4302, %v4300
        %v4380 = vpack.c.bf16 %v4303, %v4301
        %v4381 = vpack.c.bf16 %v4306, %v4304
        %v4382 = vpack.c.bf16 %v4307, %v4305
        %v4383 = vpack.c.bf16 %v4310, %v4308
        %v4384 = vpack.c.bf16 %v4311, %v4309
        %v4385 = vpack.c.bf16 %v4314, %v4312
        %v4386 = vpack.c.bf16 %v4315, %v4313
        %v4387 = vpack.c.bf16 %v4318, %v4316
        %v4388 = vpack.c.bf16 %v4319, %v4317
        %v4389 = vpack.c.bf16 %v4322, %v4320
        %v4390 = vpack.c.bf16 %v4323, %v4321
        %v4391 = vpack.c.bf16 %v4326, %v4324
        %v4392 = vpack.c.bf16 %v4327, %v4325
        %v4394 = vlaneseq
        %v4395 = vshrl.u32 %v4394, 7
        %v4396 = vsub.s32 0, %v4395
        %v4397 = vrot.slane %v4360, %v4396
        %v4398 = vlaneseq
        %v4399 = vshrl.u32 %v4398, 7
        %v4400 = vsub.s32 1, %v4399
        %v4401 = vrot.slane %v4360, %v4400
        %v4436 = vunpack.c.l.b16 %v4328
        %v4437 = vunpack.c.h.b16 %v4328
        %v4438 = vunpack.c.l.b16 %v4329
        %v4439 = vunpack.c.h.b16 %v4329
        %v4440 = vunpack.c.l.b16 %v4330
        %v4441 = vunpack.c.h.b16 %v4330
        %v4442 = vunpack.c.l.b16 %v4331
        %v4443 = vunpack.c.h.b16 %v4331
        %v4444 = vunpack.c.l.b16 %v4332
        %v4445 = vunpack.c.h.b16 %v4332
        %v4446 = vunpack.c.l.b16 %v4333
        %v4447 = vunpack.c.h.b16 %v4333
        %v4448 = vunpack.c.l.b16 %v4334
        %v4449 = vunpack.c.h.b16 %v4334
        %v4450 = vunpack.c.l.b16 %v4335
        %v4451 = vunpack.c.h.b16 %v4335
        %v4452 = vunpack.c.l.b16 %v4336
        %v4453 = vunpack.c.h.b16 %v4336
        %v4454 = vunpack.c.l.b16 %v4337
        %v4455 = vunpack.c.h.b16 %v4337
        %v4456 = vunpack.c.l.b16 %v4338
        %v4457 = vunpack.c.h.b16 %v4338
        %v4458 = vunpack.c.l.b16 %v4339
        %v4459 = vunpack.c.h.b16 %v4339
        %v4460 = vunpack.c.l.b16 %v4340
        %v4461 = vunpack.c.h.b16 %v4340
        %v4462 = vunpack.c.l.b16 %v4341
        %v4463 = vunpack.c.h.b16 %v4341
        %v4464 = vunpack.c.l.b16 %v4342
        %v4465 = vunpack.c.h.b16 %v4342
        %v4466 = vunpack.c.l.b16 %v4343
        %v4467 = vunpack.c.h.b16 %v4343
        %v4468 = vunpack.c.l.b16 %v4344
        %v4469 = vunpack.c.h.b16 %v4344
        %v4470 = vunpack.c.l.b16 %v4345
        %v4471 = vunpack.c.h.b16 %v4345
        %v4472 = vunpack.c.l.b16 %v4346
        %v4473 = vunpack.c.h.b16 %v4346
        %v4474 = vunpack.c.l.b16 %v4347
        %v4475 = vunpack.c.h.b16 %v4347
        %v4476 = vunpack.c.l.b16 %v4348
        %v4477 = vunpack.c.h.b16 %v4348
        %v4478 = vunpack.c.l.b16 %v4349
        %v4479 = vunpack.c.h.b16 %v4349
        %v4480 = vunpack.c.l.b16 %v4350
        %v4481 = vunpack.c.h.b16 %v4350
        %v4482 = vunpack.c.l.b16 %v4351
        %v4483 = vunpack.c.h.b16 %v4351
        %v4484 = vunpack.c.l.b16 %v4352
        %v4485 = vunpack.c.h.b16 %v4352
        %v4486 = vunpack.c.l.b16 %v4353
        %v4487 = vunpack.c.h.b16 %v4353
        %v4488 = vunpack.c.l.b16 %v4354
        %v4489 = vunpack.c.h.b16 %v4354
        %v4490 = vunpack.c.l.b16 %v4355
        %v4491 = vunpack.c.h.b16 %v4355
        %v4492 = vunpack.c.l.b16 %v4356
        %v4493 = vunpack.c.h.b16 %v4356
        %v4494 = vunpack.c.l.b16 %v4357
        %v4495 = vunpack.c.h.b16 %v4357
        %v4496 = vunpack.c.l.b16 %v4358
        %v4497 = vunpack.c.h.b16 %v4358
        %v4498 = vunpack.c.l.b16 %v4359
        %v4499 = vunpack.c.h.b16 %v4359
        %v4500 = vpack.c.b16 %v4438, %v4436
        %v4501 = vpack.c.b16 %v4439, %v4437
        %v4502 = vpack.c.b16 %v4442, %v4440
        %v4503 = vpack.c.b16 %v4443, %v4441
        %v4504 = vpack.c.b16 %v4446, %v4444
        %v4505 = vpack.c.b16 %v4447, %v4445
        %v4506 = vpack.c.b16 %v4450, %v4448
        %v4507 = vpack.c.b16 %v4451, %v4449
        %v4508 = vpack.c.b16 %v4454, %v4452
        %v4509 = vpack.c.b16 %v4455, %v4453
        %v4510 = vpack.c.b16 %v4458, %v4456
        %v4511 = vpack.c.b16 %v4459, %v4457
        %v4512 = vpack.c.b16 %v4462, %v4460
        %v4513 = vpack.c.b16 %v4463, %v4461
        %v4514 = vpack.c.b16 %v4466, %v4464
        %v4515 = vpack.c.b16 %v4467, %v4465
        %v4516 = vpack.c.b16 %v4470, %v4468
        %v4517 = vpack.c.b16 %v4471, %v4469
        %v4518 = vpack.c.b16 %v4474, %v4472
        %v4519 = vpack.c.b16 %v4475, %v4473
        %v4520 = vpack.c.b16 %v4478, %v4476
        %v4521 = vpack.c.b16 %v4479, %v4477
        %v4522 = vpack.c.b16 %v4482, %v4480
        %v4523 = vpack.c.b16 %v4483, %v4481
        %v4524 = vpack.c.b16 %v4486, %v4484
        %v4525 = vpack.c.b16 %v4487, %v4485
        %v4526 = vpack.c.b16 %v4490, %v4488
        %v4527 = vpack.c.b16 %v4491, %v4489
        %v4528 = vpack.c.b16 %v4494, %v4492
        %v4529 = vpack.c.b16 %v4495, %v4493
        %v4530 = vpack.c.b16 %v4498, %v4496
        %v4531 = vpack.c.b16 %v4499, %v4497
        %4564 = vmatprep.subr.bf16.mxu0 %v4501
        %4565 = vmatpush1.bf16.msra.mxu0 %v4500
        %4566 = vmatprep.subr.bf16.mxu0 %v4503
        %4567 = vmatpush1.bf16.msra.mxu0 %v4502
        %4568 = vmatprep.subr.bf16.mxu0 %v4505
        %4569 = vmatpush1.bf16.msra.mxu0 %v4504
        %4570 = vmatprep.subr.bf16.mxu0 %v4507
        %4571 = vmatpush1.bf16.msra.mxu0 %v4506
        %4572 = vmatprep.subr.bf16.mxu0 %v4509
        %4573 = vmatpush1.bf16.msra.mxu0 %v4508
        %4574 = vmatprep.subr.bf16.mxu0 %v4511
        %4575 = vmatpush1.bf16.msra.mxu0 %v4510
        %4576 = vmatprep.subr.bf16.mxu0 %v4513
        %4577 = vmatpush1.bf16.msra.mxu0 %v4512
        %4578 = vmatprep.subr.bf16.mxu0 %v4515
        %4579 = vmatpush1.bf16.msra.mxu0 %v4514
        %4580 = vmatprep.subr.bf16.mxu0 %v4517
        %4581 = vmatpush1.bf16.msra.mxu0 %v4516
        %4582 = vmatprep.subr.bf16.mxu0 %v4519
        %4583 = vmatpush1.bf16.msra.mxu0 %v4518
        %4584 = vmatprep.subr.bf16.mxu0 %v4521
        %4585 = vmatpush1.bf16.msra.mxu0 %v4520
        %4586 = vmatprep.subr.bf16.mxu0 %v4523
        %4587 = vmatpush1.bf16.msra.mxu0 %v4522
        %4588 = vmatprep.subr.bf16.mxu0 %v4525
        %4589 = vmatpush1.bf16.msra.mxu0 %v4524
        %4590 = vmatprep.subr.bf16.mxu0 %v4527
        %4591 = vmatpush1.bf16.msra.mxu0 %v4526
        %4592 = vmatprep.subr.bf16.mxu0 %v4529
        %4593 = vmatpush1.bf16.msra.mxu0 %v4528
        %4594 = vmatprep.subr.bf16.mxu0 %v4531
        %4595 = vmatpush1.bf16.msra.mxu0 %v4530
        %4596 = vmatprep.mubr.bf16.mxu0 %v4362
        %4597 = vmatmul.mubr.bf16.gmra.mrb[0].mxu0 %v4361
        %v4598 = vpop.f32.mrb[0].mxu0
        %v4599 = vadd.f32 %v4397, %v4598
        %v4600 = vpop.f32.mrb[0].mxu0
        %v4601 = vadd.f32 %v4401, %v4600
        %v4602 = vpop.f32.mrb[0].mxu0
        %v4603 = vadd.f32 %v4397, %v4602
        %v4604 = vpop.f32.mrb[0].mxu0
        %v4605 = vadd.f32 %v4401, %v4604
        %4606 = vmatprep.mubr.bf16.mxu0 %v4364
        %4607 = vmatmul.mubr.bf16.gmra.mrb[0].mxu0 %v4363
        %v4608 = vpop.f32.mrb[0].mxu0
        %v4609 = vadd.f32 %v4397, %v4608
        %v4610 = vpop.f32.mrb[0].mxu0
        %v4611 = vadd.f32 %v4401, %v4610
        %v4612 = vpop.f32.mrb[0].mxu0
        %v4613 = vadd.f32 %v4397, %v4612
        %v4614 = vpop.f32.mrb[0].mxu0
        %v4615 = vadd.f32 %v4401, %v4614
        %4616 = vmatprep.mubr.bf16.mxu0 %v4366
        %4617 = vmatmul.mubr.bf16.gmra.mrb[0].mxu0 %v4365
        %v4618 = vpop.f32.mrb[0].mxu0
        %v4619 = vadd.f32 %v4397, %v4618
        %v4620 = vpop.f32.mrb[0].mxu0
        %v4621 = vadd.f32 %v4401, %v4620
        %v4622 = vpop.f32.mrb[0].mxu0
        %v4623 = vadd.f32 %v4397, %v4622
        %v4624 = vpop.f32.mrb[0].mxu0
        %v4625 = vadd.f32 %v4401, %v4624
        %4626 = vmatprep.mubr.bf16.mxu0 %v4368
        %4627 = vmatmul.mubr.bf16.gmra.mrb[0].mxu0 %v4367
        %v4628 = vpop.f32.mrb[0].mxu0
        %v4629 = vadd.f32 %v4397, %v4628
        %v4630 = vpop.f32.mrb[0].mxu0
        %v4631 = vadd.f32 %v4401, %v4630
        %v4632 = vpop.f32.mrb[0].mxu0
        %v4633 = vadd.f32 %v4397, %v4632
        %v4634 = vpop.f32.mrb[0].mxu0
        %v4635 = vadd.f32 %v4401, %v4634
        %4636 = vmatprep.mubr.bf16.mxu0 %v4370
        %4637 = vmatmul.mubr.bf16.gmra.mrb[0].mxu0 %v4369
        %v4638 = vpop.f32.mrb[0].mxu0
        %v4639 = vadd.f32 %v4397, %v4638
        %v4640 = vpop.f32.mrb[0].mxu0
        %v4641 = vadd.f32 %v4401, %v4640
        %v4642 = vpop.f32.mrb[0].mxu0
        %v4643 = vadd.f32 %v4397, %v4642
        %v4644 = vpop.f32.mrb[0].mxu0
        %v4645 = vadd.f32 %v4401, %v4644
        %4646 = vmatprep.mubr.bf16.mxu0 %v4372
        %4647 = vmatmul.mubr.bf16.gmra.mrb[0].mxu0 %v4371
        %v4648 = vpop.f32.mrb[0].mxu0
        %v4649 = vadd.f32 %v4397, %v4648
        %v4650 = vpop.f32.mrb[0].mxu0
        %v4651 = vadd.f32 %v4401, %v4650
        %v4652 = vpop.f32.mrb[0].mxu0
        %v4653 = vadd.f32 %v4397, %v4652
        %v4654 = vpop.f32.mrb[0].mxu0
        %v4655 = vadd.f32 %v4401, %v4654
        %4656 = vmatprep.mubr.bf16.mxu0 %v4374
        %4657 = vmatmul.mubr.bf16.gmra.mrb[0].mxu0 %v4373
        %v4658 = vpop.f32.mrb[0].mxu0
        %v4659 = vadd.f32 %v4397, %v4658
        %v4660 = vpop.f32.mrb[0].mxu0
        %v4661 = vadd.f32 %v4401, %v4660
        %v4662 = vpop.f32.mrb[0].mxu0
        %v4663 = vadd.f32 %v4397, %v4662
        %v4664 = vpop.f32.mrb[0].mxu0
        %v4665 = vadd.f32 %v4401, %v4664
        %4666 = vmatprep.mubr.bf16.mxu0 %v4376
        %4667 = vmatmul.mubr.bf16.gmra.mrb[0].mxu0 %v4375
        %v4668 = vpop.f32.mrb[0].mxu0
        %v4669 = vadd.f32 %v4397, %v4668
        %v4670 = vpop.f32.mrb[0].mxu0
        %v4671 = vadd.f32 %v4401, %v4670
        %v4672 = vpop.f32.mrb[0].mxu0
        %v4673 = vadd.f32 %v4397, %v4672
        %v4674 = vpop.f32.mrb[0].mxu0
        %v4675 = vadd.f32 %v4401, %v4674
        %4676 = vmatprep.mubr.bf16.mxu0 %v4378
        %4677 = vmatmul.mubr.bf16.gmra.mrb[0].mxu0 %v4377
        %v4678 = vpop.f32.mrb[0].mxu0
        %v4679 = vadd.f32 %v4397, %v4678
        %v4680 = vpop.f32.mrb[0].mxu0
        %v4681 = vadd.f32 %v4401, %v4680
        %v4682 = vpop.f32.mrb[0].mxu0
        %v4683 = vadd.f32 %v4397, %v4682
        %v4684 = vpop.f32.mrb[0].mxu0
        %v4685 = vadd.f32 %v4401, %v4684
        %4686 = vmatprep.mubr.bf16.mxu0 %v4380
        %4687 = vmatmul.mubr.bf16.gmra.mrb[0].mxu0 %v4379
        %v4688 = vpop.f32.mrb[0].mxu0
        %v4689 = vadd.f32 %v4397, %v4688
        %v4690 = vpop.f32.mrb[0].mxu0
        %v4691 = vadd.f32 %v4401, %v4690
        %v4692 = vpop.f32.mrb[0].mxu0
        %v4693 = vadd.f32 %v4397, %v4692
        %v4694 = vpop.f32.mrb[0].mxu0
        %v4695 = vadd.f32 %v4401, %v4694
        %4696 = vmatprep.mubr.bf16.mxu0 %v4382
        %4697 = vmatmul.mubr.bf16.gmra.mrb[0].mxu0 %v4381
        %v4698 = vpop.f32.mrb[0].mxu0
        %v4699 = vadd.f32 %v4397, %v4698
        %v4700 = vpop.f32.mrb[0].mxu0
        %v4701 = vadd.f32 %v4401, %v4700
        %v4702 = vpop.f32.mrb[0].mxu0
        %v4703 = vadd.f32 %v4397, %v4702
        %v4704 = vpop.f32.mrb[0].mxu0
        %v4705 = vadd.f32 %v4401, %v4704
        %4706 = vmatprep.mubr.bf16.mxu0 %v4384
        %4707 = vmatmul.mubr.bf16.gmra.mrb[0].mxu0 %v4383
        %v4708 = vpop.f32.mrb[0].mxu0
        %v4709 = vadd.f32 %v4397, %v4708
        %v4710 = vpop.f32.mrb[0].mxu0
        %v4711 = vadd.f32 %v4401, %v4710
        %v4712 = vpop.f32.mrb[0].mxu0
        %v4713 = vadd.f32 %v4397, %v4712
        %v4714 = vpop.f32.mrb[0].mxu0
        %v4715 = vadd.f32 %v4401, %v4714
        %4716 = vmatprep.mubr.bf16.mxu0 %v4386
        %4717 = vmatmul.mubr.bf16.gmra.mrb[0].mxu0 %v4385
        %v4718 = vpop.f32.mrb[0].mxu0
        %v4719 = vadd.f32 %v4397, %v4718
        %v4720 = vpop.f32.mrb[0].mxu0
        %v4721 = vadd.f32 %v4401, %v4720
        %v4722 = vpop.f32.mrb[0].mxu0
        %v4723 = vadd.f32 %v4397, %v4722
        %v4724 = vpop.f32.mrb[0].mxu0
        %v4725 = vadd.f32 %v4401, %v4724
        %4726 = vmatprep.mubr.bf16.mxu0 %v4388
        %4727 = vmatmul.mubr.bf16.gmra.mrb[0].mxu0 %v4387
        %v4728 = vpop.f32.mrb[0].mxu0
        %v4729 = vadd.f32 %v4397, %v4728
        %v4730 = vpop.f32.mrb[0].mxu0
        %v4731 = vadd.f32 %v4401, %v4730
        %v4732 = vpop.f32.mrb[0].mxu0
        %v4733 = vadd.f32 %v4397, %v4732
        %v4734 = vpop.f32.mrb[0].mxu0
        %v4735 = vadd.f32 %v4401, %v4734
        %4736 = vmatprep.mubr.bf16.mxu0 %v4390
        %4737 = vmatmul.mubr.bf16.gmra.mrb[0].mxu0 %v4389
        %v4738 = vpop.f32.mrb[0].mxu0
        %v4739 = vadd.f32 %v4397, %v4738
        %v4740 = vpop.f32.mrb[0].mxu0
        %v4741 = vadd.f32 %v4401, %v4740
        %v4742 = vpop.f32.mrb[0].mxu0
        %v4743 = vadd.f32 %v4397, %v4742
        %v4744 = vpop.f32.mrb[0].mxu0
        %v4745 = vadd.f32 %v4401, %v4744
        %4746 = vmatprep.mubr.bf16.mxu0 %v4392
        %4747 = vmatmul.mubr.bf16.gmra.mrb[0].mxu0 %v4391
        %v4748 = vpop.f32.mrb[0].mxu0
        %v4749 = vadd.f32 %v4397, %v4748
        %v4750 = vpop.f32.mrb[0].mxu0
        %v4751 = vadd.f32 %v4401, %v4750
        %v4752 = vpop.f32.mrb[0].mxu0
        %v4753 = vadd.f32 %v4397, %v4752
        %v4754 = vpop.f32.mrb[0].mxu0
        %v4755 = vadd.f32 %v4401, %v4754
        %4756 = vdwg.mxu0
        %v4757 = vmax.f32 %v4599, 0.0
        %v4758 = vmax.f32 %v4601, 0.0
        %v4759 = vmax.f32 %v4603, 0.0
        %v4760 = vmax.f32 %v4605, 0.0
        %v4761 = vmax.f32 %v4609, 0.0
        %v4762 = vmax.f32 %v4611, 0.0
        %v4763 = vmax.f32 %v4613, 0.0
        %v4764 = vmax.f32 %v4615, 0.0
        %v4765 = vmax.f32 %v4619, 0.0
        %v4766 = vmax.f32 %v4621, 0.0
        %v4767 = vmax.f32 %v4623, 0.0
        %v4768 = vmax.f32 %v4625, 0.0
        %v4769 = vmax.f32 %v4629, 0.0
        %v4770 = vmax.f32 %v4631, 0.0
        %v4771 = vmax.f32 %v4633, 0.0
        %v4772 = vmax.f32 %v4635, 0.0
        %v4773 = vmax.f32 %v4639, 0.0
        %v4774 = vmax.f32 %v4641, 0.0
        %v4775 = vmax.f32 %v4643, 0.0
        %v4776 = vmax.f32 %v4645, 0.0
        %v4777 = vmax.f32 %v4649, 0.0
        %v4778 = vmax.f32 %v4651, 0.0
        %v4779 = vmax.f32 %v4653, 0.0
        %v4780 = vmax.f32 %v4655, 0.0
        %v4781 = vmax.f32 %v4659, 0.0
        %v4782 = vmax.f32 %v4661, 0.0
        %v4783 = vmax.f32 %v4663, 0.0
        %v4784 = vmax.f32 %v4665, 0.0
        %v4785 = vmax.f32 %v4669, 0.0
        %v4786 = vmax.f32 %v4671, 0.0
        %v4787 = vmax.f32 %v4673, 0.0
        %v4788 = vmax.f32 %v4675, 0.0
        %v4789 = vmax.f32 %v4679, 0.0
        %v4790 = vmax.f32 %v4681, 0.0
        %v4791 = vmax.f32 %v4683, 0.0
        %v4792 = vmax.f32 %v4685, 0.0
        %v4793 = vmax.f32 %v4689, 0.0
        %v4794 = vmax.f32 %v4691, 0.0
        %v4795 = vmax.f32 %v4693, 0.0
        %v4796 = vmax.f32 %v4695, 0.0
        %v4797 = vmax.f32 %v4699, 0.0
        %v4798 = vmax.f32 %v4701, 0.0
        %v4799 = vmax.f32 %v4703, 0.0
        %v4800 = vmax.f32 %v4705, 0.0
        %v4801 = vmax.f32 %v4709, 0.0
        %v4802 = vmax.f32 %v4711, 0.0
        %v4803 = vmax.f32 %v4713, 0.0
        %v4804 = vmax.f32 %v4715, 0.0
        %v4805 = vmax.f32 %v4719, 0.0
        %v4806 = vmax.f32 %v4721, 0.0
        %v4807 = vmax.f32 %v4723, 0.0
        %v4808 = vmax.f32 %v4725, 0.0
        %v4809 = vmax.f32 %v4729, 0.0
        %v4810 = vmax.f32 %v4731, 0.0
        %v4811 = vmax.f32 %v4733, 0.0
        %v4812 = vmax.f32 %v4735, 0.0
        %v4813 = vmax.f32 %v4739, 0.0
        %v4814 = vmax.f32 %v4741, 0.0
        %v4815 = vmax.f32 %v4743, 0.0
        %v4816 = vmax.f32 %v4745, 0.0
        %v4817 = vmax.f32 %v4749, 0.0
        %v4818 = vmax.f32 %v4751, 0.0
        %v4819 = vmax.f32 %v4753, 0.0
        %v4820 = vmax.f32 %v4755, 0.0
        %v4821 = vld [vmem:[#allocation13] sm:$0xff]
        %v4822 = vld [vmem:[#allocation13 + $0x8] sm:$0xff]
        %v4823 = vld [vmem:[#allocation13 + $0x10] sm:$0xff]
        %v4824 = vld [vmem:[#allocation13 + $0x18] sm:$0xff]
        %v4825 = vld [vmem:[#allocation13 + $0x20] sm:$0xff]
        %v4826 = vld [vmem:[#allocation13 + $0x28] sm:$0xff]
        %v4827 = vld [vmem:[#allocation13 + $0x30] sm:$0xff]
        %v4828 = vld [vmem:[#allocation13 + $0x38] sm:$0xff]
        %v4829 = vld [vmem:[#allocation13 + $0x40] sm:$0xff]
        %v4830 = vld [vmem:[#allocation13 + $0x48] sm:$0xff]
        %v4831 = vld [vmem:[#allocation13 + $0x50] sm:$0xff]
        %v4832 = vld [vmem:[#allocation13 + $0x58] sm:$0xff]
        %v4833 = vld [vmem:[#allocation13 + $0x60] sm:$0xff]
        %v4834 = vld [vmem:[#allocation13 + $0x68] sm:$0xff]
        %v4835 = vld [vmem:[#allocation13 + $0x70] sm:$0xff]
        %v4836 = vld [vmem:[#allocation13 + $0x78] sm:$0xff]
        %v4837 = vld [vmem:[#allocation13 + $0x80] sm:$0xff]
        %v4838 = vld [vmem:[#allocation13 + $0x88] sm:$0xff]
        %v4839 = vld [vmem:[#allocation13 + $0x90] sm:$0xff]
        %v4840 = vld [vmem:[#allocation13 + $0x98] sm:$0xff]
        %v4841 = vld [vmem:[#allocation13 + $0xa0] sm:$0xff]
        %v4842 = vld [vmem:[#allocation13 + $0xa8] sm:$0xff]
        %v4843 = vld [vmem:[#allocation13 + $0xb0] sm:$0xff]
        %v4844 = vld [vmem:[#allocation13 + $0xb8] sm:$0xff]
        %v4845 = vld [vmem:[#allocation13 + $0xc0] sm:$0xff]
        %v4846 = vld [vmem:[#allocation13 + $0xc8] sm:$0xff]
        %v4847 = vld [vmem:[#allocation13 + $0xd0] sm:$0xff]
        %v4848 = vld [vmem:[#allocation13 + $0xd8] sm:$0xff]
        %v4849 = vld [vmem:[#allocation13 + $0xe0] sm:$0xff]
        %v4850 = vld [vmem:[#allocation13 + $0xe8] sm:$0xff]
        %v4851 = vld [vmem:[#allocation13 + $0xf0] sm:$0xff]
        %v4852 = vld [vmem:[#allocation13 + $0xf8] sm:$0xff]
        %v4853 = vld [vmem:[%s35] sm:$0x3]
        %v4854 = vpack.c.bf16 %v4759, %v4757
        %v4855 = vpack.c.bf16 %v4760, %v4758
        %v4856 = vpack.c.bf16 %v4763, %v4761
        %v4857 = vpack.c.bf16 %v4764, %v4762
        %v4858 = vpack.c.bf16 %v4767, %v4765
        %v4859 = vpack.c.bf16 %v4768, %v4766
        %v4860 = vpack.c.bf16 %v4771, %v4769
        %v4861 = vpack.c.bf16 %v4772, %v4770
        %v4862 = vpack.c.bf16 %v4775, %v4773
        %v4863 = vpack.c.bf16 %v4776, %v4774
        %v4864 = vpack.c.bf16 %v4779, %v4777
        %v4865 = vpack.c.bf16 %v4780, %v4778
        %v4866 = vpack.c.bf16 %v4783, %v4781
        %v4867 = vpack.c.bf16 %v4784, %v4782
        %v4868 = vpack.c.bf16 %v4787, %v4785
        %v4869 = vpack.c.bf16 %v4788, %v4786
        %v4870 = vpack.c.bf16 %v4791, %v4789
        %v4871 = vpack.c.bf16 %v4792, %v4790
        %v4872 = vpack.c.bf16 %v4795, %v4793
        %v4873 = vpack.c.bf16 %v4796, %v4794
        %v4874 = vpack.c.bf16 %v4799, %v4797
        %v4875 = vpack.c.bf16 %v4800, %v4798
        %v4876 = vpack.c.bf16 %v4803, %v4801
        %v4877 = vpack.c.bf16 %v4804, %v4802
        %v4878 = vpack.c.bf16 %v4807, %v4805
        %v4879 = vpack.c.bf16 %v4808, %v4806
        %v4880 = vpack.c.bf16 %v4811, %v4809
        %v4881 = vpack.c.bf16 %v4812, %v4810
        %v4882 = vpack.c.bf16 %v4815, %v4813
        %v4883 = vpack.c.bf16 %v4816, %v4814
        %v4884 = vpack.c.bf16 %v4819, %v4817
        %v4885 = vpack.c.bf16 %v4820, %v4818
        %v4887 = vlaneseq
        %v4888 = vshrl.u32 %v4887, 7
        %v4889 = vsub.s32 0, %v4888
        %v4890 = vrot.slane %v4853, %v4889
        %v4891 = vlaneseq
        %v4892 = vshrl.u32 %v4891, 7
        %v4893 = vsub.s32 1, %v4892
        %v4894 = vrot.slane %v4853, %v4893
        %v4929 = vunpack.c.l.b16 %v4821
        %v4930 = vunpack.c.h.b16 %v4821
        %v4931 = vunpack.c.l.b16 %v4822
        %v4932 = vunpack.c.h.b16 %v4822
        %v4933 = vunpack.c.l.b16 %v4823
        %v4934 = vunpack.c.h.b16 %v4823
        %v4935 = vunpack.c.l.b16 %v4824
        %v4936 = vunpack.c.h.b16 %v4824
        %v4937 = vunpack.c.l.b16 %v4825
        %v4938 = vunpack.c.h.b16 %v4825
        %v4939 = vunpack.c.l.b16 %v4826
        %v4940 = vunpack.c.h.b16 %v4826
        %v4941 = vunpack.c.l.b16 %v4827
        %v4942 = vunpack.c.h.b16 %v4827
        %v4943 = vunpack.c.l.b16 %v4828
        %v4944 = vunpack.c.h.b16 %v4828
        %v4945 = vunpack.c.l.b16 %v4829
        %v4946 = vunpack.c.h.b16 %v4829
        %v4947 = vunpack.c.l.b16 %v4830
        %v4948 = vunpack.c.h.b16 %v4830
        %v4949 = vunpack.c.l.b16 %v4831
        %v4950 = vunpack.c.h.b16 %v4831
        %v4951 = vunpack.c.l.b16 %v4832
        %v4952 = vunpack.c.h.b16 %v4832
        %v4953 = vunpack.c.l.b16 %v4833
        %v4954 = vunpack.c.h.b16 %v4833
        %v4955 = vunpack.c.l.b16 %v4834
        %v4956 = vunpack.c.h.b16 %v4834
        %v4957 = vunpack.c.l.b16 %v4835
        %v4958 = vunpack.c.h.b16 %v4835
        %v4959 = vunpack.c.l.b16 %v4836
        %v4960 = vunpack.c.h.b16 %v4836
        %v4961 = vunpack.c.l.b16 %v4837
        %v4962 = vunpack.c.h.b16 %v4837
        %v4963 = vunpack.c.l.b16 %v4838
        %v4964 = vunpack.c.h.b16 %v4838
        %v4965 = vunpack.c.l.b16 %v4839
        %v4966 = vunpack.c.h.b16 %v4839
        %v4967 = vunpack.c.l.b16 %v4840
        %v4968 = vunpack.c.h.b16 %v4840
        %v4969 = vunpack.c.l.b16 %v4841
        %v4970 = vunpack.c.h.b16 %v4841
        %v4971 = vunpack.c.l.b16 %v4842
        %v4972 = vunpack.c.h.b16 %v4842
        %v4973 = vunpack.c.l.b16 %v4843
        %v4974 = vunpack.c.h.b16 %v4843
        %v4975 = vunpack.c.l.b16 %v4844
        %v4976 = vunpack.c.h.b16 %v4844
        %v4977 = vunpack.c.l.b16 %v4845
        %v4978 = vunpack.c.h.b16 %v4845
        %v4979 = vunpack.c.l.b16 %v4846
        %v4980 = vunpack.c.h.b16 %v4846
        %v4981 = vunpack.c.l.b16 %v4847
        %v4982 = vunpack.c.h.b16 %v4847
        %v4983 = vunpack.c.l.b16 %v4848
        %v4984 = vunpack.c.h.b16 %v4848
        %v4985 = vunpack.c.l.b16 %v4849
        %v4986 = vunpack.c.h.b16 %v4849
        %v4987 = vunpack.c.l.b16 %v4850
        %v4988 = vunpack.c.h.b16 %v4850
        %v4989 = vunpack.c.l.b16 %v4851
        %v4990 = vunpack.c.h.b16 %v4851
        %v4991 = vunpack.c.l.b16 %v4852
        %v4992 = vunpack.c.h.b16 %v4852
        %v4993 = vpack.c.b16 %v4931, %v4929
        %v4994 = vpack.c.b16 %v4932, %v4930
        %v4995 = vpack.c.b16 %v4935, %v4933
        %v4996 = vpack.c.b16 %v4936, %v4934
        %v4997 = vpack.c.b16 %v4939, %v4937
        %v4998 = vpack.c.b16 %v4940, %v4938
        %v4999 = vpack.c.b16 %v4943, %v4941
        %v5000 = vpack.c.b16 %v4944, %v4942
        %v5001 = vpack.c.b16 %v4947, %v4945
        %v5002 = vpack.c.b16 %v4948, %v4946
        %v5003 = vpack.c.b16 %v4951, %v4949
        %v5004 = vpack.c.b16 %v4952, %v4950
        %v5005 = vpack.c.b16 %v4955, %v4953
        %v5006 = vpack.c.b16 %v4956, %v4954
        %v5007 = vpack.c.b16 %v4959, %v4957
        %v5008 = vpack.c.b16 %v4960, %v4958
        %v5009 = vpack.c.b16 %v4963, %v4961
        %v5010 = vpack.c.b16 %v4964, %v4962
        %v5011 = vpack.c.b16 %v4967, %v4965
        %v5012 = vpack.c.b16 %v4968, %v4966
        %v5013 = vpack.c.b16 %v4971, %v4969
        %v5014 = vpack.c.b16 %v4972, %v4970
        %v5015 = vpack.c.b16 %v4975, %v4973
        %v5016 = vpack.c.b16 %v4976, %v4974
        %v5017 = vpack.c.b16 %v4979, %v4977
        %v5018 = vpack.c.b16 %v4980, %v4978
        %v5019 = vpack.c.b16 %v4983, %v4981
        %v5020 = vpack.c.b16 %v4984, %v4982
        %v5021 = vpack.c.b16 %v4987, %v4985
        %v5022 = vpack.c.b16 %v4988, %v4986
        %v5023 = vpack.c.b16 %v4991, %v4989
        %v5024 = vpack.c.b16 %v4992, %v4990
        %5057 = vmatprep.subr.bf16.mxu0 %v4994
        %5058 = vmatpush1.bf16.msra.mxu0 %v4993
        %5059 = vmatprep.subr.bf16.mxu0 %v4996
        %5060 = vmatpush1.bf16.msra.mxu0 %v4995
        %5061 = vmatprep.subr.bf16.mxu0 %v4998
        %5062 = vmatpush1.bf16.msra.mxu0 %v4997
        %5063 = vmatprep.subr.bf16.mxu0 %v5000
        %5064 = vmatpush1.bf16.msra.mxu0 %v4999
        %5065 = vmatprep.subr.bf16.mxu0 %v5002
        %5066 = vmatpush1.bf16.msra.mxu0 %v5001
        %5067 = vmatprep.subr.bf16.mxu0 %v5004
        %5068 = vmatpush1.bf16.msra.mxu0 %v5003
        %5069 = vmatprep.subr.bf16.mxu0 %v5006
        %5070 = vmatpush1.bf16.msra.mxu0 %v5005
        %5071 = vmatprep.subr.bf16.mxu0 %v5008
        %5072 = vmatpush1.bf16.msra.mxu0 %v5007
        %5073 = vmatprep.subr.bf16.mxu0 %v5010
        %5074 = vmatpush1.bf16.msra.mxu0 %v5009
        %5075 = vmatprep.subr.bf16.mxu0 %v5012
        %5076 = vmatpush1.bf16.msra.mxu0 %v5011
        %5077 = vmatprep.subr.bf16.mxu0 %v5014
        %5078 = vmatpush1.bf16.msra.mxu0 %v5013
        %5079 = vmatprep.subr.bf16.mxu0 %v5016
        %5080 = vmatpush1.bf16.msra.mxu0 %v5015
        %5081 = vmatprep.subr.bf16.mxu0 %v5018
        %5082 = vmatpush1.bf16.msra.mxu0 %v5017
        %5083 = vmatprep.subr.bf16.mxu0 %v5020
        %5084 = vmatpush1.bf16.msra.mxu0 %v5019
        %5085 = vmatprep.subr.bf16.mxu0 %v5022
        %5086 = vmatpush1.bf16.msra.mxu0 %v5021
        %5087 = vmatprep.subr.bf16.mxu0 %v5024
        %5088 = vmatpush1.bf16.msra.mxu0 %v5023
        %5089 = vmatprep.mubr.bf16.mxu0 %v4855
        %5090 = vmatmul.mubr.bf16.gmra.mrb[0].mxu0 %v4854
        %v5091 = vpop.f32.mrb[0].mxu0
        %v5092 = vadd.f32 %v4890, %v5091
        %v5093 = vpop.f32.mrb[0].mxu0
        %v5094 = vadd.f32 %v4894, %v5093
        %v5095 = vpop.f32.mrb[0].mxu0
        %v5096 = vadd.f32 %v4890, %v5095
        %v5097 = vpop.f32.mrb[0].mxu0
        %v5098 = vadd.f32 %v4894, %v5097
        %5099 = vmatprep.mubr.bf16.mxu0 %v4857
        %5100 = vmatmul.mubr.bf16.gmra.mrb[0].mxu0 %v4856
        %v5101 = vpop.f32.mrb[0].mxu0
        %v5102 = vadd.f32 %v4890, %v5101
        %v5103 = vpop.f32.mrb[0].mxu0
        %v5104 = vadd.f32 %v4894, %v5103
        %v5105 = vpop.f32.mrb[0].mxu0
        %v5106 = vadd.f32 %v4890, %v5105
        %v5107 = vpop.f32.mrb[0].mxu0
        %v5108 = vadd.f32 %v4894, %v5107
        %5109 = vmatprep.mubr.bf16.mxu0 %v4859
        %5110 = vmatmul.mubr.bf16.gmra.mrb[0].mxu0 %v4858
        %v5111 = vpop.f32.mrb[0].mxu0
        %v5112 = vadd.f32 %v4890, %v5111
        %v5113 = vpop.f32.mrb[0].mxu0
        %v5114 = vadd.f32 %v4894, %v5113
        %v5115 = vpop.f32.mrb[0].mxu0
        %v5116 = vadd.f32 %v4890, %v5115
        %v5117 = vpop.f32.mrb[0].mxu0
        %v5118 = vadd.f32 %v4894, %v5117
        %5119 = vmatprep.mubr.bf16.mxu0 %v4861
        %5120 = vmatmul.mubr.bf16.gmra.mrb[0].mxu0 %v4860
        %v5121 = vpop.f32.mrb[0].mxu0
        %v5122 = vadd.f32 %v4890, %v5121
        %v5123 = vpop.f32.mrb[0].mxu0
        %v5124 = vadd.f32 %v4894, %v5123
        %v5125 = vpop.f32.mrb[0].mxu0
        %v5126 = vadd.f32 %v4890, %v5125
        %v5127 = vpop.f32.mrb[0].mxu0
        %v5128 = vadd.f32 %v4894, %v5127
        %5129 = vmatprep.mubr.bf16.mxu0 %v4863
        %5130 = vmatmul.mubr.bf16.gmra.mrb[0].mxu0 %v4862
        %v5131 = vpop.f32.mrb[0].mxu0
        %v5132 = vadd.f32 %v4890, %v5131
        %v5133 = vpop.f32.mrb[0].mxu0
        %v5134 = vadd.f32 %v4894, %v5133
        %v5135 = vpop.f32.mrb[0].mxu0
        %v5136 = vadd.f32 %v4890, %v5135
        %v5137 = vpop.f32.mrb[0].mxu0
        %v5138 = vadd.f32 %v4894, %v5137
        %5139 = vmatprep.mubr.bf16.mxu0 %v4865
        %5140 = vmatmul.mubr.bf16.gmra.mrb[0].mxu0 %v4864
        %v5141 = vpop.f32.mrb[0].mxu0
        %v5142 = vadd.f32 %v4890, %v5141
        %v5143 = vpop.f32.mrb[0].mxu0
        %v5144 = vadd.f32 %v4894, %v5143
        %v5145 = vpop.f32.mrb[0].mxu0
        %v5146 = vadd.f32 %v4890, %v5145
        %v5147 = vpop.f32.mrb[0].mxu0
        %v5148 = vadd.f32 %v4894, %v5147
        %5149 = vmatprep.mubr.bf16.mxu0 %v4867
        %5150 = vmatmul.mubr.bf16.gmra.mrb[0].mxu0 %v4866
        %v5151 = vpop.f32.mrb[0].mxu0
        %v5152 = vadd.f32 %v4890, %v5151
        %v5153 = vpop.f32.mrb[0].mxu0
        %v5154 = vadd.f32 %v4894, %v5153
        %v5155 = vpop.f32.mrb[0].mxu0
        %v5156 = vadd.f32 %v4890, %v5155
        %v5157 = vpop.f32.mrb[0].mxu0
        %v5158 = vadd.f32 %v4894, %v5157
        %5159 = vmatprep.mubr.bf16.mxu0 %v4869
        %5160 = vmatmul.mubr.bf16.gmra.mrb[0].mxu0 %v4868
        %v5161 = vpop.f32.mrb[0].mxu0
        %v5162 = vadd.f32 %v4890, %v5161
        %v5163 = vpop.f32.mrb[0].mxu0
        %v5164 = vadd.f32 %v4894, %v5163
        %v5165 = vpop.f32.mrb[0].mxu0
        %v5166 = vadd.f32 %v4890, %v5165
        %v5167 = vpop.f32.mrb[0].mxu0
        %v5168 = vadd.f32 %v4894, %v5167
        %5169 = vmatprep.mubr.bf16.mxu0 %v4871
        %5170 = vmatmul.mubr.bf16.gmra.mrb[0].mxu0 %v4870
        %v5171 = vpop.f32.mrb[0].mxu0
        %v5172 = vadd.f32 %v4890, %v5171
        %v5173 = vpop.f32.mrb[0].mxu0
        %v5174 = vadd.f32 %v4894, %v5173
        %v5175 = vpop.f32.mrb[0].mxu0
        %v5176 = vadd.f32 %v4890, %v5175
        %v5177 = vpop.f32.mrb[0].mxu0
        %v5178 = vadd.f32 %v4894, %v5177
        %5179 = vmatprep.mubr.bf16.mxu0 %v4873
        %5180 = vmatmul.mubr.bf16.gmra.mrb[0].mxu0 %v4872
        %v5181 = vpop.f32.mrb[0].mxu0
        %v5182 = vadd.f32 %v4890, %v5181
        %v5183 = vpop.f32.mrb[0].mxu0
        %v5184 = vadd.f32 %v4894, %v5183
        %v5185 = vpop.f32.mrb[0].mxu0
        %v5186 = vadd.f32 %v4890, %v5185
        %v5187 = vpop.f32.mrb[0].mxu0
        %v5188 = vadd.f32 %v4894, %v5187
        %5189 = vmatprep.mubr.bf16.mxu0 %v4875
        %5190 = vmatmul.mubr.bf16.gmra.mrb[0].mxu0 %v4874
        %v5191 = vpop.f32.mrb[0].mxu0
        %v5192 = vadd.f32 %v4890, %v5191
        %v5193 = vpop.f32.mrb[0].mxu0
        %v5194 = vadd.f32 %v4894, %v5193
        %v5195 = vpop.f32.mrb[0].mxu0
        %v5196 = vadd.f32 %v4890, %v5195
        %v5197 = vpop.f32.mrb[0].mxu0
        %v5198 = vadd.f32 %v4894, %v5197
        %5199 = vmatprep.mubr.bf16.mxu0 %v4877
        %5200 = vmatmul.mubr.bf16.gmra.mrb[0].mxu0 %v4876
        %v5201 = vpop.f32.mrb[0].mxu0
        %v5202 = vadd.f32 %v4890, %v5201
        %v5203 = vpop.f32.mrb[0].mxu0
        %v5204 = vadd.f32 %v4894, %v5203
        %v5205 = vpop.f32.mrb[0].mxu0
        %v5206 = vadd.f32 %v4890, %v5205
        %v5207 = vpop.f32.mrb[0].mxu0
        %v5208 = vadd.f32 %v4894, %v5207
        %5209 = vmatprep.mubr.bf16.mxu0 %v4879
        %5210 = vmatmul.mubr.bf16.gmra.mrb[0].mxu0 %v4878
        %v5211 = vpop.f32.mrb[0].mxu0
        %v5212 = vadd.f32 %v4890, %v5211
        %v5213 = vpop.f32.mrb[0].mxu0
        %v5214 = vadd.f32 %v4894, %v5213
        %v5215 = vpop.f32.mrb[0].mxu0
        %v5216 = vadd.f32 %v4890, %v5215
        %v5217 = vpop.f32.mrb[0].mxu0
        %v5218 = vadd.f32 %v4894, %v5217
        %5219 = vmatprep.mubr.bf16.mxu0 %v4881
        %5220 = vmatmul.mubr.bf16.gmra.mrb[0].mxu0 %v4880
        %v5221 = vpop.f32.mrb[0].mxu0
        %v5222 = vadd.f32 %v4890, %v5221
        %v5223 = vpop.f32.mrb[0].mxu0
        %v5224 = vadd.f32 %v4894, %v5223
        %v5225 = vpop.f32.mrb[0].mxu0
        %v5226 = vadd.f32 %v4890, %v5225
        %v5227 = vpop.f32.mrb[0].mxu0
        %v5228 = vadd.f32 %v4894, %v5227
        %5229 = vmatprep.mubr.bf16.mxu0 %v4883
        %5230 = vmatmul.mubr.bf16.gmra.mrb[0].mxu0 %v4882
        %v5231 = vpop.f32.mrb[0].mxu0
        %v5232 = vadd.f32 %v4890, %v5231
        %v5233 = vpop.f32.mrb[0].mxu0
        %v5234 = vadd.f32 %v4894, %v5233
        %v5235 = vpop.f32.mrb[0].mxu0
        %v5236 = vadd.f32 %v4890, %v5235
        %v5237 = vpop.f32.mrb[0].mxu0
        %v5238 = vadd.f32 %v4894, %v5237
        %5239 = vmatprep.mubr.bf16.mxu0 %v4885
        %5240 = vmatmul.mubr.bf16.gmra.mrb[0].mxu0 %v4884
        %v5241 = vpop.f32.mrb[0].mxu0
        %v5242 = vadd.f32 %v4890, %v5241
        %v5243 = vpop.f32.mrb[0].mxu0
        %v5244 = vadd.f32 %v4894, %v5243
        %v5245 = vpop.f32.mrb[0].mxu0
        %v5246 = vadd.f32 %v4890, %v5245
        %v5247 = vpop.f32.mrb[0].mxu0
        %v5248 = vadd.f32 %v4894, %v5247
        %5249 = vdwg.mxu0
        %v5250 = vmax.f32 %v5092, 0.0
        %v5251 = vmax.f32 %v5094, 0.0
        %v5252 = vmax.f32 %v5096, 0.0
        %v5253 = vmax.f32 %v5098, 0.0
        %v5254 = vmax.f32 %v5102, 0.0
        %v5255 = vmax.f32 %v5104, 0.0
        %v5256 = vmax.f32 %v5106, 0.0
        %v5257 = vmax.f32 %v5108, 0.0
        %v5258 = vmax.f32 %v5112, 0.0
        %v5259 = vmax.f32 %v5114, 0.0
        %v5260 = vmax.f32 %v5116, 0.0
        %v5261 = vmax.f32 %v5118, 0.0
        %v5262 = vmax.f32 %v5122, 0.0
        %v5263 = vmax.f32 %v5124, 0.0
        %v5264 = vmax.f32 %v5126, 0.0
        %v5265 = vmax.f32 %v5128, 0.0
        %v5266 = vmax.f32 %v5132, 0.0
        %v5267 = vmax.f32 %v5134, 0.0
        %v5268 = vmax.f32 %v5136, 0.0
        %v5269 = vmax.f32 %v5138, 0.0
        %v5270 = vmax.f32 %v5142, 0.0
        %v5271 = vmax.f32 %v5144, 0.0
        %v5272 = vmax.f32 %v5146, 0.0
        %v5273 = vmax.f32 %v5148, 0.0
        %v5274 = vmax.f32 %v5152, 0.0
        %v5275 = vmax.f32 %v5154, 0.0
        %v5276 = vmax.f32 %v5156, 0.0
        %v5277 = vmax.f32 %v5158, 0.0
        %v5278 = vmax.f32 %v5162, 0.0
        %v5279 = vmax.f32 %v5164, 0.0
        %v5280 = vmax.f32 %v5166, 0.0
        %v5281 = vmax.f32 %v5168, 0.0
        %v5282 = vmax.f32 %v5172, 0.0
        %v5283 = vmax.f32 %v5174, 0.0
        %v5284 = vmax.f32 %v5176, 0.0
        %v5285 = vmax.f32 %v5178, 0.0
        %v5286 = vmax.f32 %v5182, 0.0
        %v5287 = vmax.f32 %v5184, 0.0
        %v5288 = vmax.f32 %v5186, 0.0
        %v5289 = vmax.f32 %v5188, 0.0
        %v5290 = vmax.f32 %v5192, 0.0
        %v5291 = vmax.f32 %v5194, 0.0
        %v5292 = vmax.f32 %v5196, 0.0
        %v5293 = vmax.f32 %v5198, 0.0
        %v5294 = vmax.f32 %v5202, 0.0
        %v5295 = vmax.f32 %v5204, 0.0
        %v5296 = vmax.f32 %v5206, 0.0
        %v5297 = vmax.f32 %v5208, 0.0
        %v5298 = vmax.f32 %v5212, 0.0
        %v5299 = vmax.f32 %v5214, 0.0
        %v5300 = vmax.f32 %v5216, 0.0
        %v5301 = vmax.f32 %v5218, 0.0
        %v5302 = vmax.f32 %v5222, 0.0
        %v5303 = vmax.f32 %v5224, 0.0
        %v5304 = vmax.f32 %v5226, 0.0
        %v5305 = vmax.f32 %v5228, 0.0
        %v5306 = vmax.f32 %v5232, 0.0
        %v5307 = vmax.f32 %v5234, 0.0
        %v5308 = vmax.f32 %v5236, 0.0
        %v5309 = vmax.f32 %v5238, 0.0
        %v5310 = vmax.f32 %v5242, 0.0
        %v5311 = vmax.f32 %v5244, 0.0
        %v5312 = vmax.f32 %v5246, 0.0
        %v5313 = vmax.f32 %v5248, 0.0
        %v5314 = vld [vmem:[%s37] sm:$0xff]
        %v5315 = vld [vmem:[%s37 + $0x8] sm:$0xff]
        %v5316 = vld [vmem:[%s37 + $0x10] sm:$0xff]
        %v5317 = vld [vmem:[%s37 + $0x18] sm:$0xff]
        %v5318 = vld [vmem:[%s37 + $0x20] sm:$0xff]
        %v5319 = vld [vmem:[%s37 + $0x28] sm:$0xff]
        %v5320 = vld [vmem:[%s37 + $0x30] sm:$0xff]
        %v5321 = vld [vmem:[%s37 + $0x38] sm:$0xff]
        %v5322 = vld [vmem:[%s37 + $0x40] sm:$0xff]
        %v5323 = vld [vmem:[%s37 + $0x48] sm:$0xff]
        %v5324 = vld [vmem:[%s37 + $0x50] sm:$0xff]
        %v5325 = vld [vmem:[%s37 + $0x58] sm:$0xff]
        %v5326 = vld [vmem:[%s37 + $0x60] sm:$0xff]
        %v5327 = vld [vmem:[%s37 + $0x68] sm:$0xff]
        %v5328 = vld [vmem:[%s37 + $0x70] sm:$0xff]
        %v5329 = vld [vmem:[%s37 + $0x78] sm:$0xff]
        %v5330 = vld [vmem:[%s37 + $0x80] sm:$0xff]
        %v5331 = vld [vmem:[%s37 + $0x88] sm:$0xff]
        %v5332 = vld [vmem:[%s37 + $0x90] sm:$0xff]
        %v5333 = vld [vmem:[%s37 + $0x98] sm:$0xff]
        %v5334 = vld [vmem:[%s37 + $0xa0] sm:$0xff]
        %v5335 = vld [vmem:[%s37 + $0xa8] sm:$0xff]
        %v5336 = vld [vmem:[%s37 + $0xb0] sm:$0xff]
        %v5337 = vld [vmem:[%s37 + $0xb8] sm:$0xff]
        %v5338 = vld [vmem:[%s37 + $0xc0] sm:$0xff]
        %v5339 = vld [vmem:[%s37 + $0xc8] sm:$0xff]
        %v5340 = vld [vmem:[%s37 + $0xd0] sm:$0xff]
        %v5341 = vld [vmem:[%s37 + $0xd8] sm:$0xff]
        %v5342 = vld [vmem:[%s37 + $0xe0] sm:$0xff]
        %v5343 = vld [vmem:[%s37 + $0xe8] sm:$0xff]
        %v5344 = vld [vmem:[%s37 + $0xf0] sm:$0xff]
        %v5345 = vld [vmem:[%s37 + $0xf8] sm:$0xff]
        %v5346 = vld [vmem:[%s37 + $0x100] sm:$0xff]
        %v5347 = vld [vmem:[%s37 + $0x108] sm:$0xff]
        %v5348 = vld [vmem:[%s37 + $0x110] sm:$0xff]
        %v5349 = vld [vmem:[%s37 + $0x118] sm:$0xff]
        %v5350 = vld [vmem:[%s37 + $0x120] sm:$0xff]
        %v5351 = vld [vmem:[%s37 + $0x128] sm:$0xff]
        %v5352 = vld [vmem:[%s37 + $0x130] sm:$0xff]
        %v5353 = vld [vmem:[%s37 + $0x138] sm:$0xff]
        %v5354 = vld [vmem:[%s37 + $0x140] sm:$0xff]
        %v5355 = vld [vmem:[%s37 + $0x148] sm:$0xff]
        %v5356 = vld [vmem:[%s37 + $0x150] sm:$0xff]
        %v5357 = vld [vmem:[%s37 + $0x158] sm:$0xff]
        %v5358 = vld [vmem:[%s37 + $0x160] sm:$0xff]
        %v5359 = vld [vmem:[%s37 + $0x168] sm:$0xff]
        %v5360 = vld [vmem:[%s37 + $0x170] sm:$0xff]
        %v5361 = vld [vmem:[%s37 + $0x178] sm:$0xff]
        %v5362 = vld [vmem:[%s37 + $0x180] sm:$0xff]
        %v5363 = vld [vmem:[%s37 + $0x188] sm:$0xff]
        %v5364 = vld [vmem:[%s37 + $0x190] sm:$0xff]
        %v5365 = vld [vmem:[%s37 + $0x198] sm:$0xff]
        %v5366 = vld [vmem:[%s37 + $0x1a0] sm:$0xff]
        %v5367 = vld [vmem:[%s37 + $0x1a8] sm:$0xff]
        %v5368 = vld [vmem:[%s37 + $0x1b0] sm:$0xff]
        %v5369 = vld [vmem:[%s37 + $0x1b8] sm:$0xff]
        %v5370 = vld [vmem:[%s37 + $0x1c0] sm:$0xff]
        %v5371 = vld [vmem:[%s37 + $0x1c8] sm:$0xff]
        %v5372 = vld [vmem:[%s37 + $0x1d0] sm:$0xff]
        %v5373 = vld [vmem:[%s37 + $0x1d8] sm:$0xff]
        %v5374 = vld [vmem:[%s37 + $0x1e0] sm:$0xff]
        %v5375 = vld [vmem:[%s37 + $0x1e8] sm:$0xff]
        %v5376 = vld [vmem:[%s37 + $0x1f0] sm:$0xff]
        %v5377 = vld [vmem:[%s37 + $0x1f8] sm:$0xff]
        %v5378 = vld [vmem:[%s39] sm:$0xf]
        %v5379 = vpack.c.bf16 %v5252, %v5250
        %v5380 = vpack.c.bf16 %v5253, %v5251
        %v5381 = vpack.c.bf16 %v5256, %v5254
        %v5382 = vpack.c.bf16 %v5257, %v5255
        %v5383 = vpack.c.bf16 %v5260, %v5258
        %v5384 = vpack.c.bf16 %v5261, %v5259
        %v5385 = vpack.c.bf16 %v5264, %v5262
        %v5386 = vpack.c.bf16 %v5265, %v5263
        %v5387 = vpack.c.bf16 %v5268, %v5266
        %v5388 = vpack.c.bf16 %v5269, %v5267
        %v5389 = vpack.c.bf16 %v5272, %v5270
        %v5390 = vpack.c.bf16 %v5273, %v5271
        %v5391 = vpack.c.bf16 %v5276, %v5274
        %v5392 = vpack.c.bf16 %v5277, %v5275
        %v5393 = vpack.c.bf16 %v5280, %v5278
        %v5394 = vpack.c.bf16 %v5281, %v5279
        %v5395 = vpack.c.bf16 %v5284, %v5282
        %v5396 = vpack.c.bf16 %v5285, %v5283
        %v5397 = vpack.c.bf16 %v5288, %v5286
        %v5398 = vpack.c.bf16 %v5289, %v5287
        %v5399 = vpack.c.bf16 %v5292, %v5290
        %v5400 = vpack.c.bf16 %v5293, %v5291
        %v5401 = vpack.c.bf16 %v5296, %v5294
        %v5402 = vpack.c.bf16 %v5297, %v5295
        %v5403 = vpack.c.bf16 %v5300, %v5298
        %v5404 = vpack.c.bf16 %v5301, %v5299
        %v5405 = vpack.c.bf16 %v5304, %v5302
        %v5406 = vpack.c.bf16 %v5305, %v5303
        %v5407 = vpack.c.bf16 %v5308, %v5306
        %v5408 = vpack.c.bf16 %v5309, %v5307
        %v5409 = vpack.c.bf16 %v5312, %v5310
        %v5410 = vpack.c.bf16 %v5313, %v5311
        %v5412 = vlaneseq
        %v5413 = vshrl.u32 %v5412, 7
        %v5414 = vsub.s32 0, %v5413
        %v5415 = vrot.slane %v5378, %v5414
        %v5416 = vlaneseq
        %v5417 = vshrl.u32 %v5416, 7
        %v5418 = vsub.s32 1, %v5417
        %v5419 = vrot.slane %v5378, %v5418
        %v5420 = vlaneseq
        %v5421 = vshrl.u32 %v5420, 7
        %v5422 = vsub.s32 2, %v5421
        %v5423 = vrot.slane %v5378, %v5422
        %v5424 = vlaneseq
        %v5425 = vshrl.u32 %v5424, 7
        %v5426 = vsub.s32 3, %v5425
        %v5427 = vrot.slane %v5378, %v5426
        %v5496 = vunpack.c.l.b16 %v5314
        %v5497 = vunpack.c.h.b16 %v5314
        %v5498 = vunpack.c.l.b16 %v5315
        %v5499 = vunpack.c.h.b16 %v5315
        %v5500 = vunpack.c.l.b16 %v5316
        %v5501 = vunpack.c.h.b16 %v5316
        %v5502 = vunpack.c.l.b16 %v5317
        %v5503 = vunpack.c.h.b16 %v5317
        %v5504 = vunpack.c.l.b16 %v5318
        %v5505 = vunpack.c.h.b16 %v5318
        %v5506 = vunpack.c.l.b16 %v5319
        %v5507 = vunpack.c.h.b16 %v5319
        %v5508 = vunpack.c.l.b16 %v5320
        %v5509 = vunpack.c.h.b16 %v5320
        %v5510 = vunpack.c.l.b16 %v5321
        %v5511 = vunpack.c.h.b16 %v5321
        %v5512 = vunpack.c.l.b16 %v5322
        %v5513 = vunpack.c.h.b16 %v5322
        %v5514 = vunpack.c.l.b16 %v5323
        %v5515 = vunpack.c.h.b16 %v5323
        %v5516 = vunpack.c.l.b16 %v5324
        %v5517 = vunpack.c.h.b16 %v5324
        %v5518 = vunpack.c.l.b16 %v5325
        %v5519 = vunpack.c.h.b16 %v5325
        %v5520 = vunpack.c.l.b16 %v5326
        %v5521 = vunpack.c.h.b16 %v5326
        %v5522 = vunpack.c.l.b16 %v5327
        %v5523 = vunpack.c.h.b16 %v5327
        %v5524 = vunpack.c.l.b16 %v5328
        %v5525 = vunpack.c.h.b16 %v5328
        %v5526 = vunpack.c.l.b16 %v5329
        %v5527 = vunpack.c.h.b16 %v5329
        %v5528 = vunpack.c.l.b16 %v5330
        %v5529 = vunpack.c.h.b16 %v5330
        %v5530 = vunpack.c.l.b16 %v5331
        %v5531 = vunpack.c.h.b16 %v5331
        %v5532 = vunpack.c.l.b16 %v5332
        %v5533 = vunpack.c.h.b16 %v5332
        %v5534 = vunpack.c.l.b16 %v5333
        %v5535 = vunpack.c.h.b16 %v5333
        %v5536 = vunpack.c.l.b16 %v5334
        %v5537 = vunpack.c.h.b16 %v5334
        %v5538 = vunpack.c.l.b16 %v5335
        %v5539 = vunpack.c.h.b16 %v5335
        %v5540 = vunpack.c.l.b16 %v5336
        %v5541 = vunpack.c.h.b16 %v5336
        %v5542 = vunpack.c.l.b16 %v5337
        %v5543 = vunpack.c.h.b16 %v5337
        %v5544 = vunpack.c.l.b16 %v5338
        %v5545 = vunpack.c.h.b16 %v5338
        %v5546 = vunpack.c.l.b16 %v5339
        %v5547 = vunpack.c.h.b16 %v5339
        %v5548 = vunpack.c.l.b16 %v5340
        %v5549 = vunpack.c.h.b16 %v5340
        %v5550 = vunpack.c.l.b16 %v5341
        %v5551 = vunpack.c.h.b16 %v5341
        %v5552 = vunpack.c.l.b16 %v5342
        %v5553 = vunpack.c.h.b16 %v5342
        %v5554 = vunpack.c.l.b16 %v5343
        %v5555 = vunpack.c.h.b16 %v5343
        %v5556 = vunpack.c.l.b16 %v5344
        %v5557 = vunpack.c.h.b16 %v5344
        %v5558 = vunpack.c.l.b16 %v5345
        %v5559 = vunpack.c.h.b16 %v5345
        %v5560 = vunpack.c.l.b16 %v5346
        %v5561 = vunpack.c.h.b16 %v5346
        %v5562 = vunpack.c.l.b16 %v5347
        %v5563 = vunpack.c.h.b16 %v5347
        %v5564 = vunpack.c.l.b16 %v5348
        %v5565 = vunpack.c.h.b16 %v5348
        %v5566 = vunpack.c.l.b16 %v5349
        %v5567 = vunpack.c.h.b16 %v5349
        %v5568 = vunpack.c.l.b16 %v5350
        %v5569 = vunpack.c.h.b16 %v5350
        %v5570 = vunpack.c.l.b16 %v5351
        %v5571 = vunpack.c.h.b16 %v5351
        %v5572 = vunpack.c.l.b16 %v5352
        %v5573 = vunpack.c.h.b16 %v5352
        %v5574 = vunpack.c.l.b16 %v5353
        %v5575 = vunpack.c.h.b16 %v5353
        %v5576 = vunpack.c.l.b16 %v5354
        %v5577 = vunpack.c.h.b16 %v5354
        %v5578 = vunpack.c.l.b16 %v5355
        %v5579 = vunpack.c.h.b16 %v5355
        %v5580 = vunpack.c.l.b16 %v5356
        %v5581 = vunpack.c.h.b16 %v5356
        %v5582 = vunpack.c.l.b16 %v5357
        %v5583 = vunpack.c.h.b16 %v5357
        %v5584 = vunpack.c.l.b16 %v5358
        %v5585 = vunpack.c.h.b16 %v5358
        %v5586 = vunpack.c.l.b16 %v5359
        %v5587 = vunpack.c.h.b16 %v5359
        %v5588 = vunpack.c.l.b16 %v5360
        %v5589 = vunpack.c.h.b16 %v5360
        %v5590 = vunpack.c.l.b16 %v5361
        %v5591 = vunpack.c.h.b16 %v5361
        %v5592 = vunpack.c.l.b16 %v5362
        %v5593 = vunpack.c.h.b16 %v5362
        %v5594 = vunpack.c.l.b16 %v5363
        %v5595 = vunpack.c.h.b16 %v5363
        %v5596 = vunpack.c.l.b16 %v5364
        %v5597 = vunpack.c.h.b16 %v5364
        %v5598 = vunpack.c.l.b16 %v5365
        %v5599 = vunpack.c.h.b16 %v5365
        %v5600 = vunpack.c.l.b16 %v5366
        %v5601 = vunpack.c.h.b16 %v5366
        %v5602 = vunpack.c.l.b16 %v5367
        %v5603 = vunpack.c.h.b16 %v5367
        %v5604 = vunpack.c.l.b16 %v5368
        %v5605 = vunpack.c.h.b16 %v5368
        %v5606 = vunpack.c.l.b16 %v5369
        %v5607 = vunpack.c.h.b16 %v5369
        %v5608 = vunpack.c.l.b16 %v5370
        %v5609 = vunpack.c.h.b16 %v5370
        %v5610 = vunpack.c.l.b16 %v5371
        %v5611 = vunpack.c.h.b16 %v5371
        %v5612 = vunpack.c.l.b16 %v5372
        %v5613 = vunpack.c.h.b16 %v5372
        %v5614 = vunpack.c.l.b16 %v5373
        %v5615 = vunpack.c.h.b16 %v5373
        %v5616 = vunpack.c.l.b16 %v5374
        %v5617 = vunpack.c.h.b16 %v5374
        %v5618 = vunpack.c.l.b16 %v5375
        %v5619 = vunpack.c.h.b16 %v5375
        %v5620 = vunpack.c.l.b16 %v5376
        %v5621 = vunpack.c.h.b16 %v5376
        %v5622 = vunpack.c.l.b16 %v5377
        %v5623 = vunpack.c.h.b16 %v5377
        %v5624 = vpack.c.b16 %v5500, %v5496
        %v5625 = vpack.c.b16 %v5501, %v5497
        %v5626 = vpack.c.b16 %v5502, %v5498
        %v5627 = vpack.c.b16 %v5503, %v5499
        %v5628 = vpack.c.b16 %v5508, %v5504
        %v5629 = vpack.c.b16 %v5509, %v5505
        %v5630 = vpack.c.b16 %v5510, %v5506
        %v5631 = vpack.c.b16 %v5511, %v5507
        %v5632 = vpack.c.b16 %v5516, %v5512
        %v5633 = vpack.c.b16 %v5517, %v5513
        %v5634 = vpack.c.b16 %v5518, %v5514
        %v5635 = vpack.c.b16 %v5519, %v5515
        %v5636 = vpack.c.b16 %v5524, %v5520
        %v5637 = vpack.c.b16 %v5525, %v5521
        %v5638 = vpack.c.b16 %v5526, %v5522
        %v5639 = vpack.c.b16 %v5527, %v5523
        %v5640 = vpack.c.b16 %v5532, %v5528
        %v5641 = vpack.c.b16 %v5533, %v5529
        %v5642 = vpack.c.b16 %v5534, %v5530
        %v5643 = vpack.c.b16 %v5535, %v5531
        %v5644 = vpack.c.b16 %v5540, %v5536
        %v5645 = vpack.c.b16 %v5541, %v5537
        %v5646 = vpack.c.b16 %v5542, %v5538
        %v5647 = vpack.c.b16 %v5543, %v5539
        %v5648 = vpack.c.b16 %v5548, %v5544
        %v5649 = vpack.c.b16 %v5549, %v5545
        %v5650 = vpack.c.b16 %v5550, %v5546
        %v5651 = vpack.c.b16 %v5551, %v5547
        %v5652 = vpack.c.b16 %v5556, %v5552
        %v5653 = vpack.c.b16 %v5557, %v5553
        %v5654 = vpack.c.b16 %v5558, %v5554
        %v5655 = vpack.c.b16 %v5559, %v5555
        %v5656 = vpack.c.b16 %v5564, %v5560
        %v5657 = vpack.c.b16 %v5565, %v5561
        %v5658 = vpack.c.b16 %v5566, %v5562
        %v5659 = vpack.c.b16 %v5567, %v5563
        %v5660 = vpack.c.b16 %v5572, %v5568
        %v5661 = vpack.c.b16 %v5573, %v5569
        %v5662 = vpack.c.b16 %v5574, %v5570
        %v5663 = vpack.c.b16 %v5575, %v5571
        %v5664 = vpack.c.b16 %v5580, %v5576
        %v5665 = vpack.c.b16 %v5581, %v5577
        %v5666 = vpack.c.b16 %v5582, %v5578
        %v5667 = vpack.c.b16 %v5583, %v5579
        %v5668 = vpack.c.b16 %v5588, %v5584
        %v5669 = vpack.c.b16 %v5589, %v5585
        %v5670 = vpack.c.b16 %v5590, %v5586
        %v5671 = vpack.c.b16 %v5591, %v5587
        %v5672 = vpack.c.b16 %v5596, %v5592
        %v5673 = vpack.c.b16 %v5597, %v5593
        %v5674 = vpack.c.b16 %v5598, %v5594
        %v5675 = vpack.c.b16 %v5599, %v5595
        %v5676 = vpack.c.b16 %v5604, %v5600
        %v5677 = vpack.c.b16 %v5605, %v5601
        %v5678 = vpack.c.b16 %v5606, %v5602
        %v5679 = vpack.c.b16 %v5607, %v5603
        %v5680 = vpack.c.b16 %v5612, %v5608
        %v5681 = vpack.c.b16 %v5613, %v5609
        %v5682 = vpack.c.b16 %v5614, %v5610
        %v5683 = vpack.c.b16 %v5615, %v5611
        %v5684 = vpack.c.b16 %v5620, %v5616
        %v5685 = vpack.c.b16 %v5621, %v5617
        %v5686 = vpack.c.b16 %v5622, %v5618
        %v5687 = vpack.c.b16 %v5623, %v5619
        %5752 = vmatprep.subr.bf16.mxu0 %v5625
        %5753 = vmatpush1.bf16.msra.mxu0 %v5624
        %5754 = vmatprep.subr.bf16.mxu0 %v5629
        %5755 = vmatpush1.bf16.msra.mxu0 %v5628
        %5756 = vmatprep.subr.bf16.mxu0 %v5633
        %5757 = vmatpush1.bf16.msra.mxu0 %v5632
        %5758 = vmatprep.subr.bf16.mxu0 %v5637
        %5759 = vmatpush1.bf16.msra.mxu0 %v5636
        %5760 = vmatprep.subr.bf16.mxu0 %v5641
        %5761 = vmatpush1.bf16.msra.mxu0 %v5640
        %5762 = vmatprep.subr.bf16.mxu0 %v5645
        %5763 = vmatpush1.bf16.msra.mxu0 %v5644
        %5764 = vmatprep.subr.bf16.mxu0 %v5649
        %5765 = vmatpush1.bf16.msra.mxu0 %v5648
        %5766 = vmatprep.subr.bf16.mxu0 %v5653
        %5767 = vmatpush1.bf16.msra.mxu0 %v5652
        %5768 = vmatprep.subr.bf16.mxu0 %v5657
        %5769 = vmatpush1.bf16.msra.mxu0 %v5656
        %5770 = vmatprep.subr.bf16.mxu0 %v5661
        %5771 = vmatpush1.bf16.msra.mxu0 %v5660
        %5772 = vmatprep.subr.bf16.mxu0 %v5665
        %5773 = vmatpush1.bf16.msra.mxu0 %v5664
        %5774 = vmatprep.subr.bf16.mxu0 %v5669
        %5775 = vmatpush1.bf16.msra.mxu0 %v5668
        %5776 = vmatprep.subr.bf16.mxu0 %v5673
        %5777 = vmatpush1.bf16.msra.mxu0 %v5672
        %5778 = vmatprep.subr.bf16.mxu0 %v5677
        %5779 = vmatpush1.bf16.msra.mxu0 %v5676
        %5780 = vmatprep.subr.bf16.mxu0 %v5681
        %5781 = vmatpush1.bf16.msra.mxu0 %v5680
        %5782 = vmatprep.subr.bf16.mxu0 %v5685
        %5783 = vmatpush1.bf16.msra.mxu0 %v5684
        %5784 = vmatprep.mubr.bf16.mxu0 %v5380
        %5785 = vmatmul.mubr.bf16.gmra.mrb[0].mxu0 %v5379
        %v5786 = vpop.f32.mrb[0].mxu0
        %v5787 = vadd.f32 %v5415, %v5786
        %v5788 = vpop.f32.mrb[0].mxu0
        %v5789 = vadd.f32 %v5419, %v5788
        %v5790 = vpop.f32.mrb[0].mxu0
        %v5791 = vadd.f32 %v5415, %v5790
        %v5792 = vpop.f32.mrb[0].mxu0
        %v5793 = vadd.f32 %v5419, %v5792
        %5794 = vmatprep.mubr.bf16.mxu0 %v5382
        %5795 = vmatmul.mubr.bf16.gmra.mrb[0].mxu0 %v5381
        %v5796 = vpop.f32.mrb[0].mxu0
        %v5797 = vadd.f32 %v5415, %v5796
        %v5798 = vpop.f32.mrb[0].mxu0
        %v5799 = vadd.f32 %v5419, %v5798
        %v5800 = vpop.f32.mrb[0].mxu0
        %v5801 = vadd.f32 %v5415, %v5800
        %v5802 = vpop.f32.mrb[0].mxu0
        %v5803 = vadd.f32 %v5419, %v5802
        %5804 = vmatprep.mubr.bf16.mxu0 %v5384
        %5805 = vmatmul.mubr.bf16.gmra.mrb[0].mxu0 %v5383
        %v5806 = vpop.f32.mrb[0].mxu0
        %v5807 = vadd.f32 %v5415, %v5806
        %v5808 = vpop.f32.mrb[0].mxu0
        %v5809 = vadd.f32 %v5419, %v5808
        %v5810 = vpop.f32.mrb[0].mxu0
        %v5811 = vadd.f32 %v5415, %v5810
        %v5812 = vpop.f32.mrb[0].mxu0
        %v5813 = vadd.f32 %v5419, %v5812
        %5814 = vmatprep.mubr.bf16.mxu0 %v5386
        %5815 = vmatmul.mubr.bf16.gmra.mrb[0].mxu0 %v5385
        %v5816 = vpop.f32.mrb[0].mxu0
        %v5817 = vadd.f32 %v5415, %v5816
        %v5818 = vpop.f32.mrb[0].mxu0
        %v5819 = vadd.f32 %v5419, %v5818
        %v5820 = vpop.f32.mrb[0].mxu0
        %v5821 = vadd.f32 %v5415, %v5820
        %v5822 = vpop.f32.mrb[0].mxu0
        %v5823 = vadd.f32 %v5419, %v5822
        %5824 = vmatprep.mubr.bf16.mxu0 %v5388
        %5825 = vmatmul.mubr.bf16.gmra.mrb[0].mxu0 %v5387
        %v5826 = vpop.f32.mrb[0].mxu0
        %v5827 = vadd.f32 %v5415, %v5826
        %v5828 = vpop.f32.mrb[0].mxu0
        %v5829 = vadd.f32 %v5419, %v5828
        %v5830 = vpop.f32.mrb[0].mxu0
        %v5831 = vadd.f32 %v5415, %v5830
        %v5832 = vpop.f32.mrb[0].mxu0
        %v5833 = vadd.f32 %v5419, %v5832
        %5834 = vmatprep.mubr.bf16.mxu0 %v5390
        %5835 = vmatmul.mubr.bf16.gmra.mrb[0].mxu0 %v5389
        %v5836 = vpop.f32.mrb[0].mxu0
        %v5837 = vadd.f32 %v5415, %v5836
        %v5838 = vpop.f32.mrb[0].mxu0
        %v5839 = vadd.f32 %v5419, %v5838
        %v5840 = vpop.f32.mrb[0].mxu0
        %v5841 = vadd.f32 %v5415, %v5840
        %v5842 = vpop.f32.mrb[0].mxu0
        %v5843 = vadd.f32 %v5419, %v5842
        %5844 = vmatprep.mubr.bf16.mxu0 %v5392
        %5845 = vmatmul.mubr.bf16.gmra.mrb[0].mxu0 %v5391
        %v5846 = vpop.f32.mrb[0].mxu0
        %v5847 = vadd.f32 %v5415, %v5846
        %v5848 = vpop.f32.mrb[0].mxu0
        %v5849 = vadd.f32 %v5419, %v5848
        %v5850 = vpop.f32.mrb[0].mxu0
        %v5851 = vadd.f32 %v5415, %v5850
        %v5852 = vpop.f32.mrb[0].mxu0
        %v5853 = vadd.f32 %v5419, %v5852
        %5854 = vmatprep.mubr.bf16.mxu0 %v5394
        %5855 = vmatmul.mubr.bf16.gmra.mrb[0].mxu0 %v5393
        %v5856 = vpop.f32.mrb[0].mxu0
        %v5857 = vadd.f32 %v5415, %v5856
        %v5858 = vpop.f32.mrb[0].mxu0
        %v5859 = vadd.f32 %v5419, %v5858
        %v5860 = vpop.f32.mrb[0].mxu0
        %v5861 = vadd.f32 %v5415, %v5860
        %v5862 = vpop.f32.mrb[0].mxu0
        %v5863 = vadd.f32 %v5419, %v5862
        %5864 = vmatprep.mubr.bf16.mxu0 %v5396
        %5865 = vmatmul.mubr.bf16.gmra.mrb[0].mxu0 %v5395
        %v5866 = vpop.f32.mrb[0].mxu0
        %v5867 = vadd.f32 %v5415, %v5866
        %v5868 = vpop.f32.mrb[0].mxu0
        %v5869 = vadd.f32 %v5419, %v5868
        %v5870 = vpop.f32.mrb[0].mxu0
        %v5871 = vadd.f32 %v5415, %v5870
        %v5872 = vpop.f32.mrb[0].mxu0
        %v5873 = vadd.f32 %v5419, %v5872
        %5874 = vmatprep.mubr.bf16.mxu0 %v5398
        %5875 = vmatmul.mubr.bf16.gmra.mrb[0].mxu0 %v5397
        %v5876 = vpop.f32.mrb[0].mxu0
        %v5877 = vadd.f32 %v5415, %v5876
        %v5878 = vpop.f32.mrb[0].mxu0
        %v5879 = vadd.f32 %v5419, %v5878
        %v5880 = vpop.f32.mrb[0].mxu0
        %v5881 = vadd.f32 %v5415, %v5880
        %v5882 = vpop.f32.mrb[0].mxu0
        %v5883 = vadd.f32 %v5419, %v5882
        %5884 = vmatprep.mubr.bf16.mxu0 %v5400
        %5885 = vmatmul.mubr.bf16.gmra.mrb[0].mxu0 %v5399
        %v5886 = vpop.f32.mrb[0].mxu0
        %v5887 = vadd.f32 %v5415, %v5886
        %v5888 = vpop.f32.mrb[0].mxu0
        %v5889 = vadd.f32 %v5419, %v5888
        %v5890 = vpop.f32.mrb[0].mxu0
        %v5891 = vadd.f32 %v5415, %v5890
        %v5892 = vpop.f32.mrb[0].mxu0
        %v5893 = vadd.f32 %v5419, %v5892
        %5894 = vmatprep.mubr.bf16.mxu0 %v5402
        %5895 = vmatmul.mubr.bf16.gmra.mrb[0].mxu0 %v5401
        %v5896 = vpop.f32.mrb[0].mxu0
        %v5897 = vadd.f32 %v5415, %v5896
        %v5898 = vpop.f32.mrb[0].mxu0
        %v5899 = vadd.f32 %v5419, %v5898
        %v5900 = vpop.f32.mrb[0].mxu0
        %v5901 = vadd.f32 %v5415, %v5900
        %v5902 = vpop.f32.mrb[0].mxu0
        %v5903 = vadd.f32 %v5419, %v5902
        %5904 = vmatprep.mubr.bf16.mxu0 %v5404
        %5905 = vmatmul.mubr.bf16.gmra.mrb[0].mxu0 %v5403
        %v5906 = vpop.f32.mrb[0].mxu0
        %v5907 = vadd.f32 %v5415, %v5906
        %v5908 = vpop.f32.mrb[0].mxu0
        %v5909 = vadd.f32 %v5419, %v5908
        %v5910 = vpop.f32.mrb[0].mxu0
        %v5911 = vadd.f32 %v5415, %v5910
        %v5912 = vpop.f32.mrb[0].mxu0
        %v5913 = vadd.f32 %v5419, %v5912
        %5914 = vmatprep.mubr.bf16.mxu0 %v5406
        %5915 = vmatmul.mubr.bf16.gmra.mrb[0].mxu0 %v5405
        %v5916 = vpop.f32.mrb[0].mxu0
        %v5917 = vadd.f32 %v5415, %v5916
        %v5918 = vpop.f32.mrb[0].mxu0
        %v5919 = vadd.f32 %v5419, %v5918
        %v5920 = vpop.f32.mrb[0].mxu0
        %v5921 = vadd.f32 %v5415, %v5920
        %v5922 = vpop.f32.mrb[0].mxu0
        %v5923 = vadd.f32 %v5419, %v5922
        %5924 = vmatprep.mubr.bf16.mxu0 %v5408
        %5925 = vmatmul.mubr.bf16.gmra.mrb[0].mxu0 %v5407
        %v5926 = vpop.f32.mrb[0].mxu0
        %v5927 = vadd.f32 %v5415, %v5926
        %v5928 = vpop.f32.mrb[0].mxu0
        %v5929 = vadd.f32 %v5419, %v5928
        %v5930 = vpop.f32.mrb[0].mxu0
        %v5931 = vadd.f32 %v5415, %v5930
        %v5932 = vpop.f32.mrb[0].mxu0
        %v5933 = vadd.f32 %v5419, %v5932
        %5934 = vmatprep.mubr.bf16.mxu0 %v5410
        %5935 = vmatmul.mubr.bf16.gmra.mrb[0].mxu0 %v5409
        %v5936 = vpop.f32.mrb[0].mxu0
        %v5937 = vadd.f32 %v5415, %v5936
        %v5938 = vpop.f32.mrb[0].mxu0
        %v5939 = vadd.f32 %v5419, %v5938
        %v5940 = vpop.f32.mrb[0].mxu0
        %v5941 = vadd.f32 %v5415, %v5940
        %v5942 = vpop.f32.mrb[0].mxu0
        %v5943 = vadd.f32 %v5419, %v5942
        %5944 = vdwg.mxu0
        %5945 = vmatprep.subr.bf16.mxu0 %v5627
        %5946 = vmatpush1.bf16.msra.mxu0 %v5626
        %5947 = vmatprep.subr.bf16.mxu0 %v5631
        %5948 = vmatpush1.bf16.msra.mxu0 %v5630
        %5949 = vmatprep.subr.bf16.mxu0 %v5635
        %5950 = vmatpush1.bf16.msra.mxu0 %v5634
        %5951 = vmatprep.subr.bf16.mxu0 %v5639
        %5952 = vmatpush1.bf16.msra.mxu0 %v5638
        %5953 = vmatprep.subr.bf16.mxu0 %v5643
        %5954 = vmatpush1.bf16.msra.mxu0 %v5642
        %5955 = vmatprep.subr.bf16.mxu0 %v5647
        %5956 = vmatpush1.bf16.msra.mxu0 %v5646
        %5957 = vmatprep.subr.bf16.mxu0 %v5651
        %5958 = vmatpush1.bf16.msra.mxu0 %v5650
        %5959 = vmatprep.subr.bf16.mxu0 %v5655
        %5960 = vmatpush1.bf16.msra.mxu0 %v5654
        %5961 = vmatprep.subr.bf16.mxu0 %v5659
        %5962 = vmatpush1.bf16.msra.mxu0 %v5658
        %5963 = vmatprep.subr.bf16.mxu0 %v5663
        %5964 = vmatpush1.bf16.msra.mxu0 %v5662
        %5965 = vmatprep.subr.bf16.mxu0 %v5667
        %5966 = vmatpush1.bf16.msra.mxu0 %v5666
        %5967 = vmatprep.subr.bf16.mxu0 %v5671
        %5968 = vmatpush1.bf16.msra.mxu0 %v5670
        %5969 = vmatprep.subr.bf16.mxu0 %v5675
        %5970 = vmatpush1.bf16.msra.mxu0 %v5674
        %5971 = vmatprep.subr.bf16.mxu0 %v5679
        %5972 = vmatpush1.bf16.msra.mxu0 %v5678
        %5973 = vmatprep.subr.bf16.mxu0 %v5683
        %5974 = vmatpush1.bf16.msra.mxu0 %v5682
        %5975 = vmatprep.subr.bf16.mxu0 %v5687
        %5976 = vmatpush1.bf16.msra.mxu0 %v5686
        %5977 = vmatprep.mubr.bf16.mxu0 %v5380
        %5978 = vmatmul.mubr.bf16.gmra.mrb[0].mxu0 %v5379
        %v5979 = vpop.f32.mrb[0].mxu0
        %v5980 = vadd.f32 %v5423, %v5979
        %v5981 = vpop.f32.mrb[0].mxu0
        %v5982 = vadd.f32 %v5427, %v5981
        %v5983 = vpop.f32.mrb[0].mxu0
        %v5984 = vadd.f32 %v5423, %v5983
        %v5985 = vpop.f32.mrb[0].mxu0
        %v5986 = vadd.f32 %v5427, %v5985
        %5987 = vmatprep.mubr.bf16.mxu0 %v5382
        %5988 = vmatmul.mubr.bf16.gmra.mrb[0].mxu0 %v5381
        %v5989 = vpop.f32.mrb[0].mxu0
        %v5990 = vadd.f32 %v5423, %v5989
        %v5991 = vpop.f32.mrb[0].mxu0
        %v5992 = vadd.f32 %v5427, %v5991
        %v5993 = vpop.f32.mrb[0].mxu0
        %v5994 = vadd.f32 %v5423, %v5993
        %v5995 = vpop.f32.mrb[0].mxu0
        %v5996 = vadd.f32 %v5427, %v5995
        %5997 = vmatprep.mubr.bf16.mxu0 %v5384
        %5998 = vmatmul.mubr.bf16.gmra.mrb[0].mxu0 %v5383
        %v5999 = vpop.f32.mrb[0].mxu0
        %v6000 = vadd.f32 %v5423, %v5999
        %v6001 = vpop.f32.mrb[0].mxu0
        %v6002 = vadd.f32 %v5427, %v6001
        %v6003 = vpop.f32.mrb[0].mxu0
        %v6004 = vadd.f32 %v5423, %v6003
        %v6005 = vpop.f32.mrb[0].mxu0
        %v6006 = vadd.f32 %v5427, %v6005
        %6007 = vmatprep.mubr.bf16.mxu0 %v5386
        %6008 = vmatmul.mubr.bf16.gmra.mrb[0].mxu0 %v5385
        %v6009 = vpop.f32.mrb[0].mxu0
        %v6010 = vadd.f32 %v5423, %v6009
        %v6011 = vpop.f32.mrb[0].mxu0
        %v6012 = vadd.f32 %v5427, %v6011
        %v6013 = vpop.f32.mrb[0].mxu0
        %v6014 = vadd.f32 %v5423, %v6013
        %v6015 = vpop.f32.mrb[0].mxu0
        %v6016 = vadd.f32 %v5427, %v6015
        %6017 = vmatprep.mubr.bf16.mxu0 %v5388
        %6018 = vmatmul.mubr.bf16.gmra.mrb[0].mxu0 %v5387
        %v6019 = vpop.f32.mrb[0].mxu0
        %v6020 = vadd.f32 %v5423, %v6019
        %v6021 = vpop.f32.mrb[0].mxu0
        %v6022 = vadd.f32 %v5427, %v6021
        %v6023 = vpop.f32.mrb[0].mxu0
        %v6024 = vadd.f32 %v5423, %v6023
        %v6025 = vpop.f32.mrb[0].mxu0
        %v6026 = vadd.f32 %v5427, %v6025
        %6027 = vmatprep.mubr.bf16.mxu0 %v5390
        %6028 = vmatmul.mubr.bf16.gmra.mrb[0].mxu0 %v5389
        %v6029 = vpop.f32.mrb[0].mxu0
        %v6030 = vadd.f32 %v5423, %v6029
        %v6031 = vpop.f32.mrb[0].mxu0
        %v6032 = vadd.f32 %v5427, %v6031
        %v6033 = vpop.f32.mrb[0].mxu0
        %v6034 = vadd.f32 %v5423, %v6033
        %v6035 = vpop.f32.mrb[0].mxu0
        %v6036 = vadd.f32 %v5427, %v6035
        %6037 = vmatprep.mubr.bf16.mxu0 %v5392
        %6038 = vmatmul.mubr.bf16.gmra.mrb[0].mxu0 %v5391
        %v6039 = vpop.f32.mrb[0].mxu0
        %v6040 = vadd.f32 %v5423, %v6039
        %v6041 = vpop.f32.mrb[0].mxu0
        %v6042 = vadd.f32 %v5427, %v6041
        %v6043 = vpop.f32.mrb[0].mxu0
        %v6044 = vadd.f32 %v5423, %v6043
        %v6045 = vpop.f32.mrb[0].mxu0
        %v6046 = vadd.f32 %v5427, %v6045
        %6047 = vmatprep.mubr.bf16.mxu0 %v5394
        %6048 = vmatmul.mubr.bf16.gmra.mrb[0].mxu0 %v5393
        %v6049 = vpop.f32.mrb[0].mxu0
        %v6050 = vadd.f32 %v5423, %v6049
        %v6051 = vpop.f32.mrb[0].mxu0
        %v6052 = vadd.f32 %v5427, %v6051
        %v6053 = vpop.f32.mrb[0].mxu0
        %v6054 = vadd.f32 %v5423, %v6053
        %v6055 = vpop.f32.mrb[0].mxu0
        %v6056 = vadd.f32 %v5427, %v6055
        %6057 = vmatprep.mubr.bf16.mxu0 %v5396
        %6058 = vmatmul.mubr.bf16.gmra.mrb[0].mxu0 %v5395
        %v6059 = vpop.f32.mrb[0].mxu0
        %v6060 = vadd.f32 %v5423, %v6059
        %v6061 = vpop.f32.mrb[0].mxu0
        %v6062 = vadd.f32 %v5427, %v6061
        %v6063 = vpop.f32.mrb[0].mxu0
        %v6064 = vadd.f32 %v5423, %v6063
        %v6065 = vpop.f32.mrb[0].mxu0
        %v6066 = vadd.f32 %v5427, %v6065
        %6067 = vmatprep.mubr.bf16.mxu0 %v5398
        %6068 = vmatmul.mubr.bf16.gmra.mrb[0].mxu0 %v5397
        %v6069 = vpop.f32.mrb[0].mxu0
        %v6070 = vadd.f32 %v5423, %v6069
        %v6071 = vpop.f32.mrb[0].mxu0
        %v6072 = vadd.f32 %v5427, %v6071
        %v6073 = vpop.f32.mrb[0].mxu0
        %v6074 = vadd.f32 %v5423, %v6073
        %v6075 = vpop.f32.mrb[0].mxu0
        %v6076 = vadd.f32 %v5427, %v6075
        %6077 = vmatprep.mubr.bf16.mxu0 %v5400
        %6078 = vmatmul.mubr.bf16.gmra.mrb[0].mxu0 %v5399
        %v6079 = vpop.f32.mrb[0].mxu0
        %v6080 = vadd.f32 %v5423, %v6079
        %v6081 = vpop.f32.mrb[0].mxu0
        %v6082 = vadd.f32 %v5427, %v6081
        %v6083 = vpop.f32.mrb[0].mxu0
        %v6084 = vadd.f32 %v5423, %v6083
        %v6085 = vpop.f32.mrb[0].mxu0
        %v6086 = vadd.f32 %v5427, %v6085
        %6087 = vmatprep.mubr.bf16.mxu0 %v5402
        %6088 = vmatmul.mubr.bf16.gmra.mrb[0].mxu0 %v5401
        %v6089 = vpop.f32.mrb[0].mxu0
        %v6090 = vadd.f32 %v5423, %v6089
        %v6091 = vpop.f32.mrb[0].mxu0
        %v6092 = vadd.f32 %v5427, %v6091
        %v6093 = vpop.f32.mrb[0].mxu0
        %v6094 = vadd.f32 %v5423, %v6093
        %v6095 = vpop.f32.mrb[0].mxu0
        %v6096 = vadd.f32 %v5427, %v6095
        %6097 = vmatprep.mubr.bf16.mxu0 %v5404
        %6098 = vmatmul.mubr.bf16.gmra.mrb[0].mxu0 %v5403
        %v6099 = vpop.f32.mrb[0].mxu0
        %v6100 = vadd.f32 %v5423, %v6099
        %v6101 = vpop.f32.mrb[0].mxu0
        %v6102 = vadd.f32 %v5427, %v6101
        %v6103 = vpop.f32.mrb[0].mxu0
        %v6104 = vadd.f32 %v5423, %v6103
        %v6105 = vpop.f32.mrb[0].mxu0
        %v6106 = vadd.f32 %v5427, %v6105
        %6107 = vmatprep.mubr.bf16.mxu0 %v5406
        %6108 = vmatmul.mubr.bf16.gmra.mrb[0].mxu0 %v5405
        %v6109 = vpop.f32.mrb[0].mxu0
        %v6110 = vadd.f32 %v5423, %v6109
        %v6111 = vpop.f32.mrb[0].mxu0
        %v6112 = vadd.f32 %v5427, %v6111
        %v6113 = vpop.f32.mrb[0].mxu0
        %v6114 = vadd.f32 %v5423, %v6113
        %v6115 = vpop.f32.mrb[0].mxu0
        %v6116 = vadd.f32 %v5427, %v6115
        %6117 = vmatprep.mubr.bf16.mxu0 %v5408
        %6118 = vmatmul.mubr.bf16.gmra.mrb[0].mxu0 %v5407
        %v6119 = vpop.f32.mrb[0].mxu0
        %v6120 = vadd.f32 %v5423, %v6119
        %v6121 = vpop.f32.mrb[0].mxu0
        %v6122 = vadd.f32 %v5427, %v6121
        %v6123 = vpop.f32.mrb[0].mxu0
        %v6124 = vadd.f32 %v5423, %v6123
        %v6125 = vpop.f32.mrb[0].mxu0
        %v6126 = vadd.f32 %v5427, %v6125
        %6127 = vmatprep.mubr.bf16.mxu0 %v5410
        %6128 = vmatmul.mubr.bf16.gmra.mrb[0].mxu0 %v5409
        %v6129 = vpop.f32.mrb[0].mxu0
        %v6130 = vadd.f32 %v5423, %v6129
        %v6131 = vpop.f32.mrb[0].mxu0
        %v6132 = vadd.f32 %v5427, %v6131
        %v6133 = vpop.f32.mrb[0].mxu0
        %v6134 = vadd.f32 %v5423, %v6133
        %v6135 = vpop.f32.mrb[0].mxu0
        %v6136 = vadd.f32 %v5427, %v6135
        %6137 = vdwg.mxu0
        %v6138 = vld [vmem:[%s41] sm:$0xff]
        %v6139 = vld [vmem:[%s41 + $0x8] sm:$0xff]
        %v6140 = vld [vmem:[%s41 + $0x10] sm:$0xff]
        %v6141 = vld [vmem:[%s41 + $0x18] sm:$0xff]
        %v6142 = vld [vmem:[%s41 + $0x20] sm:$0xff]
        %v6143 = vld [vmem:[%s41 + $0x28] sm:$0xff]
        %v6144 = vld [vmem:[%s41 + $0x30] sm:$0xff]
        %v6145 = vld [vmem:[%s41 + $0x38] sm:$0xff]
        %v6146 = vld [vmem:[%s41 + $0x40] sm:$0xff]
        %v6147 = vld [vmem:[%s41 + $0x48] sm:$0xff]
        %v6148 = vld [vmem:[%s41 + $0x50] sm:$0xff]
        %v6149 = vld [vmem:[%s41 + $0x58] sm:$0xff]
        %v6150 = vld [vmem:[%s41 + $0x60] sm:$0xff]
        %v6151 = vld [vmem:[%s41 + $0x68] sm:$0xff]
        %v6152 = vld [vmem:[%s41 + $0x70] sm:$0xff]
        %v6153 = vld [vmem:[%s41 + $0x78] sm:$0xff]
        %v6154 = vld [vmem:[%s41 + $0x80] sm:$0xff]
        %v6155 = vld [vmem:[%s41 + $0x88] sm:$0xff]
        %v6156 = vld [vmem:[%s41 + $0x90] sm:$0xff]
        %v6157 = vld [vmem:[%s41 + $0x98] sm:$0xff]
        %v6158 = vld [vmem:[%s41 + $0xa0] sm:$0xff]
        %v6159 = vld [vmem:[%s41 + $0xa8] sm:$0xff]
        %v6160 = vld [vmem:[%s41 + $0xb0] sm:$0xff]
        %v6161 = vld [vmem:[%s41 + $0xb8] sm:$0xff]
        %v6162 = vld [vmem:[%s41 + $0xc0] sm:$0xff]
        %v6163 = vld [vmem:[%s41 + $0xc8] sm:$0xff]
        %v6164 = vld [vmem:[%s41 + $0xd0] sm:$0xff]
        %v6165 = vld [vmem:[%s41 + $0xd8] sm:$0xff]
        %v6166 = vld [vmem:[%s41 + $0xe0] sm:$0xff]
        %v6167 = vld [vmem:[%s41 + $0xe8] sm:$0xff]
        %v6168 = vld [vmem:[%s41 + $0xf0] sm:$0xff]
        %v6169 = vld [vmem:[%s41 + $0xf8] sm:$0xff]
        %v6170 = vld [vmem:[%s41 + $0x100] sm:$0xff]
        %v6171 = vld [vmem:[%s41 + $0x108] sm:$0xff]
        %v6172 = vld [vmem:[%s41 + $0x110] sm:$0xff]
        %v6173 = vld [vmem:[%s41 + $0x118] sm:$0xff]
        %v6174 = vld [vmem:[%s41 + $0x120] sm:$0xff]
        %v6175 = vld [vmem:[%s41 + $0x128] sm:$0xff]
        %v6176 = vld [vmem:[%s41 + $0x130] sm:$0xff]
        %v6177 = vld [vmem:[%s41 + $0x138] sm:$0xff]
        %v6178 = vld [vmem:[%s41 + $0x140] sm:$0xff]
        %v6179 = vld [vmem:[%s41 + $0x148] sm:$0xff]
        %v6180 = vld [vmem:[%s41 + $0x150] sm:$0xff]
        %v6181 = vld [vmem:[%s41 + $0x158] sm:$0xff]
        %v6182 = vld [vmem:[%s41 + $0x160] sm:$0xff]
        %v6183 = vld [vmem:[%s41 + $0x168] sm:$0xff]
        %v6184 = vld [vmem:[%s41 + $0x170] sm:$0xff]
        %v6185 = vld [vmem:[%s41 + $0x178] sm:$0xff]
        %v6186 = vld [vmem:[%s41 + $0x180] sm:$0xff]
        %v6187 = vld [vmem:[%s41 + $0x188] sm:$0xff]
        %v6188 = vld [vmem:[%s41 + $0x190] sm:$0xff]
        %v6189 = vld [vmem:[%s41 + $0x198] sm:$0xff]
        %v6190 = vld [vmem:[%s41 + $0x1a0] sm:$0xff]
        %v6191 = vld [vmem:[%s41 + $0x1a8] sm:$0xff]
        %v6192 = vld [vmem:[%s41 + $0x1b0] sm:$0xff]
        %v6193 = vld [vmem:[%s41 + $0x1b8] sm:$0xff]
        %v6194 = vld [vmem:[%s41 + $0x1c0] sm:$0xff]
        %v6195 = vld [vmem:[%s41 + $0x1c8] sm:$0xff]
        %v6196 = vld [vmem:[%s41 + $0x1d0] sm:$0xff]
        %v6197 = vld [vmem:[%s41 + $0x1d8] sm:$0xff]
        %v6198 = vld [vmem:[%s41 + $0x1e0] sm:$0xff]
        %v6199 = vld [vmem:[%s41 + $0x1e8] sm:$0xff]
        %v6200 = vld [vmem:[%s41 + $0x1f0] sm:$0xff]
        %v6201 = vld [vmem:[%s41 + $0x1f8] sm:$0xff]
        %v6202 = vld [vmem:[%s43] sm:$0x3]
        %v6203 = vpack.c.bf16 %v5791, %v5787
        %v6204 = vpack.c.bf16 %v5793, %v5789
        %v6205 = vpack.c.bf16 %v5984, %v5980
        %v6206 = vpack.c.bf16 %v5986, %v5982
        %v6207 = vpack.c.bf16 %v5801, %v5797
        %v6208 = vpack.c.bf16 %v5803, %v5799
        %v6209 = vpack.c.bf16 %v5994, %v5990
        %v6210 = vpack.c.bf16 %v5996, %v5992
        %v6211 = vpack.c.bf16 %v5811, %v5807
        %v6212 = vpack.c.bf16 %v5813, %v5809
        %v6213 = vpack.c.bf16 %v6004, %v6000
        %v6214 = vpack.c.bf16 %v6006, %v6002
        %v6215 = vpack.c.bf16 %v5821, %v5817
        %v6216 = vpack.c.bf16 %v5823, %v5819
        %v6217 = vpack.c.bf16 %v6014, %v6010
        %v6218 = vpack.c.bf16 %v6016, %v6012
        %v6219 = vpack.c.bf16 %v5831, %v5827
        %v6220 = vpack.c.bf16 %v5833, %v5829
        %v6221 = vpack.c.bf16 %v6024, %v6020
        %v6222 = vpack.c.bf16 %v6026, %v6022
        %v6223 = vpack.c.bf16 %v5841, %v5837
        %v6224 = vpack.c.bf16 %v5843, %v5839
        %v6225 = vpack.c.bf16 %v6034, %v6030
        %v6226 = vpack.c.bf16 %v6036, %v6032
        %v6227 = vpack.c.bf16 %v5851, %v5847
        %v6228 = vpack.c.bf16 %v5853, %v5849
        %v6229 = vpack.c.bf16 %v6044, %v6040
        %v6230 = vpack.c.bf16 %v6046, %v6042
        %v6231 = vpack.c.bf16 %v5861, %v5857
        %v6232 = vpack.c.bf16 %v5863, %v5859
        %v6233 = vpack.c.bf16 %v6054, %v6050
        %v6234 = vpack.c.bf16 %v6056, %v6052
        %v6235 = vpack.c.bf16 %v5871, %v5867
        %v6236 = vpack.c.bf16 %v5873, %v5869
        %v6237 = vpack.c.bf16 %v6064, %v6060
        %v6238 = vpack.c.bf16 %v6066, %v6062
        %v6239 = vpack.c.bf16 %v5881, %v5877
        %v6240 = vpack.c.bf16 %v5883, %v5879
        %v6241 = vpack.c.bf16 %v6074, %v6070
        %v6242 = vpack.c.bf16 %v6076, %v6072
        %v6243 = vpack.c.bf16 %v5891, %v5887
        %v6244 = vpack.c.bf16 %v5893, %v5889
        %v6245 = vpack.c.bf16 %v6084, %v6080
        %v6246 = vpack.c.bf16 %v6086, %v6082
        %v6247 = vpack.c.bf16 %v5901, %v5897
        %v6248 = vpack.c.bf16 %v5903, %v5899
        %v6249 = vpack.c.bf16 %v6094, %v6090
        %v6250 = vpack.c.bf16 %v6096, %v6092
        %v6251 = vpack.c.bf16 %v5911, %v5907
        %v6252 = vpack.c.bf16 %v5913, %v5909
        %v6253 = vpack.c.bf16 %v6104, %v6100
        %v6254 = vpack.c.bf16 %v6106, %v6102
        %v6255 = vpack.c.bf16 %v5921, %v5917
        %v6256 = vpack.c.bf16 %v5923, %v5919
        %v6257 = vpack.c.bf16 %v6114, %v6110
        %v6258 = vpack.c.bf16 %v6116, %v6112
        %v6259 = vpack.c.bf16 %v5931, %v5927
        %v6260 = vpack.c.bf16 %v5933, %v5929
        %v6261 = vpack.c.bf16 %v6124, %v6120
        %v6262 = vpack.c.bf16 %v6126, %v6122
        %v6263 = vpack.c.bf16 %v5941, %v5937
        %v6264 = vpack.c.bf16 %v5943, %v5939
        %v6265 = vpack.c.bf16 %v6134, %v6130
        %v6266 = vpack.c.bf16 %v6136, %v6132
        %v6268 = vlaneseq
        %v6269 = vshrl.u32 %v6268, 7
        %v6270 = vsub.s32 0, %v6269
        %v6271 = vrot.slane %v6202, %v6270
        %v6272 = vlaneseq
        %v6273 = vshrl.u32 %v6272, 7
        %v6274 = vsub.s32 1, %v6273
        %v6275 = vrot.slane %v6202, %v6274
        %v6342 = vunpack.c.l.b16 %v6138
        %v6343 = vunpack.c.h.b16 %v6138
        %v6344 = vunpack.c.l.b16 %v6139
        %v6345 = vunpack.c.h.b16 %v6139
        %v6346 = vunpack.c.l.b16 %v6140
        %v6347 = vunpack.c.h.b16 %v6140
        %v6348 = vunpack.c.l.b16 %v6141
        %v6349 = vunpack.c.h.b16 %v6141
        %v6350 = vunpack.c.l.b16 %v6142
        %v6351 = vunpack.c.h.b16 %v6142
        %v6352 = vunpack.c.l.b16 %v6143
        %v6353 = vunpack.c.h.b16 %v6143
        %v6354 = vunpack.c.l.b16 %v6144
        %v6355 = vunpack.c.h.b16 %v6144
        %v6356 = vunpack.c.l.b16 %v6145
        %v6357 = vunpack.c.h.b16 %v6145
        %v6358 = vunpack.c.l.b16 %v6146
        %v6359 = vunpack.c.h.b16 %v6146
        %v6360 = vunpack.c.l.b16 %v6147
        %v6361 = vunpack.c.h.b16 %v6147
        %v6362 = vunpack.c.l.b16 %v6148
        %v6363 = vunpack.c.h.b16 %v6148
        %v6364 = vunpack.c.l.b16 %v6149
        %v6365 = vunpack.c.h.b16 %v6149
        %v6366 = vunpack.c.l.b16 %v6150
        %v6367 = vunpack.c.h.b16 %v6150
        %v6368 = vunpack.c.l.b16 %v6151
        %v6369 = vunpack.c.h.b16 %v6151
        %v6370 = vunpack.c.l.b16 %v6152
        %v6371 = vunpack.c.h.b16 %v6152
        %v6372 = vunpack.c.l.b16 %v6153
        %v6373 = vunpack.c.h.b16 %v6153
        %v6374 = vunpack.c.l.b16 %v6154
        %v6375 = vunpack.c.h.b16 %v6154
        %v6376 = vunpack.c.l.b16 %v6155
        %v6377 = vunpack.c.h.b16 %v6155
        %v6378 = vunpack.c.l.b16 %v6156
        %v6379 = vunpack.c.h.b16 %v6156
        %v6380 = vunpack.c.l.b16 %v6157
        %v6381 = vunpack.c.h.b16 %v6157
        %v6382 = vunpack.c.l.b16 %v6158
        %v6383 = vunpack.c.h.b16 %v6158
        %v6384 = vunpack.c.l.b16 %v6159
        %v6385 = vunpack.c.h.b16 %v6159
        %v6386 = vunpack.c.l.b16 %v6160
        %v6387 = vunpack.c.h.b16 %v6160
        %v6388 = vunpack.c.l.b16 %v6161
        %v6389 = vunpack.c.h.b16 %v6161
        %v6390 = vunpack.c.l.b16 %v6162
        %v6391 = vunpack.c.h.b16 %v6162
        %v6392 = vunpack.c.l.b16 %v6163
        %v6393 = vunpack.c.h.b16 %v6163
        %v6394 = vunpack.c.l.b16 %v6164
        %v6395 = vunpack.c.h.b16 %v6164
        %v6396 = vunpack.c.l.b16 %v6165
        %v6397 = vunpack.c.h.b16 %v6165
        %v6398 = vunpack.c.l.b16 %v6166
        %v6399 = vunpack.c.h.b16 %v6166
        %v6400 = vunpack.c.l.b16 %v6167
        %v6401 = vunpack.c.h.b16 %v6167
        %v6402 = vunpack.c.l.b16 %v6168
        %v6403 = vunpack.c.h.b16 %v6168
        %v6404 = vunpack.c.l.b16 %v6169
        %v6405 = vunpack.c.h.b16 %v6169
        %v6406 = vunpack.c.l.b16 %v6170
        %v6407 = vunpack.c.h.b16 %v6170
        %v6408 = vunpack.c.l.b16 %v6171
        %v6409 = vunpack.c.h.b16 %v6171
        %v6410 = vunpack.c.l.b16 %v6172
        %v6411 = vunpack.c.h.b16 %v6172
        %v6412 = vunpack.c.l.b16 %v6173
        %v6413 = vunpack.c.h.b16 %v6173
        %v6414 = vunpack.c.l.b16 %v6174
        %v6415 = vunpack.c.h.b16 %v6174
        %v6416 = vunpack.c.l.b16 %v6175
        %v6417 = vunpack.c.h.b16 %v6175
        %v6418 = vunpack.c.l.b16 %v6176
        %v6419 = vunpack.c.h.b16 %v6176
        %v6420 = vunpack.c.l.b16 %v6177
        %v6421 = vunpack.c.h.b16 %v6177
        %v6422 = vunpack.c.l.b16 %v6178
        %v6423 = vunpack.c.h.b16 %v6178
        %v6424 = vunpack.c.l.b16 %v6179
        %v6425 = vunpack.c.h.b16 %v6179
        %v6426 = vunpack.c.l.b16 %v6180
        %v6427 = vunpack.c.h.b16 %v6180
        %v6428 = vunpack.c.l.b16 %v6181
        %v6429 = vunpack.c.h.b16 %v6181
        %v6430 = vunpack.c.l.b16 %v6182
        %v6431 = vunpack.c.h.b16 %v6182
        %v6432 = vunpack.c.l.b16 %v6183
        %v6433 = vunpack.c.h.b16 %v6183
        %v6434 = vunpack.c.l.b16 %v6184
        %v6435 = vunpack.c.h.b16 %v6184
        %v6436 = vunpack.c.l.b16 %v6185
        %v6437 = vunpack.c.h.b16 %v6185
        %v6438 = vunpack.c.l.b16 %v6186
        %v6439 = vunpack.c.h.b16 %v6186
        %v6440 = vunpack.c.l.b16 %v6187
        %v6441 = vunpack.c.h.b16 %v6187
        %v6442 = vunpack.c.l.b16 %v6188
        %v6443 = vunpack.c.h.b16 %v6188
        %v6444 = vunpack.c.l.b16 %v6189
        %v6445 = vunpack.c.h.b16 %v6189
        %v6446 = vunpack.c.l.b16 %v6190
        %v6447 = vunpack.c.h.b16 %v6190
        %v6448 = vunpack.c.l.b16 %v6191
        %v6449 = vunpack.c.h.b16 %v6191
        %v6450 = vunpack.c.l.b16 %v6192
        %v6451 = vunpack.c.h.b16 %v6192
        %v6452 = vunpack.c.l.b16 %v6193
        %v6453 = vunpack.c.h.b16 %v6193
        %v6454 = vunpack.c.l.b16 %v6194
        %v6455 = vunpack.c.h.b16 %v6194
        %v6456 = vunpack.c.l.b16 %v6195
        %v6457 = vunpack.c.h.b16 %v6195
        %v6458 = vunpack.c.l.b16 %v6196
        %v6459 = vunpack.c.h.b16 %v6196
        %v6460 = vunpack.c.l.b16 %v6197
        %v6461 = vunpack.c.h.b16 %v6197
        %v6462 = vunpack.c.l.b16 %v6198
        %v6463 = vunpack.c.h.b16 %v6198
        %v6464 = vunpack.c.l.b16 %v6199
        %v6465 = vunpack.c.h.b16 %v6199
        %v6466 = vunpack.c.l.b16 %v6200
        %v6467 = vunpack.c.h.b16 %v6200
        %v6468 = vunpack.c.l.b16 %v6201
        %v6469 = vunpack.c.h.b16 %v6201
        %v6470 = vpack.c.b16 %v6344, %v6342
        %v6471 = vpack.c.b16 %v6345, %v6343
        %v6472 = vpack.c.b16 %v6348, %v6346
        %v6473 = vpack.c.b16 %v6349, %v6347
        %v6474 = vpack.c.b16 %v6352, %v6350
        %v6475 = vpack.c.b16 %v6353, %v6351
        %v6476 = vpack.c.b16 %v6356, %v6354
        %v6477 = vpack.c.b16 %v6357, %v6355
        %v6478 = vpack.c.b16 %v6360, %v6358
        %v6479 = vpack.c.b16 %v6361, %v6359
        %v6480 = vpack.c.b16 %v6364, %v6362
        %v6481 = vpack.c.b16 %v6365, %v6363
        %v6482 = vpack.c.b16 %v6368, %v6366
        %v6483 = vpack.c.b16 %v6369, %v6367
        %v6484 = vpack.c.b16 %v6372, %v6370
        %v6485 = vpack.c.b16 %v6373, %v6371
        %v6486 = vpack.c.b16 %v6376, %v6374
        %v6487 = vpack.c.b16 %v6377, %v6375
        %v6488 = vpack.c.b16 %v6380, %v6378
        %v6489 = vpack.c.b16 %v6381, %v6379
        %v6490 = vpack.c.b16 %v6384, %v6382
        %v6491 = vpack.c.b16 %v6385, %v6383
        %v6492 = vpack.c.b16 %v6388, %v6386
        %v6493 = vpack.c.b16 %v6389, %v6387
        %v6494 = vpack.c.b16 %v6392, %v6390
        %v6495 = vpack.c.b16 %v6393, %v6391
        %v6496 = vpack.c.b16 %v6396, %v6394
        %v6497 = vpack.c.b16 %v6397, %v6395
        %v6498 = vpack.c.b16 %v6400, %v6398
        %v6499 = vpack.c.b16 %v6401, %v6399
        %v6500 = vpack.c.b16 %v6404, %v6402
        %v6501 = vpack.c.b16 %v6405, %v6403
        %v6502 = vpack.c.b16 %v6408, %v6406
        %v6503 = vpack.c.b16 %v6409, %v6407
        %v6504 = vpack.c.b16 %v6412, %v6410
        %v6505 = vpack.c.b16 %v6413, %v6411
        %v6506 = vpack.c.b16 %v6416, %v6414
        %v6507 = vpack.c.b16 %v6417, %v6415
        %v6508 = vpack.c.b16 %v6420, %v6418
        %v6509 = vpack.c.b16 %v6421, %v6419
        %v6510 = vpack.c.b16 %v6424, %v6422
        %v6511 = vpack.c.b16 %v6425, %v6423
        %v6512 = vpack.c.b16 %v6428, %v6426
        %v6513 = vpack.c.b16 %v6429, %v6427
        %v6514 = vpack.c.b16 %v6432, %v6430
        %v6515 = vpack.c.b16 %v6433, %v6431
        %v6516 = vpack.c.b16 %v6436, %v6434
        %v6517 = vpack.c.b16 %v6437, %v6435
        %v6518 = vpack.c.b16 %v6440, %v6438
        %v6519 = vpack.c.b16 %v6441, %v6439
        %v6520 = vpack.c.b16 %v6444, %v6442
        %v6521 = vpack.c.b16 %v6445, %v6443
        %v6522 = vpack.c.b16 %v6448, %v6446
        %v6523 = vpack.c.b16 %v6449, %v6447
        %v6524 = vpack.c.b16 %v6452, %v6450
        %v6525 = vpack.c.b16 %v6453, %v6451
        %v6526 = vpack.c.b16 %v6456, %v6454
        %v6527 = vpack.c.b16 %v6457, %v6455
        %v6528 = vpack.c.b16 %v6460, %v6458
        %v6529 = vpack.c.b16 %v6461, %v6459
        %v6530 = vpack.c.b16 %v6464, %v6462
        %v6531 = vpack.c.b16 %v6465, %v6463
        %v6532 = vpack.c.b16 %v6468, %v6466
        %v6533 = vpack.c.b16 %v6469, %v6467
        %6598 = vmatprep.subr.bf16.mxu0 %v6471
        %6599 = vmatpush1.bf16.msra.mxu0 %v6470
        %6600 = vmatprep.subr.bf16.mxu0 %v6473
        %6601 = vmatpush1.bf16.msra.mxu0 %v6472
        %6602 = vmatprep.subr.bf16.mxu0 %v6475
        %6603 = vmatpush1.bf16.msra.mxu0 %v6474
        %6604 = vmatprep.subr.bf16.mxu0 %v6477
        %6605 = vmatpush1.bf16.msra.mxu0 %v6476
        %6606 = vmatprep.subr.bf16.mxu0 %v6479
        %6607 = vmatpush1.bf16.msra.mxu0 %v6478
        %6608 = vmatprep.subr.bf16.mxu0 %v6481
        %6609 = vmatpush1.bf16.msra.mxu0 %v6480
        %6610 = vmatprep.subr.bf16.mxu0 %v6483
        %6611 = vmatpush1.bf16.msra.mxu0 %v6482
        %6612 = vmatprep.subr.bf16.mxu0 %v6485
        %6613 = vmatpush1.bf16.msra.mxu0 %v6484
        %6614 = vmatprep.subr.bf16.mxu0 %v6487
        %6615 = vmatpush1.bf16.msra.mxu0 %v6486
        %6616 = vmatprep.subr.bf16.mxu0 %v6489
        %6617 = vmatpush1.bf16.msra.mxu0 %v6488
        %6618 = vmatprep.subr.bf16.mxu0 %v6491
        %6619 = vmatpush1.bf16.msra.mxu0 %v6490
        %6620 = vmatprep.subr.bf16.mxu0 %v6493
        %6621 = vmatpush1.bf16.msra.mxu0 %v6492
        %6622 = vmatprep.subr.bf16.mxu0 %v6495
        %6623 = vmatpush1.bf16.msra.mxu0 %v6494
        %6624 = vmatprep.subr.bf16.mxu0 %v6497
        %6625 = vmatpush1.bf16.msra.mxu0 %v6496
        %6626 = vmatprep.subr.bf16.mxu0 %v6499
        %6627 = vmatpush1.bf16.msra.mxu0 %v6498
        %6628 = vmatprep.subr.bf16.mxu0 %v6501
        %6629 = vmatpush1.bf16.msra.mxu0 %v6500
        %6630 = vmatprep.mubr.bf16.mxu0 %v6204
        %6631 = vmatmul.mubr.bf16.gmra.mrb[0].mxu0 %v6203
        %v6632 = vpop.f32.mrb[0].mxu0
        %v6633 = vadd.f32 %v6271, %v6632
        %v6634 = vpop.f32.mrb[0].mxu0
        %v6635 = vadd.f32 %v6275, %v6634
        %v6636 = vpop.f32.mrb[0].mxu0
        %v6637 = vadd.f32 %v6271, %v6636
        %v6638 = vpop.f32.mrb[0].mxu0
        %v6639 = vadd.f32 %v6275, %v6638
        %6640 = vmatprep.mubr.bf16.mxu0 %v6208
        %6641 = vmatmul.mubr.bf16.gmra.mrb[0].mxu0 %v6207
        %v6642 = vpop.f32.mrb[0].mxu0
        %v6643 = vadd.f32 %v6271, %v6642
        %v6644 = vpop.f32.mrb[0].mxu0
        %v6645 = vadd.f32 %v6275, %v6644
        %v6646 = vpop.f32.mrb[0].mxu0
        %v6647 = vadd.f32 %v6271, %v6646
        %v6648 = vpop.f32.mrb[0].mxu0
        %v6649 = vadd.f32 %v6275, %v6648
        %6650 = vmatprep.mubr.bf16.mxu0 %v6212
        %6651 = vmatmul.mubr.bf16.gmra.mrb[0].mxu0 %v6211
        %v6652 = vpop.f32.mrb[0].mxu0
        %v6653 = vadd.f32 %v6271, %v6652
        %v6654 = vpop.f32.mrb[0].mxu0
        %v6655 = vadd.f32 %v6275, %v6654
        %v6656 = vpop.f32.mrb[0].mxu0
        %v6657 = vadd.f32 %v6271, %v6656
        %v6658 = vpop.f32.mrb[0].mxu0
        %v6659 = vadd.f32 %v6275, %v6658
        %6660 = vmatprep.mubr.bf16.mxu0 %v6216
        %6661 = vmatmul.mubr.bf16.gmra.mrb[0].mxu0 %v6215
        %v6662 = vpop.f32.mrb[0].mxu0
        %v6663 = vadd.f32 %v6271, %v6662
        %v6664 = vpop.f32.mrb[0].mxu0
        %v6665 = vadd.f32 %v6275, %v6664
        %v6666 = vpop.f32.mrb[0].mxu0
        %v6667 = vadd.f32 %v6271, %v6666
        %v6668 = vpop.f32.mrb[0].mxu0
        %v6669 = vadd.f32 %v6275, %v6668
        %6670 = vmatprep.mubr.bf16.mxu0 %v6220
        %6671 = vmatmul.mubr.bf16.gmra.mrb[0].mxu0 %v6219
        %v6672 = vpop.f32.mrb[0].mxu0
        %v6673 = vadd.f32 %v6271, %v6672
        %v6674 = vpop.f32.mrb[0].mxu0
        %v6675 = vadd.f32 %v6275, %v6674
        %v6676 = vpop.f32.mrb[0].mxu0
        %v6677 = vadd.f32 %v6271, %v6676
        %v6678 = vpop.f32.mrb[0].mxu0
        %v6679 = vadd.f32 %v6275, %v6678
        %6680 = vmatprep.mubr.bf16.mxu0 %v6224
        %6681 = vmatmul.mubr.bf16.gmra.mrb[0].mxu0 %v6223
        %v6682 = vpop.f32.mrb[0].mxu0
        %v6683 = vadd.f32 %v6271, %v6682
        %v6684 = vpop.f32.mrb[0].mxu0
        %v6685 = vadd.f32 %v6275, %v6684
        %v6686 = vpop.f32.mrb[0].mxu0
        %v6687 = vadd.f32 %v6271, %v6686
        %v6688 = vpop.f32.mrb[0].mxu0
        %v6689 = vadd.f32 %v6275, %v6688
        %6690 = vmatprep.mubr.bf16.mxu0 %v6228
        %6691 = vmatmul.mubr.bf16.gmra.mrb[0].mxu0 %v6227
        %v6692 = vpop.f32.mrb[0].mxu0
        %v6693 = vadd.f32 %v6271, %v6692
        %v6694 = vpop.f32.mrb[0].mxu0
        %v6695 = vadd.f32 %v6275, %v6694
        %v6696 = vpop.f32.mrb[0].mxu0
        %v6697 = vadd.f32 %v6271, %v6696
        %v6698 = vpop.f32.mrb[0].mxu0
        %v6699 = vadd.f32 %v6275, %v6698
        %6700 = vmatprep.mubr.bf16.mxu0 %v6232
        %6701 = vmatmul.mubr.bf16.gmra.mrb[0].mxu0 %v6231
        %v6702 = vpop.f32.mrb[0].mxu0
        %v6703 = vadd.f32 %v6271, %v6702
        %v6704 = vpop.f32.mrb[0].mxu0
        %v6705 = vadd.f32 %v6275, %v6704
        %v6706 = vpop.f32.mrb[0].mxu0
        %v6707 = vadd.f32 %v6271, %v6706
        %v6708 = vpop.f32.mrb[0].mxu0
        %v6709 = vadd.f32 %v6275, %v6708
        %6710 = vmatprep.mubr.bf16.mxu0 %v6236
        %6711 = vmatmul.mubr.bf16.gmra.mrb[0].mxu0 %v6235
        %v6712 = vpop.f32.mrb[0].mxu0
        %v6713 = vadd.f32 %v6271, %v6712
        %v6714 = vpop.f32.mrb[0].mxu0
        %v6715 = vadd.f32 %v6275, %v6714
        %v6716 = vpop.f32.mrb[0].mxu0
        %v6717 = vadd.f32 %v6271, %v6716
        %v6718 = vpop.f32.mrb[0].mxu0
        %v6719 = vadd.f32 %v6275, %v6718
        %6720 = vmatprep.mubr.bf16.mxu0 %v6240
        %6721 = vmatmul.mubr.bf16.gmra.mrb[0].mxu0 %v6239
        %v6722 = vpop.f32.mrb[0].mxu0
        %v6723 = vadd.f32 %v6271, %v6722
        %v6724 = vpop.f32.mrb[0].mxu0
        %v6725 = vadd.f32 %v6275, %v6724
        %v6726 = vpop.f32.mrb[0].mxu0
        %v6727 = vadd.f32 %v6271, %v6726
        %v6728 = vpop.f32.mrb[0].mxu0
        %v6729 = vadd.f32 %v6275, %v6728
        %6730 = vmatprep.mubr.bf16.mxu0 %v6244
        %6731 = vmatmul.mubr.bf16.gmra.mrb[0].mxu0 %v6243
        %v6732 = vpop.f32.mrb[0].mxu0
        %v6733 = vadd.f32 %v6271, %v6732
        %v6734 = vpop.f32.mrb[0].mxu0
        %v6735 = vadd.f32 %v6275, %v6734
        %v6736 = vpop.f32.mrb[0].mxu0
        %v6737 = vadd.f32 %v6271, %v6736
        %v6738 = vpop.f32.mrb[0].mxu0
        %v6739 = vadd.f32 %v6275, %v6738
        %6740 = vmatprep.mubr.bf16.mxu0 %v6248
        %6741 = vmatmul.mubr.bf16.gmra.mrb[0].mxu0 %v6247
        %v6742 = vpop.f32.mrb[0].mxu0
        %v6743 = vadd.f32 %v6271, %v6742
        %v6744 = vpop.f32.mrb[0].mxu0
        %v6745 = vadd.f32 %v6275, %v6744
        %v6746 = vpop.f32.mrb[0].mxu0
        %v6747 = vadd.f32 %v6271, %v6746
        %v6748 = vpop.f32.mrb[0].mxu0
        %v6749 = vadd.f32 %v6275, %v6748
        %6750 = vmatprep.mubr.bf16.mxu0 %v6252
        %6751 = vmatmul.mubr.bf16.gmra.mrb[0].mxu0 %v6251
        %v6752 = vpop.f32.mrb[0].mxu0
        %v6753 = vadd.f32 %v6271, %v6752
        %v6754 = vpop.f32.mrb[0].mxu0
        %v6755 = vadd.f32 %v6275, %v6754
        %v6756 = vpop.f32.mrb[0].mxu0
        %v6757 = vadd.f32 %v6271, %v6756
        %v6758 = vpop.f32.mrb[0].mxu0
        %v6759 = vadd.f32 %v6275, %v6758
        %6760 = vmatprep.mubr.bf16.mxu0 %v6256
        %6761 = vmatmul.mubr.bf16.gmra.mrb[0].mxu0 %v6255
        %v6762 = vpop.f32.mrb[0].mxu0
        %v6763 = vadd.f32 %v6271, %v6762
        %v6764 = vpop.f32.mrb[0].mxu0
        %v6765 = vadd.f32 %v6275, %v6764
        %v6766 = vpop.f32.mrb[0].mxu0
        %v6767 = vadd.f32 %v6271, %v6766
        %v6768 = vpop.f32.mrb[0].mxu0
        %v6769 = vadd.f32 %v6275, %v6768
        %6770 = vmatprep.mubr.bf16.mxu0 %v6260
        %6771 = vmatmul.mubr.bf16.gmra.mrb[0].mxu0 %v6259
        %v6772 = vpop.f32.mrb[0].mxu0
        %v6773 = vadd.f32 %v6271, %v6772
        %v6774 = vpop.f32.mrb[0].mxu0
        %v6775 = vadd.f32 %v6275, %v6774
        %v6776 = vpop.f32.mrb[0].mxu0
        %v6777 = vadd.f32 %v6271, %v6776
        %v6778 = vpop.f32.mrb[0].mxu0
        %v6779 = vadd.f32 %v6275, %v6778
        %6780 = vmatprep.mubr.bf16.mxu0 %v6264
        %6781 = vmatmul.mubr.bf16.gmra.mrb[0].mxu0 %v6263
        %v6782 = vpop.f32.mrb[0].mxu0
        %v6783 = vadd.f32 %v6271, %v6782
        %v6784 = vpop.f32.mrb[0].mxu0
        %v6785 = vadd.f32 %v6275, %v6784
        %v6786 = vpop.f32.mrb[0].mxu0
        %v6787 = vadd.f32 %v6271, %v6786
        %v6788 = vpop.f32.mrb[0].mxu0
        %v6789 = vadd.f32 %v6275, %v6788
        %6790 = vdwg.mxu0
        %6791 = vmatprep.subr.bf16.mxu0 %v6503
        %6792 = vmatpush1.bf16.msra.mxu0 %v6502
        %6793 = vmatprep.subr.bf16.mxu0 %v6505
        %6794 = vmatpush1.bf16.msra.mxu0 %v6504
        %6795 = vmatprep.subr.bf16.mxu0 %v6507
        %6796 = vmatpush1.bf16.msra.mxu0 %v6506
        %6797 = vmatprep.subr.bf16.mxu0 %v6509
        %6798 = vmatpush1.bf16.msra.mxu0 %v6508
        %6799 = vmatprep.subr.bf16.mxu0 %v6511
        %6800 = vmatpush1.bf16.msra.mxu0 %v6510
        %6801 = vmatprep.subr.bf16.mxu0 %v6513
        %6802 = vmatpush1.bf16.msra.mxu0 %v6512
        %6803 = vmatprep.subr.bf16.mxu0 %v6515
        %6804 = vmatpush1.bf16.msra.mxu0 %v6514
        %6805 = vmatprep.subr.bf16.mxu0 %v6517
        %6806 = vmatpush1.bf16.msra.mxu0 %v6516
        %6807 = vmatprep.subr.bf16.mxu0 %v6519
        %6808 = vmatpush1.bf16.msra.mxu0 %v6518
        %6809 = vmatprep.subr.bf16.mxu0 %v6521
        %6810 = vmatpush1.bf16.msra.mxu0 %v6520
        %6811 = vmatprep.subr.bf16.mxu0 %v6523
        %6812 = vmatpush1.bf16.msra.mxu0 %v6522
        %6813 = vmatprep.subr.bf16.mxu0 %v6525
        %6814 = vmatpush1.bf16.msra.mxu0 %v6524
        %6815 = vmatprep.subr.bf16.mxu0 %v6527
        %6816 = vmatpush1.bf16.msra.mxu0 %v6526
        %6817 = vmatprep.subr.bf16.mxu0 %v6529
        %6818 = vmatpush1.bf16.msra.mxu0 %v6528
        %6819 = vmatprep.subr.bf16.mxu0 %v6531
        %6820 = vmatpush1.bf16.msra.mxu0 %v6530
        %6821 = vmatprep.subr.bf16.mxu0 %v6533
        %6822 = vmatpush1.bf16.msra.mxu0 %v6532
        %6823 = vmatprep.mubr.bf16.mxu0 %v6206
        %6824 = vmatmul.mubr.bf16.gmra.mrb[0].mxu0 %v6205
        %v6825 = vpop.f32.mrb[0].mxu0
        %v6826 = vadd.f32 %v6633, %v6825
        %v6827 = vpop.f32.mrb[0].mxu0
        %v6828 = vadd.f32 %v6635, %v6827
        %v6829 = vpop.f32.mrb[0].mxu0
        %v6830 = vadd.f32 %v6637, %v6829
        %v6831 = vpop.f32.mrb[0].mxu0
        %v6832 = vadd.f32 %v6639, %v6831
        %6833 = vmatprep.mubr.bf16.mxu0 %v6210
        %6834 = vmatmul.mubr.bf16.gmra.mrb[0].mxu0 %v6209
        %v6835 = vpop.f32.mrb[0].mxu0
        %v6836 = vadd.f32 %v6643, %v6835
        %v6837 = vpop.f32.mrb[0].mxu0
        %v6838 = vadd.f32 %v6645, %v6837
        %v6839 = vpop.f32.mrb[0].mxu0
        %v6840 = vadd.f32 %v6647, %v6839
        %v6841 = vpop.f32.mrb[0].mxu0
        %v6842 = vadd.f32 %v6649, %v6841
        %6843 = vmatprep.mubr.bf16.mxu0 %v6214
        %6844 = vmatmul.mubr.bf16.gmra.mrb[0].mxu0 %v6213
        %v6845 = vpop.f32.mrb[0].mxu0
        %v6846 = vadd.f32 %v6653, %v6845
        %v6847 = vpop.f32.mrb[0].mxu0
        %v6848 = vadd.f32 %v6655, %v6847
        %v6849 = vpop.f32.mrb[0].mxu0
        %v6850 = vadd.f32 %v6657, %v6849
        %v6851 = vpop.f32.mrb[0].mxu0
        %v6852 = vadd.f32 %v6659, %v6851
        %6853 = vmatprep.mubr.bf16.mxu0 %v6218
        %6854 = vmatmul.mubr.bf16.gmra.mrb[0].mxu0 %v6217
        %v6855 = vpop.f32.mrb[0].mxu0
        %v6856 = vadd.f32 %v6663, %v6855
        %v6857 = vpop.f32.mrb[0].mxu0
        %v6858 = vadd.f32 %v6665, %v6857
        %v6859 = vpop.f32.mrb[0].mxu0
        %v6860 = vadd.f32 %v6667, %v6859
        %v6861 = vpop.f32.mrb[0].mxu0
        %v6862 = vadd.f32 %v6669, %v6861
        %6863 = vmatprep.mubr.bf16.mxu0 %v6222
        %6864 = vmatmul.mubr.bf16.gmra.mrb[0].mxu0 %v6221
        %v6865 = vpop.f32.mrb[0].mxu0
        %v6866 = vadd.f32 %v6673, %v6865
        %v6867 = vpop.f32.mrb[0].mxu0
        %v6868 = vadd.f32 %v6675, %v6867
        %v6869 = vpop.f32.mrb[0].mxu0
        %v6870 = vadd.f32 %v6677, %v6869
        %v6871 = vpop.f32.mrb[0].mxu0
        %v6872 = vadd.f32 %v6679, %v6871
        %6873 = vmatprep.mubr.bf16.mxu0 %v6226
        %6874 = vmatmul.mubr.bf16.gmra.mrb[0].mxu0 %v6225
        %v6875 = vpop.f32.mrb[0].mxu0
        %v6876 = vadd.f32 %v6683, %v6875
        %v6877 = vpop.f32.mrb[0].mxu0
        %v6878 = vadd.f32 %v6685, %v6877
        %v6879 = vpop.f32.mrb[0].mxu0
        %v6880 = vadd.f32 %v6687, %v6879
        %v6881 = vpop.f32.mrb[0].mxu0
        %v6882 = vadd.f32 %v6689, %v6881
        %6883 = vmatprep.mubr.bf16.mxu0 %v6230
        %6884 = vmatmul.mubr.bf16.gmra.mrb[0].mxu0 %v6229
        %v6885 = vpop.f32.mrb[0].mxu0
        %v6886 = vadd.f32 %v6693, %v6885
        %v6887 = vpop.f32.mrb[0].mxu0
        %v6888 = vadd.f32 %v6695, %v6887
        %v6889 = vpop.f32.mrb[0].mxu0
        %v6890 = vadd.f32 %v6697, %v6889
        %v6891 = vpop.f32.mrb[0].mxu0
        %v6892 = vadd.f32 %v6699, %v6891
        %6893 = vmatprep.mubr.bf16.mxu0 %v6234
        %6894 = vmatmul.mubr.bf16.gmra.mrb[0].mxu0 %v6233
        %v6895 = vpop.f32.mrb[0].mxu0
        %v6896 = vadd.f32 %v6703, %v6895
        %v6897 = vpop.f32.mrb[0].mxu0
        %v6898 = vadd.f32 %v6705, %v6897
        %v6899 = vpop.f32.mrb[0].mxu0
        %v6900 = vadd.f32 %v6707, %v6899
        %v6901 = vpop.f32.mrb[0].mxu0
        %v6902 = vadd.f32 %v6709, %v6901
        %6903 = vmatprep.mubr.bf16.mxu0 %v6238
        %6904 = vmatmul.mubr.bf16.gmra.mrb[0].mxu0 %v6237
        %v6905 = vpop.f32.mrb[0].mxu0
        %v6906 = vadd.f32 %v6713, %v6905
        %v6907 = vpop.f32.mrb[0].mxu0
        %v6908 = vadd.f32 %v6715, %v6907
        %v6909 = vpop.f32.mrb[0].mxu0
        %v6910 = vadd.f32 %v6717, %v6909
        %v6911 = vpop.f32.mrb[0].mxu0
        %v6912 = vadd.f32 %v6719, %v6911
        %6913 = vmatprep.mubr.bf16.mxu0 %v6242
        %6914 = vmatmul.mubr.bf16.gmra.mrb[0].mxu0 %v6241
        %v6915 = vpop.f32.mrb[0].mxu0
        %v6916 = vadd.f32 %v6723, %v6915
        %v6917 = vpop.f32.mrb[0].mxu0
        %v6918 = vadd.f32 %v6725, %v6917
        %v6919 = vpop.f32.mrb[0].mxu0
        %v6920 = vadd.f32 %v6727, %v6919
        %v6921 = vpop.f32.mrb[0].mxu0
        %v6922 = vadd.f32 %v6729, %v6921
        %6923 = vmatprep.mubr.bf16.mxu0 %v6246
        %6924 = vmatmul.mubr.bf16.gmra.mrb[0].mxu0 %v6245
        %v6925 = vpop.f32.mrb[0].mxu0
        %v6926 = vadd.f32 %v6733, %v6925
        %v6927 = vpop.f32.mrb[0].mxu0
        %v6928 = vadd.f32 %v6735, %v6927
        %v6929 = vpop.f32.mrb[0].mxu0
        %v6930 = vadd.f32 %v6737, %v6929
        %v6931 = vpop.f32.mrb[0].mxu0
        %v6932 = vadd.f32 %v6739, %v6931
        %6933 = vmatprep.mubr.bf16.mxu0 %v6250
        %6934 = vmatmul.mubr.bf16.gmra.mrb[0].mxu0 %v6249
        %v6935 = vpop.f32.mrb[0].mxu0
        %v6936 = vadd.f32 %v6743, %v6935
        %v6937 = vpop.f32.mrb[0].mxu0
        %v6938 = vadd.f32 %v6745, %v6937
        %v6939 = vpop.f32.mrb[0].mxu0
        %v6940 = vadd.f32 %v6747, %v6939
        %v6941 = vpop.f32.mrb[0].mxu0
        %v6942 = vadd.f32 %v6749, %v6941
        %6943 = vmatprep.mubr.bf16.mxu0 %v6254
        %6944 = vmatmul.mubr.bf16.gmra.mrb[0].mxu0 %v6253
        %v6945 = vpop.f32.mrb[0].mxu0
        %v6946 = vadd.f32 %v6753, %v6945
        %v6947 = vpop.f32.mrb[0].mxu0
        %v6948 = vadd.f32 %v6755, %v6947
        %v6949 = vpop.f32.mrb[0].mxu0
        %v6950 = vadd.f32 %v6757, %v6949
        %v6951 = vpop.f32.mrb[0].mxu0
        %v6952 = vadd.f32 %v6759, %v6951
        %6953 = vmatprep.mubr.bf16.mxu0 %v6258
        %6954 = vmatmul.mubr.bf16.gmra.mrb[0].mxu0 %v6257
        %v6955 = vpop.f32.mrb[0].mxu0
        %v6956 = vadd.f32 %v6763, %v6955
        %v6957 = vpop.f32.mrb[0].mxu0
        %v6958 = vadd.f32 %v6765, %v6957
        %v6959 = vpop.f32.mrb[0].mxu0
        %v6960 = vadd.f32 %v6767, %v6959
        %v6961 = vpop.f32.mrb[0].mxu0
        %v6962 = vadd.f32 %v6769, %v6961
        %6963 = vmatprep.mubr.bf16.mxu0 %v6262
        %6964 = vmatmul.mubr.bf16.gmra.mrb[0].mxu0 %v6261
        %v6965 = vpop.f32.mrb[0].mxu0
        %v6966 = vadd.f32 %v6773, %v6965
        %v6967 = vpop.f32.mrb[0].mxu0
        %v6968 = vadd.f32 %v6775, %v6967
        %v6969 = vpop.f32.mrb[0].mxu0
        %v6970 = vadd.f32 %v6777, %v6969
        %v6971 = vpop.f32.mrb[0].mxu0
        %v6972 = vadd.f32 %v6779, %v6971
        %6973 = vmatprep.mubr.bf16.mxu0 %v6266
        %6974 = vmatmul.mubr.bf16.gmra.mrb[0].mxu0 %v6265
        %v6975 = vpop.f32.mrb[0].mxu0
        %v6976 = vadd.f32 %v6783, %v6975
        %v6977 = vpop.f32.mrb[0].mxu0
        %v6978 = vadd.f32 %v6785, %v6977
        %v6979 = vpop.f32.mrb[0].mxu0
        %v6980 = vadd.f32 %v6787, %v6979
        %v6981 = vpop.f32.mrb[0].mxu0
        %v6982 = vadd.f32 %v6789, %v6981
        %6983 = vdwg.mxu0
        %v6984 = vmax.f32 %v6826, 0.0
        %v6985 = vmax.f32 %v6828, 0.0
        %v6986 = vmax.f32 %v6830, 0.0
        %v6987 = vmax.f32 %v6832, 0.0
        %v6988 = vmax.f32 %v6836, 0.0
        %v6989 = vmax.f32 %v6838, 0.0
        %v6990 = vmax.f32 %v6840, 0.0
        %v6991 = vmax.f32 %v6842, 0.0
        %v6992 = vmax.f32 %v6846, 0.0
        %v6993 = vmax.f32 %v6848, 0.0
        %v6994 = vmax.f32 %v6850, 0.0
        %v6995 = vmax.f32 %v6852, 0.0
        %v6996 = vmax.f32 %v6856, 0.0
        %v6997 = vmax.f32 %v6858, 0.0
        %v6998 = vmax.f32 %v6860, 0.0
        %v6999 = vmax.f32 %v6862, 0.0
        %v7000 = vmax.f32 %v6866, 0.0
        %v7001 = vmax.f32 %v6868, 0.0
        %v7002 = vmax.f32 %v6870, 0.0
        %v7003 = vmax.f32 %v6872, 0.0
        %v7004 = vmax.f32 %v6876, 0.0
        %v7005 = vmax.f32 %v6878, 0.0
        %v7006 = vmax.f32 %v6880, 0.0
        %v7007 = vmax.f32 %v6882, 0.0
        %v7008 = vmax.f32 %v6886, 0.0
        %v7009 = vmax.f32 %v6888, 0.0
        %v7010 = vmax.f32 %v6890, 0.0
        %v7011 = vmax.f32 %v6892, 0.0
        %v7012 = vmax.f32 %v6896, 0.0
        %v7013 = vmax.f32 %v6898, 0.0
        %v7014 = vmax.f32 %v6900, 0.0
        %v7015 = vmax.f32 %v6902, 0.0
        %v7016 = vmax.f32 %v6906, 0.0
        %v7017 = vmax.f32 %v6908, 0.0
        %v7018 = vmax.f32 %v6910, 0.0
        %v7019 = vmax.f32 %v6912, 0.0
        %v7020 = vmax.f32 %v6916, 0.0
        %v7021 = vmax.f32 %v6918, 0.0
        %v7022 = vmax.f32 %v6920, 0.0
        %v7023 = vmax.f32 %v6922, 0.0
        %v7024 = vmax.f32 %v6926, 0.0
        %v7025 = vmax.f32 %v6928, 0.0
        %v7026 = vmax.f32 %v6930, 0.0
        %v7027 = vmax.f32 %v6932, 0.0
        %v7028 = vmax.f32 %v6936, 0.0
        %v7029 = vmax.f32 %v6938, 0.0
        %v7030 = vmax.f32 %v6940, 0.0
        %v7031 = vmax.f32 %v6942, 0.0
        %v7032 = vmax.f32 %v6946, 0.0
        %v7033 = vmax.f32 %v6948, 0.0
        %v7034 = vmax.f32 %v6950, 0.0
        %v7035 = vmax.f32 %v6952, 0.0
        %v7036 = vmax.f32 %v6956, 0.0
        %v7037 = vmax.f32 %v6958, 0.0
        %v7038 = vmax.f32 %v6960, 0.0
        %v7039 = vmax.f32 %v6962, 0.0
        %v7040 = vmax.f32 %v6966, 0.0
        %v7041 = vmax.f32 %v6968, 0.0
        %v7042 = vmax.f32 %v6970, 0.0
        %v7043 = vmax.f32 %v6972, 0.0
        %v7044 = vmax.f32 %v6976, 0.0
        %v7045 = vmax.f32 %v6978, 0.0
        %v7046 = vmax.f32 %v6980, 0.0
        %v7047 = vmax.f32 %v6982, 0.0
        %v7048 = vld [vmem:[#allocation15] sm:$0xff]
        %v7049 = vld [vmem:[#allocation15 + $0x8] sm:$0xff]
        %v7050 = vld [vmem:[#allocation15 + $0x10] sm:$0xff]
        %v7051 = vld [vmem:[#allocation15 + $0x18] sm:$0xff]
        %v7052 = vld [vmem:[#allocation15 + $0x20] sm:$0xff]
        %v7053 = vld [vmem:[#allocation15 + $0x28] sm:$0xff]
        %v7054 = vld [vmem:[#allocation15 + $0x30] sm:$0xff]
        %v7055 = vld [vmem:[#allocation15 + $0x38] sm:$0xff]
        %v7056 = vld [vmem:[#allocation15 + $0x40] sm:$0xff]
        %v7057 = vld [vmem:[#allocation15 + $0x48] sm:$0xff]
        %v7058 = vld [vmem:[#allocation15 + $0x50] sm:$0xff]
        %v7059 = vld [vmem:[#allocation15 + $0x58] sm:$0xff]
        %v7060 = vld [vmem:[#allocation15 + $0x60] sm:$0xff]
        %v7061 = vld [vmem:[#allocation15 + $0x68] sm:$0xff]
        %v7062 = vld [vmem:[#allocation15 + $0x70] sm:$0xff]
        %v7063 = vld [vmem:[#allocation15 + $0x78] sm:$0xff]
        %v7064 = vld [vmem:[#allocation15 + $0x80] sm:$0xff]
        %v7065 = vld [vmem:[#allocation15 + $0x88] sm:$0xff]
        %v7066 = vld [vmem:[#allocation15 + $0x90] sm:$0xff]
        %v7067 = vld [vmem:[#allocation15 + $0x98] sm:$0xff]
        %v7068 = vld [vmem:[#allocation15 + $0xa0] sm:$0xff]
        %v7069 = vld [vmem:[#allocation15 + $0xa8] sm:$0xff]
        %v7070 = vld [vmem:[#allocation15 + $0xb0] sm:$0xff]
        %v7071 = vld [vmem:[#allocation15 + $0xb8] sm:$0xff]
        %v7072 = vld [vmem:[#allocation15 + $0xc0] sm:$0xff]
        %v7073 = vld [vmem:[#allocation15 + $0xc8] sm:$0xff]
        %v7074 = vld [vmem:[#allocation15 + $0xd0] sm:$0xff]
        %v7075 = vld [vmem:[#allocation15 + $0xd8] sm:$0xff]
        %v7076 = vld [vmem:[#allocation15 + $0xe0] sm:$0xff]
        %v7077 = vld [vmem:[#allocation15 + $0xe8] sm:$0xff]
        %v7078 = vld [vmem:[#allocation15 + $0xf0] sm:$0xff]
        %v7079 = vld [vmem:[#allocation15 + $0xf8] sm:$0xff]
        %v7080 = vld [vmem:[%s47] sm:$0x3]
        %v7081 = vpack.c.bf16 %v6986, %v6984
        %v7082 = vpack.c.bf16 %v6987, %v6985
        %v7083 = vpack.c.bf16 %v6990, %v6988
        %v7084 = vpack.c.bf16 %v6991, %v6989
        %v7085 = vpack.c.bf16 %v6994, %v6992
        %v7086 = vpack.c.bf16 %v6995, %v6993
        %v7087 = vpack.c.bf16 %v6998, %v6996
        %v7088 = vpack.c.bf16 %v6999, %v6997
        %v7089 = vpack.c.bf16 %v7002, %v7000
        %v7090 = vpack.c.bf16 %v7003, %v7001
        %v7091 = vpack.c.bf16 %v7006, %v7004
        %v7092 = vpack.c.bf16 %v7007, %v7005
        %v7093 = vpack.c.bf16 %v7010, %v7008
        %v7094 = vpack.c.bf16 %v7011, %v7009
        %v7095 = vpack.c.bf16 %v7014, %v7012
        %v7096 = vpack.c.bf16 %v7015, %v7013
        %v7097 = vpack.c.bf16 %v7018, %v7016
        %v7098 = vpack.c.bf16 %v7019, %v7017
        %v7099 = vpack.c.bf16 %v7022, %v7020
        %v7100 = vpack.c.bf16 %v7023, %v7021
        %v7101 = vpack.c.bf16 %v7026, %v7024
        %v7102 = vpack.c.bf16 %v7027, %v7025
        %v7103 = vpack.c.bf16 %v7030, %v7028
        %v7104 = vpack.c.bf16 %v7031, %v7029
        %v7105 = vpack.c.bf16 %v7034, %v7032
        %v7106 = vpack.c.bf16 %v7035, %v7033
        %v7107 = vpack.c.bf16 %v7038, %v7036
        %v7108 = vpack.c.bf16 %v7039, %v7037
        %v7109 = vpack.c.bf16 %v7042, %v7040
        %v7110 = vpack.c.bf16 %v7043, %v7041
        %v7111 = vpack.c.bf16 %v7046, %v7044
        %v7112 = vpack.c.bf16 %v7047, %v7045
        %v7114 = vlaneseq
        %v7115 = vshrl.u32 %v7114, 7
        %v7116 = vsub.s32 0, %v7115
        %v7117 = vrot.slane %v7080, %v7116
        %v7118 = vlaneseq
        %v7119 = vshrl.u32 %v7118, 7
        %v7120 = vsub.s32 1, %v7119
        %v7121 = vrot.slane %v7080, %v7120
        %v7156 = vunpack.c.l.b16 %v7048
        %v7157 = vunpack.c.h.b16 %v7048
        %v7158 = vunpack.c.l.b16 %v7049
        %v7159 = vunpack.c.h.b16 %v7049
        %v7160 = vunpack.c.l.b16 %v7050
        %v7161 = vunpack.c.h.b16 %v7050
        %v7162 = vunpack.c.l.b16 %v7051
        %v7163 = vunpack.c.h.b16 %v7051
        %v7164 = vunpack.c.l.b16 %v7052
        %v7165 = vunpack.c.h.b16 %v7052
        %v7166 = vunpack.c.l.b16 %v7053
        %v7167 = vunpack.c.h.b16 %v7053
        %v7168 = vunpack.c.l.b16 %v7054
        %v7169 = vunpack.c.h.b16 %v7054
        %v7170 = vunpack.c.l.b16 %v7055
        %v7171 = vunpack.c.h.b16 %v7055
        %v7172 = vunpack.c.l.b16 %v7056
        %v7173 = vunpack.c.h.b16 %v7056
        %v7174 = vunpack.c.l.b16 %v7057
        %v7175 = vunpack.c.h.b16 %v7057
        %v7176 = vunpack.c.l.b16 %v7058
        %v7177 = vunpack.c.h.b16 %v7058
        %v7178 = vunpack.c.l.b16 %v7059
        %v7179 = vunpack.c.h.b16 %v7059
        %v7180 = vunpack.c.l.b16 %v7060
        %v7181 = vunpack.c.h.b16 %v7060
        %v7182 = vunpack.c.l.b16 %v7061
        %v7183 = vunpack.c.h.b16 %v7061
        %v7184 = vunpack.c.l.b16 %v7062
        %v7185 = vunpack.c.h.b16 %v7062
        %v7186 = vunpack.c.l.b16 %v7063
        %v7187 = vunpack.c.h.b16 %v7063
        %v7188 = vunpack.c.l.b16 %v7064
        %v7189 = vunpack.c.h.b16 %v7064
        %v7190 = vunpack.c.l.b16 %v7065
        %v7191 = vunpack.c.h.b16 %v7065
        %v7192 = vunpack.c.l.b16 %v7066
        %v7193 = vunpack.c.h.b16 %v7066
        %v7194 = vunpack.c.l.b16 %v7067
        %v7195 = vunpack.c.h.b16 %v7067
        %v7196 = vunpack.c.l.b16 %v7068
        %v7197 = vunpack.c.h.b16 %v7068
        %v7198 = vunpack.c.l.b16 %v7069
        %v7199 = vunpack.c.h.b16 %v7069
        %v7200 = vunpack.c.l.b16 %v7070
        %v7201 = vunpack.c.h.b16 %v7070
        %v7202 = vunpack.c.l.b16 %v7071
        %v7203 = vunpack.c.h.b16 %v7071
        %v7204 = vunpack.c.l.b16 %v7072
        %v7205 = vunpack.c.h.b16 %v7072
        %v7206 = vunpack.c.l.b16 %v7073
        %v7207 = vunpack.c.h.b16 %v7073
        %v7208 = vunpack.c.l.b16 %v7074
        %v7209 = vunpack.c.h.b16 %v7074
        %v7210 = vunpack.c.l.b16 %v7075
        %v7211 = vunpack.c.h.b16 %v7075
        %v7212 = vunpack.c.l.b16 %v7076
        %v7213 = vunpack.c.h.b16 %v7076
        %v7214 = vunpack.c.l.b16 %v7077
        %v7215 = vunpack.c.h.b16 %v7077
        %v7216 = vunpack.c.l.b16 %v7078
        %v7217 = vunpack.c.h.b16 %v7078
        %v7218 = vunpack.c.l.b16 %v7079
        %v7219 = vunpack.c.h.b16 %v7079
        %v7220 = vpack.c.b16 %v7158, %v7156
        %v7221 = vpack.c.b16 %v7159, %v7157
        %v7222 = vpack.c.b16 %v7162, %v7160
        %v7223 = vpack.c.b16 %v7163, %v7161
        %v7224 = vpack.c.b16 %v7166, %v7164
        %v7225 = vpack.c.b16 %v7167, %v7165
        %v7226 = vpack.c.b16 %v7170, %v7168
        %v7227 = vpack.c.b16 %v7171, %v7169
        %v7228 = vpack.c.b16 %v7174, %v7172
        %v7229 = vpack.c.b16 %v7175, %v7173
        %v7230 = vpack.c.b16 %v7178, %v7176
        %v7231 = vpack.c.b16 %v7179, %v7177
        %v7232 = vpack.c.b16 %v7182, %v7180
        %v7233 = vpack.c.b16 %v7183, %v7181
        %v7234 = vpack.c.b16 %v7186, %v7184
        %v7235 = vpack.c.b16 %v7187, %v7185
        %v7236 = vpack.c.b16 %v7190, %v7188
        %v7237 = vpack.c.b16 %v7191, %v7189
        %v7238 = vpack.c.b16 %v7194, %v7192
        %v7239 = vpack.c.b16 %v7195, %v7193
        %v7240 = vpack.c.b16 %v7198, %v7196
        %v7241 = vpack.c.b16 %v7199, %v7197
        %v7242 = vpack.c.b16 %v7202, %v7200
        %v7243 = vpack.c.b16 %v7203, %v7201
        %v7244 = vpack.c.b16 %v7206, %v7204
        %v7245 = vpack.c.b16 %v7207, %v7205
        %v7246 = vpack.c.b16 %v7210, %v7208
        %v7247 = vpack.c.b16 %v7211, %v7209
        %v7248 = vpack.c.b16 %v7214, %v7212
        %v7249 = vpack.c.b16 %v7215, %v7213
        %v7250 = vpack.c.b16 %v7218, %v7216
        %v7251 = vpack.c.b16 %v7219, %v7217
        %7284 = vmatprep.subr.bf16.mxu0 %v7221
        %7285 = vmatpush1.bf16.msra.mxu0 %v7220
        %7286 = vmatprep.subr.bf16.mxu0 %v7223
        %7287 = vmatpush1.bf16.msra.mxu0 %v7222
        %7288 = vmatprep.subr.bf16.mxu0 %v7225
        %7289 = vmatpush1.bf16.msra.mxu0 %v7224
        %7290 = vmatprep.subr.bf16.mxu0 %v7227
        %7291 = vmatpush1.bf16.msra.mxu0 %v7226
        %7292 = vmatprep.subr.bf16.mxu0 %v7229
        %7293 = vmatpush1.bf16.msra.mxu0 %v7228
        %7294 = vmatprep.subr.bf16.mxu0 %v7231
        %7295 = vmatpush1.bf16.msra.mxu0 %v7230
        %7296 = vmatprep.subr.bf16.mxu0 %v7233
        %7297 = vmatpush1.bf16.msra.mxu0 %v7232
        %7298 = vmatprep.subr.bf16.mxu0 %v7235
        %7299 = vmatpush1.bf16.msra.mxu0 %v7234
        %7300 = vmatprep.subr.bf16.mxu0 %v7237
        %7301 = vmatpush1.bf16.msra.mxu0 %v7236
        %7302 = vmatprep.subr.bf16.mxu0 %v7239
        %7303 = vmatpush1.bf16.msra.mxu0 %v7238
        %7304 = vmatprep.subr.bf16.mxu0 %v7241
        %7305 = vmatpush1.bf16.msra.mxu0 %v7240
        %7306 = vmatprep.subr.bf16.mxu0 %v7243
        %7307 = vmatpush1.bf16.msra.mxu0 %v7242
        %7308 = vmatprep.subr.bf16.mxu0 %v7245
        %7309 = vmatpush1.bf16.msra.mxu0 %v7244
        %7310 = vmatprep.subr.bf16.mxu0 %v7247
        %7311 = vmatpush1.bf16.msra.mxu0 %v7246
        %7312 = vmatprep.subr.bf16.mxu0 %v7249
        %7313 = vmatpush1.bf16.msra.mxu0 %v7248
        %7314 = vmatprep.subr.bf16.mxu0 %v7251
        %7315 = vmatpush1.bf16.msra.mxu0 %v7250
        %7316 = vmatprep.mubr.bf16.mxu0 %v7082
        %7317 = vmatmul.mubr.bf16.gmra.mrb[0].mxu0 %v7081
        %v7318 = vpop.f32.mrb[0].mxu0
        %v7319 = vadd.f32 %v7117, %v7318
        %v7320 = vpop.f32.mrb[0].mxu0
        %v7321 = vadd.f32 %v7121, %v7320
        %v7322 = vpop.f32.mrb[0].mxu0
        %v7323 = vadd.f32 %v7117, %v7322
        %v7324 = vpop.f32.mrb[0].mxu0
        %v7325 = vadd.f32 %v7121, %v7324
        %7326 = vmatprep.mubr.bf16.mxu0 %v7084
        %7327 = vmatmul.mubr.bf16.gmra.mrb[0].mxu0 %v7083
        %v7328 = vpop.f32.mrb[0].mxu0
        %v7329 = vadd.f32 %v7117, %v7328
        %v7330 = vpop.f32.mrb[0].mxu0
        %v7331 = vadd.f32 %v7121, %v7330
        %v7332 = vpop.f32.mrb[0].mxu0
        %v7333 = vadd.f32 %v7117, %v7332
        %v7334 = vpop.f32.mrb[0].mxu0
        %v7335 = vadd.f32 %v7121, %v7334
        %7336 = vmatprep.mubr.bf16.mxu0 %v7086
        %7337 = vmatmul.mubr.bf16.gmra.mrb[0].mxu0 %v7085
        %v7338 = vpop.f32.mrb[0].mxu0
        %v7339 = vadd.f32 %v7117, %v7338
        %v7340 = vpop.f32.mrb[0].mxu0
        %v7341 = vadd.f32 %v7121, %v7340
        %v7342 = vpop.f32.mrb[0].mxu0
        %v7343 = vadd.f32 %v7117, %v7342
        %v7344 = vpop.f32.mrb[0].mxu0
        %v7345 = vadd.f32 %v7121, %v7344
        %7346 = vmatprep.mubr.bf16.mxu0 %v7088
        %7347 = vmatmul.mubr.bf16.gmra.mrb[0].mxu0 %v7087
        %v7348 = vpop.f32.mrb[0].mxu0
        %v7349 = vadd.f32 %v7117, %v7348
        %v7350 = vpop.f32.mrb[0].mxu0
        %v7351 = vadd.f32 %v7121, %v7350
        %v7352 = vpop.f32.mrb[0].mxu0
        %v7353 = vadd.f32 %v7117, %v7352
        %v7354 = vpop.f32.mrb[0].mxu0
        %v7355 = vadd.f32 %v7121, %v7354
        %7356 = vmatprep.mubr.bf16.mxu0 %v7090
        %7357 = vmatmul.mubr.bf16.gmra.mrb[0].mxu0 %v7089
        %v7358 = vpop.f32.mrb[0].mxu0
        %v7359 = vadd.f32 %v7117, %v7358
        %v7360 = vpop.f32.mrb[0].mxu0
        %v7361 = vadd.f32 %v7121, %v7360
        %v7362 = vpop.f32.mrb[0].mxu0
        %v7363 = vadd.f32 %v7117, %v7362
        %v7364 = vpop.f32.mrb[0].mxu0
        %v7365 = vadd.f32 %v7121, %v7364
        %7366 = vmatprep.mubr.bf16.mxu0 %v7092
        %7367 = vmatmul.mubr.bf16.gmra.mrb[0].mxu0 %v7091
        %v7368 = vpop.f32.mrb[0].mxu0
        %v7369 = vadd.f32 %v7117, %v7368
        %v7370 = vpop.f32.mrb[0].mxu0
        %v7371 = vadd.f32 %v7121, %v7370
        %v7372 = vpop.f32.mrb[0].mxu0
        %v7373 = vadd.f32 %v7117, %v7372
        %v7374 = vpop.f32.mrb[0].mxu0
        %v7375 = vadd.f32 %v7121, %v7374
        %7376 = vmatprep.mubr.bf16.mxu0 %v7094
        %7377 = vmatmul.mubr.bf16.gmra.mrb[0].mxu0 %v7093
        %v7378 = vpop.f32.mrb[0].mxu0
        %v7379 = vadd.f32 %v7117, %v7378
        %v7380 = vpop.f32.mrb[0].mxu0
        %v7381 = vadd.f32 %v7121, %v7380
        %v7382 = vpop.f32.mrb[0].mxu0
        %v7383 = vadd.f32 %v7117, %v7382
        %v7384 = vpop.f32.mrb[0].mxu0
        %v7385 = vadd.f32 %v7121, %v7384
        %7386 = vmatprep.mubr.bf16.mxu0 %v7096
        %7387 = vmatmul.mubr.bf16.gmra.mrb[0].mxu0 %v7095
        %v7388 = vpop.f32.mrb[0].mxu0
        %v7389 = vadd.f32 %v7117, %v7388
        %v7390 = vpop.f32.mrb[0].mxu0
        %v7391 = vadd.f32 %v7121, %v7390
        %v7392 = vpop.f32.mrb[0].mxu0
        %v7393 = vadd.f32 %v7117, %v7392
        %v7394 = vpop.f32.mrb[0].mxu0
        %v7395 = vadd.f32 %v7121, %v7394
        %7396 = vmatprep.mubr.bf16.mxu0 %v7098
        %7397 = vmatmul.mubr.bf16.gmra.mrb[0].mxu0 %v7097
        %v7398 = vpop.f32.mrb[0].mxu0
        %v7399 = vadd.f32 %v7117, %v7398
        %v7400 = vpop.f32.mrb[0].mxu0
        %v7401 = vadd.f32 %v7121, %v7400
        %v7402 = vpop.f32.mrb[0].mxu0
        %v7403 = vadd.f32 %v7117, %v7402
        %v7404 = vpop.f32.mrb[0].mxu0
        %v7405 = vadd.f32 %v7121, %v7404
        %7406 = vmatprep.mubr.bf16.mxu0 %v7100
        %7407 = vmatmul.mubr.bf16.gmra.mrb[0].mxu0 %v7099
        %v7408 = vpop.f32.mrb[0].mxu0
        %v7409 = vadd.f32 %v7117, %v7408
        %v7410 = vpop.f32.mrb[0].mxu0
        %v7411 = vadd.f32 %v7121, %v7410
        %v7412 = vpop.f32.mrb[0].mxu0
        %v7413 = vadd.f32 %v7117, %v7412
        %v7414 = vpop.f32.mrb[0].mxu0
        %v7415 = vadd.f32 %v7121, %v7414
        %7416 = vmatprep.mubr.bf16.mxu0 %v7102
        %7417 = vmatmul.mubr.bf16.gmra.mrb[0].mxu0 %v7101
        %v7418 = vpop.f32.mrb[0].mxu0
        %v7419 = vadd.f32 %v7117, %v7418
        %v7420 = vpop.f32.mrb[0].mxu0
        %v7421 = vadd.f32 %v7121, %v7420
        %v7422 = vpop.f32.mrb[0].mxu0
        %v7423 = vadd.f32 %v7117, %v7422
        %v7424 = vpop.f32.mrb[0].mxu0
        %v7425 = vadd.f32 %v7121, %v7424
        %7426 = vmatprep.mubr.bf16.mxu0 %v7104
        %7427 = vmatmul.mubr.bf16.gmra.mrb[0].mxu0 %v7103
        %v7428 = vpop.f32.mrb[0].mxu0
        %v7429 = vadd.f32 %v7117, %v7428
        %v7430 = vpop.f32.mrb[0].mxu0
        %v7431 = vadd.f32 %v7121, %v7430
        %v7432 = vpop.f32.mrb[0].mxu0
        %v7433 = vadd.f32 %v7117, %v7432
        %v7434 = vpop.f32.mrb[0].mxu0
        %v7435 = vadd.f32 %v7121, %v7434
        %7436 = vmatprep.mubr.bf16.mxu0 %v7106
        %7437 = vmatmul.mubr.bf16.gmra.mrb[0].mxu0 %v7105
        %v7438 = vpop.f32.mrb[0].mxu0
        %v7439 = vadd.f32 %v7117, %v7438
        %v7440 = vpop.f32.mrb[0].mxu0
        %v7441 = vadd.f32 %v7121, %v7440
        %v7442 = vpop.f32.mrb[0].mxu0
        %v7443 = vadd.f32 %v7117, %v7442
        %v7444 = vpop.f32.mrb[0].mxu0
        %v7445 = vadd.f32 %v7121, %v7444
        %7446 = vmatprep.mubr.bf16.mxu0 %v7108
        %7447 = vmatmul.mubr.bf16.gmra.mrb[0].mxu0 %v7107
        %v7448 = vpop.f32.mrb[0].mxu0
        %v7449 = vadd.f32 %v7117, %v7448
        %v7450 = vpop.f32.mrb[0].mxu0
        %v7451 = vadd.f32 %v7121, %v7450
        %v7452 = vpop.f32.mrb[0].mxu0
        %v7453 = vadd.f32 %v7117, %v7452
        %v7454 = vpop.f32.mrb[0].mxu0
        %v7455 = vadd.f32 %v7121, %v7454
        %7456 = vmatprep.mubr.bf16.mxu0 %v7110
        %7457 = vmatmul.mubr.bf16.gmra.mrb[0].mxu0 %v7109
        %v7458 = vpop.f32.mrb[0].mxu0
        %v7459 = vadd.f32 %v7117, %v7458
        %v7460 = vpop.f32.mrb[0].mxu0
        %v7461 = vadd.f32 %v7121, %v7460
        %v7462 = vpop.f32.mrb[0].mxu0
        %v7463 = vadd.f32 %v7117, %v7462
        %v7464 = vpop.f32.mrb[0].mxu0
        %v7465 = vadd.f32 %v7121, %v7464
        %7466 = vmatprep.mubr.bf16.mxu0 %v7112
        %7467 = vmatmul.mubr.bf16.gmra.mrb[0].mxu0 %v7111
        %v7468 = vpop.f32.mrb[0].mxu0
        %v7469 = vadd.f32 %v7117, %v7468
        %v7470 = vpop.f32.mrb[0].mxu0
        %v7471 = vadd.f32 %v7121, %v7470
        %v7472 = vpop.f32.mrb[0].mxu0
        %v7473 = vadd.f32 %v7117, %v7472
        %v7474 = vpop.f32.mrb[0].mxu0
        %v7475 = vadd.f32 %v7121, %v7474
        %7476 = vdwg.mxu0
        %v7477 = vmax.f32 %v7319, 0.0
        %v7478 = vmax.f32 %v7321, 0.0
        %v7479 = vmax.f32 %v7323, 0.0
        %v7480 = vmax.f32 %v7325, 0.0
        %v7481 = vmax.f32 %v7329, 0.0
        %v7482 = vmax.f32 %v7331, 0.0
        %v7483 = vmax.f32 %v7333, 0.0
        %v7484 = vmax.f32 %v7335, 0.0
        %v7485 = vmax.f32 %v7339, 0.0
        %v7486 = vmax.f32 %v7341, 0.0
        %v7487 = vmax.f32 %v7343, 0.0
        %v7488 = vmax.f32 %v7345, 0.0
        %v7489 = vmax.f32 %v7349, 0.0
        %v7490 = vmax.f32 %v7351, 0.0
        %v7491 = vmax.f32 %v7353, 0.0
        %v7492 = vmax.f32 %v7355, 0.0
        %v7493 = vmax.f32 %v7359, 0.0
        %v7494 = vmax.f32 %v7361, 0.0
        %v7495 = vmax.f32 %v7363, 0.0
        %v7496 = vmax.f32 %v7365, 0.0
        %v7497 = vmax.f32 %v7369, 0.0
        %v7498 = vmax.f32 %v7371, 0.0
        %v7499 = vmax.f32 %v7373, 0.0
        %v7500 = vmax.f32 %v7375, 0.0
        %v7501 = vmax.f32 %v7379, 0.0
        %v7502 = vmax.f32 %v7381, 0.0
        %v7503 = vmax.f32 %v7383, 0.0
        %v7504 = vmax.f32 %v7385, 0.0
        %v7505 = vmax.f32 %v7389, 0.0
        %v7506 = vmax.f32 %v7391, 0.0
        %v7507 = vmax.f32 %v7393, 0.0
        %v7508 = vmax.f32 %v7395, 0.0
        %v7509 = vmax.f32 %v7399, 0.0
        %v7510 = vmax.f32 %v7401, 0.0
        %v7511 = vmax.f32 %v7403, 0.0
        %v7512 = vmax.f32 %v7405, 0.0
        %v7513 = vmax.f32 %v7409, 0.0
        %v7514 = vmax.f32 %v7411, 0.0
        %v7515 = vmax.f32 %v7413, 0.0
        %v7516 = vmax.f32 %v7415, 0.0
        %v7517 = vmax.f32 %v7419, 0.0
        %v7518 = vmax.f32 %v7421, 0.0
        %v7519 = vmax.f32 %v7423, 0.0
        %v7520 = vmax.f32 %v7425, 0.0
        %v7521 = vmax.f32 %v7429, 0.0
        %v7522 = vmax.f32 %v7431, 0.0
        %v7523 = vmax.f32 %v7433, 0.0
        %v7524 = vmax.f32 %v7435, 0.0
        %v7525 = vmax.f32 %v7439, 0.0
        %v7526 = vmax.f32 %v7441, 0.0
        %v7527 = vmax.f32 %v7443, 0.0
        %v7528 = vmax.f32 %v7445, 0.0
        %v7529 = vmax.f32 %v7449, 0.0
        %v7530 = vmax.f32 %v7451, 0.0
        %v7531 = vmax.f32 %v7453, 0.0
        %v7532 = vmax.f32 %v7455, 0.0
        %v7533 = vmax.f32 %v7459, 0.0
        %v7534 = vmax.f32 %v7461, 0.0
        %v7535 = vmax.f32 %v7463, 0.0
        %v7536 = vmax.f32 %v7465, 0.0
        %v7537 = vmax.f32 %v7469, 0.0
        %v7538 = vmax.f32 %v7471, 0.0
        %v7539 = vmax.f32 %v7473, 0.0
        %v7540 = vmax.f32 %v7475, 0.0
        %v7541 = vld [vmem:[#allocation16] sm:$0xff]
        %v7542 = vld [vmem:[#allocation16 + $0x8] sm:$0xff]
        %v7543 = vld [vmem:[#allocation16 + $0x10] sm:$0xff]
        %v7544 = vld [vmem:[#allocation16 + $0x18] sm:$0xff]
        %v7545 = vld [vmem:[#allocation16 + $0x20] sm:$0xff]
        %v7546 = vld [vmem:[#allocation16 + $0x28] sm:$0xff]
        %v7547 = vld [vmem:[#allocation16 + $0x30] sm:$0xff]
        %v7548 = vld [vmem:[#allocation16 + $0x38] sm:$0xff]
        %v7549 = vld [vmem:[#allocation16 + $0x40] sm:$0xff]
        %v7550 = vld [vmem:[#allocation16 + $0x48] sm:$0xff]
        %v7551 = vld [vmem:[#allocation16 + $0x50] sm:$0xff]
        %v7552 = vld [vmem:[#allocation16 + $0x58] sm:$0xff]
        %v7553 = vld [vmem:[#allocation16 + $0x60] sm:$0xff]
        %v7554 = vld [vmem:[#allocation16 + $0x68] sm:$0xff]
        %v7555 = vld [vmem:[#allocation16 + $0x70] sm:$0xff]
        %v7556 = vld [vmem:[#allocation16 + $0x78] sm:$0xff]
        %v7557 = vld [vmem:[#allocation16 + $0x80] sm:$0xff]
        %v7558 = vld [vmem:[#allocation16 + $0x88] sm:$0xff]
        %v7559 = vld [vmem:[#allocation16 + $0x90] sm:$0xff]
        %v7560 = vld [vmem:[#allocation16 + $0x98] sm:$0xff]
        %v7561 = vld [vmem:[#allocation16 + $0xa0] sm:$0xff]
        %v7562 = vld [vmem:[#allocation16 + $0xa8] sm:$0xff]
        %v7563 = vld [vmem:[#allocation16 + $0xb0] sm:$0xff]
        %v7564 = vld [vmem:[#allocation16 + $0xb8] sm:$0xff]
        %v7565 = vld [vmem:[#allocation16 + $0xc0] sm:$0xff]
        %v7566 = vld [vmem:[#allocation16 + $0xc8] sm:$0xff]
        %v7567 = vld [vmem:[#allocation16 + $0xd0] sm:$0xff]
        %v7568 = vld [vmem:[#allocation16 + $0xd8] sm:$0xff]
        %v7569 = vld [vmem:[#allocation16 + $0xe0] sm:$0xff]
        %v7570 = vld [vmem:[#allocation16 + $0xe8] sm:$0xff]
        %v7571 = vld [vmem:[#allocation16 + $0xf0] sm:$0xff]
        %v7572 = vld [vmem:[#allocation16 + $0xf8] sm:$0xff]
        %v7573 = vld [vmem:[%s51] sm:$0x3]
        %v7574 = vpack.c.bf16 %v7479, %v7477
        %v7575 = vpack.c.bf16 %v7480, %v7478
        %v7576 = vpack.c.bf16 %v7483, %v7481
        %v7577 = vpack.c.bf16 %v7484, %v7482
        %v7578 = vpack.c.bf16 %v7487, %v7485
        %v7579 = vpack.c.bf16 %v7488, %v7486
        %v7580 = vpack.c.bf16 %v7491, %v7489
        %v7581 = vpack.c.bf16 %v7492, %v7490
        %v7582 = vpack.c.bf16 %v7495, %v7493
        %v7583 = vpack.c.bf16 %v7496, %v7494
        %v7584 = vpack.c.bf16 %v7499, %v7497
        %v7585 = vpack.c.bf16 %v7500, %v7498
        %v7586 = vpack.c.bf16 %v7503, %v7501
        %v7587 = vpack.c.bf16 %v7504, %v7502
        %v7588 = vpack.c.bf16 %v7507, %v7505
        %v7589 = vpack.c.bf16 %v7508, %v7506
        %v7590 = vpack.c.bf16 %v7511, %v7509
        %v7591 = vpack.c.bf16 %v7512, %v7510
        %v7592 = vpack.c.bf16 %v7515, %v7513
        %v7593 = vpack.c.bf16 %v7516, %v7514
        %v7594 = vpack.c.bf16 %v7519, %v7517
        %v7595 = vpack.c.bf16 %v7520, %v7518
        %v7596 = vpack.c.bf16 %v7523, %v7521
        %v7597 = vpack.c.bf16 %v7524, %v7522
        %v7598 = vpack.c.bf16 %v7527, %v7525
        %v7599 = vpack.c.bf16 %v7528, %v7526
        %v7600 = vpack.c.bf16 %v7531, %v7529
        %v7601 = vpack.c.bf16 %v7532, %v7530
        %v7602 = vpack.c.bf16 %v7535, %v7533
        %v7603 = vpack.c.bf16 %v7536, %v7534
        %v7604 = vpack.c.bf16 %v7539, %v7537
        %v7605 = vpack.c.bf16 %v7540, %v7538
        %v7607 = vlaneseq
        %v7608 = vshrl.u32 %v7607, 7
        %v7609 = vsub.s32 0, %v7608
        %v7610 = vrot.slane %v7573, %v7609
        %v7611 = vlaneseq
        %v7612 = vshrl.u32 %v7611, 7
        %v7613 = vsub.s32 1, %v7612
        %v7614 = vrot.slane %v7573, %v7613
        %v7649 = vunpack.c.l.b16 %v7541
        %v7650 = vunpack.c.h.b16 %v7541
        %v7651 = vunpack.c.l.b16 %v7542
        %v7652 = vunpack.c.h.b16 %v7542
        %v7653 = vunpack.c.l.b16 %v7543
        %v7654 = vunpack.c.h.b16 %v7543
        %v7655 = vunpack.c.l.b16 %v7544
        %v7656 = vunpack.c.h.b16 %v7544
        %v7657 = vunpack.c.l.b16 %v7545
        %v7658 = vunpack.c.h.b16 %v7545
        %v7659 = vunpack.c.l.b16 %v7546
        %v7660 = vunpack.c.h.b16 %v7546
        %v7661 = vunpack.c.l.b16 %v7547
        %v7662 = vunpack.c.h.b16 %v7547
        %v7663 = vunpack.c.l.b16 %v7548
        %v7664 = vunpack.c.h.b16 %v7548
        %v7665 = vunpack.c.l.b16 %v7549
        %v7666 = vunpack.c.h.b16 %v7549
        %v7667 = vunpack.c.l.b16 %v7550
        %v7668 = vunpack.c.h.b16 %v7550
        %v7669 = vunpack.c.l.b16 %v7551
        %v7670 = vunpack.c.h.b16 %v7551
        %v7671 = vunpack.c.l.b16 %v7552
        %v7672 = vunpack.c.h.b16 %v7552
        %v7673 = vunpack.c.l.b16 %v7553
        %v7674 = vunpack.c.h.b16 %v7553
        %v7675 = vunpack.c.l.b16 %v7554
        %v7676 = vunpack.c.h.b16 %v7554
        %v7677 = vunpack.c.l.b16 %v7555
        %v7678 = vunpack.c.h.b16 %v7555
        %v7679 = vunpack.c.l.b16 %v7556
        %v7680 = vunpack.c.h.b16 %v7556
        %v7681 = vunpack.c.l.b16 %v7557
        %v7682 = vunpack.c.h.b16 %v7557
        %v7683 = vunpack.c.l.b16 %v7558
        %v7684 = vunpack.c.h.b16 %v7558
        %v7685 = vunpack.c.l.b16 %v7559
        %v7686 = vunpack.c.h.b16 %v7559
        %v7687 = vunpack.c.l.b16 %v7560
        %v7688 = vunpack.c.h.b16 %v7560
        %v7689 = vunpack.c.l.b16 %v7561
        %v7690 = vunpack.c.h.b16 %v7561
        %v7691 = vunpack.c.l.b16 %v7562
        %v7692 = vunpack.c.h.b16 %v7562
        %v7693 = vunpack.c.l.b16 %v7563
        %v7694 = vunpack.c.h.b16 %v7563
        %v7695 = vunpack.c.l.b16 %v7564
        %v7696 = vunpack.c.h.b16 %v7564
        %v7697 = vunpack.c.l.b16 %v7565
        %v7698 = vunpack.c.h.b16 %v7565
        %v7699 = vunpack.c.l.b16 %v7566
        %v7700 = vunpack.c.h.b16 %v7566
        %v7701 = vunpack.c.l.b16 %v7567
        %v7702 = vunpack.c.h.b16 %v7567
        %v7703 = vunpack.c.l.b16 %v7568
        %v7704 = vunpack.c.h.b16 %v7568
        %v7705 = vunpack.c.l.b16 %v7569
        %v7706 = vunpack.c.h.b16 %v7569
        %v7707 = vunpack.c.l.b16 %v7570
        %v7708 = vunpack.c.h.b16 %v7570
        %v7709 = vunpack.c.l.b16 %v7571
        %v7710 = vunpack.c.h.b16 %v7571
        %v7711 = vunpack.c.l.b16 %v7572
        %v7712 = vunpack.c.h.b16 %v7572
        %v7713 = vpack.c.b16 %v7651, %v7649
        %v7714 = vpack.c.b16 %v7652, %v7650
        %v7715 = vpack.c.b16 %v7655, %v7653
        %v7716 = vpack.c.b16 %v7656, %v7654
        %v7717 = vpack.c.b16 %v7659, %v7657
        %v7718 = vpack.c.b16 %v7660, %v7658
        %v7719 = vpack.c.b16 %v7663, %v7661
        %v7720 = vpack.c.b16 %v7664, %v7662
        %v7721 = vpack.c.b16 %v7667, %v7665
        %v7722 = vpack.c.b16 %v7668, %v7666
        %v7723 = vpack.c.b16 %v7671, %v7669
        %v7724 = vpack.c.b16 %v7672, %v7670
        %v7725 = vpack.c.b16 %v7675, %v7673
        %v7726 = vpack.c.b16 %v7676, %v7674
        %v7727 = vpack.c.b16 %v7679, %v7677
        %v7728 = vpack.c.b16 %v7680, %v7678
        %v7729 = vpack.c.b16 %v7683, %v7681
        %v7730 = vpack.c.b16 %v7684, %v7682
        %v7731 = vpack.c.b16 %v7687, %v7685
        %v7732 = vpack.c.b16 %v7688, %v7686
        %v7733 = vpack.c.b16 %v7691, %v7689
        %v7734 = vpack.c.b16 %v7692, %v7690
        %v7735 = vpack.c.b16 %v7695, %v7693
        %v7736 = vpack.c.b16 %v7696, %v7694
        %v7737 = vpack.c.b16 %v7699, %v7697
        %v7738 = vpack.c.b16 %v7700, %v7698
        %v7739 = vpack.c.b16 %v7703, %v7701
        %v7740 = vpack.c.b16 %v7704, %v7702
        %v7741 = vpack.c.b16 %v7707, %v7705
        %v7742 = vpack.c.b16 %v7708, %v7706
        %v7743 = vpack.c.b16 %v7711, %v7709
        %v7744 = vpack.c.b16 %v7712, %v7710
        %7777 = vmatprep.subr.bf16.mxu0 %v7714
        %7778 = vmatpush1.bf16.msra.mxu0 %v7713
        %7779 = vmatprep.subr.bf16.mxu0 %v7716
        %7780 = vmatpush1.bf16.msra.mxu0 %v7715
        %7781 = vmatprep.subr.bf16.mxu0 %v7718
        %7782 = vmatpush1.bf16.msra.mxu0 %v7717
        %7783 = vmatprep.subr.bf16.mxu0 %v7720
        %7784 = vmatpush1.bf16.msra.mxu0 %v7719
        %7785 = vmatprep.subr.bf16.mxu0 %v7722
        %7786 = vmatpush1.bf16.msra.mxu0 %v7721
        %7787 = vmatprep.subr.bf16.mxu0 %v7724
        %7788 = vmatpush1.bf16.msra.mxu0 %v7723
        %7789 = vmatprep.subr.bf16.mxu0 %v7726
        %7790 = vmatpush1.bf16.msra.mxu0 %v7725
        %7791 = vmatprep.subr.bf16.mxu0 %v7728
        %7792 = vmatpush1.bf16.msra.mxu0 %v7727
        %7793 = vmatprep.subr.bf16.mxu0 %v7730
        %7794 = vmatpush1.bf16.msra.mxu0 %v7729
        %7795 = vmatprep.subr.bf16.mxu0 %v7732
        %7796 = vmatpush1.bf16.msra.mxu0 %v7731
        %7797 = vmatprep.subr.bf16.mxu0 %v7734
        %7798 = vmatpush1.bf16.msra.mxu0 %v7733
        %7799 = vmatprep.subr.bf16.mxu0 %v7736
        %7800 = vmatpush1.bf16.msra.mxu0 %v7735
        %7801 = vmatprep.subr.bf16.mxu0 %v7738
        %7802 = vmatpush1.bf16.msra.mxu0 %v7737
        %7803 = vmatprep.subr.bf16.mxu0 %v7740
        %7804 = vmatpush1.bf16.msra.mxu0 %v7739
        %7805 = vmatprep.subr.bf16.mxu0 %v7742
        %7806 = vmatpush1.bf16.msra.mxu0 %v7741
        %7807 = vmatprep.subr.bf16.mxu0 %v7744
        %7808 = vmatpush1.bf16.msra.mxu0 %v7743
        %7809 = vmatprep.mubr.bf16.mxu0 %v7575
        %7810 = vmatmul.mubr.bf16.gmra.mrb[0].mxu0 %v7574
        %v7811 = vpop.f32.mrb[0].mxu0
        %v7812 = vadd.f32 %v7610, %v7811
        %v7813 = vpop.f32.mrb[0].mxu0
        %v7814 = vadd.f32 %v7614, %v7813
        %v7815 = vpop.f32.mrb[0].mxu0
        %v7816 = vadd.f32 %v7610, %v7815
        %v7817 = vpop.f32.mrb[0].mxu0
        %v7818 = vadd.f32 %v7614, %v7817
        %7819 = vmatprep.mubr.bf16.mxu0 %v7577
        %7820 = vmatmul.mubr.bf16.gmra.mrb[0].mxu0 %v7576
        %v7821 = vpop.f32.mrb[0].mxu0
        %v7822 = vadd.f32 %v7610, %v7821
        %v7823 = vpop.f32.mrb[0].mxu0
        %v7824 = vadd.f32 %v7614, %v7823
        %v7825 = vpop.f32.mrb[0].mxu0
        %v7826 = vadd.f32 %v7610, %v7825
        %v7827 = vpop.f32.mrb[0].mxu0
        %v7828 = vadd.f32 %v7614, %v7827
        %7829 = vmatprep.mubr.bf16.mxu0 %v7579
        %7830 = vmatmul.mubr.bf16.gmra.mrb[0].mxu0 %v7578
        %v7831 = vpop.f32.mrb[0].mxu0
        %v7832 = vadd.f32 %v7610, %v7831
        %v7833 = vpop.f32.mrb[0].mxu0
        %v7834 = vadd.f32 %v7614, %v7833
        %v7835 = vpop.f32.mrb[0].mxu0
        %v7836 = vadd.f32 %v7610, %v7835
        %v7837 = vpop.f32.mrb[0].mxu0
        %v7838 = vadd.f32 %v7614, %v7837
        %7839 = vmatprep.mubr.bf16.mxu0 %v7581
        %7840 = vmatmul.mubr.bf16.gmra.mrb[0].mxu0 %v7580
        %v7841 = vpop.f32.mrb[0].mxu0
        %v7842 = vadd.f32 %v7610, %v7841
        %v7843 = vpop.f32.mrb[0].mxu0
        %v7844 = vadd.f32 %v7614, %v7843
        %v7845 = vpop.f32.mrb[0].mxu0
        %v7846 = vadd.f32 %v7610, %v7845
        %v7847 = vpop.f32.mrb[0].mxu0
        %v7848 = vadd.f32 %v7614, %v7847
        %7849 = vmatprep.mubr.bf16.mxu0 %v7583
        %7850 = vmatmul.mubr.bf16.gmra.mrb[0].mxu0 %v7582
        %v7851 = vpop.f32.mrb[0].mxu0
        %v7852 = vadd.f32 %v7610, %v7851
        %v7853 = vpop.f32.mrb[0].mxu0
        %v7854 = vadd.f32 %v7614, %v7853
        %v7855 = vpop.f32.mrb[0].mxu0
        %v7856 = vadd.f32 %v7610, %v7855
        %v7857 = vpop.f32.mrb[0].mxu0
        %v7858 = vadd.f32 %v7614, %v7857
        %7859 = vmatprep.mubr.bf16.mxu0 %v7585
        %7860 = vmatmul.mubr.bf16.gmra.mrb[0].mxu0 %v7584
        %v7861 = vpop.f32.mrb[0].mxu0
        %v7862 = vadd.f32 %v7610, %v7861
        %v7863 = vpop.f32.mrb[0].mxu0
        %v7864 = vadd.f32 %v7614, %v7863
        %v7865 = vpop.f32.mrb[0].mxu0
        %v7866 = vadd.f32 %v7610, %v7865
        %v7867 = vpop.f32.mrb[0].mxu0
        %v7868 = vadd.f32 %v7614, %v7867
        %7869 = vmatprep.mubr.bf16.mxu0 %v7587
        %7870 = vmatmul.mubr.bf16.gmra.mrb[0].mxu0 %v7586
        %v7871 = vpop.f32.mrb[0].mxu0
        %v7872 = vadd.f32 %v7610, %v7871
        %v7873 = vpop.f32.mrb[0].mxu0
        %v7874 = vadd.f32 %v7614, %v7873
        %v7875 = vpop.f32.mrb[0].mxu0
        %v7876 = vadd.f32 %v7610, %v7875
        %v7877 = vpop.f32.mrb[0].mxu0
        %v7878 = vadd.f32 %v7614, %v7877
        %7879 = vmatprep.mubr.bf16.mxu0 %v7589
        %7880 = vmatmul.mubr.bf16.gmra.mrb[0].mxu0 %v7588
        %v7881 = vpop.f32.mrb[0].mxu0
        %v7882 = vadd.f32 %v7610, %v7881
        %v7883 = vpop.f32.mrb[0].mxu0
        %v7884 = vadd.f32 %v7614, %v7883
        %v7885 = vpop.f32.mrb[0].mxu0
        %v7886 = vadd.f32 %v7610, %v7885
        %v7887 = vpop.f32.mrb[0].mxu0
        %v7888 = vadd.f32 %v7614, %v7887
        %7889 = vmatprep.mubr.bf16.mxu0 %v7591
        %7890 = vmatmul.mubr.bf16.gmra.mrb[0].mxu0 %v7590
        %v7891 = vpop.f32.mrb[0].mxu0
        %v7892 = vadd.f32 %v7610, %v7891
        %v7893 = vpop.f32.mrb[0].mxu0
        %v7894 = vadd.f32 %v7614, %v7893
        %v7895 = vpop.f32.mrb[0].mxu0
        %v7896 = vadd.f32 %v7610, %v7895
        %v7897 = vpop.f32.mrb[0].mxu0
        %v7898 = vadd.f32 %v7614, %v7897
        %7899 = vmatprep.mubr.bf16.mxu0 %v7593
        %7900 = vmatmul.mubr.bf16.gmra.mrb[0].mxu0 %v7592
        %v7901 = vpop.f32.mrb[0].mxu0
        %v7902 = vadd.f32 %v7610, %v7901
        %v7903 = vpop.f32.mrb[0].mxu0
        %v7904 = vadd.f32 %v7614, %v7903
        %v7905 = vpop.f32.mrb[0].mxu0
        %v7906 = vadd.f32 %v7610, %v7905
        %v7907 = vpop.f32.mrb[0].mxu0
        %v7908 = vadd.f32 %v7614, %v7907
        %7909 = vmatprep.mubr.bf16.mxu0 %v7595
        %7910 = vmatmul.mubr.bf16.gmra.mrb[0].mxu0 %v7594
        %v7911 = vpop.f32.mrb[0].mxu0
        %v7912 = vadd.f32 %v7610, %v7911
        %v7913 = vpop.f32.mrb[0].mxu0
        %v7914 = vadd.f32 %v7614, %v7913
        %v7915 = vpop.f32.mrb[0].mxu0
        %v7916 = vadd.f32 %v7610, %v7915
        %v7917 = vpop.f32.mrb[0].mxu0
        %v7918 = vadd.f32 %v7614, %v7917
        %7919 = vmatprep.mubr.bf16.mxu0 %v7597
        %7920 = vmatmul.mubr.bf16.gmra.mrb[0].mxu0 %v7596
        %v7921 = vpop.f32.mrb[0].mxu0
        %v7922 = vadd.f32 %v7610, %v7921
        %v7923 = vpop.f32.mrb[0].mxu0
        %v7924 = vadd.f32 %v7614, %v7923
        %v7925 = vpop.f32.mrb[0].mxu0
        %v7926 = vadd.f32 %v7610, %v7925
        %v7927 = vpop.f32.mrb[0].mxu0
        %v7928 = vadd.f32 %v7614, %v7927
        %7929 = vmatprep.mubr.bf16.mxu0 %v7599
        %7930 = vmatmul.mubr.bf16.gmra.mrb[0].mxu0 %v7598
        %v7931 = vpop.f32.mrb[0].mxu0
        %v7932 = vadd.f32 %v7610, %v7931
        %v7933 = vpop.f32.mrb[0].mxu0
        %v7934 = vadd.f32 %v7614, %v7933
        %v7935 = vpop.f32.mrb[0].mxu0
        %v7936 = vadd.f32 %v7610, %v7935
        %v7937 = vpop.f32.mrb[0].mxu0
        %v7938 = vadd.f32 %v7614, %v7937
        %7939 = vmatprep.mubr.bf16.mxu0 %v7601
        %7940 = vmatmul.mubr.bf16.gmra.mrb[0].mxu0 %v7600
        %v7941 = vpop.f32.mrb[0].mxu0
        %v7942 = vadd.f32 %v7610, %v7941
        %v7943 = vpop.f32.mrb[0].mxu0
        %v7944 = vadd.f32 %v7614, %v7943
        %v7945 = vpop.f32.mrb[0].mxu0
        %v7946 = vadd.f32 %v7610, %v7945
        %v7947 = vpop.f32.mrb[0].mxu0
        %v7948 = vadd.f32 %v7614, %v7947
        %7949 = vmatprep.mubr.bf16.mxu0 %v7603
        %7950 = vmatmul.mubr.bf16.gmra.mrb[0].mxu0 %v7602
        %v7951 = vpop.f32.mrb[0].mxu0
        %v7952 = vadd.f32 %v7610, %v7951
        %v7953 = vpop.f32.mrb[0].mxu0
        %v7954 = vadd.f32 %v7614, %v7953
        %v7955 = vpop.f32.mrb[0].mxu0
        %v7956 = vadd.f32 %v7610, %v7955
        %v7957 = vpop.f32.mrb[0].mxu0
        %v7958 = vadd.f32 %v7614, %v7957
        %7959 = vmatprep.mubr.bf16.mxu0 %v7605
        %7960 = vmatmul.mubr.bf16.gmra.mrb[0].mxu0 %v7604
        %v7961 = vpop.f32.mrb[0].mxu0
        %v7962 = vadd.f32 %v7610, %v7961
        %v7963 = vpop.f32.mrb[0].mxu0
        %v7964 = vadd.f32 %v7614, %v7963
        %v7965 = vpop.f32.mrb[0].mxu0
        %v7966 = vadd.f32 %v7610, %v7965
        %v7967 = vpop.f32.mrb[0].mxu0
        %v7968 = vadd.f32 %v7614, %v7967
        %7969 = vdwg.mxu0
        %v7970 = vmax.f32 %v7812, 0.0
        %v7971 = vmax.f32 %v7814, 0.0
        %v7972 = vmax.f32 %v7816, 0.0
        %v7973 = vmax.f32 %v7818, 0.0
        %v7974 = vmax.f32 %v7822, 0.0
        %v7975 = vmax.f32 %v7824, 0.0
        %v7976 = vmax.f32 %v7826, 0.0
        %v7977 = vmax.f32 %v7828, 0.0
        %v7978 = vmax.f32 %v7832, 0.0
        %v7979 = vmax.f32 %v7834, 0.0
        %v7980 = vmax.f32 %v7836, 0.0
        %v7981 = vmax.f32 %v7838, 0.0
        %v7982 = vmax.f32 %v7842, 0.0
        %v7983 = vmax.f32 %v7844, 0.0
        %v7984 = vmax.f32 %v7846, 0.0
        %v7985 = vmax.f32 %v7848, 0.0
        %v7986 = vmax.f32 %v7852, 0.0
        %v7987 = vmax.f32 %v7854, 0.0
        %v7988 = vmax.f32 %v7856, 0.0
        %v7989 = vmax.f32 %v7858, 0.0
        %v7990 = vmax.f32 %v7862, 0.0
        %v7991 = vmax.f32 %v7864, 0.0
        %v7992 = vmax.f32 %v7866, 0.0
        %v7993 = vmax.f32 %v7868, 0.0
        %v7994 = vmax.f32 %v7872, 0.0
        %v7995 = vmax.f32 %v7874, 0.0
        %v7996 = vmax.f32 %v7876, 0.0
        %v7997 = vmax.f32 %v7878, 0.0
        %v7998 = vmax.f32 %v7882, 0.0
        %v7999 = vmax.f32 %v7884, 0.0
        %v8000 = vmax.f32 %v7886, 0.0
        %v8001 = vmax.f32 %v7888, 0.0
        %v8002 = vmax.f32 %v7892, 0.0
        %v8003 = vmax.f32 %v7894, 0.0
        %v8004 = vmax.f32 %v7896, 0.0
        %v8005 = vmax.f32 %v7898, 0.0
        %v8006 = vmax.f32 %v7902, 0.0
        %v8007 = vmax.f32 %v7904, 0.0
        %v8008 = vmax.f32 %v7906, 0.0
        %v8009 = vmax.f32 %v7908, 0.0
        %v8010 = vmax.f32 %v7912, 0.0
        %v8011 = vmax.f32 %v7914, 0.0
        %v8012 = vmax.f32 %v7916, 0.0
        %v8013 = vmax.f32 %v7918, 0.0
        %v8014 = vmax.f32 %v7922, 0.0
        %v8015 = vmax.f32 %v7924, 0.0
        %v8016 = vmax.f32 %v7926, 0.0
        %v8017 = vmax.f32 %v7928, 0.0
        %v8018 = vmax.f32 %v7932, 0.0
        %v8019 = vmax.f32 %v7934, 0.0
        %v8020 = vmax.f32 %v7936, 0.0
        %v8021 = vmax.f32 %v7938, 0.0
        %v8022 = vmax.f32 %v7942, 0.0
        %v8023 = vmax.f32 %v7944, 0.0
        %v8024 = vmax.f32 %v7946, 0.0
        %v8025 = vmax.f32 %v7948, 0.0
        %v8026 = vmax.f32 %v7952, 0.0
        %v8027 = vmax.f32 %v7954, 0.0
        %v8028 = vmax.f32 %v7956, 0.0
        %v8029 = vmax.f32 %v7958, 0.0
        %v8030 = vmax.f32 %v7962, 0.0
        %v8031 = vmax.f32 %v7964, 0.0
        %v8032 = vmax.f32 %v7966, 0.0
        %v8033 = vmax.f32 %v7968, 0.0
        %v8034 = vld [vmem:[#allocation18] sm:$0xff]
        %v8035 = vld [vmem:[#allocation18 + $0x8] sm:$0xff]
        %v8036 = vld [vmem:[#allocation18 + $0x10] sm:$0xff]
        %v8037 = vld [vmem:[#allocation18 + $0x18] sm:$0xff]
        %v8038 = vld [vmem:[#allocation18 + $0x20] sm:$0xff]
        %v8039 = vld [vmem:[#allocation18 + $0x28] sm:$0xff]
        %v8040 = vld [vmem:[#allocation18 + $0x30] sm:$0xff]
        %v8041 = vld [vmem:[#allocation18 + $0x38] sm:$0xff]
        %v8042 = vld [vmem:[#allocation18 + $0x40] sm:$0xff]
        %v8043 = vld [vmem:[#allocation18 + $0x48] sm:$0xff]
        %v8044 = vld [vmem:[#allocation18 + $0x50] sm:$0xff]
        %v8045 = vld [vmem:[#allocation18 + $0x58] sm:$0xff]
        %v8046 = vld [vmem:[#allocation18 + $0x60] sm:$0xff]
        %v8047 = vld [vmem:[#allocation18 + $0x68] sm:$0xff]
        %v8048 = vld [vmem:[#allocation18 + $0x70] sm:$0xff]
        %v8049 = vld [vmem:[#allocation18 + $0x78] sm:$0xff]
        %v8050 = vld [vmem:[#allocation18 + $0x80] sm:$0xff]
        %v8051 = vld [vmem:[#allocation18 + $0x88] sm:$0xff]
        %v8052 = vld [vmem:[#allocation18 + $0x90] sm:$0xff]
        %v8053 = vld [vmem:[#allocation18 + $0x98] sm:$0xff]
        %v8054 = vld [vmem:[#allocation18 + $0xa0] sm:$0xff]
        %v8055 = vld [vmem:[#allocation18 + $0xa8] sm:$0xff]
        %v8056 = vld [vmem:[#allocation18 + $0xb0] sm:$0xff]
        %v8057 = vld [vmem:[#allocation18 + $0xb8] sm:$0xff]
        %v8058 = vld [vmem:[#allocation18 + $0xc0] sm:$0xff]
        %v8059 = vld [vmem:[#allocation18 + $0xc8] sm:$0xff]
        %v8060 = vld [vmem:[#allocation18 + $0xd0] sm:$0xff]
        %v8061 = vld [vmem:[#allocation18 + $0xd8] sm:$0xff]
        %v8062 = vld [vmem:[#allocation18 + $0xe0] sm:$0xff]
        %v8063 = vld [vmem:[#allocation18 + $0xe8] sm:$0xff]
        %v8064 = vld [vmem:[#allocation18 + $0xf0] sm:$0xff]
        %v8065 = vld [vmem:[#allocation18 + $0xf8] sm:$0xff]
        %v8066 = vld [vmem:[%s55] sm:$0x3]
        %v8067 = vpack.c.bf16 %v7972, %v7970
        %v8068 = vpack.c.bf16 %v7973, %v7971
        %v8069 = vpack.c.bf16 %v7976, %v7974
        %v8070 = vpack.c.bf16 %v7977, %v7975
        %v8071 = vpack.c.bf16 %v7980, %v7978
        %v8072 = vpack.c.bf16 %v7981, %v7979
        %v8073 = vpack.c.bf16 %v7984, %v7982
        %v8074 = vpack.c.bf16 %v7985, %v7983
        %v8075 = vpack.c.bf16 %v7988, %v7986
        %v8076 = vpack.c.bf16 %v7989, %v7987
        %v8077 = vpack.c.bf16 %v7992, %v7990
        %v8078 = vpack.c.bf16 %v7993, %v7991
        %v8079 = vpack.c.bf16 %v7996, %v7994
        %v8080 = vpack.c.bf16 %v7997, %v7995
        %v8081 = vpack.c.bf16 %v8000, %v7998
        %v8082 = vpack.c.bf16 %v8001, %v7999
        %v8083 = vpack.c.bf16 %v8004, %v8002
        %v8084 = vpack.c.bf16 %v8005, %v8003
        %v8085 = vpack.c.bf16 %v8008, %v8006
        %v8086 = vpack.c.bf16 %v8009, %v8007
        %v8087 = vpack.c.bf16 %v8012, %v8010
        %v8088 = vpack.c.bf16 %v8013, %v8011
        %v8089 = vpack.c.bf16 %v8016, %v8014
        %v8090 = vpack.c.bf16 %v8017, %v8015
        %v8091 = vpack.c.bf16 %v8020, %v8018
        %v8092 = vpack.c.bf16 %v8021, %v8019
        %v8093 = vpack.c.bf16 %v8024, %v8022
        %v8094 = vpack.c.bf16 %v8025, %v8023
        %v8095 = vpack.c.bf16 %v8028, %v8026
        %v8096 = vpack.c.bf16 %v8029, %v8027
        %v8097 = vpack.c.bf16 %v8032, %v8030
        %v8098 = vpack.c.bf16 %v8033, %v8031
        %v8100 = vlaneseq
        %v8101 = vshrl.u32 %v8100, 7
        %v8102 = vsub.s32 0, %v8101
        %v8103 = vrot.slane %v8066, %v8102
        %v8104 = vlaneseq
        %v8105 = vshrl.u32 %v8104, 7
        %v8106 = vsub.s32 1, %v8105
        %v8107 = vrot.slane %v8066, %v8106
        %v8142 = vunpack.c.l.b16 %v8034
        %v8143 = vunpack.c.h.b16 %v8034
        %v8144 = vunpack.c.l.b16 %v8035
        %v8145 = vunpack.c.h.b16 %v8035
        %v8146 = vunpack.c.l.b16 %v8036
        %v8147 = vunpack.c.h.b16 %v8036
        %v8148 = vunpack.c.l.b16 %v8037
        %v8149 = vunpack.c.h.b16 %v8037
        %v8150 = vunpack.c.l.b16 %v8038
        %v8151 = vunpack.c.h.b16 %v8038
        %v8152 = vunpack.c.l.b16 %v8039
        %v8153 = vunpack.c.h.b16 %v8039
        %v8154 = vunpack.c.l.b16 %v8040
        %v8155 = vunpack.c.h.b16 %v8040
        %v8156 = vunpack.c.l.b16 %v8041
        %v8157 = vunpack.c.h.b16 %v8041
        %v8158 = vunpack.c.l.b16 %v8042
        %v8159 = vunpack.c.h.b16 %v8042
        %v8160 = vunpack.c.l.b16 %v8043
        %v8161 = vunpack.c.h.b16 %v8043
        %v8162 = vunpack.c.l.b16 %v8044
        %v8163 = vunpack.c.h.b16 %v8044
        %v8164 = vunpack.c.l.b16 %v8045
        %v8165 = vunpack.c.h.b16 %v8045
        %v8166 = vunpack.c.l.b16 %v8046
        %v8167 = vunpack.c.h.b16 %v8046
        %v8168 = vunpack.c.l.b16 %v8047
        %v8169 = vunpack.c.h.b16 %v8047
        %v8170 = vunpack.c.l.b16 %v8048
        %v8171 = vunpack.c.h.b16 %v8048
        %v8172 = vunpack.c.l.b16 %v8049
        %v8173 = vunpack.c.h.b16 %v8049
        %v8174 = vunpack.c.l.b16 %v8050
        %v8175 = vunpack.c.h.b16 %v8050
        %v8176 = vunpack.c.l.b16 %v8051
        %v8177 = vunpack.c.h.b16 %v8051
        %v8178 = vunpack.c.l.b16 %v8052
        %v8179 = vunpack.c.h.b16 %v8052
        %v8180 = vunpack.c.l.b16 %v8053
        %v8181 = vunpack.c.h.b16 %v8053
        %v8182 = vunpack.c.l.b16 %v8054
        %v8183 = vunpack.c.h.b16 %v8054
        %v8184 = vunpack.c.l.b16 %v8055
        %v8185 = vunpack.c.h.b16 %v8055
        %v8186 = vunpack.c.l.b16 %v8056
        %v8187 = vunpack.c.h.b16 %v8056
        %v8188 = vunpack.c.l.b16 %v8057
        %v8189 = vunpack.c.h.b16 %v8057
        %v8190 = vunpack.c.l.b16 %v8058
        %v8191 = vunpack.c.h.b16 %v8058
        %v8192 = vunpack.c.l.b16 %v8059
        %v8193 = vunpack.c.h.b16 %v8059
        %v8194 = vunpack.c.l.b16 %v8060
        %v8195 = vunpack.c.h.b16 %v8060
        %v8196 = vunpack.c.l.b16 %v8061
        %v8197 = vunpack.c.h.b16 %v8061
        %v8198 = vunpack.c.l.b16 %v8062
        %v8199 = vunpack.c.h.b16 %v8062
        %v8200 = vunpack.c.l.b16 %v8063
        %v8201 = vunpack.c.h.b16 %v8063
        %v8202 = vunpack.c.l.b16 %v8064
        %v8203 = vunpack.c.h.b16 %v8064
        %v8204 = vunpack.c.l.b16 %v8065
        %v8205 = vunpack.c.h.b16 %v8065
        %v8206 = vpack.c.b16 %v8144, %v8142
        %v8207 = vpack.c.b16 %v8145, %v8143
        %v8208 = vpack.c.b16 %v8148, %v8146
        %v8209 = vpack.c.b16 %v8149, %v8147
        %v8210 = vpack.c.b16 %v8152, %v8150
        %v8211 = vpack.c.b16 %v8153, %v8151
        %v8212 = vpack.c.b16 %v8156, %v8154
        %v8213 = vpack.c.b16 %v8157, %v8155
        %v8214 = vpack.c.b16 %v8160, %v8158
        %v8215 = vpack.c.b16 %v8161, %v8159
        %v8216 = vpack.c.b16 %v8164, %v8162
        %v8217 = vpack.c.b16 %v8165, %v8163
        %v8218 = vpack.c.b16 %v8168, %v8166
        %v8219 = vpack.c.b16 %v8169, %v8167
        %v8220 = vpack.c.b16 %v8172, %v8170
        %v8221 = vpack.c.b16 %v8173, %v8171
        %v8222 = vpack.c.b16 %v8176, %v8174
        %v8223 = vpack.c.b16 %v8177, %v8175
        %v8224 = vpack.c.b16 %v8180, %v8178
        %v8225 = vpack.c.b16 %v8181, %v8179
        %v8226 = vpack.c.b16 %v8184, %v8182
        %v8227 = vpack.c.b16 %v8185, %v8183
        %v8228 = vpack.c.b16 %v8188, %v8186
        %v8229 = vpack.c.b16 %v8189, %v8187
        %v8230 = vpack.c.b16 %v8192, %v8190
        %v8231 = vpack.c.b16 %v8193, %v8191
        %v8232 = vpack.c.b16 %v8196, %v8194
        %v8233 = vpack.c.b16 %v8197, %v8195
        %v8234 = vpack.c.b16 %v8200, %v8198
        %v8235 = vpack.c.b16 %v8201, %v8199
        %v8236 = vpack.c.b16 %v8204, %v8202
        %v8237 = vpack.c.b16 %v8205, %v8203
        %8270 = vmatprep.subr.bf16.mxu0 %v8207
        %8271 = vmatpush1.bf16.msra.mxu0 %v8206
        %8272 = vmatprep.subr.bf16.mxu0 %v8209
        %8273 = vmatpush1.bf16.msra.mxu0 %v8208
        %8274 = vmatprep.subr.bf16.mxu0 %v8211
        %8275 = vmatpush1.bf16.msra.mxu0 %v8210
        %8276 = vmatprep.subr.bf16.mxu0 %v8213
        %8277 = vmatpush1.bf16.msra.mxu0 %v8212
        %8278 = vmatprep.subr.bf16.mxu0 %v8215
        %8279 = vmatpush1.bf16.msra.mxu0 %v8214
        %8280 = vmatprep.subr.bf16.mxu0 %v8217
        %8281 = vmatpush1.bf16.msra.mxu0 %v8216
        %8282 = vmatprep.subr.bf16.mxu0 %v8219
        %8283 = vmatpush1.bf16.msra.mxu0 %v8218
        %8284 = vmatprep.subr.bf16.mxu0 %v8221
        %8285 = vmatpush1.bf16.msra.mxu0 %v8220
        %8286 = vmatprep.subr.bf16.mxu0 %v8223
        %8287 = vmatpush1.bf16.msra.mxu0 %v8222
        %8288 = vmatprep.subr.bf16.mxu0 %v8225
        %8289 = vmatpush1.bf16.msra.mxu0 %v8224
        %8290 = vmatprep.subr.bf16.mxu0 %v8227
        %8291 = vmatpush1.bf16.msra.mxu0 %v8226
        %8292 = vmatprep.subr.bf16.mxu0 %v8229
        %8293 = vmatpush1.bf16.msra.mxu0 %v8228
        %8294 = vmatprep.subr.bf16.mxu0 %v8231
        %8295 = vmatpush1.bf16.msra.mxu0 %v8230
        %8296 = vmatprep.subr.bf16.mxu0 %v8233
        %8297 = vmatpush1.bf16.msra.mxu0 %v8232
        %8298 = vmatprep.subr.bf16.mxu0 %v8235
        %8299 = vmatpush1.bf16.msra.mxu0 %v8234
        %8300 = vmatprep.subr.bf16.mxu0 %v8237
        %8301 = vmatpush1.bf16.msra.mxu0 %v8236
        %8302 = vmatprep.mubr.bf16.mxu0 %v8068
        %8303 = vmatmul.mubr.bf16.gmra.mrb[0].mxu0 %v8067
        %v8304 = vpop.f32.mrb[0].mxu0
        %v8305 = vadd.f32 %v8103, %v8304
        %v8306 = vpop.f32.mrb[0].mxu0
        %v8307 = vadd.f32 %v8107, %v8306
        %v8308 = vpop.f32.mrb[0].mxu0
        %v8309 = vadd.f32 %v8103, %v8308
        %v8310 = vpop.f32.mrb[0].mxu0
        %v8311 = vadd.f32 %v8107, %v8310
        %8312 = vmatprep.mubr.bf16.mxu0 %v8070
        %8313 = vmatmul.mubr.bf16.gmra.mrb[0].mxu0 %v8069
        %v8314 = vpop.f32.mrb[0].mxu0
        %v8315 = vadd.f32 %v8103, %v8314
        %v8316 = vpop.f32.mrb[0].mxu0
        %v8317 = vadd.f32 %v8107, %v8316
        %v8318 = vpop.f32.mrb[0].mxu0
        %v8319 = vadd.f32 %v8103, %v8318
        %v8320 = vpop.f32.mrb[0].mxu0
        %v8321 = vadd.f32 %v8107, %v8320
        %8322 = vmatprep.mubr.bf16.mxu0 %v8072
        %8323 = vmatmul.mubr.bf16.gmra.mrb[0].mxu0 %v8071
        %v8324 = vpop.f32.mrb[0].mxu0
        %v8325 = vadd.f32 %v8103, %v8324
        %v8326 = vpop.f32.mrb[0].mxu0
        %v8327 = vadd.f32 %v8107, %v8326
        %v8328 = vpop.f32.mrb[0].mxu0
        %v8329 = vadd.f32 %v8103, %v8328
        %v8330 = vpop.f32.mrb[0].mxu0
        %v8331 = vadd.f32 %v8107, %v8330
        %8332 = vmatprep.mubr.bf16.mxu0 %v8074
        %8333 = vmatmul.mubr.bf16.gmra.mrb[0].mxu0 %v8073
        %v8334 = vpop.f32.mrb[0].mxu0
        %v8335 = vadd.f32 %v8103, %v8334
        %v8336 = vpop.f32.mrb[0].mxu0
        %v8337 = vadd.f32 %v8107, %v8336
        %v8338 = vpop.f32.mrb[0].mxu0
        %v8339 = vadd.f32 %v8103, %v8338
        %v8340 = vpop.f32.mrb[0].mxu0
        %v8341 = vadd.f32 %v8107, %v8340
        %8342 = vmatprep.mubr.bf16.mxu0 %v8076
        %8343 = vmatmul.mubr.bf16.gmra.mrb[0].mxu0 %v8075
        %v8344 = vpop.f32.mrb[0].mxu0
        %v8345 = vadd.f32 %v8103, %v8344
        %v8346 = vpop.f32.mrb[0].mxu0
        %v8347 = vadd.f32 %v8107, %v8346
        %v8348 = vpop.f32.mrb[0].mxu0
        %v8349 = vadd.f32 %v8103, %v8348
        %v8350 = vpop.f32.mrb[0].mxu0
        %v8351 = vadd.f32 %v8107, %v8350
        %8352 = vmatprep.mubr.bf16.mxu0 %v8078
        %8353 = vmatmul.mubr.bf16.gmra.mrb[0].mxu0 %v8077
        %v8354 = vpop.f32.mrb[0].mxu0
        %v8355 = vadd.f32 %v8103, %v8354
        %v8356 = vpop.f32.mrb[0].mxu0
        %v8357 = vadd.f32 %v8107, %v8356
        %v8358 = vpop.f32.mrb[0].mxu0
        %v8359 = vadd.f32 %v8103, %v8358
        %v8360 = vpop.f32.mrb[0].mxu0
        %v8361 = vadd.f32 %v8107, %v8360
        %8362 = vmatprep.mubr.bf16.mxu0 %v8080
        %8363 = vmatmul.mubr.bf16.gmra.mrb[0].mxu0 %v8079
        %v8364 = vpop.f32.mrb[0].mxu0
        %v8365 = vadd.f32 %v8103, %v8364
        %v8366 = vpop.f32.mrb[0].mxu0
        %v8367 = vadd.f32 %v8107, %v8366
        %v8368 = vpop.f32.mrb[0].mxu0
        %v8369 = vadd.f32 %v8103, %v8368
        %v8370 = vpop.f32.mrb[0].mxu0
        %v8371 = vadd.f32 %v8107, %v8370
        %8372 = vmatprep.mubr.bf16.mxu0 %v8082
        %8373 = vmatmul.mubr.bf16.gmra.mrb[0].mxu0 %v8081
        %v8374 = vpop.f32.mrb[0].mxu0
        %v8375 = vadd.f32 %v8103, %v8374
        %v8376 = vpop.f32.mrb[0].mxu0
        %v8377 = vadd.f32 %v8107, %v8376
        %v8378 = vpop.f32.mrb[0].mxu0
        %v8379 = vadd.f32 %v8103, %v8378
        %v8380 = vpop.f32.mrb[0].mxu0
        %v8381 = vadd.f32 %v8107, %v8380
        %8382 = vmatprep.mubr.bf16.mxu0 %v8084
        %8383 = vmatmul.mubr.bf16.gmra.mrb[0].mxu0 %v8083
        %v8384 = vpop.f32.mrb[0].mxu0
        %v8385 = vadd.f32 %v8103, %v8384
        %v8386 = vpop.f32.mrb[0].mxu0
        %v8387 = vadd.f32 %v8107, %v8386
        %v8388 = vpop.f32.mrb[0].mxu0
        %v8389 = vadd.f32 %v8103, %v8388
        %v8390 = vpop.f32.mrb[0].mxu0
        %v8391 = vadd.f32 %v8107, %v8390
        %8392 = vmatprep.mubr.bf16.mxu0 %v8086
        %8393 = vmatmul.mubr.bf16.gmra.mrb[0].mxu0 %v8085
        %v8394 = vpop.f32.mrb[0].mxu0
        %v8395 = vadd.f32 %v8103, %v8394
        %v8396 = vpop.f32.mrb[0].mxu0
        %v8397 = vadd.f32 %v8107, %v8396
        %v8398 = vpop.f32.mrb[0].mxu0
        %v8399 = vadd.f32 %v8103, %v8398
        %v8400 = vpop.f32.mrb[0].mxu0
        %v8401 = vadd.f32 %v8107, %v8400
        %8402 = vmatprep.mubr.bf16.mxu0 %v8088
        %8403 = vmatmul.mubr.bf16.gmra.mrb[0].mxu0 %v8087
        %v8404 = vpop.f32.mrb[0].mxu0
        %v8405 = vadd.f32 %v8103, %v8404
        %v8406 = vpop.f32.mrb[0].mxu0
        %v8407 = vadd.f32 %v8107, %v8406
        %v8408 = vpop.f32.mrb[0].mxu0
        %v8409 = vadd.f32 %v8103, %v8408
        %v8410 = vpop.f32.mrb[0].mxu0
        %v8411 = vadd.f32 %v8107, %v8410
        %8412 = vmatprep.mubr.bf16.mxu0 %v8090
        %8413 = vmatmul.mubr.bf16.gmra.mrb[0].mxu0 %v8089
        %v8414 = vpop.f32.mrb[0].mxu0
        %v8415 = vadd.f32 %v8103, %v8414
        %v8416 = vpop.f32.mrb[0].mxu0
        %v8417 = vadd.f32 %v8107, %v8416
        %v8418 = vpop.f32.mrb[0].mxu0
        %v8419 = vadd.f32 %v8103, %v8418
        %v8420 = vpop.f32.mrb[0].mxu0
        %v8421 = vadd.f32 %v8107, %v8420
        %8422 = vmatprep.mubr.bf16.mxu0 %v8092
        %8423 = vmatmul.mubr.bf16.gmra.mrb[0].mxu0 %v8091
        %v8424 = vpop.f32.mrb[0].mxu0
        %v8425 = vadd.f32 %v8103, %v8424
        %v8426 = vpop.f32.mrb[0].mxu0
        %v8427 = vadd.f32 %v8107, %v8426
        %v8428 = vpop.f32.mrb[0].mxu0
        %v8429 = vadd.f32 %v8103, %v8428
        %v8430 = vpop.f32.mrb[0].mxu0
        %v8431 = vadd.f32 %v8107, %v8430
        %8432 = vmatprep.mubr.bf16.mxu0 %v8094
        %8433 = vmatmul.mubr.bf16.gmra.mrb[0].mxu0 %v8093
        %v8434 = vpop.f32.mrb[0].mxu0
        %v8435 = vadd.f32 %v8103, %v8434
        %v8436 = vpop.f32.mrb[0].mxu0
        %v8437 = vadd.f32 %v8107, %v8436
        %v8438 = vpop.f32.mrb[0].mxu0
        %v8439 = vadd.f32 %v8103, %v8438
        %v8440 = vpop.f32.mrb[0].mxu0
        %v8441 = vadd.f32 %v8107, %v8440
        %8442 = vmatprep.mubr.bf16.mxu0 %v8096
        %8443 = vmatmul.mubr.bf16.gmra.mrb[0].mxu0 %v8095
        %v8444 = vpop.f32.mrb[0].mxu0
        %v8445 = vadd.f32 %v8103, %v8444
        %v8446 = vpop.f32.mrb[0].mxu0
        %v8447 = vadd.f32 %v8107, %v8446
        %v8448 = vpop.f32.mrb[0].mxu0
        %v8449 = vadd.f32 %v8103, %v8448
        %v8450 = vpop.f32.mrb[0].mxu0
        %v8451 = vadd.f32 %v8107, %v8450
        %8452 = vmatprep.mubr.bf16.mxu0 %v8098
        %8453 = vmatmul.mubr.bf16.gmra.mrb[0].mxu0 %v8097
        %v8454 = vpop.f32.mrb[0].mxu0
        %v8455 = vadd.f32 %v8103, %v8454
        %v8456 = vpop.f32.mrb[0].mxu0
        %v8457 = vadd.f32 %v8107, %v8456
        %v8458 = vpop.f32.mrb[0].mxu0
        %v8459 = vadd.f32 %v8103, %v8458
        %v8460 = vpop.f32.mrb[0].mxu0
        %v8461 = vadd.f32 %v8107, %v8460
        %8462 = vdwg.mxu0
        %v8463 = vmax.f32 %v8305, 0.0
        %v8464 = vmax.f32 %v8307, 0.0
        %v8465 = vmax.f32 %v8309, 0.0
        %v8466 = vmax.f32 %v8311, 0.0
        %v8467 = vmax.f32 %v8315, 0.0
        %v8468 = vmax.f32 %v8317, 0.0
        %v8469 = vmax.f32 %v8319, 0.0
        %v8470 = vmax.f32 %v8321, 0.0
        %v8471 = vmax.f32 %v8325, 0.0
        %v8472 = vmax.f32 %v8327, 0.0
        %v8473 = vmax.f32 %v8329, 0.0
        %v8474 = vmax.f32 %v8331, 0.0
        %v8475 = vmax.f32 %v8335, 0.0
        %v8476 = vmax.f32 %v8337, 0.0
        %v8477 = vmax.f32 %v8339, 0.0
        %v8478 = vmax.f32 %v8341, 0.0
        %v8479 = vmax.f32 %v8345, 0.0
        %v8480 = vmax.f32 %v8347, 0.0
        %v8481 = vmax.f32 %v8349, 0.0
        %v8482 = vmax.f32 %v8351, 0.0
        %v8483 = vmax.f32 %v8355, 0.0
        %v8484 = vmax.f32 %v8357, 0.0
        %v8485 = vmax.f32 %v8359, 0.0
        %v8486 = vmax.f32 %v8361, 0.0
        %v8487 = vmax.f32 %v8365, 0.0
        %v8488 = vmax.f32 %v8367, 0.0
        %v8489 = vmax.f32 %v8369, 0.0
        %v8490 = vmax.f32 %v8371, 0.0
        %v8491 = vmax.f32 %v8375, 0.0
        %v8492 = vmax.f32 %v8377, 0.0
        %v8493 = vmax.f32 %v8379, 0.0
        %v8494 = vmax.f32 %v8381, 0.0
        %v8495 = vmax.f32 %v8385, 0.0
        %v8496 = vmax.f32 %v8387, 0.0
        %v8497 = vmax.f32 %v8389, 0.0
        %v8498 = vmax.f32 %v8391, 0.0
        %v8499 = vmax.f32 %v8395, 0.0
        %v8500 = vmax.f32 %v8397, 0.0
        %v8501 = vmax.f32 %v8399, 0.0
        %v8502 = vmax.f32 %v8401, 0.0
        %v8503 = vmax.f32 %v8405, 0.0
        %v8504 = vmax.f32 %v8407, 0.0
        %v8505 = vmax.f32 %v8409, 0.0
        %v8506 = vmax.f32 %v8411, 0.0
        %v8507 = vmax.f32 %v8415, 0.0
        %v8508 = vmax.f32 %v8417, 0.0
        %v8509 = vmax.f32 %v8419, 0.0
        %v8510 = vmax.f32 %v8421, 0.0
        %v8511 = vmax.f32 %v8425, 0.0
        %v8512 = vmax.f32 %v8427, 0.0
        %v8513 = vmax.f32 %v8429, 0.0
        %v8514 = vmax.f32 %v8431, 0.0
        %v8515 = vmax.f32 %v8435, 0.0
        %v8516 = vmax.f32 %v8437, 0.0
        %v8517 = vmax.f32 %v8439, 0.0
        %v8518 = vmax.f32 %v8441, 0.0
        %v8519 = vmax.f32 %v8445, 0.0
        %v8520 = vmax.f32 %v8447, 0.0
        %v8521 = vmax.f32 %v8449, 0.0
        %v8522 = vmax.f32 %v8451, 0.0
        %v8523 = vmax.f32 %v8455, 0.0
        %v8524 = vmax.f32 %v8457, 0.0
        %v8525 = vmax.f32 %v8459, 0.0
        %v8526 = vmax.f32 %v8461, 0.0
        %v8527 = vld [vmem:[%s57] sm:$0xf]
        %v8528 = vld [vmem:[%s57 + $0x4] sm:$0xf]
        %v8529 = vld [vmem:[%s57 + $0x8] sm:$0xf]
        %v8530 = vld [vmem:[%s57 + $0xc] sm:$0xf]
        %v8531 = vld [vmem:[%s57 + $0x10] sm:$0xf]
        %v8532 = vld [vmem:[%s57 + $0x14] sm:$0xf]
        %v8533 = vld [vmem:[%s57 + $0x18] sm:$0xf]
        %v8534 = vld [vmem:[%s57 + $0x1c] sm:$0xf]
        %v8535 = vld [vmem:[%s57 + $0x20] sm:$0xf]
        %v8536 = vld [vmem:[%s57 + $0x24] sm:$0xf]
        %v8537 = vld [vmem:[%s57 + $0x28] sm:$0xf]
        %v8538 = vld [vmem:[%s57 + $0x2c] sm:$0xf]
        %v8539 = vld [vmem:[%s57 + $0x30] sm:$0xf]
        %v8540 = vld [vmem:[%s57 + $0x34] sm:$0xf]
        %v8541 = vld [vmem:[%s57 + $0x38] sm:$0xf]
        %v8542 = vld [vmem:[%s57 + $0x3c] sm:$0xf]
        %v8543 = vld [vmem:[%s57 + $0x40] sm:$0xf]
        %v8544 = vld [vmem:[%s57 + $0x44] sm:$0xf]
        %v8545 = vld [vmem:[%s57 + $0x48] sm:$0xf]
        %v8546 = vld [vmem:[%s57 + $0x4c] sm:$0xf]
        %v8547 = vld [vmem:[%s57 + $0x50] sm:$0xf]
        %v8548 = vld [vmem:[%s57 + $0x54] sm:$0xf]
        %v8549 = vld [vmem:[%s57 + $0x58] sm:$0xf]
        %v8550 = vld [vmem:[%s57 + $0x5c] sm:$0xf]
        %v8551 = vld [vmem:[%s57 + $0x60] sm:$0xf]
        %v8552 = vld [vmem:[%s57 + $0x64] sm:$0xf]
        %v8553 = vld [vmem:[%s57 + $0x68] sm:$0xf]
        %v8554 = vld [vmem:[%s57 + $0x6c] sm:$0xf]
        %v8555 = vld [vmem:[%s57 + $0x70] sm:$0xf]
        %v8556 = vld [vmem:[%s57 + $0x74] sm:$0xf]
        %v8557 = vld [vmem:[%s57 + $0x78] sm:$0xf]
        %v8558 = vld [vmem:[%s57 + $0x7c] sm:$0xf]
        %v8559 = vld [vmem:[%s59] sm:$0x1]
        %v8560 = vpack.c.bf16 %v8465, %v8463
        %v8561 = vpack.c.bf16 %v8466, %v8464
        %v8562 = vpack.c.bf16 %v8469, %v8467
        %v8563 = vpack.c.bf16 %v8470, %v8468
        %v8564 = vpack.c.bf16 %v8473, %v8471
        %v8565 = vpack.c.bf16 %v8474, %v8472
        %v8566 = vpack.c.bf16 %v8477, %v8475
        %v8567 = vpack.c.bf16 %v8478, %v8476
        %v8568 = vpack.c.bf16 %v8481, %v8479
        %v8569 = vpack.c.bf16 %v8482, %v8480
        %v8570 = vpack.c.bf16 %v8485, %v8483
        %v8571 = vpack.c.bf16 %v8486, %v8484
        %v8572 = vpack.c.bf16 %v8489, %v8487
        %v8573 = vpack.c.bf16 %v8490, %v8488
        %v8574 = vpack.c.bf16 %v8493, %v8491
        %v8575 = vpack.c.bf16 %v8494, %v8492
        %v8576 = vpack.c.bf16 %v8497, %v8495
        %v8577 = vpack.c.bf16 %v8498, %v8496
        %v8578 = vpack.c.bf16 %v8501, %v8499
        %v8579 = vpack.c.bf16 %v8502, %v8500
        %v8580 = vpack.c.bf16 %v8505, %v8503
        %v8581 = vpack.c.bf16 %v8506, %v8504
        %v8582 = vpack.c.bf16 %v8509, %v8507
        %v8583 = vpack.c.bf16 %v8510, %v8508
        %v8584 = vpack.c.bf16 %v8513, %v8511
        %v8585 = vpack.c.bf16 %v8514, %v8512
        %v8586 = vpack.c.bf16 %v8517, %v8515
        %v8587 = vpack.c.bf16 %v8518, %v8516
        %v8588 = vpack.c.bf16 %v8521, %v8519
        %v8589 = vpack.c.bf16 %v8522, %v8520
        %v8590 = vpack.c.bf16 %v8525, %v8523
        %v8591 = vpack.c.bf16 %v8526, %v8524
        %v8593 = vlaneseq
        %v8594 = vshrl.u32 %v8593, 7
        %v8595 = vsub.s32 0, %v8594
        %v8596 = vrot.slane %v8559, %v8595
        %v8630 = vunpack.c.l.b16 %v8527
        %v8631 = vunpack.c.l.b16 %v8528
        %v8632 = vunpack.c.l.b16 %v8529
        %v8633 = vunpack.c.l.b16 %v8530
        %v8634 = vunpack.c.l.b16 %v8531
        %v8635 = vunpack.c.l.b16 %v8532
        %v8636 = vunpack.c.l.b16 %v8533
        %v8637 = vunpack.c.l.b16 %v8534
        %v8638 = vunpack.c.l.b16 %v8535
        %v8639 = vunpack.c.l.b16 %v8536
        %v8640 = vunpack.c.l.b16 %v8537
        %v8641 = vunpack.c.l.b16 %v8538
        %v8642 = vunpack.c.l.b16 %v8539
        %v8643 = vunpack.c.l.b16 %v8540
        %v8644 = vunpack.c.l.b16 %v8541
        %v8645 = vunpack.c.l.b16 %v8542
        %v8646 = vunpack.c.l.b16 %v8543
        %v8647 = vunpack.c.l.b16 %v8544
        %v8648 = vunpack.c.l.b16 %v8545
        %v8649 = vunpack.c.l.b16 %v8546
        %v8650 = vunpack.c.l.b16 %v8547
        %v8651 = vunpack.c.l.b16 %v8548
        %v8652 = vunpack.c.l.b16 %v8549
        %v8653 = vunpack.c.l.b16 %v8550
        %v8654 = vunpack.c.l.b16 %v8551
        %v8655 = vunpack.c.l.b16 %v8552
        %v8656 = vunpack.c.l.b16 %v8553
        %v8657 = vunpack.c.l.b16 %v8554
        %v8658 = vunpack.c.l.b16 %v8555
        %v8659 = vunpack.c.l.b16 %v8556
        %v8660 = vunpack.c.l.b16 %v8557
        %v8661 = vunpack.c.l.b16 %v8558
        %v8662 = vpack.c.b16 %v8631, %v8630
        %v8663 = vpack.c.b16 %v8633, %v8632
        %v8664 = vpack.c.b16 %v8635, %v8634
        %v8665 = vpack.c.b16 %v8637, %v8636
        %v8666 = vpack.c.b16 %v8639, %v8638
        %v8667 = vpack.c.b16 %v8641, %v8640
        %v8668 = vpack.c.b16 %v8643, %v8642
        %v8669 = vpack.c.b16 %v8645, %v8644
        %v8670 = vpack.c.b16 %v8647, %v8646
        %v8671 = vpack.c.b16 %v8649, %v8648
        %v8672 = vpack.c.b16 %v8651, %v8650
        %v8673 = vpack.c.b16 %v8653, %v8652
        %v8674 = vpack.c.b16 %v8655, %v8654
        %v8675 = vpack.c.b16 %v8657, %v8656
        %v8676 = vpack.c.b16 %v8659, %v8658
        %v8677 = vpack.c.b16 %v8661, %v8660
        %8694 = vmatprep.subr.bf16.mxu0 0
        %8695 = vmatpush1.bf16.msra.mxu0 %v8662
        %8696 = vmatprep.subr.bf16.mxu0 0
        %8697 = vmatpush1.bf16.msra.mxu0 %v8663
        %8698 = vmatprep.subr.bf16.mxu0 0
        %8699 = vmatpush1.bf16.msra.mxu0 %v8664
        %8700 = vmatprep.subr.bf16.mxu0 0
        %8701 = vmatpush1.bf16.msra.mxu0 %v8665
        %8702 = vmatprep.subr.bf16.mxu0 0
        %8703 = vmatpush1.bf16.msra.mxu0 %v8666
        %8704 = vmatprep.subr.bf16.mxu0 0
        %8705 = vmatpush1.bf16.msra.mxu0 %v8667
        %8706 = vmatprep.subr.bf16.mxu0 0
        %8707 = vmatpush1.bf16.msra.mxu0 %v8668
        %8708 = vmatprep.subr.bf16.mxu0 0
        %8709 = vmatpush1.bf16.msra.mxu0 %v8669
        %8710 = vmatprep.subr.bf16.mxu0 0
        %8711 = vmatpush1.bf16.msra.mxu0 %v8670
        %8712 = vmatprep.subr.bf16.mxu0 0
        %8713 = vmatpush1.bf16.msra.mxu0 %v8671
        %8714 = vmatprep.subr.bf16.mxu0 0
        %8715 = vmatpush1.bf16.msra.mxu0 %v8672
        %8716 = vmatprep.subr.bf16.mxu0 0
        %8717 = vmatpush1.bf16.msra.mxu0 %v8673
        %8718 = vmatprep.subr.bf16.mxu0 0
        %8719 = vmatpush1.bf16.msra.mxu0 %v8674
        %8720 = vmatprep.subr.bf16.mxu0 0
        %8721 = vmatpush1.bf16.msra.mxu0 %v8675
        %8722 = vmatprep.subr.bf16.mxu0 0
        %8723 = vmatpush1.bf16.msra.mxu0 %v8676
        %8724 = vmatprep.subr.bf16.mxu0 0
        %8725 = vmatpush1.bf16.msra.mxu0 %v8677
        %8726 = vmatprep.mubr.bf16.mxu0 %v8561
        %8727 = vmatmul.mubr.bf16.gmra.mrb[0].mxu0 %v8560
        %v8728 = vpop.f32.mrb[0].mxu0
        %v8729 = vadd.f32 %v8596, %v8728
        %v8730 = vpop.f32.mrb[0].mxu0
        %v8731 = vpop.f32.mrb[0].mxu0
        %v8732 = vadd.f32 %v8596, %v8731
        %v8733 = vpop.f32.mrb[0].mxu0
        %8734 = vmatprep.mubr.bf16.mxu0 %v8563
        %8735 = vmatmul.mubr.bf16.gmra.mrb[0].mxu0 %v8562
        %v8736 = vpop.f32.mrb[0].mxu0
        %v8737 = vadd.f32 %v8596, %v8736
        %v8738 = vpop.f32.mrb[0].mxu0
        %v8739 = vpop.f32.mrb[0].mxu0
        %v8740 = vadd.f32 %v8596, %v8739
        %v8741 = vpop.f32.mrb[0].mxu0
        %8742 = vmatprep.mubr.bf16.mxu0 %v8565
        %8743 = vmatmul.mubr.bf16.gmra.mrb[0].mxu0 %v8564
        %v8744 = vpop.f32.mrb[0].mxu0
        %v8745 = vadd.f32 %v8596, %v8744
        %v8746 = vpop.f32.mrb[0].mxu0
        %v8747 = vpop.f32.mrb[0].mxu0
        %v8748 = vadd.f32 %v8596, %v8747
        %v8749 = vpop.f32.mrb[0].mxu0
        %8750 = vmatprep.mubr.bf16.mxu0 %v8567
        %8751 = vmatmul.mubr.bf16.gmra.mrb[0].mxu0 %v8566
        %v8752 = vpop.f32.mrb[0].mxu0
        %v8753 = vadd.f32 %v8596, %v8752
        %v8754 = vpop.f32.mrb[0].mxu0
        %v8755 = vpop.f32.mrb[0].mxu0
        %v8756 = vadd.f32 %v8596, %v8755
        %v8757 = vpop.f32.mrb[0].mxu0
        %8758 = vmatprep.mubr.bf16.mxu0 %v8569
        %8759 = vmatmul.mubr.bf16.gmra.mrb[0].mxu0 %v8568
        %v8760 = vpop.f32.mrb[0].mxu0
        %v8761 = vadd.f32 %v8596, %v8760
        %v8762 = vpop.f32.mrb[0].mxu0
        %v8763 = vpop.f32.mrb[0].mxu0
        %v8764 = vadd.f32 %v8596, %v8763
        %v8765 = vpop.f32.mrb[0].mxu0
        %8766 = vmatprep.mubr.bf16.mxu0 %v8571
        %8767 = vmatmul.mubr.bf16.gmra.mrb[0].mxu0 %v8570
        %v8768 = vpop.f32.mrb[0].mxu0
        %v8769 = vadd.f32 %v8596, %v8768
        %v8770 = vpop.f32.mrb[0].mxu0
        %v8771 = vpop.f32.mrb[0].mxu0
        %v8772 = vadd.f32 %v8596, %v8771
        %v8773 = vpop.f32.mrb[0].mxu0
        %8774 = vmatprep.mubr.bf16.mxu0 %v8573
        %8775 = vmatmul.mubr.bf16.gmra.mrb[0].mxu0 %v8572
        %v8776 = vpop.f32.mrb[0].mxu0
        %v8777 = vadd.f32 %v8596, %v8776
        %v8778 = vpop.f32.mrb[0].mxu0
        %v8779 = vpop.f32.mrb[0].mxu0
        %v8780 = vadd.f32 %v8596, %v8779
        %v8781 = vpop.f32.mrb[0].mxu0
        %8782 = vmatprep.mubr.bf16.mxu0 %v8575
        %8783 = vmatmul.mubr.bf16.gmra.mrb[0].mxu0 %v8574
        %v8784 = vpop.f32.mrb[0].mxu0
        %v8785 = vadd.f32 %v8596, %v8784
        %v8786 = vpop.f32.mrb[0].mxu0
        %v8787 = vpop.f32.mrb[0].mxu0
        %v8788 = vadd.f32 %v8596, %v8787
        %v8789 = vpop.f32.mrb[0].mxu0
        %8790 = vmatprep.mubr.bf16.mxu0 %v8577
        %8791 = vmatmul.mubr.bf16.gmra.mrb[0].mxu0 %v8576
        %v8792 = vpop.f32.mrb[0].mxu0
        %v8793 = vadd.f32 %v8596, %v8792
        %v8794 = vpop.f32.mrb[0].mxu0
        %v8795 = vpop.f32.mrb[0].mxu0
        %v8796 = vadd.f32 %v8596, %v8795
        %v8797 = vpop.f32.mrb[0].mxu0
        %8798 = vmatprep.mubr.bf16.mxu0 %v8579
        %8799 = vmatmul.mubr.bf16.gmra.mrb[0].mxu0 %v8578
        %v8800 = vpop.f32.mrb[0].mxu0
        %v8801 = vadd.f32 %v8596, %v8800
        %v8802 = vpop.f32.mrb[0].mxu0
        %v8803 = vpop.f32.mrb[0].mxu0
        %v8804 = vadd.f32 %v8596, %v8803
        %v8805 = vpop.f32.mrb[0].mxu0
        %8806 = vmatprep.mubr.bf16.mxu0 %v8581
        %8807 = vmatmul.mubr.bf16.gmra.mrb[0].mxu0 %v8580
        %v8808 = vpop.f32.mrb[0].mxu0
        %v8809 = vadd.f32 %v8596, %v8808
        %v8810 = vpop.f32.mrb[0].mxu0
        %v8811 = vpop.f32.mrb[0].mxu0
        %v8812 = vadd.f32 %v8596, %v8811
        %v8813 = vpop.f32.mrb[0].mxu0
        %8814 = vmatprep.mubr.bf16.mxu0 %v8583
        %8815 = vmatmul.mubr.bf16.gmra.mrb[0].mxu0 %v8582
        %v8816 = vpop.f32.mrb[0].mxu0
        %v8817 = vadd.f32 %v8596, %v8816
        %v8818 = vpop.f32.mrb[0].mxu0
        %v8819 = vpop.f32.mrb[0].mxu0
        %v8820 = vadd.f32 %v8596, %v8819
        %v8821 = vpop.f32.mrb[0].mxu0
        %8822 = vmatprep.mubr.bf16.mxu0 %v8585
        %8823 = vmatmul.mubr.bf16.gmra.mrb[0].mxu0 %v8584
        %v8824 = vpop.f32.mrb[0].mxu0
        %v8825 = vadd.f32 %v8596, %v8824
        %v8826 = vpop.f32.mrb[0].mxu0
        %v8827 = vpop.f32.mrb[0].mxu0
        %v8828 = vadd.f32 %v8596, %v8827
        %v8829 = vpop.f32.mrb[0].mxu0
        %8830 = vmatprep.mubr.bf16.mxu0 %v8587
        %8831 = vmatmul.mubr.bf16.gmra.mrb[0].mxu0 %v8586
        %v8832 = vpop.f32.mrb[0].mxu0
        %v8833 = vadd.f32 %v8596, %v8832
        %v8834 = vpop.f32.mrb[0].mxu0
        %v8835 = vpop.f32.mrb[0].mxu0
        %v8836 = vadd.f32 %v8596, %v8835
        %v8837 = vpop.f32.mrb[0].mxu0
        %8838 = vmatprep.mubr.bf16.mxu0 %v8589
        %8839 = vmatmul.mubr.bf16.gmra.mrb[0].mxu0 %v8588
        %v8840 = vpop.f32.mrb[0].mxu0
        %v8841 = vadd.f32 %v8596, %v8840
        %v8842 = vpop.f32.mrb[0].mxu0
        %v8843 = vpop.f32.mrb[0].mxu0
        %v8844 = vadd.f32 %v8596, %v8843
        %v8845 = vpop.f32.mrb[0].mxu0
        %8846 = vmatprep.mubr.bf16.mxu0 %v8591
        %8847 = vmatmul.mubr.bf16.gmra.mrb[0].mxu0 %v8590
        %v8848 = vpop.f32.mrb[0].mxu0
        %v8849 = vadd.f32 %v8596, %v8848
        %v8850 = vpop.f32.mrb[0].mxu0
        %v8851 = vpop.f32.mrb[0].mxu0
        %v8852 = vadd.f32 %v8596, %v8851
        %v8853 = vpop.f32.mrb[0].mxu0
        %8854 = vdwg.mxu0
        %v8855 = vand.u32 2147483647, %v8729
        %v8856 = vand.u32 2147483647, %v8732
        %v8857 = vand.u32 2147483647, %v8737
        %v8858 = vand.u32 2147483647, %v8740
        %v8859 = vand.u32 2147483647, %v8745
        %v8860 = vand.u32 2147483647, %v8748
        %v8861 = vand.u32 2147483647, %v8753
        %v8862 = vand.u32 2147483647, %v8756
        %v8863 = vand.u32 2147483647, %v8761
        %v8864 = vand.u32 2147483647, %v8764
        %v8865 = vand.u32 2147483647, %v8769
        %v8866 = vand.u32 2147483647, %v8772
        %v8867 = vand.u32 2147483647, %v8777
        %v8868 = vand.u32 2147483647, %v8780
        %v8869 = vand.u32 2147483647, %v8785
        %v8870 = vand.u32 2147483647, %v8788
        %v8871 = vand.u32 2147483647, %v8793
        %v8872 = vand.u32 2147483647, %v8796
        %v8873 = vand.u32 2147483647, %v8801
        %v8874 = vand.u32 2147483647, %v8804
        %v8875 = vand.u32 2147483647, %v8809
        %v8876 = vand.u32 2147483647, %v8812
        %v8877 = vand.u32 2147483647, %v8817
        %v8878 = vand.u32 2147483647, %v8820
        %v8879 = vand.u32 2147483647, %v8825
        %v8880 = vand.u32 2147483647, %v8828
        %v8881 = vand.u32 2147483647, %v8833
        %v8882 = vand.u32 2147483647, %v8836
        %v8883 = vand.u32 2147483647, %v8841
        %v8884 = vand.u32 2147483647, %v8844
        %v8885 = vand.u32 2147483647, %v8849
        %v8886 = vand.u32 2147483647, %v8852
        %vm8887 = vcmask 64512
        %8888 = vst.msk [vmem:[%s1092] sm:$0xff] %vm8887, %v8855
        %8889 = vst.msk [vmem:[%s1092 + $0x8] sm:$0xff] %vm8887, %v8856
        %8890 = vst.msk [vmem:[%s1092 + $0x10] sm:$0xff] %vm8887, %v8857
        %8891 = vst.msk [vmem:[%s1092 + $0x18] sm:$0xff] %vm8887, %v8858
        %8892 = vst.msk [vmem:[%s1092 + $0x20] sm:$0xff] %vm8887, %v8859
        %8893 = vst.msk [vmem:[%s1092 + $0x28] sm:$0xff] %vm8887, %v8860
        %8894 = vst.msk [vmem:[%s1092 + $0x30] sm:$0xff] %vm8887, %v8861
        %8895 = vst.msk [vmem:[%s1092 + $0x38] sm:$0xff] %vm8887, %v8862
        %8896 = vst.msk [vmem:[%s1092 + $0x40] sm:$0xff] %vm8887, %v8863
        %8897 = vst.msk [vmem:[%s1092 + $0x48] sm:$0xff] %vm8887, %v8864
        %8898 = vst.msk [vmem:[%s1092 + $0x50] sm:$0xff] %vm8887, %v8865
        %8899 = vst.msk [vmem:[%s1092 + $0x58] sm:$0xff] %vm8887, %v8866
        %8900 = vst.msk [vmem:[%s1092 + $0x60] sm:$0xff] %vm8887, %v8867
        %8901 = vst.msk [vmem:[%s1092 + $0x68] sm:$0xff] %vm8887, %v8868
        %8902 = vst.msk [vmem:[%s1092 + $0x70] sm:$0xff] %vm8887, %v8869
        %8903 = vst.msk [vmem:[%s1092 + $0x78] sm:$0xff] %vm8887, %v8870
        %8904 = vst.msk [vmem:[%s1092 + $0x80] sm:$0xff] %vm8887, %v8871
        %8905 = vst.msk [vmem:[%s1092 + $0x88] sm:$0xff] %vm8887, %v8872
        %8906 = vst.msk [vmem:[%s1092 + $0x90] sm:$0xff] %vm8887, %v8873
        %8907 = vst.msk [vmem:[%s1092 + $0x98] sm:$0xff] %vm8887, %v8874
        %8908 = vst.msk [vmem:[%s1092 + $0xa0] sm:$0xff] %vm8887, %v8875
        %8909 = vst.msk [vmem:[%s1092 + $0xa8] sm:$0xff] %vm8887, %v8876
        %8910 = vst.msk [vmem:[%s1092 + $0xb0] sm:$0xff] %vm8887, %v8877
        %8911 = vst.msk [vmem:[%s1092 + $0xb8] sm:$0xff] %vm8887, %v8878
        %8912 = vst.msk [vmem:[%s1092 + $0xc0] sm:$0xff] %vm8887, %v8879
        %8913 = vst.msk [vmem:[%s1092 + $0xc8] sm:$0xff] %vm8887, %v8880
        %8914 = vst.msk [vmem:[%s1092 + $0xd0] sm:$0xff] %vm8887, %v8881
        %8915 = vst.msk [vmem:[%s1092 + $0xd8] sm:$0xff] %vm8887, %v8882
        %8916 = vst.msk [vmem:[%s1092 + $0xe0] sm:$0xff] %vm8887, %v8883
        %8917 = vst.msk [vmem:[%s1092 + $0xe8] sm:$0xff] %vm8887, %v8884
        %8918 = vst.msk [vmem:[%s1092 + $0xf0] sm:$0xff] %vm8887, %v8885
        %8919 = vst.msk [vmem:[%s1092 + $0xf8] sm:$0xff] %vm8887, %v8886
        %s8920 = smul.u32 32, %s78
        %p8921 = scmp.lt.s32.totalorder %s8920, 63
        %s8922 = scalar_select %p8921, %s8920, 63
        %s8923 = smul.addr %s8922, 8
        %s8924 = scalar_lea.vmem %s61, %s8923
        // Predicated region
        $region185: #{spinlight_forward.1} parent=139 // pred_check
          %p8925 = pneg %p731
        $region186: #{spinlight_forward.1} parent=139 // pred_check_branch
          %8927 = sbr.rel (%p8925) target = $region188
        $region187: #{spinlight_forward.1} parent=139 // pred_region
          %s8928 = smul.u32 32, %s78
        $region188: #{spinlight_forward.1} parent=139 // pred_fallthru
          _
      $region140: #{spinlight_forward.1} parent=5 // pred_fallthru
        _
      %p8929 = scmp.le.s32.totalorder 2, %s73
      // Predicated region
      $region189: #{spinlight_forward.1} parent=5 // pred_check
        %p8930 = pneg %p8929
      $region190: #{spinlight_forward.1} parent=5 // pred_check_branch
        %8932 = sbr.rel (%p8930) target = $region192
      $region191: #{spinlight_forward.1} parent=5 // pred_region
        %s8933 = ssub.s32 %s73, 2
        // Predicated region
        $region193: #{spinlight_forward.1} parent=191 // pred_check
          %p8934 = pneg %p737
        $region194: #{spinlight_forward.1} parent=191 // pred_check_branch
          %8936 = sbr.rel (%p8934) target = $region196
        $region195: #{spinlight_forward.1} parent=191 // pred_region
          %s8937 = smul.u32 32, %s79
          %p8938 = scmp.lt.s32.totalorder %s8937, 63
          %s8939 = scalar_select %p8938, %s8937, 63
          %s8940 = smul.addr %s8939, 8
          %s8941 = scalar_lea.vmem %s61, %s8940
        $region196: #{spinlight_forward.1} parent=191 // pred_fallthru
          _
      $region192: #{spinlight_forward.1} parent=5 // pred_fallthru
        _
    $region6: #{spinlight_forward.1} parent=1 // loop_footer
      %s77 = sadd.s32 1, %s73
    $region7: #{spinlight_forward.1} parent=1 // loop_footer_branch
      %72 = sbr.rel target = $region3
    $region8: #{spinlight_forward.1} parent=1 // loop_exit
      _
    %8942 = vsyncpa [#allocation3], 1
    %s8943 = scalar_lea.sflag [#allocation3], 1
    %8944 = vsyncpa %s8943, 1
    %8945 = vsyncpa [#allocation5], 1
    %8946 = vsyncpa [#allocation8], 1
    %8947 = vsyncpa [#allocation11], 1
    %8948 = vsyncpa [#allocation14], 1
    %8949 = vsyncpa [#allocation17], 1

</llo_original>
